<compile_context>
chip_gen: v5e
topology: v5e:2x2
jax: 0.10.0
libtpu: 0.0.40
codegen_flags: <defaults>
</compile_context>

<pallas_src>
import jax
import jax.numpy as jnp
import numpy as np
from jax import lax
from jax.experimental import pallas as pl
from jax.experimental.pallas import tpu as pltpu


def _round_up(x, m):
    return ((x + m - 1) // m) * m


def _make_lstm_kernel(T, Hp, unroll):
    """Builds the per-(batch-block, time-block) LSTM recurrence kernel."""
    f32 = jnp.float32

    def kernel(len_ref, emb_ref, wih_ref, whh_ref, bias_ref,
               out_ref, hn_ref, cn_ref,
               h_sc, c_sc, gx_sc):
        # len_ref : (Bt, Hp) int32  per-row sequence length, lane-dense
        # emb_ref : (T, Bt, E)      embedding block (matmul dtype)
        # wih_ref : (E, 4*Hp)       input weight, gate-aligned/padded
        # whh_ref : (Hp, 4*Hp)      recurrent weight, gate-aligned/padded
        # bias_ref: (1, 4*Hp) f32   b_ih + b_hh, gate-aligned/padded
        # out_ref : (T, Bt, Hp)     memory_bank block
        # hn_ref/cn_ref: (1, Bt, Hp) final states (resident across time blocks)
        # h_sc/c_sc: (Bt, Hp) f32   carried recurrent state
        # gx_sc   : (T, Bt, 4*Hp) f32  staged x @ W_ih^T + b for this block
        tb = pl.program_id(1)                  # time-block index (sequential)
        Bt = h_sc.shape[0]
        E = emb_ref.shape[-1]

        @pl.when(tb == 0)
        def _():
            h_sc[...] = jnp.zeros_like(h_sc)
            c_sc[...] = jnp.zeros_like(c_sc)

        # ---- Fused, time-parallel input projection: one big matmul on the
        # otherwise-idle MXU, staged into VMEM (no gx HBM round trip). ----
        x2d = emb_ref[...].reshape(T * Bt, E)
        gx = jnp.dot(x2d, wih_ref[...], preferred_element_type=f32)
        gx_sc[...] = (gx + bias_ref[...]).reshape(T, Bt, 4 * Hp)

        lens = len_ref[...]                    # (Bt, Hp) int32, lane-dense
        t0 = tb * T

        def step(tt, carry):
            h, c = carry
            hm = h.astype(whh_ref.dtype)       # matmul-input dtype only

            def gate(g):
                # Each gate is its own lane-aligned Hp-wide slab; per-gate
                # matmuls keep live values to (Bt, Hp) chunks (vreg pressure).
                return gx_sc[tt, :, g * Hp:(g + 1) * Hp] + jnp.dot(
                    hm, whh_ref[:, g * Hp:(g + 1) * Hp],
                    preferred_element_type=f32)

            i_g = jax.nn.sigmoid(gate(0))
            f_g = jax.nn.sigmoid(gate(1))
            g_g = jnp.tanh(gate(2))
            c_new = f_g * c + i_g * g_g
            o_g = jax.nn.sigmoid(gate(3))
            h_new = o_g * jnp.tanh(c_new)

            # pack_padded_sequence semantics: freeze state and emit zeros once
            # t >= length.  Full-vreg VPU compare, no lane broadcast needed.
            mask = (t0 + tt) < lens            # (Bt, Hp) bool
            out_ref[tt] = jnp.where(mask, h_new, 0.0)
            return jnp.where(mask, h_new, h), jnp.where(mask, c_new, c)

        h_fin, c_fin = lax.fori_loop(0, T, step, (h_sc[...], c_sc[...]),
                                     unroll=unroll)
        h_sc[...] = h_fin
        c_sc[...] = c_fin

        @pl.when(tb == pl.num_programs(1) - 1)
        def _():
            hn_ref[0] = h_fin
            cn_ref[0] = c_fin

    return kernel


def lstm_encoder_pallas(emb, lengths, w_ih_t, w_hh_t, bias, *,
                        time_block=16, batch_block=128,
                        matmul_dtype=jnp.float32):
    """emb: (S, B, E), lengths: (B,) int, w_ih_t: (E, 4H), w_hh_t: (H, 4H),
    bias: (4H,).  Returns (memory_bank (S,B,H), h_n (1,B,H), c_n (1,B,H))."""
    S, B, E = emb.shape
    H = w_hh_t.shape[0]
    f32 = jnp.float32

    Hp = _round_up(max(H, 128), 128)          # lane-dense hidden per gate

    # Batch block: big enough to feed the MXU (review: >=128 when B allows,
    # capped at 128-per-vmatmul on v5e anyway), but keep >=2 blocks when B > 8
    # so v7x's two TensorCores can split the leading "parallel" axis.
    Bt = min(_round_up(batch_block, 8), _round_up(B, 8))
    if B > 8 and _round_up(B, Bt) // Bt < 2:
        Bt = _round_up((B + 1) // 2, 8)
    Bp = _round_up(B, Bt)

    T = max(1, int(time_block))
    Sp = _round_up(S, T)

    # ---- Gate-align + pad the (tiny) weights, NOT the activations. ----
    wih = jnp.pad(w_ih_t.astype(f32).reshape(E, 4, H),
                  ((0, 0), (0, 0), (0, Hp - H))).reshape(E, 4 * Hp)
    whh = jnp.pad(w_hh_t.astype(f32).reshape(H, 4, H),
                  ((0, Hp - H), (0, 0), (0, Hp - H))).reshape(Hp, 4 * Hp)
    b = jnp.pad(bias.astype(f32).reshape(4, H),
                ((0, 0), (0, Hp - H))).reshape(1, 4 * Hp)

    # Only matmul inputs may be narrowed (e.g. bf16); state/gates stay f32.
    emb_p = jnp.pad(emb.astype(f32),
                    ((0, Sp - S), (0, Bp - B), (0, 0))).astype(matmul_dtype)
    wih = wih.astype(matmul_dtype)
    whh = whh.astype(matmul_dtype)

    # Lengths as a lane-dense int32 tile (padded batch rows -> length 0).
    len_pad = jnp.zeros((Bp,), jnp.int32).at[:B].set(lengths.astype(jnp.int32))
    len_b = jnp.broadcast_to(len_pad[:, None], (Bp, Hp))

    grid = (Bp // Bt, Sp // T)   # (batch-parallel, time-sequential)

    # Full unroll only while the per-step working set fits the 64-vreg file;
    # at large batch blocks unroll=2 avoids VMEM spill traffic.
    unroll = True if Bt * Hp <= 32 * 128 else 2

    kernel = _make_lstm_kernel(T, Hp, unroll)

    grid_spec = pltpu.PrefetchScalarGridSpec(
        num_scalar_prefetch=0,
        grid=grid,
        in_specs=[
            pl.BlockSpec((Bt, Hp), lambda i, t: (i, 0)),           # lengths
            pl.BlockSpec((T, Bt, E), lambda i, t: (t, i, 0)),      # embeddings
            pl.BlockSpec((E, 4 * Hp), lambda i, t: (0, 0)),        # W_ih^T
            pl.BlockSpec((Hp, 4 * Hp), lambda i, t: (0, 0)),       # W_hh^T
            pl.BlockSpec((1, 4 * Hp), lambda i, t: (0, 0)),        # bias
        ],
        out_specs=[
            pl.BlockSpec((T, Bt, Hp), lambda i, t: (t, i, 0)),     # memory_bank
            pl.BlockSpec((1, Bt, Hp), lambda i, t: (0, i, 0)),     # h_n
            pl.BlockSpec((1, Bt, Hp), lambda i, t: (0, i, 0)),     # c_n
        ],
        scratch_shapes=[
            pltpu.VMEM((Bt, Hp), f32),                             # h state
            pltpu.VMEM((Bt, Hp), f32),                             # c state
            pltpu.VMEM((T, Bt, 4 * Hp), f32),                      # staged gx
        ],
    )

    out_shapes = (
        jax.ShapeDtypeStruct((Sp, Bp, Hp), f32),
        jax.ShapeDtypeStruct((1, Bp, Hp), f32),
        jax.ShapeDtypeStruct((1, Bp, Hp), f32),
    )

    # NOTE: at these test sizes every block is tiny and 32 MiB scoped VMEM is
    # ample on all generations.  At production H (Hp~1024) re-derive T / Bt /
    # matmul_dtype against v7x's 64 MiB physical VMEM (single-buffer the
    # grid-invariant W_hh via pipeline_mode=pl.Buffered(1) and/or shrink T /
    # store gx_sc narrower); on v6e the limit can instead be raised toward
    # ~100 MiB of the 128 MiB physical VMEM.
    mb, hn, cn = pl.pallas_call(
        kernel,
        out_shape=out_shapes,
        grid_spec=grid_spec,
        compiler_params=pltpu.CompilerParams(
            dimension_semantics=("parallel", "arbitrary"),
            vmem_limit_bytes=32 * 1024 * 1024,
        ),
    )(len_b, emb_p, wih, whh, b)

    # TODO(synk): the post-call slices copy the memory bank once more in HBM;
    # keep the padded layout for downstream consumers at production sizes.
    return mb[:S, :B, :H], hn[:, :B, :H], cn[:, :B, :H]


def rnn_encoder_forward(src, lengths, params):
    """RNNEncoder.forward: src (S, B, 1) int32 indices, lengths (B,) int32.
    Returns (encoder_final=(h_n, c_n), memory_bank)."""
    # embeddings(src) — lookup is glue, not the hot path.
    emb = jnp.take(params["emb_table"], src[..., 0], axis=0)   # (S, B, E)
    memory_bank, h_n, c_n = lstm_encoder_pallas(
        emb, lengths, params["w_ih_t"], params["w_hh_t"], params["bias"],
        time_block=16, batch_block=128, matmul_dtype=jnp.float32)
    # TODO(synk): use_bridge=False here; the optional Linear+ReLU bridge is not emitted.
    return (h_n, c_n), memory_bank


def _reference_forward(src, lengths, params):
    """Pure-JAX reference (lax.scan) for correctness check."""
    emb = jnp.take(params["emb_table"], src[..., 0], axis=0)
    S, B, E = emb.shape
    H = params["w_hh_t"].shape[0]
    wih, whh, b = params["w_ih_t"], params["w_hh_t"], params["bias"]

    def step(carry, inp):
        h, c = carry
        xt, t = inp
        gates = xt @ wih + h @ whh + b
        i = jax.nn.sigmoid(gates[:, :H])
        f = jax.nn.sigmoid(gates[:, H:2 * H])
        g = jnp.tanh(gates[:, 2 * H:3 * H])
        o = jax.nn.sigmoid(gates[:, 3 * H:])
        c_new = f * c + i * g
        h_new = o * jnp.tanh(c_new)
        mask = (t < lengths)[:, None]
        h2 = jnp.where(mask, h_new, h)
        c2 = jnp.where(mask, c_new, c)
        out = jnp.where(mask, h_new, 0.0)
        return (h2, c2), out

    (h_fin, c_fin), outs = lax.scan(
        step,
        (jnp.zeros((B, H), jnp.float32), jnp.zeros((B, H), jnp.float32)),
        (emb, jnp.arange(S, dtype=jnp.int32)))
    return (h_fin[None], c_fin[None]), outs


if __name__ == "__main__":
    # Small shapes chosen so that S, B and H all need padding and the grid has
    # multiple batch blocks AND multiple time blocks (state carry exercised).
    S, B, E, H, VOCAB = 40, 12, 16, 32, 50   # src_len, batch, emb_dim, hidden

    key = jax.random.PRNGKey(0)
    k_emb, k_wih, k_whh, k_bih, k_bhh, k_src, k_len = jax.random.split(key, 7)

    scale = 1.0 / np.sqrt(H)
    params = {
        # nn.Embedding(VOCAB, E)
        "emb_table": jax.random.normal(k_emb, (VOCAB, E), jnp.float32),
        # nn.LSTM weights: W_ih (4H, E), W_hh (4H, H) — stored transposed for x @ W.
        "w_ih_t": jax.random.uniform(k_wih, (E, 4 * H), jnp.float32,
                                     -scale, scale),
        "w_hh_t": jax.random.uniform(k_whh, (H, 4 * H), jnp.float32,
                                     -scale, scale),
        # b_ih + b_hh combined (they are only ever added).
        "bias": (jax.random.uniform(k_bih, (4 * H,), jnp.float32, -scale, scale)
                 + jax.random.uniform(k_bhh, (4 * H,), jnp.float32, -scale, scale)),
    }

    src = jax.random.randint(k_src, (S, B, 1), 0, VOCAB, dtype=jnp.int32)
    lengths = jax.random.randint(k_len, (B,), 1, S + 1, dtype=jnp.int32)
    lengths = lengths.at[0].set(S)   # at least one full-length sequence

    (h_n, c_n), memory_bank = rnn_encoder_forward(src, lengths, params)
    jax.block_until_ready((h_n, c_n, memory_bank))

    # Correctness check against the pure-JAX reference (all-f32 path).
    (h_ref, c_ref), mb_ref = _reference_forward(src, lengths, params)
    np.testing.assert_allclose(np.asarray(memory_bank), np.asarray(mb_ref),
                               rtol=1e-4, atol=1e-4)
    np.testing.assert_allclose(np.asarray(h_n), np.asarray(h_ref),
                               rtol=1e-4, atol=1e-4)
    np.testing.assert_allclose(np.asarray(c_n), np.asarray(c_ref),
                               rtol=1e-4, atol=1e-4)

    assert memory_bank.shape == (S, B, H)
    assert h_n.shape == (1, B, H) and c_n.shape == (1, B, H)
    print("KERNEL_OK")
</pallas_src>

<mosaic_0001>
module attributes {stable_mosaic.version = 11 : i64} {
  func.func @kernel(%arg0: i32, %arg1: i32, %arg2: memref<8x128xi32, #tpu.memory_space<vmem>>, %arg3: memref<16x8x16xf32, #tpu.memory_space<vmem>>, %arg4: memref<16x512xf32, #tpu.memory_space<vmem>>, %arg5: memref<128x512xf32, #tpu.memory_space<vmem>>, %arg6: memref<1x512xf32, #tpu.memory_space<vmem>>, %arg7: memref<16x8x128xf32, #tpu.memory_space<vmem>>, %arg8: memref<1x8x128xf32, #tpu.memory_space<vmem>>, %arg9: memref<1x8x128xf32, #tpu.memory_space<vmem>>, %arg10: memref<8x128xf32, #tpu.memory_space<vmem>>, %arg11: memref<8x128xf32, #tpu.memory_space<vmem>>, %arg12: memref<16x8x512xf32, #tpu.memory_space<vmem>>) attributes {dimension_semantics = [#tpu.dimension_semantics<parallel>, #tpu.dimension_semantics<arbitrary>], iteration_bounds = array<i64: 2, 3>, scalar_prefetch = 0 : i64, scratch_operands = 3 : i64, tpu.core_type = #tpu.core_type<tc>, window_params = [{transform_indices = @transform_0, window_bounds = array<i64: 8, 128>}, {transform_indices = @transform_1, window_bounds = array<i64: 16, 8, 16>}, {pipeline_mode = #tpu.pipeline_mode<synchronous>, transform_indices = @transform_2, window_bounds = array<i64: 16, 512>}, {pipeline_mode = #tpu.pipeline_mode<synchronous>, transform_indices = @transform_3, window_bounds = array<i64: 128, 512>}, {pipeline_mode = #tpu.pipeline_mode<synchronous>, transform_indices = @transform_4, window_bounds = array<i64: 1, 512>}, {transform_indices = @transform_5, window_bounds = array<i64: 16, 8, 128>}, {transform_indices = @transform_6, window_bounds = array<i64: 1, 8, 128>}, {transform_indices = @transform_7, window_bounds = array<i64: 1, 8, 128>}]} {
    %c0_i32 = arith.constant 0 : i32
    %0 = arith.cmpi eq, %arg1, %c0_i32 : i32
    %1 = arith.extui %0 : i1 to i32
    %c0_i32_0 = arith.constant 0 : i32
    %2 = arith.cmpi ne, %1, %c0_i32_0 : i32
    scf.if %2 {
      %cst_437 = arith.constant 0.000000e+00 : f32
      %917 = vector.broadcast %cst_437 : f32 to vector<8x128xf32>
      %c0_438 = arith.constant 0 : index
      %c0_439 = arith.constant 0 : index
      %918 = vector.load %arg10[%c0_438, %c0_439] : memref<8x128xf32, #tpu.memory_space<vmem>>, vector<8x128xf32>
      tpu.vector_store %arg10[%c0_438, %c0_439], %917 {strides = array<i32>} : memref<8x128xf32, #tpu.memory_space<vmem>>, vector<8x128xf32>,
      %cst_440 = arith.constant 0.000000e+00 : f32
      %919 = vector.broadcast %cst_440 : f32 to vector<8x128xf32>
      %c0_441 = arith.constant 0 : index
      %c0_442 = arith.constant 0 : index
      %920 = vector.load %arg11[%c0_441, %c0_442] : memref<8x128xf32, #tpu.memory_space<vmem>>, vector<8x128xf32>
      tpu.vector_store %arg11[%c0_441, %c0_442], %919 {strides = array<i32>} : memref<8x128xf32, #tpu.memory_space<vmem>>, vector<8x128xf32>,
    } else {
    }
    %c0 = arith.constant 0 : index
    %c0_1 = arith.constant 0 : index
    %c0_2 = arith.constant 0 : index
    %3 = vector.load %arg3[%c0, %c0_1, %c0_2] : memref<16x8x16xf32, #tpu.memory_space<vmem>>, vector<16x8x16xf32>
    %4 = vector.shape_cast %3 : vector<16x8x16xf32> to vector<128x16xf32>
    %c0_3 = arith.constant 0 : index
    %c0_4 = arith.constant 0 : index
    %5 = vector.load %arg4[%c0_3, %c0_4] : memref<16x512xf32, #tpu.memory_space<vmem>>, vector<16x512xf32>
    %cst = arith.constant dense<0.000000e+00> : vector<128x512xf32>
    %6 = tpu.matmul %4, %5, %cst {dimension_numbers = #tpu.dot_dimension_numbers<[1], [0], [0], [1], [0, 0, 1, 1], [], []>} : vector<128x16xf32>, vector<16x512xf32>, vector<128x512xf32> -> vector<128x512xf32>
    %c0_5 = arith.constant 0 : index
    %c0_6 = arith.constant 0 : index
    %7 = vector.load %arg6[%c0_5, %c0_6] : memref<1x512xf32, #tpu.memory_space<vmem>>, vector<1x512xf32>
    %8 = vector.broadcast %7 : vector<1x512xf32> to vector<128x512xf32>
    %9 = arith.addf %6, %8 : vector<128x512xf32>
    %10 = vector.shape_cast %9 : vector<128x512xf32> to vector<16x8x512xf32>
    %c0_7 = arith.constant 0 : index
    %c0_8 = arith.constant 0 : index
    %c0_9 = arith.constant 0 : index
    %11 = vector.load %arg12[%c0_7, %c0_8, %c0_9] : memref<16x8x512xf32, #tpu.memory_space<vmem>>, vector<16x8x512xf32>
    tpu.vector_store %arg12[%c0_7, %c0_8, %c0_9], %10 {strides = array<i32>} : memref<16x8x512xf32, #tpu.memory_space<vmem>>, vector<16x8x512xf32>,
    %c0_10 = arith.constant 0 : index
    %c0_11 = arith.constant 0 : index
    %12 = vector.load %arg2[%c0_10, %c0_11] : memref<8x128xi32, #tpu.memory_space<vmem>>, vector<8x128xi32>
    %c16_i32 = arith.constant 16 : i32
    %13 = arith.muli %arg1, %c16_i32 : i32
    %c0_12 = arith.constant 0 : index
    %c0_13 = arith.constant 0 : index
    %14 = vector.load %arg10[%c0_12, %c0_13] : memref<8x128xf32, #tpu.memory_space<vmem>>, vector<8x128xf32>
    %c0_14 = arith.constant 0 : index
    %c0_15 = arith.constant 0 : index
    %15 = vector.load %arg11[%c0_14, %c0_15] : memref<8x128xf32, #tpu.memory_space<vmem>>, vector<8x128xf32>
    %c0_i32_16 = arith.constant 0 : i32
    %16 = arith.index_cast %c0_i32_16 : i32 to index
    %c0_17 = arith.constant 0 : index
    %c0_18 = arith.constant 0 : index
    %17 = vector.load %arg12[%16, %c0_17, %c0_18] : memref<16x8x512xf32, #tpu.memory_space<vmem>>, vector<1x8x128xf32>
    %18 = vector.shape_cast %17 : vector<1x8x128xf32> to vector<8x128xf32>
    %c0_19 = arith.constant 0 : index
    %c0_20 = arith.constant 0 : index
    %19 = vector.load %arg5[%c0_19, %c0_20] : memref<128x512xf32, #tpu.memory_space<vmem>>, vector<128x128xf32>
    %cst_21 = arith.constant dense<0.000000e+00> : vector<8x128xf32>
    %20 = tpu.matmul %14, %19, %cst_21 {dimension_numbers = #tpu.dot_dimension_numbers<[1], [0], [0], [1], [0, 0, 1, 1], [], []>} : vector<8x128xf32>, vector<128x128xf32>, vector<8x128xf32> -> vector<8x128xf32>
    %21 = arith.addf %18, %20 : vector<8x128xf32>
    %22 = arith.negf %21 : vector<8x128xf32>
    %23 = math.exp %22 : vector<8x128xf32>
    %cst_22 = arith.constant 1.000000e+00 : f32
    %24 = vector.broadcast %cst_22 : f32 to vector<8x128xf32>
    %25 = arith.addf %24, %23 : vector<8x128xf32>
    %26 = arith.divf %24, %25 : vector<8x128xf32>
    %27 = arith.index_cast %c0_i32_16 : i32 to index
    %c0_23 = arith.constant 0 : index
    %c128 = arith.constant 128 : index
    %28 = vector.load %arg12[%27, %c0_23, %c128] : memref<16x8x512xf32, #tpu.memory_space<vmem>>, vector<1x8x128xf32>
    %29 = vector.shape_cast %28 : vector<1x8x128xf32> to vector<8x128xf32>
    %c0_24 = arith.constant 0 : index
    %c128_25 = arith.constant 128 : index
    %30 = vector.load %arg5[%c0_24, %c128_25] : memref<128x512xf32, #tpu.memory_space<vmem>>, vector<128x128xf32>
    %cst_26 = arith.constant dense<0.000000e+00> : vector<8x128xf32>
    %31 = tpu.matmul %14, %30, %cst_26 {dimension_numbers = #tpu.dot_dimension_numbers<[1], [0], [0], [1], [0, 0, 1, 1], [], []>} : vector<8x128xf32>, vector<128x128xf32>, vector<8x128xf32> -> vector<8x128xf32>
    %32 = arith.addf %29, %31 : vector<8x128xf32>
    %33 = arith.negf %32 : vector<8x128xf32>
    %34 = math.exp %33 : vector<8x128xf32>
    %cst_27 = arith.constant 1.000000e+00 : f32
    %35 = vector.broadcast %cst_27 : f32 to vector<8x128xf32>
    %36 = arith.addf %35, %34 : vector<8x128xf32>
    %37 = arith.divf %35, %36 : vector<8x128xf32>
    %38 = arith.index_cast %c0_i32_16 : i32 to index
    %c0_28 = arith.constant 0 : index
    %c256 = arith.constant 256 : index
    %39 = vector.load %arg12[%38, %c0_28, %c256] : memref<16x8x512xf32, #tpu.memory_space<vmem>>, vector<1x8x128xf32>
    %40 = vector.shape_cast %39 : vector<1x8x128xf32> to vector<8x128xf32>
    %c0_29 = arith.constant 0 : index
    %c256_30 = arith.constant 256 : index
    %41 = vector.load %arg5[%c0_29, %c256_30] : memref<128x512xf32, #tpu.memory_space<vmem>>, vector<128x128xf32>
    %cst_31 = arith.constant dense<0.000000e+00> : vector<8x128xf32>
    %42 = tpu.matmul %14, %41, %cst_31 {dimension_numbers = #tpu.dot_dimension_numbers<[1], [0], [0], [1], [0, 0, 1, 1], [], []>} : vector<8x128xf32>, vector<128x128xf32>, vector<8x128xf32> -> vector<8x128xf32>
    %43 = arith.addf %40, %42 : vector<8x128xf32>
    %44 = math.tanh %43 : vector<8x128xf32>
    %45 = arith.mulf %37, %15 : vector<8x128xf32>
    %46 = arith.mulf %26, %44 : vector<8x128xf32>
    %47 = arith.addf %45, %46 : vector<8x128xf32>
    %48 = arith.index_cast %c0_i32_16 : i32 to index
    %c0_32 = arith.constant 0 : index
    %c384 = arith.constant 384 : index
    %49 = vector.load %arg12[%48, %c0_32, %c384] : memref<16x8x512xf32, #tpu.memory_space<vmem>>, vector<1x8x128xf32>
    %50 = vector.shape_cast %49 : vector<1x8x128xf32> to vector<8x128xf32>
    %c0_33 = arith.constant 0 : index
    %c384_34 = arith.constant 384 : index
    %51 = vector.load %arg5[%c0_33, %c384_34] : memref<128x512xf32, #tpu.memory_space<vmem>>, vector<128x128xf32>
    %cst_35 = arith.constant dense<0.000000e+00> : vector<8x128xf32>
    %52 = tpu.matmul %14, %51, %cst_35 {dimension_numbers = #tpu.dot_dimension_numbers<[1], [0], [0], [1], [0, 0, 1, 1], [], []>} : vector<8x128xf32>, vector<128x128xf32>, vector<8x128xf32> -> vector<8x128xf32>
    %53 = arith.addf %50, %52 : vector<8x128xf32>
    %54 = arith.negf %53 : vector<8x128xf32>
    %55 = math.exp %54 : vector<8x128xf32>
    %cst_36 = arith.constant 1.000000e+00 : f32
    %56 = vector.broadcast %cst_36 : f32 to vector<8x128xf32>
    %57 = arith.addf %56, %55 : vector<8x128xf32>
    %58 = arith.divf %56, %57 : vector<8x128xf32>
    %59 = math.tanh %47 : vector<8x128xf32>
    %60 = arith.mulf %58, %59 : vector<8x128xf32>
    %61 = arith.addi %13, %c0_i32_16 : i32
    %62 = vector.broadcast %61 : i32 to vector<8x128xi32>
    %63 = arith.cmpi slt, %62, %12 : vector<8x128xi32>
    %cst_37 = arith.constant 0.000000e+00 : f32
    %64 = vector.broadcast %cst_37 : f32 to vector<8x128xf32>
    %65 = arith.select %63, %60, %64 : vector<8x128xi1>, vector<8x128xf32>
    %66 = arith.index_cast %c0_i32_16 : i32 to index
    %c0_38 = arith.constant 0 : index
    %c0_39 = arith.constant 0 : index
    %67 = vector.load %arg7[%66, %c0_38, %c0_39] : memref<16x8x128xf32, #tpu.memory_space<vmem>>, vector<1x8x128xf32>
    %68 = vector.shape_cast %67 : vector<1x8x128xf32> to vector<8x128xf32>
    %69 = vector.shape_cast %65 : vector<8x128xf32> to vector<1x8x128xf32>
    tpu.vector_store %arg7[%66, %c0_38, %c0_39], %69 {strides = array<i32>} : memref<16x8x128xf32, #tpu.memory_space<vmem>>, vector<1x8x128xf32>,
    %70 = arith.select %63, %60, %14 : vector<8x128xi1>, vector<8x128xf32>
    %71 = arith.select %63, %47, %15 : vector<8x128xi1>, vector<8x128xf32>
    %c1_i32 = arith.constant 1 : i32
    %72 = arith.index_cast %c1_i32 : i32 to index
    %c0_40 = arith.constant 0 : index
    %c0_41 = arith.constant 0 : index
    %73 = vector.load %arg12[%72, %c0_40, %c0_41] : memref<16x8x512xf32, #tpu.memory_space<vmem>>, vector<1x8x128xf32>
    %74 = vector.shape_cast %73 : vector<1x8x128xf32> to vector<8x128xf32>
    %c0_42 = arith.constant 0 : index
    %c0_43 = arith.constant 0 : index
    %75 = vector.load %arg5[%c0_42, %c0_43] : memref<128x512xf32, #tpu.memory_space<vmem>>, vector<128x128xf32>
    %cst_44 = arith.constant dense<0.000000e+00> : vector<8x128xf32>
    %76 = tpu.matmul %70, %75, %cst_44 {dimension_numbers = #tpu.dot_dimension_numbers<[1], [0], [0], [1], [0, 0, 1, 1], [], []>} : vector<8x128xf32>, vector<128x128xf32>, vector<8x128xf32> -> vector<8x128xf32>
    %77 = arith.addf %74, %76 : vector<8x128xf32>
    %78 = arith.negf %77 : vector<8x128xf32>
    %79 = math.exp %78 : vector<8x128xf32>
    %cst_45 = arith.constant 1.000000e+00 : f32
    %80 = vector.broadcast %cst_45 : f32 to vector<8x128xf32>
    %81 = arith.addf %80, %79 : vector<8x128xf32>
    %82 = arith.divf %80, %81 : vector<8x128xf32>
    %83 = arith.index_cast %c1_i32 : i32 to index
    %c0_46 = arith.constant 0 : index
    %c128_47 = arith.constant 128 : index
    %84 = vector.load %arg12[%83, %c0_46, %c128_47] : memref<16x8x512xf32, #tpu.memory_space<vmem>>, vector<1x8x128xf32>
    %85 = vector.shape_cast %84 : vector<1x8x128xf32> to vector<8x128xf32>
    %c0_48 = arith.constant 0 : index
    %c128_49 = arith.constant 128 : index
    %86 = vector.load %arg5[%c0_48, %c128_49] : memref<128x512xf32, #tpu.memory_space<vmem>>, vector<128x128xf32>
    %cst_50 = arith.constant dense<0.000000e+00> : vector<8x128xf32>
    %87 = tpu.matmul %70, %86, %cst_50 {dimension_numbers = #tpu.dot_dimension_numbers<[1], [0], [0], [1], [0, 0, 1, 1], [], []>} : vector<8x128xf32>, vector<128x128xf32>, vector<8x128xf32> -> vector<8x128xf32>
    %88 = arith.addf %85, %87 : vector<8x128xf32>
    %89 = arith.negf %88 : vector<8x128xf32>
    %90 = math.exp %89 : vector<8x128xf32>
    %cst_51 = arith.constant 1.000000e+00 : f32
    %91 = vector.broadcast %cst_51 : f32 to vector<8x128xf32>
    %92 = arith.addf %91, %90 : vector<8x128xf32>
    %93 = arith.divf %91, %92 : vector<8x128xf32>
    %94 = arith.index_cast %c1_i32 : i32 to index
    %c0_52 = arith.constant 0 : index
    %c256_53 = arith.constant 256 : index
    %95 = vector.load %arg12[%94, %c0_52, %c256_53] : memref<16x8x512xf32, #tpu.memory_space<vmem>>, vector<1x8x128xf32>
    %96 = vector.shape_cast %95 : vector<1x8x128xf32> to vector<8x128xf32>
    %c0_54 = arith.constant 0 : index
    %c256_55 = arith.constant 256 : index
    %97 = vector.load %arg5[%c0_54, %c256_55] : memref<128x512xf32, #tpu.memory_space<vmem>>, vector<128x128xf32>
    %cst_56 = arith.constant dense<0.000000e+00> : vector<8x128xf32>
    %98 = tpu.matmul %70, %97, %cst_56 {dimension_numbers = #tpu.dot_dimension_numbers<[1], [0], [0], [1], [0, 0, 1, 1], [], []>} : vector<8x128xf32>, vector<128x128xf32>, vector<8x128xf32> -> vector<8x128xf32>
    %99 = arith.addf %96, %98 : vector<8x128xf32>
    %100 = math.tanh %99 : vector<8x128xf32>
    %101 = arith.mulf %93, %71 : vector<8x128xf32>
    %102 = arith.mulf %82, %100 : vector<8x128xf32>
    %103 = arith.addf %101, %102 : vector<8x128xf32>
    %104 = arith.index_cast %c1_i32 : i32 to index
    %c0_57 = arith.constant 0 : index
    %c384_58 = arith.constant 384 : index
    %105 = vector.load %arg12[%104, %c0_57, %c384_58] : memref<16x8x512xf32, #tpu.memory_space<vmem>>, vector<1x8x128xf32>
    %106 = vector.shape_cast %105 : vector<1x8x128xf32> to vector<8x128xf32>
    %c0_59 = arith.constant 0 : index
    %c384_60 = arith.constant 384 : index
    %107 = vector.load %arg5[%c0_59, %c384_60] : memref<128x512xf32, #tpu.memory_space<vmem>>, vector<128x128xf32>
    %cst_61 = arith.constant dense<0.000000e+00> : vector<8x128xf32>
    %108 = tpu.matmul %70, %107, %cst_61 {dimension_numbers = #tpu.dot_dimension_numbers<[1], [0], [0], [1], [0, 0, 1, 1], [], []>} : vector<8x128xf32>, vector<128x128xf32>, vector<8x128xf32> -> vector<8x128xf32>
    %109 = arith.addf %106, %108 : vector<8x128xf32>
    %110 = arith.negf %109 : vector<8x128xf32>
    %111 = math.exp %110 : vector<8x128xf32>
    %cst_62 = arith.constant 1.000000e+00 : f32
    %112 = vector.broadcast %cst_62 : f32 to vector<8x128xf32>
    %113 = arith.addf %112, %111 : vector<8x128xf32>
    %114 = arith.divf %112, %113 : vector<8x128xf32>
    %115 = math.tanh %103 : vector<8x128xf32>
    %116 = arith.mulf %114, %115 : vector<8x128xf32>
    %117 = arith.addi %13, %c1_i32 : i32
    %118 = vector.broadcast %117 : i32 to vector<8x128xi32>
    %119 = arith.cmpi slt, %118, %12 : vector<8x128xi32>
    %cst_63 = arith.constant 0.000000e+00 : f32
    %120 = vector.broadcast %cst_63 : f32 to vector<8x128xf32>
    %121 = arith.select %119, %116, %120 : vector<8x128xi1>, vector<8x128xf32>
    %122 = arith.index_cast %c1_i32 : i32 to index
    %c0_64 = arith.constant 0 : index
    %c0_65 = arith.constant 0 : index
    %123 = vector.load %arg7[%122, %c0_64, %c0_65] : memref<16x8x128xf32, #tpu.memory_space<vmem>>, vector<1x8x128xf32>
    %124 = vector.shape_cast %123 : vector<1x8x128xf32> to vector<8x128xf32>
    %125 = vector.shape_cast %121 : vector<8x128xf32> to vector<1x8x128xf32>
    tpu.vector_store %arg7[%122, %c0_64, %c0_65], %125 {strides = array<i32>} : memref<16x8x128xf32, #tpu.memory_space<vmem>>, vector<1x8x128xf32>,
    %126 = arith.select %119, %116, %70 : vector<8x128xi1>, vector<8x128xf32>
    %127 = arith.select %119, %103, %71 : vector<8x128xi1>, vector<8x128xf32>
    %c2_i32 = arith.constant 2 : i32
    %128 = arith.index_cast %c2_i32 : i32 to index
    %c0_66 = arith.constant 0 : index
    %c0_67 = arith.constant 0 : index
    %129 = vector.load %arg12[%128, %c0_66, %c0_67] : memref<16x8x512xf32, #tpu.memory_space<vmem>>, vector<1x8x128xf32>
    %130 = vector.shape_cast %129 : vector<1x8x128xf32> to vector<8x128xf32>
    %c0_68 = arith.constant 0 : index
    %c0_69 = arith.constant 0 : index
    %131 = vector.load %arg5[%c0_68, %c0_69] : memref<128x512xf32, #tpu.memory_space<vmem>>, vector<128x128xf32>
    %cst_70 = arith.constant dense<0.000000e+00> : vector<8x128xf32>
    %132 = tpu.matmul %126, %131, %cst_70 {dimension_numbers = #tpu.dot_dimension_numbers<[1], [0], [0], [1], [0, 0, 1, 1], [], []>} : vector<8x128xf32>, vector<128x128xf32>, vector<8x128xf32> -> vector<8x128xf32>
    %133 = arith.addf %130, %132 : vector<8x128xf32>
    %134 = arith.negf %133 : vector<8x128xf32>
    %135 = math.exp %134 : vector<8x128xf32>
    %cst_71 = arith.constant 1.000000e+00 : f32
    %136 = vector.broadcast %cst_71 : f32 to vector<8x128xf32>
    %137 = arith.addf %136, %135 : vector<8x128xf32>
    %138 = arith.divf %136, %137 : vector<8x128xf32>
    %139 = arith.index_cast %c2_i32 : i32 to index
    %c0_72 = arith.constant 0 : index
    %c128_73 = arith.constant 128 : index
    %140 = vector.load %arg12[%139, %c0_72, %c128_73] : memref<16x8x512xf32, #tpu.memory_space<vmem>>, vector<1x8x128xf32>
    %141 = vector.shape_cast %140 : vector<1x8x128xf32> to vector<8x128xf32>
    %c0_74 = arith.constant 0 : index
    %c128_75 = arith.constant 128 : index
    %142 = vector.load %arg5[%c0_74, %c128_75] : memref<128x512xf32, #tpu.memory_space<vmem>>, vector<128x128xf32>
    %cst_76 = arith.constant dense<0.000000e+00> : vector<8x128xf32>
    %143 = tpu.matmul %126, %142, %cst_76 {dimension_numbers = #tpu.dot_dimension_numbers<[1], [0], [0], [1], [0, 0, 1, 1], [], []>} : vector<8x128xf32>, vector<128x128xf32>, vector<8x128xf32> -> vector<8x128xf32>
    %144 = arith.addf %141, %143 : vector<8x128xf32>
    %145 = arith.negf %144 : vector<8x128xf32>
    %146 = math.exp %145 : vector<8x128xf32>
    %cst_77 = arith.constant 1.000000e+00 : f32
    %147 = vector.broadcast %cst_77 : f32 to vector<8x128xf32>
    %148 = arith.addf %147, %146 : vector<8x128xf32>
    %149 = arith.divf %147, %148 : vector<8x128xf32>
    %150 = arith.index_cast %c2_i32 : i32 to index
    %c0_78 = arith.constant 0 : index
    %c256_79 = arith.constant 256 : index
    %151 = vector.load %arg12[%150, %c0_78, %c256_79] : memref<16x8x512xf32, #tpu.memory_space<vmem>>, vector<1x8x128xf32>
    %152 = vector.shape_cast %151 : vector<1x8x128xf32> to vector<8x128xf32>
    %c0_80 = arith.constant 0 : index
    %c256_81 = arith.constant 256 : index
    %153 = vector.load %arg5[%c0_80, %c256_81] : memref<128x512xf32, #tpu.memory_space<vmem>>, vector<128x128xf32>
    %cst_82 = arith.constant dense<0.000000e+00> : vector<8x128xf32>
    %154 = tpu.matmul %126, %153, %cst_82 {dimension_numbers = #tpu.dot_dimension_numbers<[1], [0], [0], [1], [0, 0, 1, 1], [], []>} : vector<8x128xf32>, vector<128x128xf32>, vector<8x128xf32> -> vector<8x128xf32>
    %155 = arith.addf %152, %154 : vector<8x128xf32>
    %156 = math.tanh %155 : vector<8x128xf32>
    %157 = arith.mulf %149, %127 : vector<8x128xf32>
    %158 = arith.mulf %138, %156 : vector<8x128xf32>
    %159 = arith.addf %157, %158 : vector<8x128xf32>
    %160 = arith.index_cast %c2_i32 : i32 to index
    %c0_83 = arith.constant 0 : index
    %c384_84 = arith.constant 384 : index
    %161 = vector.load %arg12[%160, %c0_83, %c384_84] : memref<16x8x512xf32, #tpu.memory_space<vmem>>, vector<1x8x128xf32>
    %162 = vector.shape_cast %161 : vector<1x8x128xf32> to vector<8x128xf32>
    %c0_85 = arith.constant 0 : index
    %c384_86 = arith.constant 384 : index
    %163 = vector.load %arg5[%c0_85, %c384_86] : memref<128x512xf32, #tpu.memory_space<vmem>>, vector<128x128xf32>
    %cst_87 = arith.constant dense<0.000000e+00> : vector<8x128xf32>
    %164 = tpu.matmul %126, %163, %cst_87 {dimension_numbers = #tpu.dot_dimension_numbers<[1], [0], [0], [1], [0, 0, 1, 1], [], []>} : vector<8x128xf32>, vector<128x128xf32>, vector<8x128xf32> -> vector<8x128xf32>
    %165 = arith.addf %162, %164 : vector<8x128xf32>
    %166 = arith.negf %165 : vector<8x128xf32>
    %167 = math.exp %166 : vector<8x128xf32>
    %cst_88 = arith.constant 1.000000e+00 : f32
    %168 = vector.broadcast %cst_88 : f32 to vector<8x128xf32>
    %169 = arith.addf %168, %167 : vector<8x128xf32>
    %170 = arith.divf %168, %169 : vector<8x128xf32>
    %171 = math.tanh %159 : vector<8x128xf32>
    %172 = arith.mulf %170, %171 : vector<8x128xf32>
    %173 = arith.addi %13, %c2_i32 : i32
    %174 = vector.broadcast %173 : i32 to vector<8x128xi32>
    %175 = arith.cmpi slt, %174, %12 : vector<8x128xi32>
    %cst_89 = arith.constant 0.000000e+00 : f32
    %176 = vector.broadcast %cst_89 : f32 to vector<8x128xf32>
    %177 = arith.select %175, %172, %176 : vector<8x128xi1>, vector<8x128xf32>
    %178 = arith.index_cast %c2_i32 : i32 to index
    %c0_90 = arith.constant 0 : index
    %c0_91 = arith.constant 0 : index
    %179 = vector.load %arg7[%178, %c0_90, %c0_91] : memref<16x8x128xf32, #tpu.memory_space<vmem>>, vector<1x8x128xf32>
    %180 = vector.shape_cast %179 : vector<1x8x128xf32> to vector<8x128xf32>
    %181 = vector.shape_cast %177 : vector<8x128xf32> to vector<1x8x128xf32>
    tpu.vector_store %arg7[%178, %c0_90, %c0_91], %181 {strides = array<i32>} : memref<16x8x128xf32, #tpu.memory_space<vmem>>, vector<1x8x128xf32>,
    %182 = arith.select %175, %172, %126 : vector<8x128xi1>, vector<8x128xf32>
    %183 = arith.select %175, %159, %127 : vector<8x128xi1>, vector<8x128xf32>
    %c3_i32 = arith.constant 3 : i32
    %184 = arith.index_cast %c3_i32 : i32 to index
    %c0_92 = arith.constant 0 : index
    %c0_93 = arith.constant 0 : index
    %185 = vector.load %arg12[%184, %c0_92, %c0_93] : memref<16x8x512xf32, #tpu.memory_space<vmem>>, vector<1x8x128xf32>
    %186 = vector.shape_cast %185 : vector<1x8x128xf32> to vector<8x128xf32>
    %c0_94 = arith.constant 0 : index
    %c0_95 = arith.constant 0 : index
    %187 = vector.load %arg5[%c0_94, %c0_95] : memref<128x512xf32, #tpu.memory_space<vmem>>, vector<128x128xf32>
    %cst_96 = arith.constant dense<0.000000e+00> : vector<8x128xf32>
    %188 = tpu.matmul %182, %187, %cst_96 {dimension_numbers = #tpu.dot_dimension_numbers<[1], [0], [0], [1], [0, 0, 1, 1], [], []>} : vector<8x128xf32>, vector<128x128xf32>, vector<8x128xf32> -> vector<8x128xf32>
    %189 = arith.addf %186, %188 : vector<8x128xf32>
    %190 = arith.negf %189 : vector<8x128xf32>
    %191 = math.exp %190 : vector<8x128xf32>
    %cst_97 = arith.constant 1.000000e+00 : f32
    %192 = vector.broadcast %cst_97 : f32 to vector<8x128xf32>
    %193 = arith.addf %192, %191 : vector<8x128xf32>
    %194 = arith.divf %192, %193 : vector<8x128xf32>
    %195 = arith.index_cast %c3_i32 : i32 to index
    %c0_98 = arith.constant 0 : index
    %c128_99 = arith.constant 128 : index
    %196 = vector.load %arg12[%195, %c0_98, %c128_99] : memref<16x8x512xf32, #tpu.memory_space<vmem>>, vector<1x8x128xf32>
    %197 = vector.shape_cast %196 : vector<1x8x128xf32> to vector<8x128xf32>
    %c0_100 = arith.constant 0 : index
    %c128_101 = arith.constant 128 : index
    %198 = vector.load %arg5[%c0_100, %c128_101] : memref<128x512xf32, #tpu.memory_space<vmem>>, vector<128x128xf32>
    %cst_102 = arith.constant dense<0.000000e+00> : vector<8x128xf32>
    %199 = tpu.matmul %182, %198, %cst_102 {dimension_numbers = #tpu.dot_dimension_numbers<[1], [0], [0], [1], [0, 0, 1, 1], [], []>} : vector<8x128xf32>, vector<128x128xf32>, vector<8x128xf32> -> vector<8x128xf32>
    %200 = arith.addf %197, %199 : vector<8x128xf32>
    %201 = arith.negf %200 : vector<8x128xf32>
    %202 = math.exp %201 : vector<8x128xf32>
    %cst_103 = arith.constant 1.000000e+00 : f32
    %203 = vector.broadcast %cst_103 : f32 to vector<8x128xf32>
    %204 = arith.addf %203, %202 : vector<8x128xf32>
    %205 = arith.divf %203, %204 : vector<8x128xf32>
    %206 = arith.index_cast %c3_i32 : i32 to index
    %c0_104 = arith.constant 0 : index
    %c256_105 = arith.constant 256 : index
    %207 = vector.load %arg12[%206, %c0_104, %c256_105] : memref<16x8x512xf32, #tpu.memory_space<vmem>>, vector<1x8x128xf32>
    %208 = vector.shape_cast %207 : vector<1x8x128xf32> to vector<8x128xf32>
    %c0_106 = arith.constant 0 : index
    %c256_107 = arith.constant 256 : index
    %209 = vector.load %arg5[%c0_106, %c256_107] : memref<128x512xf32, #tpu.memory_space<vmem>>, vector<128x128xf32>
    %cst_108 = arith.constant dense<0.000000e+00> : vector<8x128xf32>
    %210 = tpu.matmul %182, %209, %cst_108 {dimension_numbers = #tpu.dot_dimension_numbers<[1], [0], [0], [1], [0, 0, 1, 1], [], []>} : vector<8x128xf32>, vector<128x128xf32>, vector<8x128xf32> -> vector<8x128xf32>
    %211 = arith.addf %208, %210 : vector<8x128xf32>
    %212 = math.tanh %211 : vector<8x128xf32>
    %213 = arith.mulf %205, %183 : vector<8x128xf32>
    %214 = arith.mulf %194, %212 : vector<8x128xf32>
    %215 = arith.addf %213, %214 : vector<8x128xf32>
    %216 = arith.index_cast %c3_i32 : i32 to index
    %c0_109 = arith.constant 0 : index
    %c384_110 = arith.constant 384 : index
    %217 = vector.load %arg12[%216, %c0_109, %c384_110] : memref<16x8x512xf32, #tpu.memory_space<vmem>>, vector<1x8x128xf32>
    %218 = vector.shape_cast %217 : vector<1x8x128xf32> to vector<8x128xf32>
    %c0_111 = arith.constant 0 : index
    %c384_112 = arith.constant 384 : index
    %219 = vector.load %arg5[%c0_111, %c384_112] : memref<128x512xf32, #tpu.memory_space<vmem>>, vector<128x128xf32>
    %cst_113 = arith.constant dense<0.000000e+00> : vector<8x128xf32>
    %220 = tpu.matmul %182, %219, %cst_113 {dimension_numbers = #tpu.dot_dimension_numbers<[1], [0], [0], [1], [0, 0, 1, 1], [], []>} : vector<8x128xf32>, vector<128x128xf32>, vector<8x128xf32> -> vector<8x128xf32>
    %221 = arith.addf %218, %220 : vector<8x128xf32>
    %222 = arith.negf %221 : vector<8x128xf32>
    %223 = math.exp %222 : vector<8x128xf32>
    %cst_114 = arith.constant 1.000000e+00 : f32
    %224 = vector.broadcast %cst_114 : f32 to vector<8x128xf32>
    %225 = arith.addf %224, %223 : vector<8x128xf32>
    %226 = arith.divf %224, %225 : vector<8x128xf32>
    %227 = math.tanh %215 : vector<8x128xf32>
    %228 = arith.mulf %226, %227 : vector<8x128xf32>
    %229 = arith.addi %13, %c3_i32 : i32
    %230 = vector.broadcast %229 : i32 to vector<8x128xi32>
    %231 = arith.cmpi slt, %230, %12 : vector<8x128xi32>
    %cst_115 = arith.constant 0.000000e+00 : f32
    %232 = vector.broadcast %cst_115 : f32 to vector<8x128xf32>
    %233 = arith.select %231, %228, %232 : vector<8x128xi1>, vector<8x128xf32>
    %234 = arith.index_cast %c3_i32 : i32 to index
    %c0_116 = arith.constant 0 : index
    %c0_117 = arith.constant 0 : index
    %235 = vector.load %arg7[%234, %c0_116, %c0_117] : memref<16x8x128xf32, #tpu.memory_space<vmem>>, vector<1x8x128xf32>
    %236 = vector.shape_cast %235 : vector<1x8x128xf32> to vector<8x128xf32>
    %237 = vector.shape_cast %233 : vector<8x128xf32> to vector<1x8x128xf32>
    tpu.vector_store %arg7[%234, %c0_116, %c0_117], %237 {strides = array<i32>} : memref<16x8x128xf32, #tpu.memory_space<vmem>>, vector<1x8x128xf32>,
    %238 = arith.select %231, %228, %182 : vector<8x128xi1>, vector<8x128xf32>
    %239 = arith.select %231, %215, %183 : vector<8x128xi1>, vector<8x128xf32>
    %c4_i32 = arith.constant 4 : i32
    %240 = arith.index_cast %c4_i32 : i32 to index
    %c0_118 = arith.constant 0 : index
    %c0_119 = arith.constant 0 : index
    %241 = vector.load %arg12[%240, %c0_118, %c0_119] : memref<16x8x512xf32, #tpu.memory_space<vmem>>, vector<1x8x128xf32>
    %242 = vector.shape_cast %241 : vector<1x8x128xf32> to vector<8x128xf32>
    %c0_120 = arith.constant 0 : index
    %c0_121 = arith.constant 0 : index
    %243 = vector.load %arg5[%c0_120, %c0_121] : memref<128x512xf32, #tpu.memory_space<vmem>>, vector<128x128xf32>
    %cst_122 = arith.constant dense<0.000000e+00> : vector<8x128xf32>
    %244 = tpu.matmul %238, %243, %cst_122 {dimension_numbers = #tpu.dot_dimension_numbers<[1], [0], [0], [1], [0, 0, 1, 1], [], []>} : vector<8x128xf32>, vector<128x128xf32>, vector<8x128xf32> -> vector<8x128xf32>
    %245 = arith.addf %242, %244 : vector<8x128xf32>
    %246 = arith.negf %245 : vector<8x128xf32>
    %247 = math.exp %246 : vector<8x128xf32>
    %cst_123 = arith.constant 1.000000e+00 : f32
    %248 = vector.broadcast %cst_123 : f32 to vector<8x128xf32>
    %249 = arith.addf %248, %247 : vector<8x128xf32>
    %250 = arith.divf %248, %249 : vector<8x128xf32>
    %251 = arith.index_cast %c4_i32 : i32 to index
    %c0_124 = arith.constant 0 : index
    %c128_125 = arith.constant 128 : index
    %252 = vector.load %arg12[%251, %c0_124, %c128_125] : memref<16x8x512xf32, #tpu.memory_space<vmem>>, vector<1x8x128xf32>
    %253 = vector.shape_cast %252 : vector<1x8x128xf32> to vector<8x128xf32>
    %c0_126 = arith.constant 0 : index
    %c128_127 = arith.constant 128 : index
    %254 = vector.load %arg5[%c0_126, %c128_127] : memref<128x512xf32, #tpu.memory_space<vmem>>, vector<128x128xf32>
    %cst_128 = arith.constant dense<0.000000e+00> : vector<8x128xf32>
    %255 = tpu.matmul %238, %254, %cst_128 {dimension_numbers = #tpu.dot_dimension_numbers<[1], [0], [0], [1], [0, 0, 1, 1], [], []>} : vector<8x128xf32>, vector<128x128xf32>, vector<8x128xf32> -> vector<8x128xf32>
    %256 = arith.addf %253, %255 : vector<8x128xf32>
    %257 = arith.negf %256 : vector<8x128xf32>
    %258 = math.exp %257 : vector<8x128xf32>
    %cst_129 = arith.constant 1.000000e+00 : f32
    %259 = vector.broadcast %cst_129 : f32 to vector<8x128xf32>
    %260 = arith.addf %259, %258 : vector<8x128xf32>
    %261 = arith.divf %259, %260 : vector<8x128xf32>
    %262 = arith.index_cast %c4_i32 : i32 to index
    %c0_130 = arith.constant 0 : index
    %c256_131 = arith.constant 256 : index
    %263 = vector.load %arg12[%262, %c0_130, %c256_131] : memref<16x8x512xf32, #tpu.memory_space<vmem>>, vector<1x8x128xf32>
    %264 = vector.shape_cast %263 : vector<1x8x128xf32> to vector<8x128xf32>
    %c0_132 = arith.constant 0 : index
    %c256_133 = arith.constant 256 : index
    %265 = vector.load %arg5[%c0_132, %c256_133] : memref<128x512xf32, #tpu.memory_space<vmem>>, vector<128x128xf32>
    %cst_134 = arith.constant dense<0.000000e+00> : vector<8x128xf32>
    %266 = tpu.matmul %238, %265, %cst_134 {dimension_numbers = #tpu.dot_dimension_numbers<[1], [0], [0], [1], [0, 0, 1, 1], [], []>} : vector<8x128xf32>, vector<128x128xf32>, vector<8x128xf32> -> vector<8x128xf32>
    %267 = arith.addf %264, %266 : vector<8x128xf32>
    %268 = math.tanh %267 : vector<8x128xf32>
    %269 = arith.mulf %261, %239 : vector<8x128xf32>
    %270 = arith.mulf %250, %268 : vector<8x128xf32>
    %271 = arith.addf %269, %270 : vector<8x128xf32>
    %272 = arith.index_cast %c4_i32 : i32 to index
    %c0_135 = arith.constant 0 : index
    %c384_136 = arith.constant 384 : index
    %273 = vector.load %arg12[%272, %c0_135, %c384_136] : memref<16x8x512xf32, #tpu.memory_space<vmem>>, vector<1x8x128xf32>
    %274 = vector.shape_cast %273 : vector<1x8x128xf32> to vector<8x128xf32>
    %c0_137 = arith.constant 0 : index
    %c384_138 = arith.constant 384 : index
    %275 = vector.load %arg5[%c0_137, %c384_138] : memref<128x512xf32, #tpu.memory_space<vmem>>, vector<128x128xf32>
    %cst_139 = arith.constant dense<0.000000e+00> : vector<8x128xf32>
    %276 = tpu.matmul %238, %275, %cst_139 {dimension_numbers = #tpu.dot_dimension_numbers<[1], [0], [0], [1], [0, 0, 1, 1], [], []>} : vector<8x128xf32>, vector<128x128xf32>, vector<8x128xf32> -> vector<8x128xf32>
    %277 = arith.addf %274, %276 : vector<8x128xf32>
    %278 = arith.negf %277 : vector<8x128xf32>
    %279 = math.exp %278 : vector<8x128xf32>
    %cst_140 = arith.constant 1.000000e+00 : f32
    %280 = vector.broadcast %cst_140 : f32 to vector<8x128xf32>
    %281 = arith.addf %280, %279 : vector<8x128xf32>
    %282 = arith.divf %280, %281 : vector<8x128xf32>
    %283 = math.tanh %271 : vector<8x128xf32>
    %284 = arith.mulf %282, %283 : vector<8x128xf32>
    %285 = arith.addi %13, %c4_i32 : i32
    %286 = vector.broadcast %285 : i32 to vector<8x128xi32>
    %287 = arith.cmpi slt, %286, %12 : vector<8x128xi32>
    %cst_141 = arith.constant 0.000000e+00 : f32
    %288 = vector.broadcast %cst_141 : f32 to vector<8x128xf32>
    %289 = arith.select %287, %284, %288 : vector<8x128xi1>, vector<8x128xf32>
    %290 = arith.index_cast %c4_i32 : i32 to index
    %c0_142 = arith.constant 0 : index
    %c0_143 = arith.constant 0 : index
    %291 = vector.load %arg7[%290, %c0_142, %c0_143] : memref<16x8x128xf32, #tpu.memory_space<vmem>>, vector<1x8x128xf32>
    %292 = vector.shape_cast %291 : vector<1x8x128xf32> to vector<8x128xf32>
    %293 = vector.shape_cast %289 : vector<8x128xf32> to vector<1x8x128xf32>
    tpu.vector_store %arg7[%290, %c0_142, %c0_143], %293 {strides = array<i32>} : memref<16x8x128xf32, #tpu.memory_space<vmem>>, vector<1x8x128xf32>,
    %294 = arith.select %287, %284, %238 : vector<8x128xi1>, vector<8x128xf32>
    %295 = arith.select %287, %271, %239 : vector<8x128xi1>, vector<8x128xf32>
    %c5_i32 = arith.constant 5 : i32
    %296 = arith.index_cast %c5_i32 : i32 to index
    %c0_144 = arith.constant 0 : index
    %c0_145 = arith.constant 0 : index
    %297 = vector.load %arg12[%296, %c0_144, %c0_145] : memref<16x8x512xf32, #tpu.memory_space<vmem>>, vector<1x8x128xf32>
    %298 = vector.shape_cast %297 : vector<1x8x128xf32> to vector<8x128xf32>
    %c0_146 = arith.constant 0 : index
    %c0_147 = arith.constant 0 : index
    %299 = vector.load %arg5[%c0_146, %c0_147] : memref<128x512xf32, #tpu.memory_space<vmem>>, vector<128x128xf32>
    %cst_148 = arith.constant dense<0.000000e+00> : vector<8x128xf32>
    %300 = tpu.matmul %294, %299, %cst_148 {dimension_numbers = #tpu.dot_dimension_numbers<[1], [0], [0], [1], [0, 0, 1, 1], [], []>} : vector<8x128xf32>, vector<128x128xf32>, vector<8x128xf32> -> vector<8x128xf32>
    %301 = arith.addf %298, %300 : vector<8x128xf32>
    %302 = arith.negf %301 : vector<8x128xf32>
    %303 = math.exp %302 : vector<8x128xf32>
    %cst_149 = arith.constant 1.000000e+00 : f32
    %304 = vector.broadcast %cst_149 : f32 to vector<8x128xf32>
    %305 = arith.addf %304, %303 : vector<8x128xf32>
    %306 = arith.divf %304, %305 : vector<8x128xf32>
    %307 = arith.index_cast %c5_i32 : i32 to index
    %c0_150 = arith.constant 0 : index
    %c128_151 = arith.constant 128 : index
    %308 = vector.load %arg12[%307, %c0_150, %c128_151] : memref<16x8x512xf32, #tpu.memory_space<vmem>>, vector<1x8x128xf32>
    %309 = vector.shape_cast %308 : vector<1x8x128xf32> to vector<8x128xf32>
    %c0_152 = arith.constant 0 : index
    %c128_153 = arith.constant 128 : index
    %310 = vector.load %arg5[%c0_152, %c128_153] : memref<128x512xf32, #tpu.memory_space<vmem>>, vector<128x128xf32>
    %cst_154 = arith.constant dense<0.000000e+00> : vector<8x128xf32>
    %311 = tpu.matmul %294, %310, %cst_154 {dimension_numbers = #tpu.dot_dimension_numbers<[1], [0], [0], [1], [0, 0, 1, 1], [], []>} : vector<8x128xf32>, vector<128x128xf32>, vector<8x128xf32> -> vector<8x128xf32>
    %312 = arith.addf %309, %311 : vector<8x128xf32>
    %313 = arith.negf %312 : vector<8x128xf32>
    %314 = math.exp %313 : vector<8x128xf32>
    %cst_155 = arith.constant 1.000000e+00 : f32
    %315 = vector.broadcast %cst_155 : f32 to vector<8x128xf32>
    %316 = arith.addf %315, %314 : vector<8x128xf32>
    %317 = arith.divf %315, %316 : vector<8x128xf32>
    %318 = arith.index_cast %c5_i32 : i32 to index
    %c0_156 = arith.constant 0 : index
    %c256_157 = arith.constant 256 : index
    %319 = vector.load %arg12[%318, %c0_156, %c256_157] : memref<16x8x512xf32, #tpu.memory_space<vmem>>, vector<1x8x128xf32>
    %320 = vector.shape_cast %319 : vector<1x8x128xf32> to vector<8x128xf32>
    %c0_158 = arith.constant 0 : index
    %c256_159 = arith.constant 256 : index
    %321 = vector.load %arg5[%c0_158, %c256_159] : memref<128x512xf32, #tpu.memory_space<vmem>>, vector<128x128xf32>
    %cst_160 = arith.constant dense<0.000000e+00> : vector<8x128xf32>
    %322 = tpu.matmul %294, %321, %cst_160 {dimension_numbers = #tpu.dot_dimension_numbers<[1], [0], [0], [1], [0, 0, 1, 1], [], []>} : vector<8x128xf32>, vector<128x128xf32>, vector<8x128xf32> -> vector<8x128xf32>
    %323 = arith.addf %320, %322 : vector<8x128xf32>
    %324 = math.tanh %323 : vector<8x128xf32>
    %325 = arith.mulf %317, %295 : vector<8x128xf32>
    %326 = arith.mulf %306, %324 : vector<8x128xf32>
    %327 = arith.addf %325, %326 : vector<8x128xf32>
    %328 = arith.index_cast %c5_i32 : i32 to index
    %c0_161 = arith.constant 0 : index
    %c384_162 = arith.constant 384 : index
    %329 = vector.load %arg12[%328, %c0_161, %c384_162] : memref<16x8x512xf32, #tpu.memory_space<vmem>>, vector<1x8x128xf32>
    %330 = vector.shape_cast %329 : vector<1x8x128xf32> to vector<8x128xf32>
    %c0_163 = arith.constant 0 : index
    %c384_164 = arith.constant 384 : index
    %331 = vector.load %arg5[%c0_163, %c384_164] : memref<128x512xf32, #tpu.memory_space<vmem>>, vector<128x128xf32>
    %cst_165 = arith.constant dense<0.000000e+00> : vector<8x128xf32>
    %332 = tpu.matmul %294, %331, %cst_165 {dimension_numbers = #tpu.dot_dimension_numbers<[1], [0], [0], [1], [0, 0, 1, 1], [], []>} : vector<8x128xf32>, vector<128x128xf32>, vector<8x128xf32> -> vector<8x128xf32>
    %333 = arith.addf %330, %332 : vector<8x128xf32>
    %334 = arith.negf %333 : vector<8x128xf32>
    %335 = math.exp %334 : vector<8x128xf32>
    %cst_166 = arith.constant 1.000000e+00 : f32
    %336 = vector.broadcast %cst_166 : f32 to vector<8x128xf32>
    %337 = arith.addf %336, %335 : vector<8x128xf32>
    %338 = arith.divf %336, %337 : vector<8x128xf32>
    %339 = math.tanh %327 : vector<8x128xf32>
    %340 = arith.mulf %338, %339 : vector<8x128xf32>
    %341 = arith.addi %13, %c5_i32 : i32
    %342 = vector.broadcast %341 : i32 to vector<8x128xi32>
    %343 = arith.cmpi slt, %342, %12 : vector<8x128xi32>
    %cst_167 = arith.constant 0.000000e+00 : f32
    %344 = vector.broadcast %cst_167 : f32 to vector<8x128xf32>
    %345 = arith.select %343, %340, %344 : vector<8x128xi1>, vector<8x128xf32>
    %346 = arith.index_cast %c5_i32 : i32 to index
    %c0_168 = arith.constant 0 : index
    %c0_169 = arith.constant 0 : index
    %347 = vector.load %arg7[%346, %c0_168, %c0_169] : memref<16x8x128xf32, #tpu.memory_space<vmem>>, vector<1x8x128xf32>
    %348 = vector.shape_cast %347 : vector<1x8x128xf32> to vector<8x128xf32>
    %349 = vector.shape_cast %345 : vector<8x128xf32> to vector<1x8x128xf32>
    tpu.vector_store %arg7[%346, %c0_168, %c0_169], %349 {strides = array<i32>} : memref<16x8x128xf32, #tpu.memory_space<vmem>>, vector<1x8x128xf32>,
    %350 = arith.select %343, %340, %294 : vector<8x128xi1>, vector<8x128xf32>
    %351 = arith.select %343, %327, %295 : vector<8x128xi1>, vector<8x128xf32>
    %c6_i32 = arith.constant 6 : i32
    %352 = arith.index_cast %c6_i32 : i32 to index
    %c0_170 = arith.constant 0 : index
    %c0_171 = arith.constant 0 : index
    %353 = vector.load %arg12[%352, %c0_170, %c0_171] : memref<16x8x512xf32, #tpu.memory_space<vmem>>, vector<1x8x128xf32>
    %354 = vector.shape_cast %353 : vector<1x8x128xf32> to vector<8x128xf32>
    %c0_172 = arith.constant 0 : index
    %c0_173 = arith.constant 0 : index
    %355 = vector.load %arg5[%c0_172, %c0_173] : memref<128x512xf32, #tpu.memory_space<vmem>>, vector<128x128xf32>
    %cst_174 = arith.constant dense<0.000000e+00> : vector<8x128xf32>
    %356 = tpu.matmul %350, %355, %cst_174 {dimension_numbers = #tpu.dot_dimension_numbers<[1], [0], [0], [1], [0, 0, 1, 1], [], []>} : vector<8x128xf32>, vector<128x128xf32>, vector<8x128xf32> -> vector<8x128xf32>
    %357 = arith.addf %354, %356 : vector<8x128xf32>
    %358 = arith.negf %357 : vector<8x128xf32>
    %359 = math.exp %358 : vector<8x128xf32>
    %cst_175 = arith.constant 1.000000e+00 : f32
    %360 = vector.broadcast %cst_175 : f32 to vector<8x128xf32>
    %361 = arith.addf %360, %359 : vector<8x128xf32>
    %362 = arith.divf %360, %361 : vector<8x128xf32>
    %363 = arith.index_cast %c6_i32 : i32 to index
    %c0_176 = arith.constant 0 : index
    %c128_177 = arith.constant 128 : index
    %364 = vector.load %arg12[%363, %c0_176, %c128_177] : memref<16x8x512xf32, #tpu.memory_space<vmem>>, vector<1x8x128xf32>
    %365 = vector.shape_cast %364 : vector<1x8x128xf32> to vector<8x128xf32>
    %c0_178 = arith.constant 0 : index
    %c128_179 = arith.constant 128 : index
    %366 = vector.load %arg5[%c0_178, %c128_179] : memref<128x512xf32, #tpu.memory_space<vmem>>, vector<128x128xf32>
    %cst_180 = arith.constant dense<0.000000e+00> : vector<8x128xf32>
    %367 = tpu.matmul %350, %366, %cst_180 {dimension_numbers = #tpu.dot_dimension_numbers<[1], [0], [0], [1], [0, 0, 1, 1], [], []>} : vector<8x128xf32>, vector<128x128xf32>, vector<8x128xf32> -> vector<8x128xf32>
    %368 = arith.addf %365, %367 : vector<8x128xf32>
    %369 = arith.negf %368 : vector<8x128xf32>
    %370 = math.exp %369 : vector<8x128xf32>
    %cst_181 = arith.constant 1.000000e+00 : f32
    %371 = vector.broadcast %cst_181 : f32 to vector<8x128xf32>
    %372 = arith.addf %371, %370 : vector<8x128xf32>
    %373 = arith.divf %371, %372 : vector<8x128xf32>
    %374 = arith.index_cast %c6_i32 : i32 to index
    %c0_182 = arith.constant 0 : index
    %c256_183 = arith.constant 256 : index
    %375 = vector.load %arg12[%374, %c0_182, %c256_183] : memref<16x8x512xf32, #tpu.memory_space<vmem>>, vector<1x8x128xf32>
    %376 = vector.shape_cast %375 : vector<1x8x128xf32> to vector<8x128xf32>
    %c0_184 = arith.constant 0 : index
    %c256_185 = arith.constant 256 : index
    %377 = vector.load %arg5[%c0_184, %c256_185] : memref<128x512xf32, #tpu.memory_space<vmem>>, vector<128x128xf32>
    %cst_186 = arith.constant dense<0.000000e+00> : vector<8x128xf32>
    %378 = tpu.matmul %350, %377, %cst_186 {dimension_numbers = #tpu.dot_dimension_numbers<[1], [0], [0], [1], [0, 0, 1, 1], [], []>} : vector<8x128xf32>, vector<128x128xf32>, vector<8x128xf32> -> vector<8x128xf32>
    %379 = arith.addf %376, %378 : vector<8x128xf32>
    %380 = math.tanh %379 : vector<8x128xf32>
    %381 = arith.mulf %373, %351 : vector<8x128xf32>
    %382 = arith.mulf %362, %380 : vector<8x128xf32>
    %383 = arith.addf %381, %382 : vector<8x128xf32>
    %384 = arith.index_cast %c6_i32 : i32 to index
    %c0_187 = arith.constant 0 : index
    %c384_188 = arith.constant 384 : index
    %385 = vector.load %arg12[%384, %c0_187, %c384_188] : memref<16x8x512xf32, #tpu.memory_space<vmem>>, vector<1x8x128xf32>
    %386 = vector.shape_cast %385 : vector<1x8x128xf32> to vector<8x128xf32>
    %c0_189 = arith.constant 0 : index
    %c384_190 = arith.constant 384 : index
    %387 = vector.load %arg5[%c0_189, %c384_190] : memref<128x512xf32, #tpu.memory_space<vmem>>, vector<128x128xf32>
    %cst_191 = arith.constant dense<0.000000e+00> : vector<8x128xf32>
    %388 = tpu.matmul %350, %387, %cst_191 {dimension_numbers = #tpu.dot_dimension_numbers<[1], [0], [0], [1], [0, 0, 1, 1], [], []>} : vector<8x128xf32>, vector<128x128xf32>, vector<8x128xf32> -> vector<8x128xf32>
    %389 = arith.addf %386, %388 : vector<8x128xf32>
    %390 = arith.negf %389 : vector<8x128xf32>
    %391 = math.exp %390 : vector<8x128xf32>
    %cst_192 = arith.constant 1.000000e+00 : f32
    %392 = vector.broadcast %cst_192 : f32 to vector<8x128xf32>
    %393 = arith.addf %392, %391 : vector<8x128xf32>
    %394 = arith.divf %392, %393 : vector<8x128xf32>
    %395 = math.tanh %383 : vector<8x128xf32>
    %396 = arith.mulf %394, %395 : vector<8x128xf32>
    %397 = arith.addi %13, %c6_i32 : i32
    %398 = vector.broadcast %397 : i32 to vector<8x128xi32>
    %399 = arith.cmpi slt, %398, %12 : vector<8x128xi32>
    %cst_193 = arith.constant 0.000000e+00 : f32
    %400 = vector.broadcast %cst_193 : f32 to vector<8x128xf32>
    %401 = arith.select %399, %396, %400 : vector<8x128xi1>, vector<8x128xf32>
    %402 = arith.index_cast %c6_i32 : i32 to index
    %c0_194 = arith.constant 0 : index
    %c0_195 = arith.constant 0 : index
    %403 = vector.load %arg7[%402, %c0_194, %c0_195] : memref<16x8x128xf32, #tpu.memory_space<vmem>>, vector<1x8x128xf32>
    %404 = vector.shape_cast %403 : vector<1x8x128xf32> to vector<8x128xf32>
    %405 = vector.shape_cast %401 : vector<8x128xf32> to vector<1x8x128xf32>
    tpu.vector_store %arg7[%402, %c0_194, %c0_195], %405 {strides = array<i32>} : memref<16x8x128xf32, #tpu.memory_space<vmem>>, vector<1x8x128xf32>,
    %406 = arith.select %399, %396, %350 : vector<8x128xi1>, vector<8x128xf32>
    %407 = arith.select %399, %383, %351 : vector<8x128xi1>, vector<8x128xf32>
    %c7_i32 = arith.constant 7 : i32
    %408 = arith.index_cast %c7_i32 : i32 to index
    %c0_196 = arith.constant 0 : index
    %c0_197 = arith.constant 0 : index
    %409 = vector.load %arg12[%408, %c0_196, %c0_197] : memref<16x8x512xf32, #tpu.memory_space<vmem>>, vector<1x8x128xf32>
    %410 = vector.shape_cast %409 : vector<1x8x128xf32> to vector<8x128xf32>
    %c0_198 = arith.constant 0 : index
    %c0_199 = arith.constant 0 : index
    %411 = vector.load %arg5[%c0_198, %c0_199] : memref<128x512xf32, #tpu.memory_space<vmem>>, vector<128x128xf32>
    %cst_200 = arith.constant dense<0.000000e+00> : vector<8x128xf32>
    %412 = tpu.matmul %406, %411, %cst_200 {dimension_numbers = #tpu.dot_dimension_numbers<[1], [0], [0], [1], [0, 0, 1, 1], [], []>} : vector<8x128xf32>, vector<128x128xf32>, vector<8x128xf32> -> vector<8x128xf32>
    %413 = arith.addf %410, %412 : vector<8x128xf32>
    %414 = arith.negf %413 : vector<8x128xf32>
    %415 = math.exp %414 : vector<8x128xf32>
    %cst_201 = arith.constant 1.000000e+00 : f32
    %416 = vector.broadcast %cst_201 : f32 to vector<8x128xf32>
    %417 = arith.addf %416, %415 : vector<8x128xf32>
    %418 = arith.divf %416, %417 : vector<8x128xf32>
    %419 = arith.index_cast %c7_i32 : i32 to index
    %c0_202 = arith.constant 0 : index
    %c128_203 = arith.constant 128 : index
    %420 = vector.load %arg12[%419, %c0_202, %c128_203] : memref<16x8x512xf32, #tpu.memory_space<vmem>>, vector<1x8x128xf32>
    %421 = vector.shape_cast %420 : vector<1x8x128xf32> to vector<8x128xf32>
    %c0_204 = arith.constant 0 : index
    %c128_205 = arith.constant 128 : index
    %422 = vector.load %arg5[%c0_204, %c128_205] : memref<128x512xf32, #tpu.memory_space<vmem>>, vector<128x128xf32>
    %cst_206 = arith.constant dense<0.000000e+00> : vector<8x128xf32>
    %423 = tpu.matmul %406, %422, %cst_206 {dimension_numbers = #tpu.dot_dimension_numbers<[1], [0], [0], [1], [0, 0, 1, 1], [], []>} : vector<8x128xf32>, vector<128x128xf32>, vector<8x128xf32> -> vector<8x128xf32>
    %424 = arith.addf %421, %423 : vector<8x128xf32>
    %425 = arith.negf %424 : vector<8x128xf32>
    %426 = math.exp %425 : vector<8x128xf32>
    %cst_207 = arith.constant 1.000000e+00 : f32
    %427 = vector.broadcast %cst_207 : f32 to vector<8x128xf32>
    %428 = arith.addf %427, %426 : vector<8x128xf32>
    %429 = arith.divf %427, %428 : vector<8x128xf32>
    %430 = arith.index_cast %c7_i32 : i32 to index
    %c0_208 = arith.constant 0 : index
    %c256_209 = arith.constant 256 : index
    %431 = vector.load %arg12[%430, %c0_208, %c256_209] : memref<16x8x512xf32, #tpu.memory_space<vmem>>, vector<1x8x128xf32>
    %432 = vector.shape_cast %431 : vector<1x8x128xf32> to vector<8x128xf32>
    %c0_210 = arith.constant 0 : index
    %c256_211 = arith.constant 256 : index
    %433 = vector.load %arg5[%c0_210, %c256_211] : memref<128x512xf32, #tpu.memory_space<vmem>>, vector<128x128xf32>
    %cst_212 = arith.constant dense<0.000000e+00> : vector<8x128xf32>
    %434 = tpu.matmul %406, %433, %cst_212 {dimension_numbers = #tpu.dot_dimension_numbers<[1], [0], [0], [1], [0, 0, 1, 1], [], []>} : vector<8x128xf32>, vector<128x128xf32>, vector<8x128xf32> -> vector<8x128xf32>
    %435 = arith.addf %432, %434 : vector<8x128xf32>
    %436 = math.tanh %435 : vector<8x128xf32>
    %437 = arith.mulf %429, %407 : vector<8x128xf32>
    %438 = arith.mulf %418, %436 : vector<8x128xf32>
    %439 = arith.addf %437, %438 : vector<8x128xf32>
    %440 = arith.index_cast %c7_i32 : i32 to index
    %c0_213 = arith.constant 0 : index
    %c384_214 = arith.constant 384 : index
    %441 = vector.load %arg12[%440, %c0_213, %c384_214] : memref<16x8x512xf32, #tpu.memory_space<vmem>>, vector<1x8x128xf32>
    %442 = vector.shape_cast %441 : vector<1x8x128xf32> to vector<8x128xf32>
    %c0_215 = arith.constant 0 : index
    %c384_216 = arith.constant 384 : index
    %443 = vector.load %arg5[%c0_215, %c384_216] : memref<128x512xf32, #tpu.memory_space<vmem>>, vector<128x128xf32>
    %cst_217 = arith.constant dense<0.000000e+00> : vector<8x128xf32>
    %444 = tpu.matmul %406, %443, %cst_217 {dimension_numbers = #tpu.dot_dimension_numbers<[1], [0], [0], [1], [0, 0, 1, 1], [], []>} : vector<8x128xf32>, vector<128x128xf32>, vector<8x128xf32> -> vector<8x128xf32>
    %445 = arith.addf %442, %444 : vector<8x128xf32>
    %446 = arith.negf %445 : vector<8x128xf32>
    %447 = math.exp %446 : vector<8x128xf32>
    %cst_218 = arith.constant 1.000000e+00 : f32
    %448 = vector.broadcast %cst_218 : f32 to vector<8x128xf32>
    %449 = arith.addf %448, %447 : vector<8x128xf32>
    %450 = arith.divf %448, %449 : vector<8x128xf32>
    %451 = math.tanh %439 : vector<8x128xf32>
    %452 = arith.mulf %450, %451 : vector<8x128xf32>
    %453 = arith.addi %13, %c7_i32 : i32
    %454 = vector.broadcast %453 : i32 to vector<8x128xi32>
    %455 = arith.cmpi slt, %454, %12 : vector<8x128xi32>
    %cst_219 = arith.constant 0.000000e+00 : f32
    %456 = vector.broadcast %cst_219 : f32 to vector<8x128xf32>
    %457 = arith.select %455, %452, %456 : vector<8x128xi1>, vector<8x128xf32>
    %458 = arith.index_cast %c7_i32 : i32 to index
    %c0_220 = arith.constant 0 : index
    %c0_221 = arith.constant 0 : index
    %459 = vector.load %arg7[%458, %c0_220, %c0_221] : memref<16x8x128xf32, #tpu.memory_space<vmem>>, vector<1x8x128xf32>
    %460 = vector.shape_cast %459 : vector<1x8x128xf32> to vector<8x128xf32>
    %461 = vector.shape_cast %457 : vector<8x128xf32> to vector<1x8x128xf32>
    tpu.vector_store %arg7[%458, %c0_220, %c0_221], %461 {strides = array<i32>} : memref<16x8x128xf32, #tpu.memory_space<vmem>>, vector<1x8x128xf32>,
    %462 = arith.select %455, %452, %406 : vector<8x128xi1>, vector<8x128xf32>
    %463 = arith.select %455, %439, %407 : vector<8x128xi1>, vector<8x128xf32>
    %c8_i32 = arith.constant 8 : i32
    %464 = arith.index_cast %c8_i32 : i32 to index
    %c0_222 = arith.constant 0 : index
    %c0_223 = arith.constant 0 : index
    %465 = vector.load %arg12[%464, %c0_222, %c0_223] : memref<16x8x512xf32, #tpu.memory_space<vmem>>, vector<1x8x128xf32>
    %466 = vector.shape_cast %465 : vector<1x8x128xf32> to vector<8x128xf32>
    %c0_224 = arith.constant 0 : index
    %c0_225 = arith.constant 0 : index
    %467 = vector.load %arg5[%c0_224, %c0_225] : memref<128x512xf32, #tpu.memory_space<vmem>>, vector<128x128xf32>
    %cst_226 = arith.constant dense<0.000000e+00> : vector<8x128xf32>
    %468 = tpu.matmul %462, %467, %cst_226 {dimension_numbers = #tpu.dot_dimension_numbers<[1], [0], [0], [1], [0, 0, 1, 1], [], []>} : vector<8x128xf32>, vector<128x128xf32>, vector<8x128xf32> -> vector<8x128xf32>
    %469 = arith.addf %466, %468 : vector<8x128xf32>
    %470 = arith.negf %469 : vector<8x128xf32>
    %471 = math.exp %470 : vector<8x128xf32>
    %cst_227 = arith.constant 1.000000e+00 : f32
    %472 = vector.broadcast %cst_227 : f32 to vector<8x128xf32>
    %473 = arith.addf %472, %471 : vector<8x128xf32>
    %474 = arith.divf %472, %473 : vector<8x128xf32>
    %475 = arith.index_cast %c8_i32 : i32 to index
    %c0_228 = arith.constant 0 : index
    %c128_229 = arith.constant 128 : index
    %476 = vector.load %arg12[%475, %c0_228, %c128_229] : memref<16x8x512xf32, #tpu.memory_space<vmem>>, vector<1x8x128xf32>
    %477 = vector.shape_cast %476 : vector<1x8x128xf32> to vector<8x128xf32>
    %c0_230 = arith.constant 0 : index
    %c128_231 = arith.constant 128 : index
    %478 = vector.load %arg5[%c0_230, %c128_231] : memref<128x512xf32, #tpu.memory_space<vmem>>, vector<128x128xf32>
    %cst_232 = arith.constant dense<0.000000e+00> : vector<8x128xf32>
    %479 = tpu.matmul %462, %478, %cst_232 {dimension_numbers = #tpu.dot_dimension_numbers<[1], [0], [0], [1], [0, 0, 1, 1], [], []>} : vector<8x128xf32>, vector<128x128xf32>, vector<8x128xf32> -> vector<8x128xf32>
    %480 = arith.addf %477, %479 : vector<8x128xf32>
    %481 = arith.negf %480 : vector<8x128xf32>
    %482 = math.exp %481 : vector<8x128xf32>
    %cst_233 = arith.constant 1.000000e+00 : f32
    %483 = vector.broadcast %cst_233 : f32 to vector<8x128xf32>
    %484 = arith.addf %483, %482 : vector<8x128xf32>
    %485 = arith.divf %483, %484 : vector<8x128xf32>
    %486 = arith.index_cast %c8_i32 : i32 to index
    %c0_234 = arith.constant 0 : index
    %c256_235 = arith.constant 256 : index
    %487 = vector.load %arg12[%486, %c0_234, %c256_235] : memref<16x8x512xf32, #tpu.memory_space<vmem>>, vector<1x8x128xf32>
    %488 = vector.shape_cast %487 : vector<1x8x128xf32> to vector<8x128xf32>
    %c0_236 = arith.constant 0 : index
    %c256_237 = arith.constant 256 : index
    %489 = vector.load %arg5[%c0_236, %c256_237] : memref<128x512xf32, #tpu.memory_space<vmem>>, vector<128x128xf32>
    %cst_238 = arith.constant dense<0.000000e+00> : vector<8x128xf32>
    %490 = tpu.matmul %462, %489, %cst_238 {dimension_numbers = #tpu.dot_dimension_numbers<[1], [0], [0], [1], [0, 0, 1, 1], [], []>} : vector<8x128xf32>, vector<128x128xf32>, vector<8x128xf32> -> vector<8x128xf32>
    %491 = arith.addf %488, %490 : vector<8x128xf32>
    %492 = math.tanh %491 : vector<8x128xf32>
    %493 = arith.mulf %485, %463 : vector<8x128xf32>
    %494 = arith.mulf %474, %492 : vector<8x128xf32>
    %495 = arith.addf %493, %494 : vector<8x128xf32>
    %496 = arith.index_cast %c8_i32 : i32 to index
    %c0_239 = arith.constant 0 : index
    %c384_240 = arith.constant 384 : index
    %497 = vector.load %arg12[%496, %c0_239, %c384_240] : memref<16x8x512xf32, #tpu.memory_space<vmem>>, vector<1x8x128xf32>
    %498 = vector.shape_cast %497 : vector<1x8x128xf32> to vector<8x128xf32>
    %c0_241 = arith.constant 0 : index
    %c384_242 = arith.constant 384 : index
    %499 = vector.load %arg5[%c0_241, %c384_242] : memref<128x512xf32, #tpu.memory_space<vmem>>, vector<128x128xf32>
    %cst_243 = arith.constant dense<0.000000e+00> : vector<8x128xf32>
    %500 = tpu.matmul %462, %499, %cst_243 {dimension_numbers = #tpu.dot_dimension_numbers<[1], [0], [0], [1], [0, 0, 1, 1], [], []>} : vector<8x128xf32>, vector<128x128xf32>, vector<8x128xf32> -> vector<8x128xf32>
    %501 = arith.addf %498, %500 : vector<8x128xf32>
    %502 = arith.negf %501 : vector<8x128xf32>
    %503 = math.exp %502 : vector<8x128xf32>
    %cst_244 = arith.constant 1.000000e+00 : f32
    %504 = vector.broadcast %cst_244 : f32 to vector<8x128xf32>
    %505 = arith.addf %504, %503 : vector<8x128xf32>
    %506 = arith.divf %504, %505 : vector<8x128xf32>
    %507 = math.tanh %495 : vector<8x128xf32>
    %508 = arith.mulf %506, %507 : vector<8x128xf32>
    %509 = arith.addi %13, %c8_i32 : i32
    %510 = vector.broadcast %509 : i32 to vector<8x128xi32>
    %511 = arith.cmpi slt, %510, %12 : vector<8x128xi32>
    %cst_245 = arith.constant 0.000000e+00 : f32
    %512 = vector.broadcast %cst_245 : f32 to vector<8x128xf32>
    %513 = arith.select %511, %508, %512 : vector<8x128xi1>, vector<8x128xf32>
    %514 = arith.index_cast %c8_i32 : i32 to index
    %c0_246 = arith.constant 0 : index
    %c0_247 = arith.constant 0 : index
    %515 = vector.load %arg7[%514, %c0_246, %c0_247] : memref<16x8x128xf32, #tpu.memory_space<vmem>>, vector<1x8x128xf32>
    %516 = vector.shape_cast %515 : vector<1x8x128xf32> to vector<8x128xf32>
    %517 = vector.shape_cast %513 : vector<8x128xf32> to vector<1x8x128xf32>
    tpu.vector_store %arg7[%514, %c0_246, %c0_247], %517 {strides = array<i32>} : memref<16x8x128xf32, #tpu.memory_space<vmem>>, vector<1x8x128xf32>,
    %518 = arith.select %511, %508, %462 : vector<8x128xi1>, vector<8x128xf32>
    %519 = arith.select %511, %495, %463 : vector<8x128xi1>, vector<8x128xf32>
    %c9_i32 = arith.constant 9 : i32
    %520 = arith.index_cast %c9_i32 : i32 to index
    %c0_248 = arith.constant 0 : index
    %c0_249 = arith.constant 0 : index
    %521 = vector.load %arg12[%520, %c0_248, %c0_249] : memref<16x8x512xf32, #tpu.memory_space<vmem>>, vector<1x8x128xf32>
    %522 = vector.shape_cast %521 : vector<1x8x128xf32> to vector<8x128xf32>
    %c0_250 = arith.constant 0 : index
    %c0_251 = arith.constant 0 : index
    %523 = vector.load %arg5[%c0_250, %c0_251] : memref<128x512xf32, #tpu.memory_space<vmem>>, vector<128x128xf32>
    %cst_252 = arith.constant dense<0.000000e+00> : vector<8x128xf32>
    %524 = tpu.matmul %518, %523, %cst_252 {dimension_numbers = #tpu.dot_dimension_numbers<[1], [0], [0], [1], [0, 0, 1, 1], [], []>} : vector<8x128xf32>, vector<128x128xf32>, vector<8x128xf32> -> vector<8x128xf32>
    %525 = arith.addf %522, %524 : vector<8x128xf32>
    %526 = arith.negf %525 : vector<8x128xf32>
    %527 = math.exp %526 : vector<8x128xf32>
    %cst_253 = arith.constant 1.000000e+00 : f32
    %528 = vector.broadcast %cst_253 : f32 to vector<8x128xf32>
    %529 = arith.addf %528, %527 : vector<8x128xf32>
    %530 = arith.divf %528, %529 : vector<8x128xf32>
    %531 = arith.index_cast %c9_i32 : i32 to index
    %c0_254 = arith.constant 0 : index
    %c128_255 = arith.constant 128 : index
    %532 = vector.load %arg12[%531, %c0_254, %c128_255] : memref<16x8x512xf32, #tpu.memory_space<vmem>>, vector<1x8x128xf32>
    %533 = vector.shape_cast %532 : vector<1x8x128xf32> to vector<8x128xf32>
    %c0_256 = arith.constant 0 : index
    %c128_257 = arith.constant 128 : index
    %534 = vector.load %arg5[%c0_256, %c128_257] : memref<128x512xf32, #tpu.memory_space<vmem>>, vector<128x128xf32>
    %cst_258 = arith.constant dense<0.000000e+00> : vector<8x128xf32>
    %535 = tpu.matmul %518, %534, %cst_258 {dimension_numbers = #tpu.dot_dimension_numbers<[1], [0], [0], [1], [0, 0, 1, 1], [], []>} : vector<8x128xf32>, vector<128x128xf32>, vector<8x128xf32> -> vector<8x128xf32>
    %536 = arith.addf %533, %535 : vector<8x128xf32>
    %537 = arith.negf %536 : vector<8x128xf32>
    %538 = math.exp %537 : vector<8x128xf32>
    %cst_259 = arith.constant 1.000000e+00 : f32
    %539 = vector.broadcast %cst_259 : f32 to vector<8x128xf32>
    %540 = arith.addf %539, %538 : vector<8x128xf32>
    %541 = arith.divf %539, %540 : vector<8x128xf32>
    %542 = arith.index_cast %c9_i32 : i32 to index
    %c0_260 = arith.constant 0 : index
    %c256_261 = arith.constant 256 : index
    %543 = vector.load %arg12[%542, %c0_260, %c256_261] : memref<16x8x512xf32, #tpu.memory_space<vmem>>, vector<1x8x128xf32>
    %544 = vector.shape_cast %543 : vector<1x8x128xf32> to vector<8x128xf32>
    %c0_262 = arith.constant 0 : index
    %c256_263 = arith.constant 256 : index
    %545 = vector.load %arg5[%c0_262, %c256_263] : memref<128x512xf32, #tpu.memory_space<vmem>>, vector<128x128xf32>
    %cst_264 = arith.constant dense<0.000000e+00> : vector<8x128xf32>
    %546 = tpu.matmul %518, %545, %cst_264 {dimension_numbers = #tpu.dot_dimension_numbers<[1], [0], [0], [1], [0, 0, 1, 1], [], []>} : vector<8x128xf32>, vector<128x128xf32>, vector<8x128xf32> -> vector<8x128xf32>
    %547 = arith.addf %544, %546 : vector<8x128xf32>
    %548 = math.tanh %547 : vector<8x128xf32>
    %549 = arith.mulf %541, %519 : vector<8x128xf32>
    %550 = arith.mulf %530, %548 : vector<8x128xf32>
    %551 = arith.addf %549, %550 : vector<8x128xf32>
    %552 = arith.index_cast %c9_i32 : i32 to index
    %c0_265 = arith.constant 0 : index
    %c384_266 = arith.constant 384 : index
    %553 = vector.load %arg12[%552, %c0_265, %c384_266] : memref<16x8x512xf32, #tpu.memory_space<vmem>>, vector<1x8x128xf32>
    %554 = vector.shape_cast %553 : vector<1x8x128xf32> to vector<8x128xf32>
    %c0_267 = arith.constant 0 : index
    %c384_268 = arith.constant 384 : index
    %555 = vector.load %arg5[%c0_267, %c384_268] : memref<128x512xf32, #tpu.memory_space<vmem>>, vector<128x128xf32>
    %cst_269 = arith.constant dense<0.000000e+00> : vector<8x128xf32>
    %556 = tpu.matmul %518, %555, %cst_269 {dimension_numbers = #tpu.dot_dimension_numbers<[1], [0], [0], [1], [0, 0, 1, 1], [], []>} : vector<8x128xf32>, vector<128x128xf32>, vector<8x128xf32> -> vector<8x128xf32>
    %557 = arith.addf %554, %556 : vector<8x128xf32>
    %558 = arith.negf %557 : vector<8x128xf32>
    %559 = math.exp %558 : vector<8x128xf32>
    %cst_270 = arith.constant 1.000000e+00 : f32
    %560 = vector.broadcast %cst_270 : f32 to vector<8x128xf32>
    %561 = arith.addf %560, %559 : vector<8x128xf32>
    %562 = arith.divf %560, %561 : vector<8x128xf32>
    %563 = math.tanh %551 : vector<8x128xf32>
    %564 = arith.mulf %562, %563 : vector<8x128xf32>
    %565 = arith.addi %13, %c9_i32 : i32
    %566 = vector.broadcast %565 : i32 to vector<8x128xi32>
    %567 = arith.cmpi slt, %566, %12 : vector<8x128xi32>
    %cst_271 = arith.constant 0.000000e+00 : f32
    %568 = vector.broadcast %cst_271 : f32 to vector<8x128xf32>
    %569 = arith.select %567, %564, %568 : vector<8x128xi1>, vector<8x128xf32>
    %570 = arith.index_cast %c9_i32 : i32 to index
    %c0_272 = arith.constant 0 : index
    %c0_273 = arith.constant 0 : index
    %571 = vector.load %arg7[%570, %c0_272, %c0_273] : memref<16x8x128xf32, #tpu.memory_space<vmem>>, vector<1x8x128xf32>
    %572 = vector.shape_cast %571 : vector<1x8x128xf32> to vector<8x128xf32>
    %573 = vector.shape_cast %569 : vector<8x128xf32> to vector<1x8x128xf32>
    tpu.vector_store %arg7[%570, %c0_272, %c0_273], %573 {strides = array<i32>} : memref<16x8x128xf32, #tpu.memory_space<vmem>>, vector<1x8x128xf32>,
    %574 = arith.select %567, %564, %518 : vector<8x128xi1>, vector<8x128xf32>
    %575 = arith.select %567, %551, %519 : vector<8x128xi1>, vector<8x128xf32>
    %c10_i32 = arith.constant 10 : i32
    %576 = arith.index_cast %c10_i32 : i32 to index
    %c0_274 = arith.constant 0 : index
    %c0_275 = arith.constant 0 : index
    %577 = vector.load %arg12[%576, %c0_274, %c0_275] : memref<16x8x512xf32, #tpu.memory_space<vmem>>, vector<1x8x128xf32>
    %578 = vector.shape_cast %577 : vector<1x8x128xf32> to vector<8x128xf32>
    %c0_276 = arith.constant 0 : index
    %c0_277 = arith.constant 0 : index
    %579 = vector.load %arg5[%c0_276, %c0_277] : memref<128x512xf32, #tpu.memory_space<vmem>>, vector<128x128xf32>
    %cst_278 = arith.constant dense<0.000000e+00> : vector<8x128xf32>
    %580 = tpu.matmul %574, %579, %cst_278 {dimension_numbers = #tpu.dot_dimension_numbers<[1], [0], [0], [1], [0, 0, 1, 1], [], []>} : vector<8x128xf32>, vector<128x128xf32>, vector<8x128xf32> -> vector<8x128xf32>
    %581 = arith.addf %578, %580 : vector<8x128xf32>
    %582 = arith.negf %581 : vector<8x128xf32>
    %583 = math.exp %582 : vector<8x128xf32>
    %cst_279 = arith.constant 1.000000e+00 : f32
    %584 = vector.broadcast %cst_279 : f32 to vector<8x128xf32>
    %585 = arith.addf %584, %583 : vector<8x128xf32>
    %586 = arith.divf %584, %585 : vector<8x128xf32>
    %587 = arith.index_cast %c10_i32 : i32 to index
    %c0_280 = arith.constant 0 : index
    %c128_281 = arith.constant 128 : index
    %588 = vector.load %arg12[%587, %c0_280, %c128_281] : memref<16x8x512xf32, #tpu.memory_space<vmem>>, vector<1x8x128xf32>
    %589 = vector.shape_cast %588 : vector<1x8x128xf32> to vector<8x128xf32>
    %c0_282 = arith.constant 0 : index
    %c128_283 = arith.constant 128 : index
    %590 = vector.load %arg5[%c0_282, %c128_283] : memref<128x512xf32, #tpu.memory_space<vmem>>, vector<128x128xf32>
    %cst_284 = arith.constant dense<0.000000e+00> : vector<8x128xf32>
    %591 = tpu.matmul %574, %590, %cst_284 {dimension_numbers = #tpu.dot_dimension_numbers<[1], [0], [0], [1], [0, 0, 1, 1], [], []>} : vector<8x128xf32>, vector<128x128xf32>, vector<8x128xf32> -> vector<8x128xf32>
    %592 = arith.addf %589, %591 : vector<8x128xf32>
    %593 = arith.negf %592 : vector<8x128xf32>
    %594 = math.exp %593 : vector<8x128xf32>
    %cst_285 = arith.constant 1.000000e+00 : f32
    %595 = vector.broadcast %cst_285 : f32 to vector<8x128xf32>
    %596 = arith.addf %595, %594 : vector<8x128xf32>
    %597 = arith.divf %595, %596 : vector<8x128xf32>
    %598 = arith.index_cast %c10_i32 : i32 to index
    %c0_286 = arith.constant 0 : index
    %c256_287 = arith.constant 256 : index
    %599 = vector.load %arg12[%598, %c0_286, %c256_287] : memref<16x8x512xf32, #tpu.memory_space<vmem>>, vector<1x8x128xf32>
    %600 = vector.shape_cast %599 : vector<1x8x128xf32> to vector<8x128xf32>
    %c0_288 = arith.constant 0 : index
    %c256_289 = arith.constant 256 : index
    %601 = vector.load %arg5[%c0_288, %c256_289] : memref<128x512xf32, #tpu.memory_space<vmem>>, vector<128x128xf32>
    %cst_290 = arith.constant dense<0.000000e+00> : vector<8x128xf32>
    %602 = tpu.matmul %574, %601, %cst_290 {dimension_numbers = #tpu.dot_dimension_numbers<[1], [0], [0], [1], [0, 0, 1, 1], [], []>} : vector<8x128xf32>, vector<128x128xf32>, vector<8x128xf32> -> vector<8x128xf32>
    %603 = arith.addf %600, %602 : vector<8x128xf32>
    %604 = math.tanh %603 : vector<8x128xf32>
    %605 = arith.mulf %597, %575 : vector<8x128xf32>
    %606 = arith.mulf %586, %604 : vector<8x128xf32>
    %607 = arith.addf %605, %606 : vector<8x128xf32>
    %608 = arith.index_cast %c10_i32 : i32 to index
    %c0_291 = arith.constant 0 : index
    %c384_292 = arith.constant 384 : index
    %609 = vector.load %arg12[%608, %c0_291, %c384_292] : memref<16x8x512xf32, #tpu.memory_space<vmem>>, vector<1x8x128xf32>
    %610 = vector.shape_cast %609 : vector<1x8x128xf32> to vector<8x128xf32>
    %c0_293 = arith.constant 0 : index
    %c384_294 = arith.constant 384 : index
    %611 = vector.load %arg5[%c0_293, %c384_294] : memref<128x512xf32, #tpu.memory_space<vmem>>, vector<128x128xf32>
    %cst_295 = arith.constant dense<0.000000e+00> : vector<8x128xf32>
    %612 = tpu.matmul %574, %611, %cst_295 {dimension_numbers = #tpu.dot_dimension_numbers<[1], [0], [0], [1], [0, 0, 1, 1], [], []>} : vector<8x128xf32>, vector<128x128xf32>, vector<8x128xf32> -> vector<8x128xf32>
    %613 = arith.addf %610, %612 : vector<8x128xf32>
    %614 = arith.negf %613 : vector<8x128xf32>
    %615 = math.exp %614 : vector<8x128xf32>
    %cst_296 = arith.constant 1.000000e+00 : f32
    %616 = vector.broadcast %cst_296 : f32 to vector<8x128xf32>
    %617 = arith.addf %616, %615 : vector<8x128xf32>
    %618 = arith.divf %616, %617 : vector<8x128xf32>
    %619 = math.tanh %607 : vector<8x128xf32>
    %620 = arith.mulf %618, %619 : vector<8x128xf32>
    %621 = arith.addi %13, %c10_i32 : i32
    %622 = vector.broadcast %621 : i32 to vector<8x128xi32>
    %623 = arith.cmpi slt, %622, %12 : vector<8x128xi32>
    %cst_297 = arith.constant 0.000000e+00 : f32
    %624 = vector.broadcast %cst_297 : f32 to vector<8x128xf32>
    %625 = arith.select %623, %620, %624 : vector<8x128xi1>, vector<8x128xf32>
    %626 = arith.index_cast %c10_i32 : i32 to index
    %c0_298 = arith.constant 0 : index
    %c0_299 = arith.constant 0 : index
    %627 = vector.load %arg7[%626, %c0_298, %c0_299] : memref<16x8x128xf32, #tpu.memory_space<vmem>>, vector<1x8x128xf32>
    %628 = vector.shape_cast %627 : vector<1x8x128xf32> to vector<8x128xf32>
    %629 = vector.shape_cast %625 : vector<8x128xf32> to vector<1x8x128xf32>
    tpu.vector_store %arg7[%626, %c0_298, %c0_299], %629 {strides = array<i32>} : memref<16x8x128xf32, #tpu.memory_space<vmem>>, vector<1x8x128xf32>,
    %630 = arith.select %623, %620, %574 : vector<8x128xi1>, vector<8x128xf32>
    %631 = arith.select %623, %607, %575 : vector<8x128xi1>, vector<8x128xf32>
    %c11_i32 = arith.constant 11 : i32
    %632 = arith.index_cast %c11_i32 : i32 to index
    %c0_300 = arith.constant 0 : index
    %c0_301 = arith.constant 0 : index
    %633 = vector.load %arg12[%632, %c0_300, %c0_301] : memref<16x8x512xf32, #tpu.memory_space<vmem>>, vector<1x8x128xf32>
    %634 = vector.shape_cast %633 : vector<1x8x128xf32> to vector<8x128xf32>
    %c0_302 = arith.constant 0 : index
    %c0_303 = arith.constant 0 : index
    %635 = vector.load %arg5[%c0_302, %c0_303] : memref<128x512xf32, #tpu.memory_space<vmem>>, vector<128x128xf32>
    %cst_304 = arith.constant dense<0.000000e+00> : vector<8x128xf32>
    %636 = tpu.matmul %630, %635, %cst_304 {dimension_numbers = #tpu.dot_dimension_numbers<[1], [0], [0], [1], [0, 0, 1, 1], [], []>} : vector<8x128xf32>, vector<128x128xf32>, vector<8x128xf32> -> vector<8x128xf32>
    %637 = arith.addf %634, %636 : vector<8x128xf32>
    %638 = arith.negf %637 : vector<8x128xf32>
    %639 = math.exp %638 : vector<8x128xf32>
    %cst_305 = arith.constant 1.000000e+00 : f32
    %640 = vector.broadcast %cst_305 : f32 to vector<8x128xf32>
    %641 = arith.addf %640, %639 : vector<8x128xf32>
    %642 = arith.divf %640, %641 : vector<8x128xf32>
    %643 = arith.index_cast %c11_i32 : i32 to index
    %c0_306 = arith.constant 0 : index
    %c128_307 = arith.constant 128 : index
    %644 = vector.load %arg12[%643, %c0_306, %c128_307] : memref<16x8x512xf32, #tpu.memory_space<vmem>>, vector<1x8x128xf32>
    %645 = vector.shape_cast %644 : vector<1x8x128xf32> to vector<8x128xf32>
    %c0_308 = arith.constant 0 : index
    %c128_309 = arith.constant 128 : index
    %646 = vector.load %arg5[%c0_308, %c128_309] : memref<128x512xf32, #tpu.memory_space<vmem>>, vector<128x128xf32>
    %cst_310 = arith.constant dense<0.000000e+00> : vector<8x128xf32>
    %647 = tpu.matmul %630, %646, %cst_310 {dimension_numbers = #tpu.dot_dimension_numbers<[1], [0], [0], [1], [0, 0, 1, 1], [], []>} : vector<8x128xf32>, vector<128x128xf32>, vector<8x128xf32> -> vector<8x128xf32>
    %648 = arith.addf %645, %647 : vector<8x128xf32>
    %649 = arith.negf %648 : vector<8x128xf32>
    %650 = math.exp %649 : vector<8x128xf32>
    %cst_311 = arith.constant 1.000000e+00 : f32
    %651 = vector.broadcast %cst_311 : f32 to vector<8x128xf32>
    %652 = arith.addf %651, %650 : vector<8x128xf32>
    %653 = arith.divf %651, %652 : vector<8x128xf32>
    %654 = arith.index_cast %c11_i32 : i32 to index
    %c0_312 = arith.constant 0 : index
    %c256_313 = arith.constant 256 : index
    %655 = vector.load %arg12[%654, %c0_312, %c256_313] : memref<16x8x512xf32, #tpu.memory_space<vmem>>, vector<1x8x128xf32>
    %656 = vector.shape_cast %655 : vector<1x8x128xf32> to vector<8x128xf32>
    %c0_314 = arith.constant 0 : index
    %c256_315 = arith.constant 256 : index
    %657 = vector.load %arg5[%c0_314, %c256_315] : memref<128x512xf32, #tpu.memory_space<vmem>>, vector<128x128xf32>
    %cst_316 = arith.constant dense<0.000000e+00> : vector<8x128xf32>
    %658 = tpu.matmul %630, %657, %cst_316 {dimension_numbers = #tpu.dot_dimension_numbers<[1], [0], [0], [1], [0, 0, 1, 1], [], []>} : vector<8x128xf32>, vector<128x128xf32>, vector<8x128xf32> -> vector<8x128xf32>
    %659 = arith.addf %656, %658 : vector<8x128xf32>
    %660 = math.tanh %659 : vector<8x128xf32>
    %661 = arith.mulf %653, %631 : vector<8x128xf32>
    %662 = arith.mulf %642, %660 : vector<8x128xf32>
    %663 = arith.addf %661, %662 : vector<8x128xf32>
    %664 = arith.index_cast %c11_i32 : i32 to index
    %c0_317 = arith.constant 0 : index
    %c384_318 = arith.constant 384 : index
    %665 = vector.load %arg12[%664, %c0_317, %c384_318] : memref<16x8x512xf32, #tpu.memory_space<vmem>>, vector<1x8x128xf32>
    %666 = vector.shape_cast %665 : vector<1x8x128xf32> to vector<8x128xf32>
    %c0_319 = arith.constant 0 : index
    %c384_320 = arith.constant 384 : index
    %667 = vector.load %arg5[%c0_319, %c384_320] : memref<128x512xf32, #tpu.memory_space<vmem>>, vector<128x128xf32>
    %cst_321 = arith.constant dense<0.000000e+00> : vector<8x128xf32>
    %668 = tpu.matmul %630, %667, %cst_321 {dimension_numbers = #tpu.dot_dimension_numbers<[1], [0], [0], [1], [0, 0, 1, 1], [], []>} : vector<8x128xf32>, vector<128x128xf32>, vector<8x128xf32> -> vector<8x128xf32>
    %669 = arith.addf %666, %668 : vector<8x128xf32>
    %670 = arith.negf %669 : vector<8x128xf32>
    %671 = math.exp %670 : vector<8x128xf32>
    %cst_322 = arith.constant 1.000000e+00 : f32
    %672 = vector.broadcast %cst_322 : f32 to vector<8x128xf32>
    %673 = arith.addf %672, %671 : vector<8x128xf32>
    %674 = arith.divf %672, %673 : vector<8x128xf32>
    %675 = math.tanh %663 : vector<8x128xf32>
    %676 = arith.mulf %674, %675 : vector<8x128xf32>
    %677 = arith.addi %13, %c11_i32 : i32
    %678 = vector.broadcast %677 : i32 to vector<8x128xi32>
    %679 = arith.cmpi slt, %678, %12 : vector<8x128xi32>
    %cst_323 = arith.constant 0.000000e+00 : f32
    %680 = vector.broadcast %cst_323 : f32 to vector<8x128xf32>
    %681 = arith.select %679, %676, %680 : vector<8x128xi1>, vector<8x128xf32>
    %682 = arith.index_cast %c11_i32 : i32 to index
    %c0_324 = arith.constant 0 : index
    %c0_325 = arith.constant 0 : index
    %683 = vector.load %arg7[%682, %c0_324, %c0_325] : memref<16x8x128xf32, #tpu.memory_space<vmem>>, vector<1x8x128xf32>
    %684 = vector.shape_cast %683 : vector<1x8x128xf32> to vector<8x128xf32>
    %685 = vector.shape_cast %681 : vector<8x128xf32> to vector<1x8x128xf32>
    tpu.vector_store %arg7[%682, %c0_324, %c0_325], %685 {strides = array<i32>} : memref<16x8x128xf32, #tpu.memory_space<vmem>>, vector<1x8x128xf32>,
    %686 = arith.select %679, %676, %630 : vector<8x128xi1>, vector<8x128xf32>
    %687 = arith.select %679, %663, %631 : vector<8x128xi1>, vector<8x128xf32>
    %c12_i32 = arith.constant 12 : i32
    %688 = arith.index_cast %c12_i32 : i32 to index
    %c0_326 = arith.constant 0 : index
    %c0_327 = arith.constant 0 : index
    %689 = vector.load %arg12[%688, %c0_326, %c0_327] : memref<16x8x512xf32, #tpu.memory_space<vmem>>, vector<1x8x128xf32>
    %690 = vector.shape_cast %689 : vector<1x8x128xf32> to vector<8x128xf32>
    %c0_328 = arith.constant 0 : index
    %c0_329 = arith.constant 0 : index
    %691 = vector.load %arg5[%c0_328, %c0_329] : memref<128x512xf32, #tpu.memory_space<vmem>>, vector<128x128xf32>
    %cst_330 = arith.constant dense<0.000000e+00> : vector<8x128xf32>
    %692 = tpu.matmul %686, %691, %cst_330 {dimension_numbers = #tpu.dot_dimension_numbers<[1], [0], [0], [1], [0, 0, 1, 1], [], []>} : vector<8x128xf32>, vector<128x128xf32>, vector<8x128xf32> -> vector<8x128xf32>
    %693 = arith.addf %690, %692 : vector<8x128xf32>
    %694 = arith.negf %693 : vector<8x128xf32>
    %695 = math.exp %694 : vector<8x128xf32>
    %cst_331 = arith.constant 1.000000e+00 : f32
    %696 = vector.broadcast %cst_331 : f32 to vector<8x128xf32>
    %697 = arith.addf %696, %695 : vector<8x128xf32>
    %698 = arith.divf %696, %697 : vector<8x128xf32>
    %699 = arith.index_cast %c12_i32 : i32 to index
    %c0_332 = arith.constant 0 : index
    %c128_333 = arith.constant 128 : index
    %700 = vector.load %arg12[%699, %c0_332, %c128_333] : memref<16x8x512xf32, #tpu.memory_space<vmem>>, vector<1x8x128xf32>
    %701 = vector.shape_cast %700 : vector<1x8x128xf32> to vector<8x128xf32>
    %c0_334 = arith.constant 0 : index
    %c128_335 = arith.constant 128 : index
    %702 = vector.load %arg5[%c0_334, %c128_335] : memref<128x512xf32, #tpu.memory_space<vmem>>, vector<128x128xf32>
    %cst_336 = arith.constant dense<0.000000e+00> : vector<8x128xf32>
    %703 = tpu.matmul %686, %702, %cst_336 {dimension_numbers = #tpu.dot_dimension_numbers<[1], [0], [0], [1], [0, 0, 1, 1], [], []>} : vector<8x128xf32>, vector<128x128xf32>, vector<8x128xf32> -> vector<8x128xf32>
    %704 = arith.addf %701, %703 : vector<8x128xf32>
    %705 = arith.negf %704 : vector<8x128xf32>
    %706 = math.exp %705 : vector<8x128xf32>
    %cst_337 = arith.constant 1.000000e+00 : f32
    %707 = vector.broadcast %cst_337 : f32 to vector<8x128xf32>
    %708 = arith.addf %707, %706 : vector<8x128xf32>
    %709 = arith.divf %707, %708 : vector<8x128xf32>
    %710 = arith.index_cast %c12_i32 : i32 to index
    %c0_338 = arith.constant 0 : index
    %c256_339 = arith.constant 256 : index
    %711 = vector.load %arg12[%710, %c0_338, %c256_339] : memref<16x8x512xf32, #tpu.memory_space<vmem>>, vector<1x8x128xf32>
    %712 = vector.shape_cast %711 : vector<1x8x128xf32> to vector<8x128xf32>
    %c0_340 = arith.constant 0 : index
    %c256_341 = arith.constant 256 : index
    %713 = vector.load %arg5[%c0_340, %c256_341] : memref<128x512xf32, #tpu.memory_space<vmem>>, vector<128x128xf32>
    %cst_342 = arith.constant dense<0.000000e+00> : vector<8x128xf32>
    %714 = tpu.matmul %686, %713, %cst_342 {dimension_numbers = #tpu.dot_dimension_numbers<[1], [0], [0], [1], [0, 0, 1, 1], [], []>} : vector<8x128xf32>, vector<128x128xf32>, vector<8x128xf32> -> vector<8x128xf32>
    %715 = arith.addf %712, %714 : vector<8x128xf32>
    %716 = math.tanh %715 : vector<8x128xf32>
    %717 = arith.mulf %709, %687 : vector<8x128xf32>
    %718 = arith.mulf %698, %716 : vector<8x128xf32>
    %719 = arith.addf %717, %718 : vector<8x128xf32>
    %720 = arith.index_cast %c12_i32 : i32 to index
    %c0_343 = arith.constant 0 : index
    %c384_344 = arith.constant 384 : index
    %721 = vector.load %arg12[%720, %c0_343, %c384_344] : memref<16x8x512xf32, #tpu.memory_space<vmem>>, vector<1x8x128xf32>
    %722 = vector.shape_cast %721 : vector<1x8x128xf32> to vector<8x128xf32>
    %c0_345 = arith.constant 0 : index
    %c384_346 = arith.constant 384 : index
    %723 = vector.load %arg5[%c0_345, %c384_346] : memref<128x512xf32, #tpu.memory_space<vmem>>, vector<128x128xf32>
    %cst_347 = arith.constant dense<0.000000e+00> : vector<8x128xf32>
    %724 = tpu.matmul %686, %723, %cst_347 {dimension_numbers = #tpu.dot_dimension_numbers<[1], [0], [0], [1], [0, 0, 1, 1], [], []>} : vector<8x128xf32>, vector<128x128xf32>, vector<8x128xf32> -> vector<8x128xf32>
    %725 = arith.addf %722, %724 : vector<8x128xf32>
    %726 = arith.negf %725 : vector<8x128xf32>
    %727 = math.exp %726 : vector<8x128xf32>
    %cst_348 = arith.constant 1.000000e+00 : f32
    %728 = vector.broadcast %cst_348 : f32 to vector<8x128xf32>
    %729 = arith.addf %728, %727 : vector<8x128xf32>
    %730 = arith.divf %728, %729 : vector<8x128xf32>
    %731 = math.tanh %719 : vector<8x128xf32>
    %732 = arith.mulf %730, %731 : vector<8x128xf32>
    %733 = arith.addi %13, %c12_i32 : i32
    %734 = vector.broadcast %733 : i32 to vector<8x128xi32>
    %735 = arith.cmpi slt, %734, %12 : vector<8x128xi32>
    %cst_349 = arith.constant 0.000000e+00 : f32
    %736 = vector.broadcast %cst_349 : f32 to vector<8x128xf32>
    %737 = arith.select %735, %732, %736 : vector<8x128xi1>, vector<8x128xf32>
    %738 = arith.index_cast %c12_i32 : i32 to index
    %c0_350 = arith.constant 0 : index
    %c0_351 = arith.constant 0 : index
    %739 = vector.load %arg7[%738, %c0_350, %c0_351] : memref<16x8x128xf32, #tpu.memory_space<vmem>>, vector<1x8x128xf32>
    %740 = vector.shape_cast %739 : vector<1x8x128xf32> to vector<8x128xf32>
    %741 = vector.shape_cast %737 : vector<8x128xf32> to vector<1x8x128xf32>
    tpu.vector_store %arg7[%738, %c0_350, %c0_351], %741 {strides = array<i32>} : memref<16x8x128xf32, #tpu.memory_space<vmem>>, vector<1x8x128xf32>,
    %742 = arith.select %735, %732, %686 : vector<8x128xi1>, vector<8x128xf32>
    %743 = arith.select %735, %719, %687 : vector<8x128xi1>, vector<8x128xf32>
    %c13_i32 = arith.constant 13 : i32
    %744 = arith.index_cast %c13_i32 : i32 to index
    %c0_352 = arith.constant 0 : index
    %c0_353 = arith.constant 0 : index
    %745 = vector.load %arg12[%744, %c0_352, %c0_353] : memref<16x8x512xf32, #tpu.memory_space<vmem>>, vector<1x8x128xf32>
    %746 = vector.shape_cast %745 : vector<1x8x128xf32> to vector<8x128xf32>
    %c0_354 = arith.constant 0 : index
    %c0_355 = arith.constant 0 : index
    %747 = vector.load %arg5[%c0_354, %c0_355] : memref<128x512xf32, #tpu.memory_space<vmem>>, vector<128x128xf32>
    %cst_356 = arith.constant dense<0.000000e+00> : vector<8x128xf32>
    %748 = tpu.matmul %742, %747, %cst_356 {dimension_numbers = #tpu.dot_dimension_numbers<[1], [0], [0], [1], [0, 0, 1, 1], [], []>} : vector<8x128xf32>, vector<128x128xf32>, vector<8x128xf32> -> vector<8x128xf32>
    %749 = arith.addf %746, %748 : vector<8x128xf32>
    %750 = arith.negf %749 : vector<8x128xf32>
    %751 = math.exp %750 : vector<8x128xf32>
    %cst_357 = arith.constant 1.000000e+00 : f32
    %752 = vector.broadcast %cst_357 : f32 to vector<8x128xf32>
    %753 = arith.addf %752, %751 : vector<8x128xf32>
    %754 = arith.divf %752, %753 : vector<8x128xf32>
    %755 = arith.index_cast %c13_i32 : i32 to index
    %c0_358 = arith.constant 0 : index
    %c128_359 = arith.constant 128 : index
    %756 = vector.load %arg12[%755, %c0_358, %c128_359] : memref<16x8x512xf32, #tpu.memory_space<vmem>>, vector<1x8x128xf32>
    %757 = vector.shape_cast %756 : vector<1x8x128xf32> to vector<8x128xf32>
    %c0_360 = arith.constant 0 : index
    %c128_361 = arith.constant 128 : index
    %758 = vector.load %arg5[%c0_360, %c128_361] : memref<128x512xf32, #tpu.memory_space<vmem>>, vector<128x128xf32>
    %cst_362 = arith.constant dense<0.000000e+00> : vector<8x128xf32>
    %759 = tpu.matmul %742, %758, %cst_362 {dimension_numbers = #tpu.dot_dimension_numbers<[1], [0], [0], [1], [0, 0, 1, 1], [], []>} : vector<8x128xf32>, vector<128x128xf32>, vector<8x128xf32> -> vector<8x128xf32>
    %760 = arith.addf %757, %759 : vector<8x128xf32>
    %761 = arith.negf %760 : vector<8x128xf32>
    %762 = math.exp %761 : vector<8x128xf32>
    %cst_363 = arith.constant 1.000000e+00 : f32
    %763 = vector.broadcast %cst_363 : f32 to vector<8x128xf32>
    %764 = arith.addf %763, %762 : vector<8x128xf32>
    %765 = arith.divf %763, %764 : vector<8x128xf32>
    %766 = arith.index_cast %c13_i32 : i32 to index
    %c0_364 = arith.constant 0 : index
    %c256_365 = arith.constant 256 : index
    %767 = vector.load %arg12[%766, %c0_364, %c256_365] : memref<16x8x512xf32, #tpu.memory_space<vmem>>, vector<1x8x128xf32>
    %768 = vector.shape_cast %767 : vector<1x8x128xf32> to vector<8x128xf32>
    %c0_366 = arith.constant 0 : index
    %c256_367 = arith.constant 256 : index
    %769 = vector.load %arg5[%c0_366, %c256_367] : memref<128x512xf32, #tpu.memory_space<vmem>>, vector<128x128xf32>
    %cst_368 = arith.constant dense<0.000000e+00> : vector<8x128xf32>
    %770 = tpu.matmul %742, %769, %cst_368 {dimension_numbers = #tpu.dot_dimension_numbers<[1], [0], [0], [1], [0, 0, 1, 1], [], []>} : vector<8x128xf32>, vector<128x128xf32>, vector<8x128xf32> -> vector<8x128xf32>
    %771 = arith.addf %768, %770 : vector<8x128xf32>
    %772 = math.tanh %771 : vector<8x128xf32>
    %773 = arith.mulf %765, %743 : vector<8x128xf32>
    %774 = arith.mulf %754, %772 : vector<8x128xf32>
    %775 = arith.addf %773, %774 : vector<8x128xf32>
    %776 = arith.index_cast %c13_i32 : i32 to index
    %c0_369 = arith.constant 0 : index
    %c384_370 = arith.constant 384 : index
    %777 = vector.load %arg12[%776, %c0_369, %c384_370] : memref<16x8x512xf32, #tpu.memory_space<vmem>>, vector<1x8x128xf32>
    %778 = vector.shape_cast %777 : vector<1x8x128xf32> to vector<8x128xf32>
    %c0_371 = arith.constant 0 : index
    %c384_372 = arith.constant 384 : index
    %779 = vector.load %arg5[%c0_371, %c384_372] : memref<128x512xf32, #tpu.memory_space<vmem>>, vector<128x128xf32>
    %cst_373 = arith.constant dense<0.000000e+00> : vector<8x128xf32>
    %780 = tpu.matmul %742, %779, %cst_373 {dimension_numbers = #tpu.dot_dimension_numbers<[1], [0], [0], [1], [0, 0, 1, 1], [], []>} : vector<8x128xf32>, vector<128x128xf32>, vector<8x128xf32> -> vector<8x128xf32>
    %781 = arith.addf %778, %780 : vector<8x128xf32>
    %782 = arith.negf %781 : vector<8x128xf32>
    %783 = math.exp %782 : vector<8x128xf32>
    %cst_374 = arith.constant 1.000000e+00 : f32
    %784 = vector.broadcast %cst_374 : f32 to vector<8x128xf32>
    %785 = arith.addf %784, %783 : vector<8x128xf32>
    %786 = arith.divf %784, %785 : vector<8x128xf32>
    %787 = math.tanh %775 : vector<8x128xf32>
    %788 = arith.mulf %786, %787 : vector<8x128xf32>
    %789 = arith.addi %13, %c13_i32 : i32
    %790 = vector.broadcast %789 : i32 to vector<8x128xi32>
    %791 = arith.cmpi slt, %790, %12 : vector<8x128xi32>
    %cst_375 = arith.constant 0.000000e+00 : f32
    %792 = vector.broadcast %cst_375 : f32 to vector<8x128xf32>
    %793 = arith.select %791, %788, %792 : vector<8x128xi1>, vector<8x128xf32>
    %794 = arith.index_cast %c13_i32 : i32 to index
    %c0_376 = arith.constant 0 : index
    %c0_377 = arith.constant 0 : index
    %795 = vector.load %arg7[%794, %c0_376, %c0_377] : memref<16x8x128xf32, #tpu.memory_space<vmem>>, vector<1x8x128xf32>
    %796 = vector.shape_cast %795 : vector<1x8x128xf32> to vector<8x128xf32>
    %797 = vector.shape_cast %793 : vector<8x128xf32> to vector<1x8x128xf32>
    tpu.vector_store %arg7[%794, %c0_376, %c0_377], %797 {strides = array<i32>} : memref<16x8x128xf32, #tpu.memory_space<vmem>>, vector<1x8x128xf32>,
    %798 = arith.select %791, %788, %742 : vector<8x128xi1>, vector<8x128xf32>
    %799 = arith.select %791, %775, %743 : vector<8x128xi1>, vector<8x128xf32>
    %c14_i32 = arith.constant 14 : i32
    %800 = arith.index_cast %c14_i32 : i32 to index
    %c0_378 = arith.constant 0 : index
    %c0_379 = arith.constant 0 : index
    %801 = vector.load %arg12[%800, %c0_378, %c0_379] : memref<16x8x512xf32, #tpu.memory_space<vmem>>, vector<1x8x128xf32>
    %802 = vector.shape_cast %801 : vector<1x8x128xf32> to vector<8x128xf32>
    %c0_380 = arith.constant 0 : index
    %c0_381 = arith.constant 0 : index
    %803 = vector.load %arg5[%c0_380, %c0_381] : memref<128x512xf32, #tpu.memory_space<vmem>>, vector<128x128xf32>
    %cst_382 = arith.constant dense<0.000000e+00> : vector<8x128xf32>
    %804 = tpu.matmul %798, %803, %cst_382 {dimension_numbers = #tpu.dot_dimension_numbers<[1], [0], [0], [1], [0, 0, 1, 1], [], []>} : vector<8x128xf32>, vector<128x128xf32>, vector<8x128xf32> -> vector<8x128xf32>
    %805 = arith.addf %802, %804 : vector<8x128xf32>
    %806 = arith.negf %805 : vector<8x128xf32>
    %807 = math.exp %806 : vector<8x128xf32>
    %cst_383 = arith.constant 1.000000e+00 : f32
    %808 = vector.broadcast %cst_383 : f32 to vector<8x128xf32>
    %809 = arith.addf %808, %807 : vector<8x128xf32>
    %810 = arith.divf %808, %809 : vector<8x128xf32>
    %811 = arith.index_cast %c14_i32 : i32 to index
    %c0_384 = arith.constant 0 : index
    %c128_385 = arith.constant 128 : index
    %812 = vector.load %arg12[%811, %c0_384, %c128_385] : memref<16x8x512xf32, #tpu.memory_space<vmem>>, vector<1x8x128xf32>
    %813 = vector.shape_cast %812 : vector<1x8x128xf32> to vector<8x128xf32>
    %c0_386 = arith.constant 0 : index
    %c128_387 = arith.constant 128 : index
    %814 = vector.load %arg5[%c0_386, %c128_387] : memref<128x512xf32, #tpu.memory_space<vmem>>, vector<128x128xf32>
    %cst_388 = arith.constant dense<0.000000e+00> : vector<8x128xf32>
    %815 = tpu.matmul %798, %814, %cst_388 {dimension_numbers = #tpu.dot_dimension_numbers<[1], [0], [0], [1], [0, 0, 1, 1], [], []>} : vector<8x128xf32>, vector<128x128xf32>, vector<8x128xf32> -> vector<8x128xf32>
    %816 = arith.addf %813, %815 : vector<8x128xf32>
    %817 = arith.negf %816 : vector<8x128xf32>
    %818 = math.exp %817 : vector<8x128xf32>
    %cst_389 = arith.constant 1.000000e+00 : f32
    %819 = vector.broadcast %cst_389 : f32 to vector<8x128xf32>
    %820 = arith.addf %819, %818 : vector<8x128xf32>
    %821 = arith.divf %819, %820 : vector<8x128xf32>
    %822 = arith.index_cast %c14_i32 : i32 to index
    %c0_390 = arith.constant 0 : index
    %c256_391 = arith.constant 256 : index
    %823 = vector.load %arg12[%822, %c0_390, %c256_391] : memref<16x8x512xf32, #tpu.memory_space<vmem>>, vector<1x8x128xf32>
    %824 = vector.shape_cast %823 : vector<1x8x128xf32> to vector<8x128xf32>
    %c0_392 = arith.constant 0 : index
    %c256_393 = arith.constant 256 : index
    %825 = vector.load %arg5[%c0_392, %c256_393] : memref<128x512xf32, #tpu.memory_space<vmem>>, vector<128x128xf32>
    %cst_394 = arith.constant dense<0.000000e+00> : vector<8x128xf32>
    %826 = tpu.matmul %798, %825, %cst_394 {dimension_numbers = #tpu.dot_dimension_numbers<[1], [0], [0], [1], [0, 0, 1, 1], [], []>} : vector<8x128xf32>, vector<128x128xf32>, vector<8x128xf32> -> vector<8x128xf32>
    %827 = arith.addf %824, %826 : vector<8x128xf32>
    %828 = math.tanh %827 : vector<8x128xf32>
    %829 = arith.mulf %821, %799 : vector<8x128xf32>
    %830 = arith.mulf %810, %828 : vector<8x128xf32>
    %831 = arith.addf %829, %830 : vector<8x128xf32>
    %832 = arith.index_cast %c14_i32 : i32 to index
    %c0_395 = arith.constant 0 : index
    %c384_396 = arith.constant 384 : index
    %833 = vector.load %arg12[%832, %c0_395, %c384_396] : memref<16x8x512xf32, #tpu.memory_space<vmem>>, vector<1x8x128xf32>
    %834 = vector.shape_cast %833 : vector<1x8x128xf32> to vector<8x128xf32>
    %c0_397 = arith.constant 0 : index
    %c384_398 = arith.constant 384 : index
    %835 = vector.load %arg5[%c0_397, %c384_398] : memref<128x512xf32, #tpu.memory_space<vmem>>, vector<128x128xf32>
    %cst_399 = arith.constant dense<0.000000e+00> : vector<8x128xf32>
    %836 = tpu.matmul %798, %835, %cst_399 {dimension_numbers = #tpu.dot_dimension_numbers<[1], [0], [0], [1], [0, 0, 1, 1], [], []>} : vector<8x128xf32>, vector<128x128xf32>, vector<8x128xf32> -> vector<8x128xf32>
    %837 = arith.addf %834, %836 : vector<8x128xf32>
    %838 = arith.negf %837 : vector<8x128xf32>
    %839 = math.exp %838 : vector<8x128xf32>
    %cst_400 = arith.constant 1.000000e+00 : f32
    %840 = vector.broadcast %cst_400 : f32 to vector<8x128xf32>
    %841 = arith.addf %840, %839 : vector<8x128xf32>
    %842 = arith.divf %840, %841 : vector<8x128xf32>
    %843 = math.tanh %831 : vector<8x128xf32>
    %844 = arith.mulf %842, %843 : vector<8x128xf32>
    %845 = arith.addi %13, %c14_i32 : i32
    %846 = vector.broadcast %845 : i32 to vector<8x128xi32>
    %847 = arith.cmpi slt, %846, %12 : vector<8x128xi32>
    %cst_401 = arith.constant 0.000000e+00 : f32
    %848 = vector.broadcast %cst_401 : f32 to vector<8x128xf32>
    %849 = arith.select %847, %844, %848 : vector<8x128xi1>, vector<8x128xf32>
    %850 = arith.index_cast %c14_i32 : i32 to index
    %c0_402 = arith.constant 0 : index
    %c0_403 = arith.constant 0 : index
    %851 = vector.load %arg7[%850, %c0_402, %c0_403] : memref<16x8x128xf32, #tpu.memory_space<vmem>>, vector<1x8x128xf32>
    %852 = vector.shape_cast %851 : vector<1x8x128xf32> to vector<8x128xf32>
    %853 = vector.shape_cast %849 : vector<8x128xf32> to vector<1x8x128xf32>
    tpu.vector_store %arg7[%850, %c0_402, %c0_403], %853 {strides = array<i32>} : memref<16x8x128xf32, #tpu.memory_space<vmem>>, vector<1x8x128xf32>,
    %854 = arith.select %847, %844, %798 : vector<8x128xi1>, vector<8x128xf32>
    %855 = arith.select %847, %831, %799 : vector<8x128xi1>, vector<8x128xf32>
    %c15_i32 = arith.constant 15 : i32
    %856 = arith.index_cast %c15_i32 : i32 to index
    %c0_404 = arith.constant 0 : index
    %c0_405 = arith.constant 0 : index
    %857 = vector.load %arg12[%856, %c0_404, %c0_405] : memref<16x8x512xf32, #tpu.memory_space<vmem>>, vector<1x8x128xf32>
    %858 = vector.shape_cast %857 : vector<1x8x128xf32> to vector<8x128xf32>
    %c0_406 = arith.constant 0 : index
    %c0_407 = arith.constant 0 : index
    %859 = vector.load %arg5[%c0_406, %c0_407] : memref<128x512xf32, #tpu.memory_space<vmem>>, vector<128x128xf32>
    %cst_408 = arith.constant dense<0.000000e+00> : vector<8x128xf32>
    %860 = tpu.matmul %854, %859, %cst_408 {dimension_numbers = #tpu.dot_dimension_numbers<[1], [0], [0], [1], [0, 0, 1, 1], [], []>} : vector<8x128xf32>, vector<128x128xf32>, vector<8x128xf32> -> vector<8x128xf32>
    %861 = arith.addf %858, %860 : vector<8x128xf32>
    %862 = arith.negf %861 : vector<8x128xf32>
    %863 = math.exp %862 : vector<8x128xf32>
    %cst_409 = arith.constant 1.000000e+00 : f32
    %864 = vector.broadcast %cst_409 : f32 to vector<8x128xf32>
    %865 = arith.addf %864, %863 : vector<8x128xf32>
    %866 = arith.divf %864, %865 : vector<8x128xf32>
    %867 = arith.index_cast %c15_i32 : i32 to index
    %c0_410 = arith.constant 0 : index
    %c128_411 = arith.constant 128 : index
    %868 = vector.load %arg12[%867, %c0_410, %c128_411] : memref<16x8x512xf32, #tpu.memory_space<vmem>>, vector<1x8x128xf32>
    %869 = vector.shape_cast %868 : vector<1x8x128xf32> to vector<8x128xf32>
    %c0_412 = arith.constant 0 : index
    %c128_413 = arith.constant 128 : index
    %870 = vector.load %arg5[%c0_412, %c128_413] : memref<128x512xf32, #tpu.memory_space<vmem>>, vector<128x128xf32>
    %cst_414 = arith.constant dense<0.000000e+00> : vector<8x128xf32>
    %871 = tpu.matmul %854, %870, %cst_414 {dimension_numbers = #tpu.dot_dimension_numbers<[1], [0], [0], [1], [0, 0, 1, 1], [], []>} : vector<8x128xf32>, vector<128x128xf32>, vector<8x128xf32> -> vector<8x128xf32>
    %872 = arith.addf %869, %871 : vector<8x128xf32>
    %873 = arith.negf %872 : vector<8x128xf32>
    %874 = math.exp %873 : vector<8x128xf32>
    %cst_415 = arith.constant 1.000000e+00 : f32
    %875 = vector.broadcast %cst_415 : f32 to vector<8x128xf32>
    %876 = arith.addf %875, %874 : vector<8x128xf32>
    %877 = arith.divf %875, %876 : vector<8x128xf32>
    %878 = arith.index_cast %c15_i32 : i32 to index
    %c0_416 = arith.constant 0 : index
    %c256_417 = arith.constant 256 : index
    %879 = vector.load %arg12[%878, %c0_416, %c256_417] : memref<16x8x512xf32, #tpu.memory_space<vmem>>, vector<1x8x128xf32>
    %880 = vector.shape_cast %879 : vector<1x8x128xf32> to vector<8x128xf32>
    %c0_418 = arith.constant 0 : index
    %c256_419 = arith.constant 256 : index
    %881 = vector.load %arg5[%c0_418, %c256_419] : memref<128x512xf32, #tpu.memory_space<vmem>>, vector<128x128xf32>
    %cst_420 = arith.constant dense<0.000000e+00> : vector<8x128xf32>
    %882 = tpu.matmul %854, %881, %cst_420 {dimension_numbers = #tpu.dot_dimension_numbers<[1], [0], [0], [1], [0, 0, 1, 1], [], []>} : vector<8x128xf32>, vector<128x128xf32>, vector<8x128xf32> -> vector<8x128xf32>
    %883 = arith.addf %880, %882 : vector<8x128xf32>
    %884 = math.tanh %883 : vector<8x128xf32>
    %885 = arith.mulf %877, %855 : vector<8x128xf32>
    %886 = arith.mulf %866, %884 : vector<8x128xf32>
    %887 = arith.addf %885, %886 : vector<8x128xf32>
    %888 = arith.index_cast %c15_i32 : i32 to index
    %c0_421 = arith.constant 0 : index
    %c384_422 = arith.constant 384 : index
    %889 = vector.load %arg12[%888, %c0_421, %c384_422] : memref<16x8x512xf32, #tpu.memory_space<vmem>>, vector<1x8x128xf32>
    %890 = vector.shape_cast %889 : vector<1x8x128xf32> to vector<8x128xf32>
    %c0_423 = arith.constant 0 : index
    %c384_424 = arith.constant 384 : index
    %891 = vector.load %arg5[%c0_423, %c384_424] : memref<128x512xf32, #tpu.memory_space<vmem>>, vector<128x128xf32>
    %cst_425 = arith.constant dense<0.000000e+00> : vector<8x128xf32>
    %892 = tpu.matmul %854, %891, %cst_425 {dimension_numbers = #tpu.dot_dimension_numbers<[1], [0], [0], [1], [0, 0, 1, 1], [], []>} : vector<8x128xf32>, vector<128x128xf32>, vector<8x128xf32> -> vector<8x128xf32>
    %893 = arith.addf %890, %892 : vector<8x128xf32>
    %894 = arith.negf %893 : vector<8x128xf32>
    %895 = math.exp %894 : vector<8x128xf32>
    %cst_426 = arith.constant 1.000000e+00 : f32
    %896 = vector.broadcast %cst_426 : f32 to vector<8x128xf32>
    %897 = arith.addf %896, %895 : vector<8x128xf32>
    %898 = arith.divf %896, %897 : vector<8x128xf32>
    %899 = math.tanh %887 : vector<8x128xf32>
    %900 = arith.mulf %898, %899 : vector<8x128xf32>
    %901 = arith.addi %13, %c15_i32 : i32
    %902 = vector.broadcast %901 : i32 to vector<8x128xi32>
    %903 = arith.cmpi slt, %902, %12 : vector<8x128xi32>
    %cst_427 = arith.constant 0.000000e+00 : f32
    %904 = vector.broadcast %cst_427 : f32 to vector<8x128xf32>
    %905 = arith.select %903, %900, %904 : vector<8x128xi1>, vector<8x128xf32>
    %906 = arith.index_cast %c15_i32 : i32 to index
    %c0_428 = arith.constant 0 : index
    %c0_429 = arith.constant 0 : index
    %907 = vector.load %arg7[%906, %c0_428, %c0_429] : memref<16x8x128xf32, #tpu.memory_space<vmem>>, vector<1x8x128xf32>
    %908 = vector.shape_cast %907 : vector<1x8x128xf32> to vector<8x128xf32>
    %909 = vector.shape_cast %905 : vector<8x128xf32> to vector<1x8x128xf32>
    tpu.vector_store %arg7[%906, %c0_428, %c0_429], %909 {strides = array<i32>} : memref<16x8x128xf32, #tpu.memory_space<vmem>>, vector<1x8x128xf32>,
    %910 = arith.select %903, %900, %854 : vector<8x128xi1>, vector<8x128xf32>
    %911 = arith.select %903, %887, %855 : vector<8x128xi1>, vector<8x128xf32>
    %c16_i32_430 = arith.constant 16 : i32
    %c0_431 = arith.constant 0 : index
    %c0_432 = arith.constant 0 : index
    %912 = vector.load %arg10[%c0_431, %c0_432] : memref<8x128xf32, #tpu.memory_space<vmem>>, vector<8x128xf32>
    tpu.vector_store %arg10[%c0_431, %c0_432], %910 {strides = array<i32>} : memref<8x128xf32, #tpu.memory_space<vmem>>, vector<8x128xf32>,
    %c0_433 = arith.constant 0 : index
    %c0_434 = arith.constant 0 : index
    %913 = vector.load %arg11[%c0_433, %c0_434] : memref<8x128xf32, #tpu.memory_space<vmem>>, vector<8x128xf32>
    tpu.vector_store %arg11[%c0_433, %c0_434], %911 {strides = array<i32>} : memref<8x128xf32, #tpu.memory_space<vmem>>, vector<8x128xf32>,
    %c2_i32_435 = arith.constant 2 : i32
    %914 = arith.cmpi eq, %arg1, %c2_i32_435 : i32
    %915 = arith.extui %914 : i1 to i32
    %c0_i32_436 = arith.constant 0 : i32
    %916 = arith.cmpi ne, %915, %c0_i32_436 : i32
    scf.if %916 {
      %c0_437 = arith.constant 0 : index
      %c0_438 = arith.constant 0 : index
      %c0_439 = arith.constant 0 : index
      %917 = vector.load %arg8[%c0_437, %c0_438, %c0_439] : memref<1x8x128xf32, #tpu.memory_space<vmem>>, vector<1x8x128xf32>
      %918 = vector.shape_cast %917 : vector<1x8x128xf32> to vector<8x128xf32>
      %919 = vector.shape_cast %910 : vector<8x128xf32> to vector<1x8x128xf32>
      tpu.vector_store %arg8[%c0_437, %c0_438, %c0_439], %919 {strides = array<i32>} : memref<1x8x128xf32, #tpu.memory_space<vmem>>, vector<1x8x128xf32>,
      %c0_440 = arith.constant 0 : index
      %c0_441 = arith.constant 0 : index
      %c0_442 = arith.constant 0 : index
      %920 = vector.load %arg9[%c0_440, %c0_441, %c0_442] : memref<1x8x128xf32, #tpu.memory_space<vmem>>, vector<1x8x128xf32>
      %921 = vector.shape_cast %920 : vector<1x8x128xf32> to vector<8x128xf32>
      %922 = vector.shape_cast %911 : vector<8x128xf32> to vector<1x8x128xf32>
      tpu.vector_store %arg9[%c0_440, %c0_441, %c0_442], %922 {strides = array<i32>} : memref<1x8x128xf32, #tpu.memory_space<vmem>>, vector<1x8x128xf32>,
    } else {
    }
    return
  }
  func.func @transform_0(%arg0: i32, %arg1: i32) -> (i32, i32) {
    %c0_i32 = arith.constant 0 : i32
    %c0_i32_0 = arith.constant 0 : i32
    return %arg0, %c0_i32 : i32, i32
  }
  func.func @transform_1(%arg0: i32, %arg1: i32) -> (i32, i32, i32) {
    %c0_i32 = arith.constant 0 : i32
    %c0_i32_0 = arith.constant 0 : i32
    return %arg1, %arg0, %c0_i32 : i32, i32, i32
  }
  func.func @transform_2(%arg0: i32, %arg1: i32) -> (i32, i32) {
    %c0_i32 = arith.constant 0 : i32
    %c0_i32_0 = arith.constant 0 : i32
    %c0_i32_1 = arith.constant 0 : i32
    return %c0_i32, %c0_i32_0 : i32, i32
  }
  func.func @transform_3(%arg0: i32, %arg1: i32) -> (i32, i32) {
    %c0_i32 = arith.constant 0 : i32
    %c0_i32_0 = arith.constant 0 : i32
    %c0_i32_1 = arith.constant 0 : i32
    return %c0_i32, %c0_i32_0 : i32, i32
  }
  func.func @transform_4(%arg0: i32, %arg1: i32) -> (i32, i32) {
    %c0_i32 = arith.constant 0 : i32
    %c0_i32_0 = arith.constant 0 : i32
    %c0_i32_1 = arith.constant 0 : i32
    return %c0_i32, %c0_i32_0 : i32, i32
  }
  func.func @transform_5(%arg0: i32, %arg1: i32) -> (i32, i32, i32) {
    %c0_i32 = arith.constant 0 : i32
    %c0_i32_0 = arith.constant 0 : i32
    return %arg1, %arg0, %c0_i32 : i32, i32, i32
  }
  func.func @transform_6(%arg0: i32, %arg1: i32) -> (i32, i32, i32) {
    %c0_i32 = arith.constant 0 : i32
    %c0_i32_0 = arith.constant 0 : i32
    %c0_i32_1 = arith.constant 0 : i32
    return %c0_i32, %arg0, %c0_i32_0 : i32, i32, i32
  }
  func.func @transform_7(%arg0: i32, %arg1: i32) -> (i32, i32, i32) {
    %c0_i32 = arith.constant 0 : i32
    %c0_i32_0 = arith.constant 0 : i32
    %c0_i32_1 = arith.constant 0 : i32
    return %c0_i32, %arg0, %c0_i32_0 : i32, i32, i32
  }
}

</mosaic_0001>

<llo_original>
// kernel: tpu_custom_call.1
$region0: #{tpu_custom_call.1}
  #allocation0 [shape = 'u32[]', space=smem, size = 0x4, offset = 0x4, fixed_abs, tag = 'smem constant byte address 0x4 - core index']
  #allocation1 [shape = 'u32[72,128]{1,0:T(1,128)}', space=vmem, size = 0x9000, scoped, tag = 'internal scratch']
  #allocation2 [shape = 'f32[8,128]{1,0:T(8,128)}', space=vmem, size = 0x1000, scoped, tag = 'scratch operand']
  #allocation3 [shape = 'f32[8,128]{1,0:T(8,128)}', space=vmem, size = 0x1000, scoped, tag = 'scratch operand']
  #allocation4 [shape = 'f32[16,8,512]{2,1,0:T(8,128)}', space=vmem, size = 0x40000, scoped, tag = 'scratch operand']
  %s0 = inlined_call_operand.vmem [shape: s32[16,128], index: 0, kind: input, shape index: {}]
  %s1 = inlined_call_operand.vmem [shape: f32[48,16,16], index: 1, kind: input, shape index: {}]
  %s2 = inlined_call_operand.vmem [shape: f32[16,512], index: 2, kind: input, shape index: {}]
  %s3 = inlined_call_operand.vmem [shape: f32[128,512], index: 3, kind: input, shape index: {}]
  %s4 = inlined_call_operand.vmem [shape: f32[1,512], index: 4, kind: input, shape index: {}]
  %s5 = inlined_call_operand.hbm [shape: f32[48,16,128], index: 5, kind: output, shape index: {0}]
  %s6 = inlined_call_operand.hbm [shape: f32[1,16,128], index: 6, kind: output, shape index: {1}]
  %s7 = inlined_call_operand.hbm [shape: f32[1,16,128], index: 7, kind: output, shape index: {2}]
  %8 = xla_tuple %s5, %s6, %s7
  %s9 = sld [smem:[#allocation0]]
  $region115: #{tpu_custom_call.1} parent=0
    _
  %s11 = ssub.s32 1, %s9
  %s12 = scalar_select 0, %s11, %s9
  $region1: #{tpu_custom_call.1} parent=0
    #allocation5 [shape = 'u8[131072]{0}', space=vmem, size = 0x20000, scoped, tag = 'input window, operand 1']
    #allocation6 [shape = 'u8[131072]{0}', space=vmem, size = 0x20000, scoped, tag = 'output window, operand 0']
    #allocation7 [shape = 's32[2]{0}', space=sflag, size = 0x8, scoped, tag = 'scoped memory for tpu_custom_call.1']
    #allocation8 [shape = 'u8[8192]{0}', space=vmem, size = 0x2000, scoped, tag = 'output window, operand 1']
    #allocation9 [shape = 's32[2]{0}', space=sflag, size = 0x8, scoped, tag = 'scoped memory for tpu_custom_call.1']
    #allocation10 [shape = 'u8[8192]{0}', space=vmem, size = 0x2000, scoped, tag = 'output window, operand 2']
    %13 = vsyncpa [#allocation7], 0
    %s14 = scalar_lea.sflag [#allocation7], 1
    %15 = vsyncpa %s14, 0
    %16 = vsyncpa [#allocation9], 0
    %s17 = scalar_lea.sflag [#allocation9], 1
    %18 = vsyncpa %s17, 0
    loop: start=0, step=1, limit=8
    $region2: #{tpu_custom_call.1} parent=1 // loop_pre_header
      _
    $region3: #{tpu_custom_call.1} parent=1 // loop_header
      %s20 = sphi 0, %s24
      %p21 = scmp.ge.s32.totalorder %s20, 8
      %s27 = sphi 0, %s39
      %s28 = sphi 0, %s35
      %s29 = sphi 0, %s27
      %s30 = sphi 0, %s28
      %s31 = sphi 0, %s29
      %s32 = sphi 0, %s30
      %s42 = sphi 0, %s44
      %s45 = sphi 0, %s42
      %s46 = sphi 0, %s45
      %s62 = sphi 0, %s46
      %s70 = sphi 0, %s72
      %s73 = sphi 0, %s70
      %s74 = sphi 0, %s73
      %s90 = sphi 0, %s74
      %s94 = sphi 0, %s94
      %s96 = sphi 0, %s94
      %s97 = sphi 0, %s96
      %s111 = sphi 0, %s97
      %s115 = sphi 0, %s115
      %s117 = sphi 0, %s115
      %s118 = sphi 0, %s117
      %s132 = sphi 0, %s118
      %s136 = sphi 0, %s136
      %s138 = sphi 0, %s136
      %s139 = sphi 0, %s138
      %s153 = sphi 0, %s139
      %s161 = sphi 0, %s163
      %s164 = sphi 0, %s161
      %s165 = sphi 0, %s164
      %s181 = sphi 0, %s165
      %s187 = sphi 0, %s189
      %s190 = sphi 0, %s187
      %s191 = sphi 0, %s190
      %s207 = sphi 0, %s191
      %s213 = sphi 0, %s215
      %s216 = sphi 0, %s213
      %s217 = sphi 0, %s216
      %s233 = sphi 0, %s217
    $region4: #{tpu_custom_call.1} parent=1 // loop_header_branch
      %23 = sbr.rel (%p21) target = $region8
    $region5: #{tpu_custom_call.1} parent=1 // loop_body
      %s25 = ssub.s32 %s20, 1
      %s26 = ssub.s32 %s20, 2
      %s33 = sadd.s32 1, %s28
      %p34 = scmp.ge.s32.totalorder %s33, 3
      %s35 = scalar_select %p34, 0, %s33
      %s36 = sadd.s32 1, %s27
      %s37 = scalar_select %p34, %s36, %s27
      %p38 = scmp.ge.s32.totalorder %s37, 2
      %s39 = scalar_select %p38, 0, %s37
      %s40 = ssub.s32 %s27, %s39
      %p41 = scmp.eq.s32.totalorder %s40, 0
      %s43 = sadd.s32 %s42, 1
      %s44 = scalar_select %p41, %s42, %s43
      %p47 = pneg %p41
      %p48 = scmp.eq.s32.totalorder %s20, 5
      %p49 = por %p47, %p48
      %p50 = scmp.ne.s32.totalorder %s42, %s45
      %p51 = scmp.eq.s32.totalorder %s20, 0
      %p52 = por %p50, %p51
      %p53 = scmp.ne.s32.totalorder %s42, %s45
      %p54 = scmp.eq.s32.totalorder %s25, 5
      %p55 = por %p53, %p54
      %p56 = scmp.ne.s32.totalorder %s45, %s46
      %p57 = scmp.eq.s32.totalorder %s25, 0
      %p58 = por %p56, %p57
      %p59 = scmp.ne.s32.totalorder %s45, %s46
      %p60 = scmp.eq.s32.totalorder %s26, 5
      %p61 = por %p59, %p60
      %p63 = scmp.ne.s32.totalorder %s46, %s62
      %p64 = scmp.eq.s32.totalorder %s26, 0
      %p65 = por %p63, %p64
      %s66 = ssub.s32 %s28, %s35
      %s67 = ssub.s32 %s27, %s39
      %s68 = sor.u32 %s66, %s67
      %p69 = scmp.eq.s32.totalorder %s68, 0
      %s71 = sadd.s32 %s70, 1
      %s72 = scalar_select %p69, %s70, %s71
      %p75 = pneg %p69
      %p76 = scmp.eq.s32.totalorder %s20, 5
      %p77 = por %p75, %p76
      %p78 = scmp.ne.s32.totalorder %s70, %s73
      %p79 = scmp.eq.s32.totalorder %s20, 0
      %p80 = por %p78, %p79
      %p81 = scmp.ne.s32.totalorder %s70, %s73
      %p82 = scmp.eq.s32.totalorder %s25, 5
      %p83 = por %p81, %p82
      %p84 = scmp.ne.s32.totalorder %s73, %s74
      %p85 = scmp.eq.s32.totalorder %s25, 0
      %p86 = por %p84, %p85
      %p87 = scmp.ne.s32.totalorder %s73, %s74
      %p88 = scmp.eq.s32.totalorder %s26, 5
      %p89 = por %p87, %p88
      %p91 = scmp.ne.s32.totalorder %s74, %s90
      %p92 = scmp.eq.s32.totalorder %s26, 0
      %p93 = por %p91, %p92
      %s95 = sadd.s32 %s94, 1
      %p98 = scmp.eq.s32.totalorder %s20, 5
      %p99 = scmp.ne.s32.totalorder %s94, %s96
      %p100 = scmp.eq.s32.totalorder %s20, 0
      %p101 = por %p99, %p100
      %p102 = scmp.ne.s32.totalorder %s94, %s96
      %p103 = scmp.eq.s32.totalorder %s25, 5
      %p104 = por %p102, %p103
      %p105 = scmp.ne.s32.totalorder %s96, %s97
      %p106 = scmp.eq.s32.totalorder %s25, 0
      %p107 = por %p105, %p106
      %p108 = scmp.ne.s32.totalorder %s96, %s97
      %p109 = scmp.eq.s32.totalorder %s26, 5
      %p110 = por %p108, %p109
      %p112 = scmp.ne.s32.totalorder %s97, %s111
      %p113 = scmp.eq.s32.totalorder %s26, 0
      %p114 = por %p112, %p113
      %s116 = sadd.s32 %s115, 1
      %p119 = scmp.eq.s32.totalorder %s20, 5
      %p120 = scmp.ne.s32.totalorder %s115, %s117
      %p121 = scmp.eq.s32.totalorder %s20, 0
      %p122 = por %p120, %p121
      %p123 = scmp.ne.s32.totalorder %s115, %s117
      %p124 = scmp.eq.s32.totalorder %s25, 5
      %p125 = por %p123, %p124
      %p126 = scmp.ne.s32.totalorder %s117, %s118
      %p127 = scmp.eq.s32.totalorder %s25, 0
      %p128 = por %p126, %p127
      %p129 = scmp.ne.s32.totalorder %s117, %s118
      %p130 = scmp.eq.s32.totalorder %s26, 5
      %p131 = por %p129, %p130
      %p133 = scmp.ne.s32.totalorder %s118, %s132
      %p134 = scmp.eq.s32.totalorder %s26, 0
      %p135 = por %p133, %p134
      %s137 = sadd.s32 %s136, 1
      %p140 = scmp.eq.s32.totalorder %s20, 5
      %p141 = scmp.ne.s32.totalorder %s136, %s138
      %p142 = scmp.eq.s32.totalorder %s20, 0
      %p143 = por %p141, %p142
      %p144 = scmp.ne.s32.totalorder %s136, %s138
      %p145 = scmp.eq.s32.totalorder %s25, 5
      %p146 = por %p144, %p145
      %p147 = scmp.ne.s32.totalorder %s138, %s139
      %p148 = scmp.eq.s32.totalorder %s25, 0
      %p149 = por %p147, %p148
      %p150 = scmp.ne.s32.totalorder %s138, %s139
      %p151 = scmp.eq.s32.totalorder %s26, 5
      %p152 = por %p150, %p151
      %p154 = scmp.ne.s32.totalorder %s139, %s153
      %p155 = scmp.eq.s32.totalorder %s26, 0
      %p156 = por %p154, %p155
      %s157 = ssub.s32 %s28, %s35
      %s158 = ssub.s32 %s27, %s39
      %s159 = sor.u32 %s157, %s158
      %p160 = scmp.eq.s32.totalorder %s159, 0
      %s162 = sadd.s32 %s161, 1
      %s163 = scalar_select %p160, %s161, %s162
      %p166 = pneg %p160
      %p167 = scmp.eq.s32.totalorder %s20, 5
      %p168 = por %p166, %p167
      %p169 = scmp.ne.s32.totalorder %s161, %s164
      %p170 = scmp.eq.s32.totalorder %s20, 0
      %p171 = por %p169, %p170
      %p172 = scmp.ne.s32.totalorder %s161, %s164
      %p173 = scmp.eq.s32.totalorder %s25, 5
      %p174 = por %p172, %p173
      %p175 = scmp.ne.s32.totalorder %s164, %s165
      %p176 = scmp.eq.s32.totalorder %s25, 0
      %p177 = por %p175, %p176
      %p178 = scmp.ne.s32.totalorder %s164, %s165
      %p179 = scmp.eq.s32.totalorder %s26, 5
      %p180 = por %p178, %p179
      %p182 = scmp.ne.s32.totalorder %s165, %s181
      %p183 = scmp.eq.s32.totalorder %s26, 0
      %p184 = por %p182, %p183
      %s185 = ssub.s32 %s27, %s39
      %p186 = scmp.eq.s32.totalorder %s185, 0
      %s188 = sadd.s32 %s187, 1
      %s189 = scalar_select %p186, %s187, %s188
      %p192 = pneg %p186
      %p193 = scmp.eq.s32.totalorder %s20, 5
      %p194 = por %p192, %p193
      %p195 = scmp.ne.s32.totalorder %s187, %s190
      %p196 = scmp.eq.s32.totalorder %s20, 0
      %p197 = por %p195, %p196
      %p198 = scmp.ne.s32.totalorder %s187, %s190
      %p199 = scmp.eq.s32.totalorder %s25, 5
      %p200 = por %p198, %p199
      %p201 = scmp.ne.s32.totalorder %s190, %s191
      %p202 = scmp.eq.s32.totalorder %s25, 0
      %p203 = por %p201, %p202
      %p204 = scmp.ne.s32.totalorder %s190, %s191
      %p205 = scmp.eq.s32.totalorder %s26, 5
      %p206 = por %p204, %p205
      %p208 = scmp.ne.s32.totalorder %s191, %s207
      %p209 = scmp.eq.s32.totalorder %s26, 0
      %p210 = por %p208, %p209
      %s211 = ssub.s32 %s27, %s39
      %p212 = scmp.eq.s32.totalorder %s211, 0
      %s214 = sadd.s32 %s213, 1
      %s215 = scalar_select %p212, %s213, %s214
      %p218 = pneg %p212
      %p219 = scmp.eq.s32.totalorder %s20, 5
      %p220 = por %p218, %p219
      %p221 = scmp.ne.s32.totalorder %s213, %s216
      %p222 = scmp.eq.s32.totalorder %s20, 0
      %p223 = por %p221, %p222
      %p224 = scmp.ne.s32.totalorder %s213, %s216
      %p225 = scmp.eq.s32.totalorder %s25, 5
      %p226 = por %p224, %p225
      %p227 = scmp.ne.s32.totalorder %s216, %s217
      %p228 = scmp.eq.s32.totalorder %s25, 0
      %p229 = por %p227, %p228
      %p230 = scmp.ne.s32.totalorder %s216, %s217
      %p231 = scmp.eq.s32.totalorder %s26, 5
      %p232 = por %p230, %p231
      %p234 = scmp.ne.s32.totalorder %s217, %s233
      %p235 = scmp.eq.s32.totalorder %s26, 0
      %p236 = por %p234, %p235
      %p237 = scmp.le.s32.totalorder 1, %s20
      %p238 = scmp.lt.s32.totalorder %s20, 7
      %p239 = pnand %p237, %p238
      %p240 = pneg %p239
      // Predicated region
      $region9: #{tpu_custom_call.1} parent=5 // pred_check
        _
      $region10: #{tpu_custom_call.1} parent=5 // pred_check_branch
        %242 = sbr.rel (%p239) target = $region12
      $region11: #{tpu_custom_call.1} parent=5 // pred_region
        %s243 = ssub.s32 %s20, 1
        // Predicated region
        $region13: #{tpu_custom_call.1} parent=11 // pred_check
          %p244 = pneg %p107
        $region14: #{tpu_custom_call.1} parent=11 // pred_check_branch
          %246 = sbr.rel (%p244) target = $region16
        $region15: #{tpu_custom_call.1} parent=11 // pred_region
          _
        $region16: #{tpu_custom_call.1} parent=11 // pred_fallthru
          _
        // Predicated region
        $region17: #{tpu_custom_call.1} parent=11 // pred_check
          %p247 = pneg %p128
        $region18: #{tpu_custom_call.1} parent=11 // pred_check_branch
          %249 = sbr.rel (%p247) target = $region20
        $region19: #{tpu_custom_call.1} parent=11 // pred_region
          _
        $region20: #{tpu_custom_call.1} parent=11 // pred_fallthru
          _
        // Predicated region
        $region21: #{tpu_custom_call.1} parent=11 // pred_check
          %p250 = pneg %p149
        $region22: #{tpu_custom_call.1} parent=11 // pred_check_branch
          %252 = sbr.rel (%p250) target = $region24
        $region23: #{tpu_custom_call.1} parent=11 // pred_region
          _
        $region24: #{tpu_custom_call.1} parent=11 // pred_fallthru
          _
      $region12: #{tpu_custom_call.1} parent=5 // pred_fallthru
        _
      %p253 = scmp.lt.s32.totalorder %s20, 6
      // Predicated region
      $region25: #{tpu_custom_call.1} parent=5 // pred_check
        %p254 = pneg %p253
      $region26: #{tpu_custom_call.1} parent=5 // pred_check_branch
        %256 = sbr.rel (%p254) target = $region28
      $region27: #{tpu_custom_call.1} parent=5 // pred_region
        // Predicated region
        $region29: #{tpu_custom_call.1} parent=27 // pred_check
          %p257 = pneg %p52
        $region30: #{tpu_custom_call.1} parent=27 // pred_check_branch
          %259 = sbr.rel (%p257) target = $region32
        $region31: #{tpu_custom_call.1} parent=27 // pred_region
          %p260 = scmp.lt.s32.totalorder %s27, 1
          %s261 = scalar_select %p260, %s27, 1
          %s262 = smul.addr %s261, 8
          %s263 = scalar_lea.vmem %s0, %s262
        $region32: #{tpu_custom_call.1} parent=27 // pred_fallthru
          _
        // Predicated region
        $region33: #{tpu_custom_call.1} parent=27 // pred_check
          %p264 = pneg %p80
        $region34: #{tpu_custom_call.1} parent=27 // pred_check_branch
          %266 = sbr.rel (%p264) target = $region36
        $region35: #{tpu_custom_call.1} parent=27 // pred_region
          %s267 = sand.u32 %s70, 1
          %s268 = sand.u32 %s70, 1
          %s269 = smul.addr %s268, 128
          %s270 = scalar_lea.vmem [#allocation5], %s269
          %s271 = smul.u32 16, %s28
          %s272 = smul.addr %s271, 2
          %s273 = sadd.s32 %s27, %s272
          %s274 = smul.addr %s273, 8
          %s275 = scalar_lea.vmem %s1, %s274
          // Predicated region
          $region37: #{tpu_custom_call.1} parent=35 // pred_check
            _
          $region38: #{tpu_custom_call.1} parent=35 // pred_check_branch
            %277 = sbr.rel (0) target = $region40
          $region39: #{tpu_custom_call.1} parent=35 // pred_region
            // Predicated region
            $region41: #{tpu_custom_call.1} parent=39 // pred_check
              _
            $region42: #{tpu_custom_call.1} parent=39 // pred_check_branch
              %279 = sbr.rel (0) target = $region44
            $region43: #{tpu_custom_call.1} parent=39 // pred_region
              // Predicated region
              $region56: #{tpu_custom_call.1} parent=43 // pred_check
                _
              $region57: #{tpu_custom_call.1} parent=43 // pred_check_branch
                %325 = sbr.rel (0) target = $region59
              $region58: #{tpu_custom_call.1} parent=43 // pred_region
                loop: start=0, step=1, limit=1
                $region60: #{tpu_custom_call.1} parent=58 // loop_pre_header
                  _
                $region61: #{tpu_custom_call.1} parent=58 // loop_header
                  %s327 = sphi 0, %s331
                  %p328 = scmp.ge.s32.totalorder %s327, 1
                  %s332 = sphi %s275, %s275
                  %s333 = sphi %s270, %s270
                $region62: #{tpu_custom_call.1} parent=58 // loop_header_branch
                  %330 = sbr.rel (%p328) target = $region66
                $region63: #{tpu_custom_call.1} parent=58 // loop_body
                  %v334 = vld [vmem:[%s332] sm:$0xff]
                  %335 = vst [vmem:[%s333] sm:$0xff] %v334
                  %v336 = vld [vmem:[%s332 + $0x10] sm:$0xff]
                  %337 = vst [vmem:[%s333 + $0x8] sm:$0xff] %v336
                  %v338 = vld [vmem:[%s332 + $0x20] sm:$0xff]
                  %339 = vst [vmem:[%s333 + $0x10] sm:$0xff] %v338
                  %v340 = vld [vmem:[%s332 + $0x30] sm:$0xff]
                  %341 = vst [vmem:[%s333 + $0x18] sm:$0xff] %v340
                  %v342 = vld [vmem:[%s332 + $0x40] sm:$0xff]
                  %343 = vst [vmem:[%s333 + $0x20] sm:$0xff] %v342
                  %v344 = vld [vmem:[%s332 + $0x50] sm:$0xff]
                  %345 = vst [vmem:[%s333 + $0x28] sm:$0xff] %v344
                  %v346 = vld [vmem:[%s332 + $0x60] sm:$0xff]
                  %347 = vst [vmem:[%s333 + $0x30] sm:$0xff] %v346
                  %v348 = vld [vmem:[%s332 + $0x70] sm:$0xff]
                  %349 = vst [vmem:[%s333 + $0x38] sm:$0xff] %v348
                  %v350 = vld [vmem:[%s332 + $0x80] sm:$0xff]
                  %351 = vst [vmem:[%s333 + $0x40] sm:$0xff] %v350
                  %v352 = vld [vmem:[%s332 + $0x90] sm:$0xff]
                  %353 = vst [vmem:[%s333 + $0x48] sm:$0xff] %v352
                  %v354 = vld [vmem:[%s332 + $0xa0] sm:$0xff]
                  %355 = vst [vmem:[%s333 + $0x50] sm:$0xff] %v354
                  %v356 = vld [vmem:[%s332 + $0xb0] sm:$0xff]
                  %357 = vst [vmem:[%s333 + $0x58] sm:$0xff] %v356
                  %v358 = vld [vmem:[%s332 + $0xc0] sm:$0xff]
                  %359 = vst [vmem:[%s333 + $0x60] sm:$0xff] %v358
                  %v360 = vld [vmem:[%s332 + $0xd0] sm:$0xff]
                  %361 = vst [vmem:[%s333 + $0x68] sm:$0xff] %v360
                  %v362 = vld [vmem:[%s332 + $0xe0] sm:$0xff]
                  %363 = vst [vmem:[%s333 + $0x70] sm:$0xff] %v362
                  %v364 = vld [vmem:[%s332 + $0xf0] sm:$0xff]
                  %365 = vst [vmem:[%s333 + $0x78] sm:$0xff] %v364
                $region64: #{tpu_custom_call.1} parent=58 // loop_footer
                  %s331 = sadd.s32 1, %s327
                $region65: #{tpu_custom_call.1} parent=58 // loop_footer_branch
                  %326 = sbr.rel target = $region61
                $region66: #{tpu_custom_call.1} parent=58 // loop_exit
                  _
              $region59: #{tpu_custom_call.1} parent=43 // pred_fallthru
                _
              // Predicated region
              $region67: #{tpu_custom_call.1} parent=43 // pred_check
                _
              $region68: #{tpu_custom_call.1} parent=43 // pred_check_branch
                %367 = sbr.rel target = $region70
              $region69: #{tpu_custom_call.1} parent=43 // pred_region
                _
              $region70: #{tpu_custom_call.1} parent=43 // pred_fallthru
                _
            $region44: #{tpu_custom_call.1} parent=39 // pred_fallthru
              _
            // Predicated region
            $region45: #{tpu_custom_call.1} parent=39 // pred_check
              _
            $region46: #{tpu_custom_call.1} parent=39 // pred_check_branch
              %281 = sbr.rel target = $region48
            $region47: #{tpu_custom_call.1} parent=39 // pred_region
              %s283 = ssub.s32 256, 1
              loop: start=0, step=1, limit=1
              $region49: #{tpu_custom_call.1} parent=47 // loop_pre_header
                _
              $region50: #{tpu_custom_call.1} parent=47 // loop_header
                %s285 = sphi 0, %s289
                %p286 = scmp.ge.s32.totalorder %s285, 1
                %s290 = sphi %s275, %s275
                %s291 = sphi %s270, %s270
              $region51: #{tpu_custom_call.1} parent=47 // loop_header_branch
                %288 = sbr.rel (%p286) target = $region55
              $region52: #{tpu_custom_call.1} parent=47 // loop_body
                %v292 = vld [vmem:[%s290] sm:%s283]
                %293 = vst [vmem:[%s291] sm:%s283] %v292
                %v294 = vld [vmem:[%s290 + $0x10] sm:%s283]
                %295 = vst [vmem:[%s291 + $0x8] sm:%s283] %v294
                %v296 = vld [vmem:[%s290 + $0x20] sm:%s283]
                %297 = vst [vmem:[%s291 + $0x10] sm:%s283] %v296
                %v298 = vld [vmem:[%s290 + $0x30] sm:%s283]
                %299 = vst [vmem:[%s291 + $0x18] sm:%s283] %v298
                %v300 = vld [vmem:[%s290 + $0x40] sm:%s283]
                %301 = vst [vmem:[%s291 + $0x20] sm:%s283] %v300
                %v302 = vld [vmem:[%s290 + $0x50] sm:%s283]
                %303 = vst [vmem:[%s291 + $0x28] sm:%s283] %v302
                %v304 = vld [vmem:[%s290 + $0x60] sm:%s283]
                %305 = vst [vmem:[%s291 + $0x30] sm:%s283] %v304
                %v306 = vld [vmem:[%s290 + $0x70] sm:%s283]
                %307 = vst [vmem:[%s291 + $0x38] sm:%s283] %v306
                %v308 = vld [vmem:[%s290 + $0x80] sm:%s283]
                %309 = vst [vmem:[%s291 + $0x40] sm:%s283] %v308
                %v310 = vld [vmem:[%s290 + $0x90] sm:%s283]
                %311 = vst [vmem:[%s291 + $0x48] sm:%s283] %v310
                %v312 = vld [vmem:[%s290 + $0xa0] sm:%s283]
                %313 = vst [vmem:[%s291 + $0x50] sm:%s283] %v312
                %v314 = vld [vmem:[%s290 + $0xb0] sm:%s283]
                %315 = vst [vmem:[%s291 + $0x58] sm:%s283] %v314
                %v316 = vld [vmem:[%s290 + $0xc0] sm:%s283]
                %317 = vst [vmem:[%s291 + $0x60] sm:%s283] %v316
                %v318 = vld [vmem:[%s290 + $0xd0] sm:%s283]
                %319 = vst [vmem:[%s291 + $0x68] sm:%s283] %v318
                %v320 = vld [vmem:[%s290 + $0xe0] sm:%s283]
                %321 = vst [vmem:[%s291 + $0x70] sm:%s283] %v320
                %v322 = vld [vmem:[%s290 + $0xf0] sm:%s283]
                %323 = vst [vmem:[%s291 + $0x78] sm:%s283] %v322
              $region53: #{tpu_custom_call.1} parent=47 // loop_footer
                %s289 = sadd.s32 1, %s285
              $region54: #{tpu_custom_call.1} parent=47 // loop_footer_branch
                %284 = sbr.rel target = $region50
              $region55: #{tpu_custom_call.1} parent=47 // loop_exit
                _
            $region48: #{tpu_custom_call.1} parent=39 // pred_fallthru
              _
          $region40: #{tpu_custom_call.1} parent=35 // pred_fallthru
            _
          %368 = vnop
        $region36: #{tpu_custom_call.1} parent=27 // pred_fallthru
          _
      $region28: #{tpu_custom_call.1} parent=5 // pred_fallthru
        _
      %p369 = scmp.le.s32.totalorder 1, %s20
      %p370 = scmp.lt.s32.totalorder %s20, 7
      %p371 = pnand %p369, %p370
      %p372 = pneg %p371
      // Predicated region
      $region71: #{tpu_custom_call.1} parent=5 // pred_check
        _
      $region72: #{tpu_custom_call.1} parent=5 // pred_check_branch
        %374 = sbr.rel (%p371) target = $region74
      $region73: #{tpu_custom_call.1} parent=5 // pred_region
        %s375 = ssub.s32 %s20, 1
        %s376 = sand.u32 %s73, 1
        %s377 = sand.u32 %s73, 1
        %s378 = smul.addr %s377, 128
        %s379 = scalar_lea.vmem [#allocation5], %s378
        // Predicated region
        $region75: #{tpu_custom_call.1} parent=73 // pred_check
          %p380 = pneg %p86
        $region76: #{tpu_custom_call.1} parent=73 // pred_check_branch
          %382 = sbr.rel (%p380) target = $region78
        $region77: #{tpu_custom_call.1} parent=73 // pred_region
          _
        $region78: #{tpu_custom_call.1} parent=73 // pred_fallthru
          _
        %p383 = scmp.lt.s32.totalorder %s29, 1
        %s384 = scalar_select %p383, %s29, 1
        %s385 = smul.addr %s384, 8
        %s386 = scalar_lea.vmem %s0, %s385
        %p387 = pneg %p58
        %p388 = pneg %p55
        %s389 = sand.u32 %s73, 1
        %s390 = sand.u32 %s73, 1
        %s391 = smul.addr %s390, 128
        %s392 = scalar_lea.vmem [#allocation5], %s391
        %p393 = pneg %p86
        %p394 = pneg %p83
        %p395 = pneg %p107
        %p396 = pneg %p104
        %p397 = pneg %p128
        %p398 = pneg %p125
        %p399 = pneg %p149
        %p400 = pneg %p146
        %p401 = pneg %p177
        %p402 = pneg %p174
        %s403 = sand.u32 %s164, 1
        %s404 = scalar_lea.sflag [#allocation7], %s403
        %s405 = sand.u32 %s164, 1
        %s406 = smul.addr %s405, 128
        %s407 = scalar_lea.vmem [#allocation6], %s406
        %p408 = pneg %p203
        %p409 = pneg %p200
        %s410 = sand.u32 %s25, 1
        %s411 = scalar_lea.sflag [#allocation9], %s410
        %s412 = sand.u32 %s190, 1
        %s413 = smul.addr %s412, 8
        %s414 = scalar_lea.vmem [#allocation8], %s413
        %p415 = pneg %p229
        %p416 = pneg %p226
        %s417 = sand.u32 %s25, 1
        %s418 = scalar_lea.sflag [#allocation9], %s417
        %s419 = sand.u32 %s216, 1
        %s420 = smul.addr %s419, 8
        %s421 = scalar_lea.vmem [#allocation10], %s420
        %p422 = scmp.lt.s32.totalorder %s29, 1
        %s423 = scalar_select %p422, %s29, 1
        %s424 = smul.addr %s423, 8
        %s425 = scalar_lea.vmem %s0, %s424
        %s426 = smul.u32 16, %s30
        %s427 = smul.u32 16, %s30
        %p428 = scmp.eq.s32.totalorder %s30, 0
        // Predicated region
        $region79: #{tpu_custom_call.1} parent=73 // pred_check
          %p429 = pneg %p428
        $region80: #{tpu_custom_call.1} parent=73 // pred_check_branch
          %431 = sbr.rel (%p429) target = $region82
        $region81: #{tpu_custom_call.1} parent=73 // pred_region
          %432 = vst [vmem:[#allocation2] sm:$0xff] 0.0
          %433 = vst [vmem:[#allocation3] sm:$0xff] 0.0
        $region82: #{tpu_custom_call.1} parent=73 // pred_fallthru
          _
        %v434 = vld [vmem:[%s379] sm:$0xff]
        %v435 = vld [vmem:[%s379 + $0x8] sm:$0xff]
        %v436 = vld [vmem:[%s379 + $0x10] sm:$0xff]
        %v437 = vld [vmem:[%s379 + $0x18] sm:$0xff]
        %v438 = vld [vmem:[%s379 + $0x20] sm:$0xff]
        %v439 = vld [vmem:[%s379 + $0x28] sm:$0xff]
        %v440 = vld [vmem:[%s379 + $0x30] sm:$0xff]
        %v441 = vld [vmem:[%s379 + $0x38] sm:$0xff]
        %v442 = vld [vmem:[%s379 + $0x40] sm:$0xff]
        %v443 = vld [vmem:[%s379 + $0x48] sm:$0xff]
        %v444 = vld [vmem:[%s379 + $0x50] sm:$0xff]
        %v445 = vld [vmem:[%s379 + $0x58] sm:$0xff]
        %v446 = vld [vmem:[%s379 + $0x60] sm:$0xff]
        %v447 = vld [vmem:[%s379 + $0x68] sm:$0xff]
        %v448 = vld [vmem:[%s379 + $0x70] sm:$0xff]
        %v449 = vld [vmem:[%s379 + $0x78] sm:$0xff]
        %v450 = vld [vmem:[%s2] sm:$0xff]
        %v451 = vld [vmem:[%s2 + $0x8] sm:$0xff]
        %v452 = vld [vmem:[%s2 + $0x10] sm:$0xff]
        %v453 = vld [vmem:[%s2 + $0x18] sm:$0xff]
        %v454 = vld [vmem:[%s2 + $0x20] sm:$0xff]
        %v455 = vld [vmem:[%s2 + $0x28] sm:$0xff]
        %v456 = vld [vmem:[%s2 + $0x30] sm:$0xff]
        %v457 = vld [vmem:[%s2 + $0x38] sm:$0xff]
        %v458 = vld [vmem:[%s4] sm:$0xf]
        %v460 = vperm.slane %v458, 0
        %v461 = vperm.slane %v458, 1
        %v462 = vperm.slane %v458, 2
        %v463 = vperm.slane %v458, 3
        %vm468 = vcmask 130048
        %v470 = vsel %vm468, %v434, 0
        %v473 = vsel %vm468, %v435, 0
        %v476 = vsel %vm468, %v436, 0
        %v479 = vsel %vm468, %v437, 0
        %v482 = vsel %vm468, %v438, 0
        %v485 = vsel %vm468, %v439, 0
        %v488 = vsel %vm468, %v440, 0
        %v491 = vsel %vm468, %v441, 0
        %v494 = vsel %vm468, %v442, 0
        %v497 = vsel %vm468, %v443, 0
        %v500 = vsel %vm468, %v444, 0
        %v503 = vsel %vm468, %v445, 0
        %v506 = vsel %vm468, %v446, 0
        %v509 = vsel %vm468, %v447, 0
        %v512 = vsel %vm468, %v448, 0
        %v515 = vsel %vm468, %v449, 0
        %517 = vmatpush.msra.mxu0 0.0
        %518 = vmatpush.msra.mxu0 0.0
        %519 = vmatpush.msra.mxu0 0.0
        %520 = vmatpush.msra.mxu0 0.0
        %521 = vmatpush.msra.mxu0 0.0
        %522 = vmatpush.msra.mxu0 0.0
        %523 = vmatpush.msra.mxu0 0.0
        %524 = vmatpush.msra.mxu0 0.0
        %525 = vmatpush.msra.mxu0 0.0
        %526 = vmatpush.msra.mxu0 0.0
        %527 = vmatpush.msra.mxu0 0.0
        %528 = vmatpush.msra.mxu0 0.0
        %529 = vmatpush.msra.mxu0 0.0
        %530 = vmatpush.msra.mxu0 0.0
        %531 = vmatpush.msra.mxu0 %v454
        %532 = vmatpush.msra.mxu0 %v450
        %533 = vmatmul.f32.gmra.mxu0 %v470
        %v534 = vpop.f32.mrf.mxu0
        %v535 = vadd.f32 %v460, %v534
        %536 = vmatmul.f32.gmra.mxu0 %v473
        %v537 = vpop.f32.mrf.mxu0
        %v538 = vadd.f32 %v460, %v537
        %539 = vmatmul.f32.gmra.mxu0 %v476
        %v540 = vpop.f32.mrf.mxu0
        %v541 = vadd.f32 %v460, %v540
        %542 = vmatmul.f32.gmra.mxu0 %v479
        %v543 = vpop.f32.mrf.mxu0
        %v544 = vadd.f32 %v460, %v543
        %545 = vmatmul.f32.gmra.mxu0 %v482
        %v546 = vpop.f32.mrf.mxu0
        %v547 = vadd.f32 %v460, %v546
        %548 = vmatmul.f32.gmra.mxu0 %v485
        %v549 = vpop.f32.mrf.mxu0
        %v550 = vadd.f32 %v460, %v549
        %551 = vmatmul.f32.gmra.mxu0 %v488
        %v552 = vpop.f32.mrf.mxu0
        %v553 = vadd.f32 %v460, %v552
        %554 = vmatmul.f32.gmra.mxu0 %v491
        %v555 = vpop.f32.mrf.mxu0
        %v556 = vadd.f32 %v460, %v555
        %557 = vmatmul.f32.gmra.mxu0 %v494
        %v558 = vpop.f32.mrf.mxu0
        %v559 = vadd.f32 %v460, %v558
        %560 = vmatmul.f32.gmra.mxu0 %v497
        %v561 = vpop.f32.mrf.mxu0
        %v562 = vadd.f32 %v460, %v561
        %563 = vmatmul.f32.gmra.mxu0 %v500
        %v564 = vpop.f32.mrf.mxu0
        %v565 = vadd.f32 %v460, %v564
        %566 = vmatmul.f32.gmra.mxu0 %v503
        %v567 = vpop.f32.mrf.mxu0
        %v568 = vadd.f32 %v460, %v567
        %569 = vmatmul.f32.gmra.mxu0 %v506
        %v570 = vpop.f32.mrf.mxu0
        %v571 = vadd.f32 %v460, %v570
        %572 = vmatmul.f32.gmra.mxu0 %v509
        %v573 = vpop.f32.mrf.mxu0
        %v574 = vadd.f32 %v460, %v573
        %575 = vmatmul.f32.gmra.mxu0 %v512
        %v576 = vpop.f32.mrf.mxu0
        %v577 = vadd.f32 %v460, %v576
        %578 = vmatmul.f32.gmra.mxu0 %v515
        %v579 = vpop.f32.mrf.mxu0
        %v580 = vadd.f32 %v460, %v579
        %581 = vdwg.mxu0
        %582 = vmatpush.msra.mxu0 0.0
        %583 = vmatpush.msra.mxu0 0.0
        %584 = vmatpush.msra.mxu0 0.0
        %585 = vmatpush.msra.mxu0 0.0
        %586 = vmatpush.msra.mxu0 0.0
        %587 = vmatpush.msra.mxu0 0.0
        %588 = vmatpush.msra.mxu0 0.0
        %589 = vmatpush.msra.mxu0 0.0
        %590 = vmatpush.msra.mxu0 0.0
        %591 = vmatpush.msra.mxu0 0.0
        %592 = vmatpush.msra.mxu0 0.0
        %593 = vmatpush.msra.mxu0 0.0
        %594 = vmatpush.msra.mxu0 0.0
        %595 = vmatpush.msra.mxu0 0.0
        %596 = vmatpush.msra.mxu0 %v455
        %597 = vmatpush.msra.mxu0 %v451
        %598 = vmatmul.f32.gmra.mxu0 %v470
        %v599 = vpop.f32.mrf.mxu0
        %v600 = vadd.f32 %v461, %v599
        %601 = vmatmul.f32.gmra.mxu0 %v473
        %v602 = vpop.f32.mrf.mxu0
        %v603 = vadd.f32 %v461, %v602
        %604 = vmatmul.f32.gmra.mxu0 %v476
        %v605 = vpop.f32.mrf.mxu0
        %v606 = vadd.f32 %v461, %v605
        %607 = vmatmul.f32.gmra.mxu0 %v479
        %v608 = vpop.f32.mrf.mxu0
        %v609 = vadd.f32 %v461, %v608
        %610 = vmatmul.f32.gmra.mxu0 %v482
        %v611 = vpop.f32.mrf.mxu0
        %v612 = vadd.f32 %v461, %v611
        %613 = vmatmul.f32.gmra.mxu0 %v485
        %v614 = vpop.f32.mrf.mxu0
        %v615 = vadd.f32 %v461, %v614
        %616 = vmatmul.f32.gmra.mxu0 %v488
        %v617 = vpop.f32.mrf.mxu0
        %v618 = vadd.f32 %v461, %v617
        %619 = vmatmul.f32.gmra.mxu0 %v491
        %v620 = vpop.f32.mrf.mxu0
        %v621 = vadd.f32 %v461, %v620
        %622 = vmatmul.f32.gmra.mxu0 %v494
        %v623 = vpop.f32.mrf.mxu0
        %v624 = vadd.f32 %v461, %v623
        %625 = vmatmul.f32.gmra.mxu0 %v497
        %v626 = vpop.f32.mrf.mxu0
        %v627 = vadd.f32 %v461, %v626
        %628 = vmatmul.f32.gmra.mxu0 %v500
        %v629 = vpop.f32.mrf.mxu0
        %v630 = vadd.f32 %v461, %v629
        %631 = vmatmul.f32.gmra.mxu0 %v503
        %v632 = vpop.f32.mrf.mxu0
        %v633 = vadd.f32 %v461, %v632
        %634 = vmatmul.f32.gmra.mxu0 %v506
        %v635 = vpop.f32.mrf.mxu0
        %v636 = vadd.f32 %v461, %v635
        %637 = vmatmul.f32.gmra.mxu0 %v509
        %v638 = vpop.f32.mrf.mxu0
        %v639 = vadd.f32 %v461, %v638
        %640 = vmatmul.f32.gmra.mxu0 %v512
        %v641 = vpop.f32.mrf.mxu0
        %v642 = vadd.f32 %v461, %v641
        %643 = vmatmul.f32.gmra.mxu0 %v515
        %v644 = vpop.f32.mrf.mxu0
        %v645 = vadd.f32 %v461, %v644
        %646 = vdwg.mxu0
        %647 = vmatpush.msra.mxu0 0.0
        %648 = vmatpush.msra.mxu0 0.0
        %649 = vmatpush.msra.mxu0 0.0
        %650 = vmatpush.msra.mxu0 0.0
        %651 = vmatpush.msra.mxu0 0.0
        %652 = vmatpush.msra.mxu0 0.0
        %653 = vmatpush.msra.mxu0 0.0
        %654 = vmatpush.msra.mxu0 0.0
        %655 = vmatpush.msra.mxu0 0.0
        %656 = vmatpush.msra.mxu0 0.0
        %657 = vmatpush.msra.mxu0 0.0
        %658 = vmatpush.msra.mxu0 0.0
        %659 = vmatpush.msra.mxu0 0.0
        %660 = vmatpush.msra.mxu0 0.0
        %661 = vmatpush.msra.mxu0 %v456
        %662 = vmatpush.msra.mxu0 %v452
        %663 = vmatmul.f32.gmra.mxu0 %v470
        %v664 = vpop.f32.mrf.mxu0
        %v665 = vadd.f32 %v462, %v664
        %666 = vmatmul.f32.gmra.mxu0 %v473
        %v667 = vpop.f32.mrf.mxu0
        %v668 = vadd.f32 %v462, %v667
        %669 = vmatmul.f32.gmra.mxu0 %v476
        %v670 = vpop.f32.mrf.mxu0
        %v671 = vadd.f32 %v462, %v670
        %672 = vmatmul.f32.gmra.mxu0 %v479
        %v673 = vpop.f32.mrf.mxu0
        %v674 = vadd.f32 %v462, %v673
        %675 = vmatmul.f32.gmra.mxu0 %v482
        %v676 = vpop.f32.mrf.mxu0
        %v677 = vadd.f32 %v462, %v676
        %678 = vmatmul.f32.gmra.mxu0 %v485
        %v679 = vpop.f32.mrf.mxu0
        %v680 = vadd.f32 %v462, %v679
        %681 = vmatmul.f32.gmra.mxu0 %v488
        %v682 = vpop.f32.mrf.mxu0
        %v683 = vadd.f32 %v462, %v682
        %684 = vmatmul.f32.gmra.mxu0 %v491
        %v685 = vpop.f32.mrf.mxu0
        %v686 = vadd.f32 %v462, %v685
        %687 = vmatmul.f32.gmra.mxu0 %v494
        %v688 = vpop.f32.mrf.mxu0
        %v689 = vadd.f32 %v462, %v688
        %690 = vmatmul.f32.gmra.mxu0 %v497
        %v691 = vpop.f32.mrf.mxu0
        %v692 = vadd.f32 %v462, %v691
        %693 = vmatmul.f32.gmra.mxu0 %v500
        %v694 = vpop.f32.mrf.mxu0
        %v695 = vadd.f32 %v462, %v694
        %696 = vmatmul.f32.gmra.mxu0 %v503
        %v697 = vpop.f32.mrf.mxu0
        %v698 = vadd.f32 %v462, %v697
        %699 = vmatmul.f32.gmra.mxu0 %v506
        %v700 = vpop.f32.mrf.mxu0
        %v701 = vadd.f32 %v462, %v700
        %702 = vmatmul.f32.gmra.mxu0 %v509
        %v703 = vpop.f32.mrf.mxu0
        %v704 = vadd.f32 %v462, %v703
        %705 = vmatmul.f32.gmra.mxu0 %v512
        %v706 = vpop.f32.mrf.mxu0
        %v707 = vadd.f32 %v462, %v706
        %708 = vmatmul.f32.gmra.mxu0 %v515
        %v709 = vpop.f32.mrf.mxu0
        %v710 = vadd.f32 %v462, %v709
        %711 = vdwg.mxu0
        %712 = vmatpush.msra.mxu0 0.0
        %713 = vmatpush.msra.mxu0 0.0
        %714 = vmatpush.msra.mxu0 0.0
        %715 = vmatpush.msra.mxu0 0.0
        %716 = vmatpush.msra.mxu0 0.0
        %717 = vmatpush.msra.mxu0 0.0
        %718 = vmatpush.msra.mxu0 0.0
        %719 = vmatpush.msra.mxu0 0.0
        %720 = vmatpush.msra.mxu0 0.0
        %721 = vmatpush.msra.mxu0 0.0
        %722 = vmatpush.msra.mxu0 0.0
        %723 = vmatpush.msra.mxu0 0.0
        %724 = vmatpush.msra.mxu0 0.0
        %725 = vmatpush.msra.mxu0 0.0
        %726 = vmatpush.msra.mxu0 %v457
        %727 = vmatpush.msra.mxu0 %v453
        %728 = vmatmul.f32.gmra.mxu0 %v470
        %v729 = vpop.f32.mrf.mxu0
        %v730 = vadd.f32 %v463, %v729
        %731 = vmatmul.f32.gmra.mxu0 %v473
        %v732 = vpop.f32.mrf.mxu0
        %v733 = vadd.f32 %v463, %v732
        %734 = vmatmul.f32.gmra.mxu0 %v476
        %v735 = vpop.f32.mrf.mxu0
        %v736 = vadd.f32 %v463, %v735
        %737 = vmatmul.f32.gmra.mxu0 %v479
        %v738 = vpop.f32.mrf.mxu0
        %v739 = vadd.f32 %v463, %v738
        %740 = vmatmul.f32.gmra.mxu0 %v482
        %v741 = vpop.f32.mrf.mxu0
        %v742 = vadd.f32 %v463, %v741
        %743 = vmatmul.f32.gmra.mxu0 %v485
        %v744 = vpop.f32.mrf.mxu0
        %v745 = vadd.f32 %v463, %v744
        %746 = vmatmul.f32.gmra.mxu0 %v488
        %v747 = vpop.f32.mrf.mxu0
        %v748 = vadd.f32 %v463, %v747
        %749 = vmatmul.f32.gmra.mxu0 %v491
        %v750 = vpop.f32.mrf.mxu0
        %v751 = vadd.f32 %v463, %v750
        %752 = vmatmul.f32.gmra.mxu0 %v494
        %v753 = vpop.f32.mrf.mxu0
        %v754 = vadd.f32 %v463, %v753
        %755 = vmatmul.f32.gmra.mxu0 %v497
        %v756 = vpop.f32.mrf.mxu0
        %v757 = vadd.f32 %v463, %v756
        %758 = vmatmul.f32.gmra.mxu0 %v500
        %v759 = vpop.f32.mrf.mxu0
        %v760 = vadd.f32 %v463, %v759
        %761 = vmatmul.f32.gmra.mxu0 %v503
        %v762 = vpop.f32.mrf.mxu0
        %v763 = vadd.f32 %v463, %v762
        %764 = vmatmul.f32.gmra.mxu0 %v506
        %v765 = vpop.f32.mrf.mxu0
        %v766 = vadd.f32 %v463, %v765
        %767 = vmatmul.f32.gmra.mxu0 %v509
        %v768 = vpop.f32.mrf.mxu0
        %v769 = vadd.f32 %v463, %v768
        %770 = vmatmul.f32.gmra.mxu0 %v512
        %v771 = vpop.f32.mrf.mxu0
        %v772 = vadd.f32 %v463, %v771
        %773 = vmatmul.f32.gmra.mxu0 %v515
        %v774 = vpop.f32.mrf.mxu0
        %v775 = vadd.f32 %v463, %v774
        %776 = vdwg.mxu0
        %777 = vst [vmem:[#allocation4] sm:$0xff] %v535
        %778 = vst [vmem:[#allocation4 + $0x8] sm:$0xff] %v600
        %779 = vst [vmem:[#allocation4 + $0x10] sm:$0xff] %v665
        %780 = vst [vmem:[#allocation4 + $0x18] sm:$0xff] %v730
        %781 = vst [vmem:[#allocation4 + $0x20] sm:$0xff] %v538
        %782 = vst [vmem:[#allocation4 + $0x28] sm:$0xff] %v603
        %783 = vst [vmem:[#allocation4 + $0x30] sm:$0xff] %v668
        %784 = vst [vmem:[#allocation4 + $0x38] sm:$0xff] %v733
        %785 = vst [vmem:[#allocation4 + $0x40] sm:$0xff] %v541
        %786 = vst [vmem:[#allocation4 + $0x48] sm:$0xff] %v606
        %787 = vst [vmem:[#allocation4 + $0x50] sm:$0xff] %v671
        %788 = vst [vmem:[#allocation4 + $0x58] sm:$0xff] %v736
        %789 = vst [vmem:[#allocation4 + $0x60] sm:$0xff] %v544
        %790 = vst [vmem:[#allocation4 + $0x68] sm:$0xff] %v609
        %791 = vst [vmem:[#allocation4 + $0x70] sm:$0xff] %v674
        %792 = vst [vmem:[#allocation4 + $0x78] sm:$0xff] %v739
        %793 = vst [vmem:[#allocation4 + $0x80] sm:$0xff] %v547
        %794 = vst [vmem:[#allocation4 + $0x88] sm:$0xff] %v612
        %795 = vst [vmem:[#allocation4 + $0x90] sm:$0xff] %v677
        %796 = vst [vmem:[#allocation4 + $0x98] sm:$0xff] %v742
        %797 = vst [vmem:[#allocation4 + $0xa0] sm:$0xff] %v550
        %798 = vst [vmem:[#allocation4 + $0xa8] sm:$0xff] %v615
        %799 = vst [vmem:[#allocation4 + $0xb0] sm:$0xff] %v680
        %800 = vst [vmem:[#allocation4 + $0xb8] sm:$0xff] %v745
        %801 = vst [vmem:[#allocation4 + $0xc0] sm:$0xff] %v553
        %802 = vst [vmem:[#allocation4 + $0xc8] sm:$0xff] %v618
        %803 = vst [vmem:[#allocation4 + $0xd0] sm:$0xff] %v683
        %804 = vst [vmem:[#allocation4 + $0xd8] sm:$0xff] %v748
        %805 = vst [vmem:[#allocation4 + $0xe0] sm:$0xff] %v556
        %806 = vst [vmem:[#allocation4 + $0xe8] sm:$0xff] %v621
        %807 = vst [vmem:[#allocation4 + $0xf0] sm:$0xff] %v686
        %808 = vst [vmem:[#allocation4 + $0xf8] sm:$0xff] %v751
        %809 = vst [vmem:[#allocation4 + $0x100] sm:$0xff] %v559
        %810 = vst [vmem:[#allocation4 + $0x108] sm:$0xff] %v624
        %811 = vst [vmem:[#allocation4 + $0x110] sm:$0xff] %v689
        %812 = vst [vmem:[#allocation4 + $0x118] sm:$0xff] %v754
        %813 = vst [vmem:[#allocation4 + $0x120] sm:$0xff] %v562
        %814 = vst [vmem:[#allocation4 + $0x128] sm:$0xff] %v627
        %815 = vst [vmem:[#allocation4 + $0x130] sm:$0xff] %v692
        %816 = vst [vmem:[#allocation4 + $0x138] sm:$0xff] %v757
        %817 = vst [vmem:[#allocation4 + $0x140] sm:$0xff] %v565
        %818 = vst [vmem:[#allocation4 + $0x148] sm:$0xff] %v630
        %819 = vst [vmem:[#allocation4 + $0x150] sm:$0xff] %v695
        %820 = vst [vmem:[#allocation4 + $0x158] sm:$0xff] %v760
        %821 = vst [vmem:[#allocation4 + $0x160] sm:$0xff] %v568
        %822 = vst [vmem:[#allocation4 + $0x168] sm:$0xff] %v633
        %823 = vst [vmem:[#allocation4 + $0x170] sm:$0xff] %v698
        %824 = vst [vmem:[#allocation4 + $0x178] sm:$0xff] %v763
        %825 = vst [vmem:[#allocation4 + $0x180] sm:$0xff] %v571
        %826 = vst [vmem:[#allocation4 + $0x188] sm:$0xff] %v636
        %827 = vst [vmem:[#allocation4 + $0x190] sm:$0xff] %v701
        %828 = vst [vmem:[#allocation4 + $0x198] sm:$0xff] %v766
        %829 = vst [vmem:[#allocation4 + $0x1a0] sm:$0xff] %v574
        %830 = vst [vmem:[#allocation4 + $0x1a8] sm:$0xff] %v639
        %831 = vst [vmem:[#allocation4 + $0x1b0] sm:$0xff] %v704
        %832 = vst [vmem:[#allocation4 + $0x1b8] sm:$0xff] %v769
        %833 = vst [vmem:[#allocation4 + $0x1c0] sm:$0xff] %v577
        %834 = vst [vmem:[#allocation4 + $0x1c8] sm:$0xff] %v642
        %835 = vst [vmem:[#allocation4 + $0x1d0] sm:$0xff] %v707
        %836 = vst [vmem:[#allocation4 + $0x1d8] sm:$0xff] %v772
        %837 = vst [vmem:[#allocation4 + $0x1e0] sm:$0xff] %v580
        %838 = vst [vmem:[#allocation4 + $0x1e8] sm:$0xff] %v645
        %839 = vst [vmem:[#allocation4 + $0x1f0] sm:$0xff] %v710
        %840 = vst [vmem:[#allocation4 + $0x1f8] sm:$0xff] %v775
        %v841 = vld [vmem:[%s425] sm:$0xff]
        %s842 = smul.u32 %s30, 16
        %v843 = vld [vmem:[#allocation2] sm:$0xff]
        %v844 = vld [vmem:[#allocation3] sm:$0xff]
        %v845 = vld [vmem:[#allocation4] sm:$0xff]
        %v846 = vld [vmem:[%s3] sm:$0xff]
        %v847 = vld [vmem:[%s3 + $0x20] sm:$0xff]
        %v848 = vld [vmem:[%s3 + $0x40] sm:$0xff]
        %v849 = vld [vmem:[%s3 + $0x60] sm:$0xff]
        %v850 = vld [vmem:[%s3 + $0x80] sm:$0xff]
        %v851 = vld [vmem:[%s3 + $0xa0] sm:$0xff]
        %v852 = vld [vmem:[%s3 + $0xc0] sm:$0xff]
        %v853 = vld [vmem:[%s3 + $0xe0] sm:$0xff]
        %v854 = vld [vmem:[%s3 + $0x100] sm:$0xff]
        %v855 = vld [vmem:[%s3 + $0x120] sm:$0xff]
        %v856 = vld [vmem:[%s3 + $0x140] sm:$0xff]
        %v857 = vld [vmem:[%s3 + $0x160] sm:$0xff]
        %v858 = vld [vmem:[%s3 + $0x180] sm:$0xff]
        %v859 = vld [vmem:[%s3 + $0x1a0] sm:$0xff]
        %v860 = vld [vmem:[%s3 + $0x1c0] sm:$0xff]
        %v861 = vld [vmem:[%s3 + $0x1e0] sm:$0xff]
        %862 = vmatpush.msra.mxu0 %v861
        %863 = vmatpush.msra.mxu0 %v860
        %864 = vmatpush.msra.mxu0 %v859
        %865 = vmatpush.msra.mxu0 %v858
        %866 = vmatpush.msra.mxu0 %v857
        %867 = vmatpush.msra.mxu0 %v856
        %868 = vmatpush.msra.mxu0 %v855
        %869 = vmatpush.msra.mxu0 %v854
        %870 = vmatpush.msra.mxu0 %v853
        %871 = vmatpush.msra.mxu0 %v852
        %872 = vmatpush.msra.mxu0 %v851
        %873 = vmatpush.msra.mxu0 %v850
        %874 = vmatpush.msra.mxu0 %v849
        %875 = vmatpush.msra.mxu0 %v848
        %876 = vmatpush.msra.mxu0 %v847
        %877 = vmatpush.msra.mxu0 %v846
        %878 = vmatmul.f32.gmra.mxu0 %v843
        %v879 = vpop.f32.mrf.mxu0
        %v880 = vadd.f32 0.0, %v879
        %881 = vdwg.mxu0
        %v882 = vadd.f32 %v845, %v880
        %v883 = vxor.u32 %v882, 2147483648
        %v884 = vmul.f32 %v883, 1.442695
        %v885 = vpow.pop %v884
        %v886 = vadd.f32 %v885, 1.0
        %v887 = vrcp.pop %v886
        %v888 = vmul.f32 %v886, %v887
        %v889 = vsub.f32 1.0, %v888
        %v890 = vmul.f32 %v887, %v889
        %v891 = vadd.f32 %v887, %v890
        %vm892 = vweird.f32 %v886
        %vm893 = vweird.f32 %v887
        %vm894 = vmor %vm892, %vm893
        %v895 = vsel %vm894, %v887, %v891
        %v896 = vand.u32 2147483647, %v886
        %vm897 = vcmp.eq.f32.partialorder %v896, 8.507059e+37
        %v898 = vand.u32 %v886, 2147483648
        %v899 = vor.u32 1.1754944e-38, %v898
        %v900 = vsel %vm897, %v899, %v895
        %v901 = vmul.f32 1.0, %v900
        %v902 = vld [vmem:[#allocation4 + $0x8] sm:$0xff]
        %v903 = vld [vmem:[%s3 + $0x8] sm:$0xff]
        %v904 = vld [vmem:[%s3 + $0x28] sm:$0xff]
        %v905 = vld [vmem:[%s3 + $0x48] sm:$0xff]
        %v906 = vld [vmem:[%s3 + $0x68] sm:$0xff]
        %v907 = vld [vmem:[%s3 + $0x88] sm:$0xff]
        %v908 = vld [vmem:[%s3 + $0xa8] sm:$0xff]
        %v909 = vld [vmem:[%s3 + $0xc8] sm:$0xff]
        %v910 = vld [vmem:[%s3 + $0xe8] sm:$0xff]
        %v911 = vld [vmem:[%s3 + $0x108] sm:$0xff]
        %v912 = vld [vmem:[%s3 + $0x128] sm:$0xff]
        %v913 = vld [vmem:[%s3 + $0x148] sm:$0xff]
        %v914 = vld [vmem:[%s3 + $0x168] sm:$0xff]
        %v915 = vld [vmem:[%s3 + $0x188] sm:$0xff]
        %v916 = vld [vmem:[%s3 + $0x1a8] sm:$0xff]
        %v917 = vld [vmem:[%s3 + $0x1c8] sm:$0xff]
        %v918 = vld [vmem:[%s3 + $0x1e8] sm:$0xff]
        %919 = vmatpush.msra.mxu0 %v918
        %920 = vmatpush.msra.mxu0 %v917
        %921 = vmatpush.msra.mxu0 %v916
        %922 = vmatpush.msra.mxu0 %v915
        %923 = vmatpush.msra.mxu0 %v914
        %924 = vmatpush.msra.mxu0 %v913
        %925 = vmatpush.msra.mxu0 %v912
        %926 = vmatpush.msra.mxu0 %v911
        %927 = vmatpush.msra.mxu0 %v910
        %928 = vmatpush.msra.mxu0 %v909
        %929 = vmatpush.msra.mxu0 %v908
        %930 = vmatpush.msra.mxu0 %v907
        %931 = vmatpush.msra.mxu0 %v906
        %932 = vmatpush.msra.mxu0 %v905
        %933 = vmatpush.msra.mxu0 %v904
        %934 = vmatpush.msra.mxu0 %v903
        %935 = vmatmul.f32.gmra.mxu0 %v843
        %v936 = vpop.f32.mrf.mxu0
        %v937 = vadd.f32 0.0, %v936
        %938 = vdwg.mxu0
        %v939 = vadd.f32 %v902, %v937
        %v940 = vxor.u32 %v939, 2147483648
        %v941 = vmul.f32 %v940, 1.442695
        %v942 = vpow.pop %v941
        %v943 = vadd.f32 %v942, 1.0
        %v944 = vrcp.pop %v943
        %v945 = vmul.f32 %v943, %v944
        %v946 = vsub.f32 1.0, %v945
        %v947 = vmul.f32 %v944, %v946
        %v948 = vadd.f32 %v944, %v947
        %vm949 = vweird.f32 %v943
        %vm950 = vweird.f32 %v944
        %vm951 = vmor %vm949, %vm950
        %v952 = vsel %vm951, %v944, %v948
        %v953 = vand.u32 2147483647, %v943
        %vm954 = vcmp.eq.f32.partialorder %v953, 8.507059e+37
        %v955 = vand.u32 %v943, 2147483648
        %v956 = vor.u32 1.1754944e-38, %v955
        %v957 = vsel %vm954, %v956, %v952
        %v958 = vmul.f32 1.0, %v957
        %v959 = vld [vmem:[#allocation4 + $0x10] sm:$0xff]
        %v960 = vld [vmem:[%s3 + $0x10] sm:$0xff]
        %v961 = vld [vmem:[%s3 + $0x30] sm:$0xff]
        %v962 = vld [vmem:[%s3 + $0x50] sm:$0xff]
        %v963 = vld [vmem:[%s3 + $0x70] sm:$0xff]
        %v964 = vld [vmem:[%s3 + $0x90] sm:$0xff]
        %v965 = vld [vmem:[%s3 + $0xb0] sm:$0xff]
        %v966 = vld [vmem:[%s3 + $0xd0] sm:$0xff]
        %v967 = vld [vmem:[%s3 + $0xf0] sm:$0xff]
        %v968 = vld [vmem:[%s3 + $0x110] sm:$0xff]
        %v969 = vld [vmem:[%s3 + $0x130] sm:$0xff]
        %v970 = vld [vmem:[%s3 + $0x150] sm:$0xff]
        %v971 = vld [vmem:[%s3 + $0x170] sm:$0xff]
        %v972 = vld [vmem:[%s3 + $0x190] sm:$0xff]
        %v973 = vld [vmem:[%s3 + $0x1b0] sm:$0xff]
        %v974 = vld [vmem:[%s3 + $0x1d0] sm:$0xff]
        %v975 = vld [vmem:[%s3 + $0x1f0] sm:$0xff]
        %976 = vmatpush.msra.mxu0 %v975
        %977 = vmatpush.msra.mxu0 %v974
        %978 = vmatpush.msra.mxu0 %v973
        %979 = vmatpush.msra.mxu0 %v972
        %980 = vmatpush.msra.mxu0 %v971
        %981 = vmatpush.msra.mxu0 %v970
        %982 = vmatpush.msra.mxu0 %v969
        %983 = vmatpush.msra.mxu0 %v968
        %984 = vmatpush.msra.mxu0 %v967
        %985 = vmatpush.msra.mxu0 %v966
        %986 = vmatpush.msra.mxu0 %v965
        %987 = vmatpush.msra.mxu0 %v964
        %988 = vmatpush.msra.mxu0 %v963
        %989 = vmatpush.msra.mxu0 %v962
        %990 = vmatpush.msra.mxu0 %v961
        %991 = vmatpush.msra.mxu0 %v960
        %992 = vmatmul.f32.gmra.mxu0 %v843
        %v993 = vpop.f32.mrf.mxu0
        %v994 = vadd.f32 0.0, %v993
        %995 = vdwg.mxu0
        %v996 = vadd.f32 %v959, %v994
        %v997 = vtanh.pop %v996
        %v998 = vmul.f32 %v958, %v844
        %v999 = vmul.f32 %v901, %v997
        %v1000 = vadd.f32 %v998, %v999
        %v1001 = vld [vmem:[#allocation4 + $0x18] sm:$0xff]
        %v1002 = vld [vmem:[%s3 + $0x18] sm:$0xff]
        %v1003 = vld [vmem:[%s3 + $0x38] sm:$0xff]
        %v1004 = vld [vmem:[%s3 + $0x58] sm:$0xff]
        %v1005 = vld [vmem:[%s3 + $0x78] sm:$0xff]
        %v1006 = vld [vmem:[%s3 + $0x98] sm:$0xff]
        %v1007 = vld [vmem:[%s3 + $0xb8] sm:$0xff]
        %v1008 = vld [vmem:[%s3 + $0xd8] sm:$0xff]
        %v1009 = vld [vmem:[%s3 + $0xf8] sm:$0xff]
        %v1010 = vld [vmem:[%s3 + $0x118] sm:$0xff]
        %v1011 = vld [vmem:[%s3 + $0x138] sm:$0xff]
        %v1012 = vld [vmem:[%s3 + $0x158] sm:$0xff]
        %v1013 = vld [vmem:[%s3 + $0x178] sm:$0xff]
        %v1014 = vld [vmem:[%s3 + $0x198] sm:$0xff]
        %v1015 = vld [vmem:[%s3 + $0x1b8] sm:$0xff]
        %v1016 = vld [vmem:[%s3 + $0x1d8] sm:$0xff]
        %v1017 = vld [vmem:[%s3 + $0x1f8] sm:$0xff]
        %1018 = vmatpush.msra.mxu0 %v1017
        %1019 = vmatpush.msra.mxu0 %v1016
        %1020 = vmatpush.msra.mxu0 %v1015
        %1021 = vmatpush.msra.mxu0 %v1014
        %1022 = vmatpush.msra.mxu0 %v1013
        %1023 = vmatpush.msra.mxu0 %v1012
        %1024 = vmatpush.msra.mxu0 %v1011
        %1025 = vmatpush.msra.mxu0 %v1010
        %1026 = vmatpush.msra.mxu0 %v1009
        %1027 = vmatpush.msra.mxu0 %v1008
        %1028 = vmatpush.msra.mxu0 %v1007
        %1029 = vmatpush.msra.mxu0 %v1006
        %1030 = vmatpush.msra.mxu0 %v1005
        %1031 = vmatpush.msra.mxu0 %v1004
        %1032 = vmatpush.msra.mxu0 %v1003
        %1033 = vmatpush.msra.mxu0 %v1002
        %1034 = vmatmul.f32.gmra.mxu0 %v843
        %v1035 = vpop.f32.mrf.mxu0
        %v1036 = vadd.f32 0.0, %v1035
        %1037 = vdwg.mxu0
        %v1038 = vadd.f32 %v1001, %v1036
        %v1039 = vxor.u32 %v1038, 2147483648
        %v1040 = vmul.f32 %v1039, 1.442695
        %v1041 = vpow.pop %v1040
        %v1042 = vadd.f32 %v1041, 1.0
        %v1043 = vrcp.pop %v1042
        %v1044 = vmul.f32 %v1042, %v1043
        %v1045 = vsub.f32 1.0, %v1044
        %v1046 = vmul.f32 %v1043, %v1045
        %v1047 = vadd.f32 %v1043, %v1046
        %vm1048 = vweird.f32 %v1042
        %vm1049 = vweird.f32 %v1043
        %vm1050 = vmor %vm1048, %vm1049
        %v1051 = vsel %vm1050, %v1043, %v1047
        %v1052 = vand.u32 2147483647, %v1042
        %vm1053 = vcmp.eq.f32.partialorder %v1052, 8.507059e+37
        %v1054 = vand.u32 %v1042, 2147483648
        %v1055 = vor.u32 1.1754944e-38, %v1054
        %v1056 = vsel %vm1053, %v1055, %v1051
        %v1057 = vmul.f32 1.0, %v1056
        %v1058 = vtanh.pop %v1000
        %v1059 = vmul.f32 %v1057, %v1058
        %v1060 = vstv %s842
        %vm1061 = vcmp.lt.s32.totalorder %v1060, %v841
        %v1062 = vsel %vm1061, %v1059, 0.0
        %1063 = vst [vmem:[%s407] sm:$0xff] %v1062
        %v1064 = vsel %vm1061, %v1059, %v843
        %v1065 = vsel %vm1061, %v1000, %v844
        %s1066 = scalar_lea.vmem [#allocation4], 32
        %v1067 = vld [vmem:[%s1066] sm:$0xff]
        %v1068 = vld [vmem:[%s3] sm:$0xff]
        %v1069 = vld [vmem:[%s3 + $0x20] sm:$0xff]
        %v1070 = vld [vmem:[%s3 + $0x40] sm:$0xff]
        %v1071 = vld [vmem:[%s3 + $0x60] sm:$0xff]
        %v1072 = vld [vmem:[%s3 + $0x80] sm:$0xff]
        %v1073 = vld [vmem:[%s3 + $0xa0] sm:$0xff]
        %v1074 = vld [vmem:[%s3 + $0xc0] sm:$0xff]
        %v1075 = vld [vmem:[%s3 + $0xe0] sm:$0xff]
        %v1076 = vld [vmem:[%s3 + $0x100] sm:$0xff]
        %v1077 = vld [vmem:[%s3 + $0x120] sm:$0xff]
        %v1078 = vld [vmem:[%s3 + $0x140] sm:$0xff]
        %v1079 = vld [vmem:[%s3 + $0x160] sm:$0xff]
        %v1080 = vld [vmem:[%s3 + $0x180] sm:$0xff]
        %v1081 = vld [vmem:[%s3 + $0x1a0] sm:$0xff]
        %v1082 = vld [vmem:[%s3 + $0x1c0] sm:$0xff]
        %v1083 = vld [vmem:[%s3 + $0x1e0] sm:$0xff]
        %1084 = vmatpush.msra.mxu0 %v1083
        %1085 = vmatpush.msra.mxu0 %v1082
        %1086 = vmatpush.msra.mxu0 %v1081
        %1087 = vmatpush.msra.mxu0 %v1080
        %1088 = vmatpush.msra.mxu0 %v1079
        %1089 = vmatpush.msra.mxu0 %v1078
        %1090 = vmatpush.msra.mxu0 %v1077
        %1091 = vmatpush.msra.mxu0 %v1076
        %1092 = vmatpush.msra.mxu0 %v1075
        %1093 = vmatpush.msra.mxu0 %v1074
        %1094 = vmatpush.msra.mxu0 %v1073
        %1095 = vmatpush.msra.mxu0 %v1072
        %1096 = vmatpush.msra.mxu0 %v1071
        %1097 = vmatpush.msra.mxu0 %v1070
        %1098 = vmatpush.msra.mxu0 %v1069
        %1099 = vmatpush.msra.mxu0 %v1068
        %1100 = vmatmul.f32.gmra.mxu0 %v1064
        %v1101 = vpop.f32.mrf.mxu0
        %v1102 = vadd.f32 0.0, %v1101
        %1103 = vdwg.mxu0
        %v1104 = vadd.f32 %v1067, %v1102
        %v1105 = vxor.u32 %v1104, 2147483648
        %v1106 = vmul.f32 %v1105, 1.442695
        %v1107 = vpow.pop %v1106
        %v1108 = vadd.f32 %v1107, 1.0
        %v1109 = vrcp.pop %v1108
        %v1110 = vmul.f32 %v1108, %v1109
        %v1111 = vsub.f32 1.0, %v1110
        %v1112 = vmul.f32 %v1109, %v1111
        %v1113 = vadd.f32 %v1109, %v1112
        %vm1114 = vweird.f32 %v1108
        %vm1115 = vweird.f32 %v1109
        %vm1116 = vmor %vm1114, %vm1115
        %v1117 = vsel %vm1116, %v1109, %v1113
        %v1118 = vand.u32 2147483647, %v1108
        %vm1119 = vcmp.eq.f32.partialorder %v1118, 8.507059e+37
        %v1120 = vand.u32 %v1108, 2147483648
        %v1121 = vor.u32 1.1754944e-38, %v1120
        %v1122 = vsel %vm1119, %v1121, %v1117
        %v1123 = vmul.f32 1.0, %v1122
        %v1124 = vld [vmem:[%s1066 + $0x8] sm:$0xff]
        %v1125 = vld [vmem:[%s3 + $0x8] sm:$0xff]
        %v1126 = vld [vmem:[%s3 + $0x28] sm:$0xff]
        %v1127 = vld [vmem:[%s3 + $0x48] sm:$0xff]
        %v1128 = vld [vmem:[%s3 + $0x68] sm:$0xff]
        %v1129 = vld [vmem:[%s3 + $0x88] sm:$0xff]
        %v1130 = vld [vmem:[%s3 + $0xa8] sm:$0xff]
        %v1131 = vld [vmem:[%s3 + $0xc8] sm:$0xff]
        %v1132 = vld [vmem:[%s3 + $0xe8] sm:$0xff]
        %v1133 = vld [vmem:[%s3 + $0x108] sm:$0xff]
        %v1134 = vld [vmem:[%s3 + $0x128] sm:$0xff]
        %v1135 = vld [vmem:[%s3 + $0x148] sm:$0xff]
        %v1136 = vld [vmem:[%s3 + $0x168] sm:$0xff]
        %v1137 = vld [vmem:[%s3 + $0x188] sm:$0xff]
        %v1138 = vld [vmem:[%s3 + $0x1a8] sm:$0xff]
        %v1139 = vld [vmem:[%s3 + $0x1c8] sm:$0xff]
        %v1140 = vld [vmem:[%s3 + $0x1e8] sm:$0xff]
        %1141 = vmatpush.msra.mxu0 %v1140
        %1142 = vmatpush.msra.mxu0 %v1139
        %1143 = vmatpush.msra.mxu0 %v1138
        %1144 = vmatpush.msra.mxu0 %v1137
        %1145 = vmatpush.msra.mxu0 %v1136
        %1146 = vmatpush.msra.mxu0 %v1135
        %1147 = vmatpush.msra.mxu0 %v1134
        %1148 = vmatpush.msra.mxu0 %v1133
        %1149 = vmatpush.msra.mxu0 %v1132
        %1150 = vmatpush.msra.mxu0 %v1131
        %1151 = vmatpush.msra.mxu0 %v1130
        %1152 = vmatpush.msra.mxu0 %v1129
        %1153 = vmatpush.msra.mxu0 %v1128
        %1154 = vmatpush.msra.mxu0 %v1127
        %1155 = vmatpush.msra.mxu0 %v1126
        %1156 = vmatpush.msra.mxu0 %v1125
        %1157 = vmatmul.f32.gmra.mxu0 %v1064
        %v1158 = vpop.f32.mrf.mxu0
        %v1159 = vadd.f32 0.0, %v1158
        %1160 = vdwg.mxu0
        %v1161 = vadd.f32 %v1124, %v1159
        %v1162 = vxor.u32 %v1161, 2147483648
        %v1163 = vmul.f32 %v1162, 1.442695
        %v1164 = vpow.pop %v1163
        %v1165 = vadd.f32 %v1164, 1.0
        %v1166 = vrcp.pop %v1165
        %v1167 = vmul.f32 %v1165, %v1166
        %v1168 = vsub.f32 1.0, %v1167
        %v1169 = vmul.f32 %v1166, %v1168
        %v1170 = vadd.f32 %v1166, %v1169
        %vm1171 = vweird.f32 %v1165
        %vm1172 = vweird.f32 %v1166
        %vm1173 = vmor %vm1171, %vm1172
        %v1174 = vsel %vm1173, %v1166, %v1170
        %v1175 = vand.u32 2147483647, %v1165
        %vm1176 = vcmp.eq.f32.partialorder %v1175, 8.507059e+37
        %v1177 = vand.u32 %v1165, 2147483648
        %v1178 = vor.u32 1.1754944e-38, %v1177
        %v1179 = vsel %vm1176, %v1178, %v1174
        %v1180 = vmul.f32 1.0, %v1179
        %v1181 = vld [vmem:[%s1066 + $0x10] sm:$0xff]
        %v1182 = vld [vmem:[%s3 + $0x10] sm:$0xff]
        %v1183 = vld [vmem:[%s3 + $0x30] sm:$0xff]
        %v1184 = vld [vmem:[%s3 + $0x50] sm:$0xff]
        %v1185 = vld [vmem:[%s3 + $0x70] sm:$0xff]
        %v1186 = vld [vmem:[%s3 + $0x90] sm:$0xff]
        %v1187 = vld [vmem:[%s3 + $0xb0] sm:$0xff]
        %v1188 = vld [vmem:[%s3 + $0xd0] sm:$0xff]
        %v1189 = vld [vmem:[%s3 + $0xf0] sm:$0xff]
        %v1190 = vld [vmem:[%s3 + $0x110] sm:$0xff]
        %v1191 = vld [vmem:[%s3 + $0x130] sm:$0xff]
        %v1192 = vld [vmem:[%s3 + $0x150] sm:$0xff]
        %v1193 = vld [vmem:[%s3 + $0x170] sm:$0xff]
        %v1194 = vld [vmem:[%s3 + $0x190] sm:$0xff]
        %v1195 = vld [vmem:[%s3 + $0x1b0] sm:$0xff]
        %v1196 = vld [vmem:[%s3 + $0x1d0] sm:$0xff]
        %v1197 = vld [vmem:[%s3 + $0x1f0] sm:$0xff]
        %1198 = vmatpush.msra.mxu0 %v1197
        %1199 = vmatpush.msra.mxu0 %v1196
        %1200 = vmatpush.msra.mxu0 %v1195
        %1201 = vmatpush.msra.mxu0 %v1194
        %1202 = vmatpush.msra.mxu0 %v1193
        %1203 = vmatpush.msra.mxu0 %v1192
        %1204 = vmatpush.msra.mxu0 %v1191
        %1205 = vmatpush.msra.mxu0 %v1190
        %1206 = vmatpush.msra.mxu0 %v1189
        %1207 = vmatpush.msra.mxu0 %v1188
        %1208 = vmatpush.msra.mxu0 %v1187
        %1209 = vmatpush.msra.mxu0 %v1186
        %1210 = vmatpush.msra.mxu0 %v1185
        %1211 = vmatpush.msra.mxu0 %v1184
        %1212 = vmatpush.msra.mxu0 %v1183
        %1213 = vmatpush.msra.mxu0 %v1182
        %1214 = vmatmul.f32.gmra.mxu0 %v1064
        %v1215 = vpop.f32.mrf.mxu0
        %v1216 = vadd.f32 0.0, %v1215
        %1217 = vdwg.mxu0
        %v1218 = vadd.f32 %v1181, %v1216
        %v1219 = vtanh.pop %v1218
        %v1220 = vmul.f32 %v1180, %v1065
        %v1221 = vmul.f32 %v1123, %v1219
        %v1222 = vadd.f32 %v1220, %v1221
        %v1223 = vld [vmem:[%s1066 + $0x18] sm:$0xff]
        %v1224 = vld [vmem:[%s3 + $0x18] sm:$0xff]
        %v1225 = vld [vmem:[%s3 + $0x38] sm:$0xff]
        %v1226 = vld [vmem:[%s3 + $0x58] sm:$0xff]
        %v1227 = vld [vmem:[%s3 + $0x78] sm:$0xff]
        %v1228 = vld [vmem:[%s3 + $0x98] sm:$0xff]
        %v1229 = vld [vmem:[%s3 + $0xb8] sm:$0xff]
        %v1230 = vld [vmem:[%s3 + $0xd8] sm:$0xff]
        %v1231 = vld [vmem:[%s3 + $0xf8] sm:$0xff]
        %v1232 = vld [vmem:[%s3 + $0x118] sm:$0xff]
        %v1233 = vld [vmem:[%s3 + $0x138] sm:$0xff]
        %v1234 = vld [vmem:[%s3 + $0x158] sm:$0xff]
        %v1235 = vld [vmem:[%s3 + $0x178] sm:$0xff]
        %v1236 = vld [vmem:[%s3 + $0x198] sm:$0xff]
        %v1237 = vld [vmem:[%s3 + $0x1b8] sm:$0xff]
        %v1238 = vld [vmem:[%s3 + $0x1d8] sm:$0xff]
        %v1239 = vld [vmem:[%s3 + $0x1f8] sm:$0xff]
        %1240 = vmatpush.msra.mxu0 %v1239
        %1241 = vmatpush.msra.mxu0 %v1238
        %1242 = vmatpush.msra.mxu0 %v1237
        %1243 = vmatpush.msra.mxu0 %v1236
        %1244 = vmatpush.msra.mxu0 %v1235
        %1245 = vmatpush.msra.mxu0 %v1234
        %1246 = vmatpush.msra.mxu0 %v1233
        %1247 = vmatpush.msra.mxu0 %v1232
        %1248 = vmatpush.msra.mxu0 %v1231
        %1249 = vmatpush.msra.mxu0 %v1230
        %1250 = vmatpush.msra.mxu0 %v1229
        %1251 = vmatpush.msra.mxu0 %v1228
        %1252 = vmatpush.msra.mxu0 %v1227
        %1253 = vmatpush.msra.mxu0 %v1226
        %1254 = vmatpush.msra.mxu0 %v1225
        %1255 = vmatpush.msra.mxu0 %v1224
        %1256 = vmatmul.f32.gmra.mxu0 %v1064
        %v1257 = vpop.f32.mrf.mxu0
        %v1258 = vadd.f32 0.0, %v1257
        %1259 = vdwg.mxu0
        %v1260 = vadd.f32 %v1223, %v1258
        %v1261 = vxor.u32 %v1260, 2147483648
        %v1262 = vmul.f32 %v1261, 1.442695
        %v1263 = vpow.pop %v1262
        %v1264 = vadd.f32 %v1263, 1.0
        %v1265 = vrcp.pop %v1264
        %v1266 = vmul.f32 %v1264, %v1265
        %v1267 = vsub.f32 1.0, %v1266
        %v1268 = vmul.f32 %v1265, %v1267
        %v1269 = vadd.f32 %v1265, %v1268
        %vm1270 = vweird.f32 %v1264
        %vm1271 = vweird.f32 %v1265
        %vm1272 = vmor %vm1270, %vm1271
        %v1273 = vsel %vm1272, %v1265, %v1269
        %v1274 = vand.u32 2147483647, %v1264
        %vm1275 = vcmp.eq.f32.partialorder %v1274, 8.507059e+37
        %v1276 = vand.u32 %v1264, 2147483648
        %v1277 = vor.u32 1.1754944e-38, %v1276
        %v1278 = vsel %vm1275, %v1277, %v1273
        %v1279 = vmul.f32 1.0, %v1278
        %v1280 = vtanh.pop %v1222
        %v1281 = vmul.f32 %v1279, %v1280
        %s1282 = sadd.s32 %s842, 1
        %v1283 = vstv %s1282
        %vm1284 = vcmp.lt.s32.totalorder %v1283, %v841
        %v1285 = vsel %vm1284, %v1281, 0.0
        %s1286 = scalar_lea.vmem %s407, 8 [#allocation6]
        %1287 = vst [vmem:[%s1286] sm:$0xff] %v1285
        %v1288 = vsel %vm1284, %v1281, %v1064
        %v1289 = vsel %vm1284, %v1222, %v1065
        %s1290 = scalar_lea.vmem [#allocation4], 64
        %v1291 = vld [vmem:[%s1290] sm:$0xff]
        %v1292 = vld [vmem:[%s3] sm:$0xff]
        %v1293 = vld [vmem:[%s3 + $0x20] sm:$0xff]
        %v1294 = vld [vmem:[%s3 + $0x40] sm:$0xff]
        %v1295 = vld [vmem:[%s3 + $0x60] sm:$0xff]
        %v1296 = vld [vmem:[%s3 + $0x80] sm:$0xff]
        %v1297 = vld [vmem:[%s3 + $0xa0] sm:$0xff]
        %v1298 = vld [vmem:[%s3 + $0xc0] sm:$0xff]
        %v1299 = vld [vmem:[%s3 + $0xe0] sm:$0xff]
        %v1300 = vld [vmem:[%s3 + $0x100] sm:$0xff]
        %v1301 = vld [vmem:[%s3 + $0x120] sm:$0xff]
        %v1302 = vld [vmem:[%s3 + $0x140] sm:$0xff]
        %v1303 = vld [vmem:[%s3 + $0x160] sm:$0xff]
        %v1304 = vld [vmem:[%s3 + $0x180] sm:$0xff]
        %v1305 = vld [vmem:[%s3 + $0x1a0] sm:$0xff]
        %v1306 = vld [vmem:[%s3 + $0x1c0] sm:$0xff]
        %v1307 = vld [vmem:[%s3 + $0x1e0] sm:$0xff]
        %1308 = vmatpush.msra.mxu0 %v1307
        %1309 = vmatpush.msra.mxu0 %v1306
        %1310 = vmatpush.msra.mxu0 %v1305
        %1311 = vmatpush.msra.mxu0 %v1304
        %1312 = vmatpush.msra.mxu0 %v1303
        %1313 = vmatpush.msra.mxu0 %v1302
        %1314 = vmatpush.msra.mxu0 %v1301
        %1315 = vmatpush.msra.mxu0 %v1300
        %1316 = vmatpush.msra.mxu0 %v1299
        %1317 = vmatpush.msra.mxu0 %v1298
        %1318 = vmatpush.msra.mxu0 %v1297
        %1319 = vmatpush.msra.mxu0 %v1296
        %1320 = vmatpush.msra.mxu0 %v1295
        %1321 = vmatpush.msra.mxu0 %v1294
        %1322 = vmatpush.msra.mxu0 %v1293
        %1323 = vmatpush.msra.mxu0 %v1292
        %1324 = vmatmul.f32.gmra.mxu0 %v1288
        %v1325 = vpop.f32.mrf.mxu0
        %v1326 = vadd.f32 0.0, %v1325
        %1327 = vdwg.mxu0
        %v1328 = vadd.f32 %v1291, %v1326
        %v1329 = vxor.u32 %v1328, 2147483648
        %v1330 = vmul.f32 %v1329, 1.442695
        %v1331 = vpow.pop %v1330
        %v1332 = vadd.f32 %v1331, 1.0
        %v1333 = vrcp.pop %v1332
        %v1334 = vmul.f32 %v1332, %v1333
        %v1335 = vsub.f32 1.0, %v1334
        %v1336 = vmul.f32 %v1333, %v1335
        %v1337 = vadd.f32 %v1333, %v1336
        %vm1338 = vweird.f32 %v1332
        %vm1339 = vweird.f32 %v1333
        %vm1340 = vmor %vm1338, %vm1339
        %v1341 = vsel %vm1340, %v1333, %v1337
        %v1342 = vand.u32 2147483647, %v1332
        %vm1343 = vcmp.eq.f32.partialorder %v1342, 8.507059e+37
        %v1344 = vand.u32 %v1332, 2147483648
        %v1345 = vor.u32 1.1754944e-38, %v1344
        %v1346 = vsel %vm1343, %v1345, %v1341
        %v1347 = vmul.f32 1.0, %v1346
        %v1348 = vld [vmem:[%s1290 + $0x8] sm:$0xff]
        %v1349 = vld [vmem:[%s3 + $0x8] sm:$0xff]
        %v1350 = vld [vmem:[%s3 + $0x28] sm:$0xff]
        %v1351 = vld [vmem:[%s3 + $0x48] sm:$0xff]
        %v1352 = vld [vmem:[%s3 + $0x68] sm:$0xff]
        %v1353 = vld [vmem:[%s3 + $0x88] sm:$0xff]
        %v1354 = vld [vmem:[%s3 + $0xa8] sm:$0xff]
        %v1355 = vld [vmem:[%s3 + $0xc8] sm:$0xff]
        %v1356 = vld [vmem:[%s3 + $0xe8] sm:$0xff]
        %v1357 = vld [vmem:[%s3 + $0x108] sm:$0xff]
        %v1358 = vld [vmem:[%s3 + $0x128] sm:$0xff]
        %v1359 = vld [vmem:[%s3 + $0x148] sm:$0xff]
        %v1360 = vld [vmem:[%s3 + $0x168] sm:$0xff]
        %v1361 = vld [vmem:[%s3 + $0x188] sm:$0xff]
        %v1362 = vld [vmem:[%s3 + $0x1a8] sm:$0xff]
        %v1363 = vld [vmem:[%s3 + $0x1c8] sm:$0xff]
        %v1364 = vld [vmem:[%s3 + $0x1e8] sm:$0xff]
        %1365 = vmatpush.msra.mxu0 %v1364
        %1366 = vmatpush.msra.mxu0 %v1363
        %1367 = vmatpush.msra.mxu0 %v1362
        %1368 = vmatpush.msra.mxu0 %v1361
        %1369 = vmatpush.msra.mxu0 %v1360
        %1370 = vmatpush.msra.mxu0 %v1359
        %1371 = vmatpush.msra.mxu0 %v1358
        %1372 = vmatpush.msra.mxu0 %v1357
        %1373 = vmatpush.msra.mxu0 %v1356
        %1374 = vmatpush.msra.mxu0 %v1355
        %1375 = vmatpush.msra.mxu0 %v1354
        %1376 = vmatpush.msra.mxu0 %v1353
        %1377 = vmatpush.msra.mxu0 %v1352
        %1378 = vmatpush.msra.mxu0 %v1351
        %1379 = vmatpush.msra.mxu0 %v1350
        %1380 = vmatpush.msra.mxu0 %v1349
        %1381 = vmatmul.f32.gmra.mxu0 %v1288
        %v1382 = vpop.f32.mrf.mxu0
        %v1383 = vadd.f32 0.0, %v1382
        %1384 = vdwg.mxu0
        %v1385 = vadd.f32 %v1348, %v1383
        %v1386 = vxor.u32 %v1385, 2147483648
        %v1387 = vmul.f32 %v1386, 1.442695
        %v1388 = vpow.pop %v1387
        %v1389 = vadd.f32 %v1388, 1.0
        %v1390 = vrcp.pop %v1389
        %v1391 = vmul.f32 %v1389, %v1390
        %v1392 = vsub.f32 1.0, %v1391
        %v1393 = vmul.f32 %v1390, %v1392
        %v1394 = vadd.f32 %v1390, %v1393
        %vm1395 = vweird.f32 %v1389
        %vm1396 = vweird.f32 %v1390
        %vm1397 = vmor %vm1395, %vm1396
        %v1398 = vsel %vm1397, %v1390, %v1394
        %v1399 = vand.u32 2147483647, %v1389
        %vm1400 = vcmp.eq.f32.partialorder %v1399, 8.507059e+37
        %v1401 = vand.u32 %v1389, 2147483648
        %v1402 = vor.u32 1.1754944e-38, %v1401
        %v1403 = vsel %vm1400, %v1402, %v1398
        %v1404 = vmul.f32 1.0, %v1403
        %v1405 = vld [vmem:[%s1290 + $0x10] sm:$0xff]
        %v1406 = vld [vmem:[%s3 + $0x10] sm:$0xff]
        %v1407 = vld [vmem:[%s3 + $0x30] sm:$0xff]
        %v1408 = vld [vmem:[%s3 + $0x50] sm:$0xff]
        %v1409 = vld [vmem:[%s3 + $0x70] sm:$0xff]
        %v1410 = vld [vmem:[%s3 + $0x90] sm:$0xff]
        %v1411 = vld [vmem:[%s3 + $0xb0] sm:$0xff]
        %v1412 = vld [vmem:[%s3 + $0xd0] sm:$0xff]
        %v1413 = vld [vmem:[%s3 + $0xf0] sm:$0xff]
        %v1414 = vld [vmem:[%s3 + $0x110] sm:$0xff]
        %v1415 = vld [vmem:[%s3 + $0x130] sm:$0xff]
        %v1416 = vld [vmem:[%s3 + $0x150] sm:$0xff]
        %v1417 = vld [vmem:[%s3 + $0x170] sm:$0xff]
        %v1418 = vld [vmem:[%s3 + $0x190] sm:$0xff]
        %v1419 = vld [vmem:[%s3 + $0x1b0] sm:$0xff]
        %v1420 = vld [vmem:[%s3 + $0x1d0] sm:$0xff]
        %v1421 = vld [vmem:[%s3 + $0x1f0] sm:$0xff]
        %1422 = vmatpush.msra.mxu0 %v1421
        %1423 = vmatpush.msra.mxu0 %v1420
        %1424 = vmatpush.msra.mxu0 %v1419
        %1425 = vmatpush.msra.mxu0 %v1418
        %1426 = vmatpush.msra.mxu0 %v1417
        %1427 = vmatpush.msra.mxu0 %v1416
        %1428 = vmatpush.msra.mxu0 %v1415
        %1429 = vmatpush.msra.mxu0 %v1414
        %1430 = vmatpush.msra.mxu0 %v1413
        %1431 = vmatpush.msra.mxu0 %v1412
        %1432 = vmatpush.msra.mxu0 %v1411
        %1433 = vmatpush.msra.mxu0 %v1410
        %1434 = vmatpush.msra.mxu0 %v1409
        %1435 = vmatpush.msra.mxu0 %v1408
        %1436 = vmatpush.msra.mxu0 %v1407
        %1437 = vmatpush.msra.mxu0 %v1406
        %1438 = vmatmul.f32.gmra.mxu0 %v1288
        %v1439 = vpop.f32.mrf.mxu0
        %v1440 = vadd.f32 0.0, %v1439
        %1441 = vdwg.mxu0
        %v1442 = vadd.f32 %v1405, %v1440
        %v1443 = vtanh.pop %v1442
        %v1444 = vmul.f32 %v1404, %v1289
        %v1445 = vmul.f32 %v1347, %v1443
        %v1446 = vadd.f32 %v1444, %v1445
        %v1447 = vld [vmem:[%s1290 + $0x18] sm:$0xff]
        %v1448 = vld [vmem:[%s3 + $0x18] sm:$0xff]
        %v1449 = vld [vmem:[%s3 + $0x38] sm:$0xff]
        %v1450 = vld [vmem:[%s3 + $0x58] sm:$0xff]
        %v1451 = vld [vmem:[%s3 + $0x78] sm:$0xff]
        %v1452 = vld [vmem:[%s3 + $0x98] sm:$0xff]
        %v1453 = vld [vmem:[%s3 + $0xb8] sm:$0xff]
        %v1454 = vld [vmem:[%s3 + $0xd8] sm:$0xff]
        %v1455 = vld [vmem:[%s3 + $0xf8] sm:$0xff]
        %v1456 = vld [vmem:[%s3 + $0x118] sm:$0xff]
        %v1457 = vld [vmem:[%s3 + $0x138] sm:$0xff]
        %v1458 = vld [vmem:[%s3 + $0x158] sm:$0xff]
        %v1459 = vld [vmem:[%s3 + $0x178] sm:$0xff]
        %v1460 = vld [vmem:[%s3 + $0x198] sm:$0xff]
        %v1461 = vld [vmem:[%s3 + $0x1b8] sm:$0xff]
        %v1462 = vld [vmem:[%s3 + $0x1d8] sm:$0xff]
        %v1463 = vld [vmem:[%s3 + $0x1f8] sm:$0xff]
        %1464 = vmatpush.msra.mxu0 %v1463
        %1465 = vmatpush.msra.mxu0 %v1462
        %1466 = vmatpush.msra.mxu0 %v1461
        %1467 = vmatpush.msra.mxu0 %v1460
        %1468 = vmatpush.msra.mxu0 %v1459
        %1469 = vmatpush.msra.mxu0 %v1458
        %1470 = vmatpush.msra.mxu0 %v1457
        %1471 = vmatpush.msra.mxu0 %v1456
        %1472 = vmatpush.msra.mxu0 %v1455
        %1473 = vmatpush.msra.mxu0 %v1454
        %1474 = vmatpush.msra.mxu0 %v1453
        %1475 = vmatpush.msra.mxu0 %v1452
        %1476 = vmatpush.msra.mxu0 %v1451
        %1477 = vmatpush.msra.mxu0 %v1450
        %1478 = vmatpush.msra.mxu0 %v1449
        %1479 = vmatpush.msra.mxu0 %v1448
        %1480 = vmatmul.f32.gmra.mxu0 %v1288
        %v1481 = vpop.f32.mrf.mxu0
        %v1482 = vadd.f32 0.0, %v1481
        %1483 = vdwg.mxu0
        %v1484 = vadd.f32 %v1447, %v1482
        %v1485 = vxor.u32 %v1484, 2147483648
        %v1486 = vmul.f32 %v1485, 1.442695
        %v1487 = vpow.pop %v1486
        %v1488 = vadd.f32 %v1487, 1.0
        %v1489 = vrcp.pop %v1488
        %v1490 = vmul.f32 %v1488, %v1489
        %v1491 = vsub.f32 1.0, %v1490
        %v1492 = vmul.f32 %v1489, %v1491
        %v1493 = vadd.f32 %v1489, %v1492
        %vm1494 = vweird.f32 %v1488
        %vm1495 = vweird.f32 %v1489
        %vm1496 = vmor %vm1494, %vm1495
        %v1497 = vsel %vm1496, %v1489, %v1493
        %v1498 = vand.u32 2147483647, %v1488
        %vm1499 = vcmp.eq.f32.partialorder %v1498, 8.507059e+37
        %v1500 = vand.u32 %v1488, 2147483648
        %v1501 = vor.u32 1.1754944e-38, %v1500
        %v1502 = vsel %vm1499, %v1501, %v1497
        %v1503 = vmul.f32 1.0, %v1502
        %v1504 = vtanh.pop %v1446
        %v1505 = vmul.f32 %v1503, %v1504
        %s1506 = sadd.s32 %s842, 2
        %v1507 = vstv %s1506
        %vm1508 = vcmp.lt.s32.totalorder %v1507, %v841
        %v1509 = vsel %vm1508, %v1505, 0.0
        %s1510 = scalar_lea.vmem %s407, 16 [#allocation6]
        %1511 = vst [vmem:[%s1510] sm:$0xff] %v1509
        %v1512 = vsel %vm1508, %v1505, %v1288
        %v1513 = vsel %vm1508, %v1446, %v1289
        %s1514 = scalar_lea.vmem [#allocation4], 96
        %v1515 = vld [vmem:[%s1514] sm:$0xff]
        %v1516 = vld [vmem:[%s3] sm:$0xff]
        %v1517 = vld [vmem:[%s3 + $0x20] sm:$0xff]
        %v1518 = vld [vmem:[%s3 + $0x40] sm:$0xff]
        %v1519 = vld [vmem:[%s3 + $0x60] sm:$0xff]
        %v1520 = vld [vmem:[%s3 + $0x80] sm:$0xff]
        %v1521 = vld [vmem:[%s3 + $0xa0] sm:$0xff]
        %v1522 = vld [vmem:[%s3 + $0xc0] sm:$0xff]
        %v1523 = vld [vmem:[%s3 + $0xe0] sm:$0xff]
        %v1524 = vld [vmem:[%s3 + $0x100] sm:$0xff]
        %v1525 = vld [vmem:[%s3 + $0x120] sm:$0xff]
        %v1526 = vld [vmem:[%s3 + $0x140] sm:$0xff]
        %v1527 = vld [vmem:[%s3 + $0x160] sm:$0xff]
        %v1528 = vld [vmem:[%s3 + $0x180] sm:$0xff]
        %v1529 = vld [vmem:[%s3 + $0x1a0] sm:$0xff]
        %v1530 = vld [vmem:[%s3 + $0x1c0] sm:$0xff]
        %v1531 = vld [vmem:[%s3 + $0x1e0] sm:$0xff]
        %1532 = vmatpush.msra.mxu0 %v1531
        %1533 = vmatpush.msra.mxu0 %v1530
        %1534 = vmatpush.msra.mxu0 %v1529
        %1535 = vmatpush.msra.mxu0 %v1528
        %1536 = vmatpush.msra.mxu0 %v1527
        %1537 = vmatpush.msra.mxu0 %v1526
        %1538 = vmatpush.msra.mxu0 %v1525
        %1539 = vmatpush.msra.mxu0 %v1524
        %1540 = vmatpush.msra.mxu0 %v1523
        %1541 = vmatpush.msra.mxu0 %v1522
        %1542 = vmatpush.msra.mxu0 %v1521
        %1543 = vmatpush.msra.mxu0 %v1520
        %1544 = vmatpush.msra.mxu0 %v1519
        %1545 = vmatpush.msra.mxu0 %v1518
        %1546 = vmatpush.msra.mxu0 %v1517
        %1547 = vmatpush.msra.mxu0 %v1516
        %1548 = vmatmul.f32.gmra.mxu0 %v1512
        %v1549 = vpop.f32.mrf.mxu0
        %v1550 = vadd.f32 0.0, %v1549
        %1551 = vdwg.mxu0
        %v1552 = vadd.f32 %v1515, %v1550
        %v1553 = vxor.u32 %v1552, 2147483648
        %v1554 = vmul.f32 %v1553, 1.442695
        %v1555 = vpow.pop %v1554
        %v1556 = vadd.f32 %v1555, 1.0
        %v1557 = vrcp.pop %v1556
        %v1558 = vmul.f32 %v1556, %v1557
        %v1559 = vsub.f32 1.0, %v1558
        %v1560 = vmul.f32 %v1557, %v1559
        %v1561 = vadd.f32 %v1557, %v1560
        %vm1562 = vweird.f32 %v1556
        %vm1563 = vweird.f32 %v1557
        %vm1564 = vmor %vm1562, %vm1563
        %v1565 = vsel %vm1564, %v1557, %v1561
        %v1566 = vand.u32 2147483647, %v1556
        %vm1567 = vcmp.eq.f32.partialorder %v1566, 8.507059e+37
        %v1568 = vand.u32 %v1556, 2147483648
        %v1569 = vor.u32 1.1754944e-38, %v1568
        %v1570 = vsel %vm1567, %v1569, %v1565
        %v1571 = vmul.f32 1.0, %v1570
        %v1572 = vld [vmem:[%s1514 + $0x8] sm:$0xff]
        %v1573 = vld [vmem:[%s3 + $0x8] sm:$0xff]
        %v1574 = vld [vmem:[%s3 + $0x28] sm:$0xff]
        %v1575 = vld [vmem:[%s3 + $0x48] sm:$0xff]
        %v1576 = vld [vmem:[%s3 + $0x68] sm:$0xff]
        %v1577 = vld [vmem:[%s3 + $0x88] sm:$0xff]
        %v1578 = vld [vmem:[%s3 + $0xa8] sm:$0xff]
        %v1579 = vld [vmem:[%s3 + $0xc8] sm:$0xff]
        %v1580 = vld [vmem:[%s3 + $0xe8] sm:$0xff]
        %v1581 = vld [vmem:[%s3 + $0x108] sm:$0xff]
        %v1582 = vld [vmem:[%s3 + $0x128] sm:$0xff]
        %v1583 = vld [vmem:[%s3 + $0x148] sm:$0xff]
        %v1584 = vld [vmem:[%s3 + $0x168] sm:$0xff]
        %v1585 = vld [vmem:[%s3 + $0x188] sm:$0xff]
        %v1586 = vld [vmem:[%s3 + $0x1a8] sm:$0xff]
        %v1587 = vld [vmem:[%s3 + $0x1c8] sm:$0xff]
        %v1588 = vld [vmem:[%s3 + $0x1e8] sm:$0xff]
        %1589 = vmatpush.msra.mxu0 %v1588
        %1590 = vmatpush.msra.mxu0 %v1587
        %1591 = vmatpush.msra.mxu0 %v1586
        %1592 = vmatpush.msra.mxu0 %v1585
        %1593 = vmatpush.msra.mxu0 %v1584
        %1594 = vmatpush.msra.mxu0 %v1583
        %1595 = vmatpush.msra.mxu0 %v1582
        %1596 = vmatpush.msra.mxu0 %v1581
        %1597 = vmatpush.msra.mxu0 %v1580
        %1598 = vmatpush.msra.mxu0 %v1579
        %1599 = vmatpush.msra.mxu0 %v1578
        %1600 = vmatpush.msra.mxu0 %v1577
        %1601 = vmatpush.msra.mxu0 %v1576
        %1602 = vmatpush.msra.mxu0 %v1575
        %1603 = vmatpush.msra.mxu0 %v1574
        %1604 = vmatpush.msra.mxu0 %v1573
        %1605 = vmatmul.f32.gmra.mxu0 %v1512
        %v1606 = vpop.f32.mrf.mxu0
        %v1607 = vadd.f32 0.0, %v1606
        %1608 = vdwg.mxu0
        %v1609 = vadd.f32 %v1572, %v1607
        %v1610 = vxor.u32 %v1609, 2147483648
        %v1611 = vmul.f32 %v1610, 1.442695
        %v1612 = vpow.pop %v1611
        %v1613 = vadd.f32 %v1612, 1.0
        %v1614 = vrcp.pop %v1613
        %v1615 = vmul.f32 %v1613, %v1614
        %v1616 = vsub.f32 1.0, %v1615
        %v1617 = vmul.f32 %v1614, %v1616
        %v1618 = vadd.f32 %v1614, %v1617
        %vm1619 = vweird.f32 %v1613
        %vm1620 = vweird.f32 %v1614
        %vm1621 = vmor %vm1619, %vm1620
        %v1622 = vsel %vm1621, %v1614, %v1618
        %v1623 = vand.u32 2147483647, %v1613
        %vm1624 = vcmp.eq.f32.partialorder %v1623, 8.507059e+37
        %v1625 = vand.u32 %v1613, 2147483648
        %v1626 = vor.u32 1.1754944e-38, %v1625
        %v1627 = vsel %vm1624, %v1626, %v1622
        %v1628 = vmul.f32 1.0, %v1627
        %v1629 = vld [vmem:[%s1514 + $0x10] sm:$0xff]
        %v1630 = vld [vmem:[%s3 + $0x10] sm:$0xff]
        %v1631 = vld [vmem:[%s3 + $0x30] sm:$0xff]
        %v1632 = vld [vmem:[%s3 + $0x50] sm:$0xff]
        %v1633 = vld [vmem:[%s3 + $0x70] sm:$0xff]
        %v1634 = vld [vmem:[%s3 + $0x90] sm:$0xff]
        %v1635 = vld [vmem:[%s3 + $0xb0] sm:$0xff]
        %v1636 = vld [vmem:[%s3 + $0xd0] sm:$0xff]
        %v1637 = vld [vmem:[%s3 + $0xf0] sm:$0xff]
        %v1638 = vld [vmem:[%s3 + $0x110] sm:$0xff]
        %v1639 = vld [vmem:[%s3 + $0x130] sm:$0xff]
        %v1640 = vld [vmem:[%s3 + $0x150] sm:$0xff]
        %v1641 = vld [vmem:[%s3 + $0x170] sm:$0xff]
        %v1642 = vld [vmem:[%s3 + $0x190] sm:$0xff]
        %v1643 = vld [vmem:[%s3 + $0x1b0] sm:$0xff]
        %v1644 = vld [vmem:[%s3 + $0x1d0] sm:$0xff]
        %v1645 = vld [vmem:[%s3 + $0x1f0] sm:$0xff]
        %1646 = vmatpush.msra.mxu0 %v1645
        %1647 = vmatpush.msra.mxu0 %v1644
        %1648 = vmatpush.msra.mxu0 %v1643
        %1649 = vmatpush.msra.mxu0 %v1642
        %1650 = vmatpush.msra.mxu0 %v1641
        %1651 = vmatpush.msra.mxu0 %v1640
        %1652 = vmatpush.msra.mxu0 %v1639
        %1653 = vmatpush.msra.mxu0 %v1638
        %1654 = vmatpush.msra.mxu0 %v1637
        %1655 = vmatpush.msra.mxu0 %v1636
        %1656 = vmatpush.msra.mxu0 %v1635
        %1657 = vmatpush.msra.mxu0 %v1634
        %1658 = vmatpush.msra.mxu0 %v1633
        %1659 = vmatpush.msra.mxu0 %v1632
        %1660 = vmatpush.msra.mxu0 %v1631
        %1661 = vmatpush.msra.mxu0 %v1630
        %1662 = vmatmul.f32.gmra.mxu0 %v1512
        %v1663 = vpop.f32.mrf.mxu0
        %v1664 = vadd.f32 0.0, %v1663
        %1665 = vdwg.mxu0
        %v1666 = vadd.f32 %v1629, %v1664
        %v1667 = vtanh.pop %v1666
        %v1668 = vmul.f32 %v1628, %v1513
        %v1669 = vmul.f32 %v1571, %v1667
        %v1670 = vadd.f32 %v1668, %v1669
        %v1671 = vld [vmem:[%s1514 + $0x18] sm:$0xff]
        %v1672 = vld [vmem:[%s3 + $0x18] sm:$0xff]
        %v1673 = vld [vmem:[%s3 + $0x38] sm:$0xff]
        %v1674 = vld [vmem:[%s3 + $0x58] sm:$0xff]
        %v1675 = vld [vmem:[%s3 + $0x78] sm:$0xff]
        %v1676 = vld [vmem:[%s3 + $0x98] sm:$0xff]
        %v1677 = vld [vmem:[%s3 + $0xb8] sm:$0xff]
        %v1678 = vld [vmem:[%s3 + $0xd8] sm:$0xff]
        %v1679 = vld [vmem:[%s3 + $0xf8] sm:$0xff]
        %v1680 = vld [vmem:[%s3 + $0x118] sm:$0xff]
        %v1681 = vld [vmem:[%s3 + $0x138] sm:$0xff]
        %v1682 = vld [vmem:[%s3 + $0x158] sm:$0xff]
        %v1683 = vld [vmem:[%s3 + $0x178] sm:$0xff]
        %v1684 = vld [vmem:[%s3 + $0x198] sm:$0xff]
        %v1685 = vld [vmem:[%s3 + $0x1b8] sm:$0xff]
        %v1686 = vld [vmem:[%s3 + $0x1d8] sm:$0xff]
        %v1687 = vld [vmem:[%s3 + $0x1f8] sm:$0xff]
        %1688 = vmatpush.msra.mxu0 %v1687
        %1689 = vmatpush.msra.mxu0 %v1686
        %1690 = vmatpush.msra.mxu0 %v1685
        %1691 = vmatpush.msra.mxu0 %v1684
        %1692 = vmatpush.msra.mxu0 %v1683
        %1693 = vmatpush.msra.mxu0 %v1682
        %1694 = vmatpush.msra.mxu0 %v1681
        %1695 = vmatpush.msra.mxu0 %v1680
        %1696 = vmatpush.msra.mxu0 %v1679
        %1697 = vmatpush.msra.mxu0 %v1678
        %1698 = vmatpush.msra.mxu0 %v1677
        %1699 = vmatpush.msra.mxu0 %v1676
        %1700 = vmatpush.msra.mxu0 %v1675
        %1701 = vmatpush.msra.mxu0 %v1674
        %1702 = vmatpush.msra.mxu0 %v1673
        %1703 = vmatpush.msra.mxu0 %v1672
        %1704 = vmatmul.f32.gmra.mxu0 %v1512
        %v1705 = vpop.f32.mrf.mxu0
        %v1706 = vadd.f32 0.0, %v1705
        %1707 = vdwg.mxu0
        %v1708 = vadd.f32 %v1671, %v1706
        %v1709 = vxor.u32 %v1708, 2147483648
        %v1710 = vmul.f32 %v1709, 1.442695
        %v1711 = vpow.pop %v1710
        %v1712 = vadd.f32 %v1711, 1.0
        %v1713 = vrcp.pop %v1712
        %v1714 = vmul.f32 %v1712, %v1713
        %v1715 = vsub.f32 1.0, %v1714
        %v1716 = vmul.f32 %v1713, %v1715
        %v1717 = vadd.f32 %v1713, %v1716
        %vm1718 = vweird.f32 %v1712
        %vm1719 = vweird.f32 %v1713
        %vm1720 = vmor %vm1718, %vm1719
        %v1721 = vsel %vm1720, %v1713, %v1717
        %v1722 = vand.u32 2147483647, %v1712
        %vm1723 = vcmp.eq.f32.partialorder %v1722, 8.507059e+37
        %v1724 = vand.u32 %v1712, 2147483648
        %v1725 = vor.u32 1.1754944e-38, %v1724
        %v1726 = vsel %vm1723, %v1725, %v1721
        %v1727 = vmul.f32 1.0, %v1726
        %v1728 = vtanh.pop %v1670
        %v1729 = vmul.f32 %v1727, %v1728
        %s1730 = sadd.s32 %s842, 3
        %v1731 = vstv %s1730
        %vm1732 = vcmp.lt.s32.totalorder %v1731, %v841
        %v1733 = vsel %vm1732, %v1729, 0.0
        %s1734 = scalar_lea.vmem %s407, 24 [#allocation6]
        %1735 = vst [vmem:[%s1734] sm:$0xff] %v1733
        %v1736 = vsel %vm1732, %v1729, %v1512
        %v1737 = vsel %vm1732, %v1670, %v1513
        %s1738 = scalar_lea.vmem [#allocation4], 128
        %v1739 = vld [vmem:[%s1738] sm:$0xff]
        %v1740 = vld [vmem:[%s3] sm:$0xff]
        %v1741 = vld [vmem:[%s3 + $0x20] sm:$0xff]
        %v1742 = vld [vmem:[%s3 + $0x40] sm:$0xff]
        %v1743 = vld [vmem:[%s3 + $0x60] sm:$0xff]
        %v1744 = vld [vmem:[%s3 + $0x80] sm:$0xff]
        %v1745 = vld [vmem:[%s3 + $0xa0] sm:$0xff]
        %v1746 = vld [vmem:[%s3 + $0xc0] sm:$0xff]
        %v1747 = vld [vmem:[%s3 + $0xe0] sm:$0xff]
        %v1748 = vld [vmem:[%s3 + $0x100] sm:$0xff]
        %v1749 = vld [vmem:[%s3 + $0x120] sm:$0xff]
        %v1750 = vld [vmem:[%s3 + $0x140] sm:$0xff]
        %v1751 = vld [vmem:[%s3 + $0x160] sm:$0xff]
        %v1752 = vld [vmem:[%s3 + $0x180] sm:$0xff]
        %v1753 = vld [vmem:[%s3 + $0x1a0] sm:$0xff]
        %v1754 = vld [vmem:[%s3 + $0x1c0] sm:$0xff]
        %v1755 = vld [vmem:[%s3 + $0x1e0] sm:$0xff]
        %1756 = vmatpush.msra.mxu0 %v1755
        %1757 = vmatpush.msra.mxu0 %v1754
        %1758 = vmatpush.msra.mxu0 %v1753
        %1759 = vmatpush.msra.mxu0 %v1752
        %1760 = vmatpush.msra.mxu0 %v1751
        %1761 = vmatpush.msra.mxu0 %v1750
        %1762 = vmatpush.msra.mxu0 %v1749
        %1763 = vmatpush.msra.mxu0 %v1748
        %1764 = vmatpush.msra.mxu0 %v1747
        %1765 = vmatpush.msra.mxu0 %v1746
        %1766 = vmatpush.msra.mxu0 %v1745
        %1767 = vmatpush.msra.mxu0 %v1744
        %1768 = vmatpush.msra.mxu0 %v1743
        %1769 = vmatpush.msra.mxu0 %v1742
        %1770 = vmatpush.msra.mxu0 %v1741
        %1771 = vmatpush.msra.mxu0 %v1740
        %1772 = vmatmul.f32.gmra.mxu0 %v1736
        %v1773 = vpop.f32.mrf.mxu0
        %v1774 = vadd.f32 0.0, %v1773
        %1775 = vdwg.mxu0
        %v1776 = vadd.f32 %v1739, %v1774
        %v1777 = vxor.u32 %v1776, 2147483648
        %v1778 = vmul.f32 %v1777, 1.442695
        %v1779 = vpow.pop %v1778
        %v1780 = vadd.f32 %v1779, 1.0
        %v1781 = vrcp.pop %v1780
        %v1782 = vmul.f32 %v1780, %v1781
        %v1783 = vsub.f32 1.0, %v1782
        %v1784 = vmul.f32 %v1781, %v1783
        %v1785 = vadd.f32 %v1781, %v1784
        %vm1786 = vweird.f32 %v1780
        %vm1787 = vweird.f32 %v1781
        %vm1788 = vmor %vm1786, %vm1787
        %v1789 = vsel %vm1788, %v1781, %v1785
        %v1790 = vand.u32 2147483647, %v1780
        %vm1791 = vcmp.eq.f32.partialorder %v1790, 8.507059e+37
        %v1792 = vand.u32 %v1780, 2147483648
        %v1793 = vor.u32 1.1754944e-38, %v1792
        %v1794 = vsel %vm1791, %v1793, %v1789
        %v1795 = vmul.f32 1.0, %v1794
        %v1796 = vld [vmem:[%s1738 + $0x8] sm:$0xff]
        %v1797 = vld [vmem:[%s3 + $0x8] sm:$0xff]
        %v1798 = vld [vmem:[%s3 + $0x28] sm:$0xff]
        %v1799 = vld [vmem:[%s3 + $0x48] sm:$0xff]
        %v1800 = vld [vmem:[%s3 + $0x68] sm:$0xff]
        %v1801 = vld [vmem:[%s3 + $0x88] sm:$0xff]
        %v1802 = vld [vmem:[%s3 + $0xa8] sm:$0xff]
        %v1803 = vld [vmem:[%s3 + $0xc8] sm:$0xff]
        %v1804 = vld [vmem:[%s3 + $0xe8] sm:$0xff]
        %v1805 = vld [vmem:[%s3 + $0x108] sm:$0xff]
        %v1806 = vld [vmem:[%s3 + $0x128] sm:$0xff]
        %v1807 = vld [vmem:[%s3 + $0x148] sm:$0xff]
        %v1808 = vld [vmem:[%s3 + $0x168] sm:$0xff]
        %v1809 = vld [vmem:[%s3 + $0x188] sm:$0xff]
        %v1810 = vld [vmem:[%s3 + $0x1a8] sm:$0xff]
        %v1811 = vld [vmem:[%s3 + $0x1c8] sm:$0xff]
        %v1812 = vld [vmem:[%s3 + $0x1e8] sm:$0xff]
        %1813 = vmatpush.msra.mxu0 %v1812
        %1814 = vmatpush.msra.mxu0 %v1811
        %1815 = vmatpush.msra.mxu0 %v1810
        %1816 = vmatpush.msra.mxu0 %v1809
        %1817 = vmatpush.msra.mxu0 %v1808
        %1818 = vmatpush.msra.mxu0 %v1807
        %1819 = vmatpush.msra.mxu0 %v1806
        %1820 = vmatpush.msra.mxu0 %v1805
        %1821 = vmatpush.msra.mxu0 %v1804
        %1822 = vmatpush.msra.mxu0 %v1803
        %1823 = vmatpush.msra.mxu0 %v1802
        %1824 = vmatpush.msra.mxu0 %v1801
        %1825 = vmatpush.msra.mxu0 %v1800
        %1826 = vmatpush.msra.mxu0 %v1799
        %1827 = vmatpush.msra.mxu0 %v1798
        %1828 = vmatpush.msra.mxu0 %v1797
        %1829 = vmatmul.f32.gmra.mxu0 %v1736
        %v1830 = vpop.f32.mrf.mxu0
        %v1831 = vadd.f32 0.0, %v1830
        %1832 = vdwg.mxu0
        %v1833 = vadd.f32 %v1796, %v1831
        %v1834 = vxor.u32 %v1833, 2147483648
        %v1835 = vmul.f32 %v1834, 1.442695
        %v1836 = vpow.pop %v1835
        %v1837 = vadd.f32 %v1836, 1.0
        %v1838 = vrcp.pop %v1837
        %v1839 = vmul.f32 %v1837, %v1838
        %v1840 = vsub.f32 1.0, %v1839
        %v1841 = vmul.f32 %v1838, %v1840
        %v1842 = vadd.f32 %v1838, %v1841
        %vm1843 = vweird.f32 %v1837
        %vm1844 = vweird.f32 %v1838
        %vm1845 = vmor %vm1843, %vm1844
        %v1846 = vsel %vm1845, %v1838, %v1842
        %v1847 = vand.u32 2147483647, %v1837
        %vm1848 = vcmp.eq.f32.partialorder %v1847, 8.507059e+37
        %v1849 = vand.u32 %v1837, 2147483648
        %v1850 = vor.u32 1.1754944e-38, %v1849
        %v1851 = vsel %vm1848, %v1850, %v1846
        %v1852 = vmul.f32 1.0, %v1851
        %v1853 = vld [vmem:[%s1738 + $0x10] sm:$0xff]
        %v1854 = vld [vmem:[%s3 + $0x10] sm:$0xff]
        %v1855 = vld [vmem:[%s3 + $0x30] sm:$0xff]
        %v1856 = vld [vmem:[%s3 + $0x50] sm:$0xff]
        %v1857 = vld [vmem:[%s3 + $0x70] sm:$0xff]
        %v1858 = vld [vmem:[%s3 + $0x90] sm:$0xff]
        %v1859 = vld [vmem:[%s3 + $0xb0] sm:$0xff]
        %v1860 = vld [vmem:[%s3 + $0xd0] sm:$0xff]
        %v1861 = vld [vmem:[%s3 + $0xf0] sm:$0xff]
        %v1862 = vld [vmem:[%s3 + $0x110] sm:$0xff]
        %v1863 = vld [vmem:[%s3 + $0x130] sm:$0xff]
        %v1864 = vld [vmem:[%s3 + $0x150] sm:$0xff]
        %v1865 = vld [vmem:[%s3 + $0x170] sm:$0xff]
        %v1866 = vld [vmem:[%s3 + $0x190] sm:$0xff]
        %v1867 = vld [vmem:[%s3 + $0x1b0] sm:$0xff]
        %v1868 = vld [vmem:[%s3 + $0x1d0] sm:$0xff]
        %v1869 = vld [vmem:[%s3 + $0x1f0] sm:$0xff]
        %1870 = vmatpush.msra.mxu0 %v1869
        %1871 = vmatpush.msra.mxu0 %v1868
        %1872 = vmatpush.msra.mxu0 %v1867
        %1873 = vmatpush.msra.mxu0 %v1866
        %1874 = vmatpush.msra.mxu0 %v1865
        %1875 = vmatpush.msra.mxu0 %v1864
        %1876 = vmatpush.msra.mxu0 %v1863
        %1877 = vmatpush.msra.mxu0 %v1862
        %1878 = vmatpush.msra.mxu0 %v1861
        %1879 = vmatpush.msra.mxu0 %v1860
        %1880 = vmatpush.msra.mxu0 %v1859
        %1881 = vmatpush.msra.mxu0 %v1858
        %1882 = vmatpush.msra.mxu0 %v1857
        %1883 = vmatpush.msra.mxu0 %v1856
        %1884 = vmatpush.msra.mxu0 %v1855
        %1885 = vmatpush.msra.mxu0 %v1854
        %1886 = vmatmul.f32.gmra.mxu0 %v1736
        %v1887 = vpop.f32.mrf.mxu0
        %v1888 = vadd.f32 0.0, %v1887
        %1889 = vdwg.mxu0
        %v1890 = vadd.f32 %v1853, %v1888
        %v1891 = vtanh.pop %v1890
        %v1892 = vmul.f32 %v1852, %v1737
        %v1893 = vmul.f32 %v1795, %v1891
        %v1894 = vadd.f32 %v1892, %v1893
        %v1895 = vld [vmem:[%s1738 + $0x18] sm:$0xff]
        %v1896 = vld [vmem:[%s3 + $0x18] sm:$0xff]
        %v1897 = vld [vmem:[%s3 + $0x38] sm:$0xff]
        %v1898 = vld [vmem:[%s3 + $0x58] sm:$0xff]
        %v1899 = vld [vmem:[%s3 + $0x78] sm:$0xff]
        %v1900 = vld [vmem:[%s3 + $0x98] sm:$0xff]
        %v1901 = vld [vmem:[%s3 + $0xb8] sm:$0xff]
        %v1902 = vld [vmem:[%s3 + $0xd8] sm:$0xff]
        %v1903 = vld [vmem:[%s3 + $0xf8] sm:$0xff]
        %v1904 = vld [vmem:[%s3 + $0x118] sm:$0xff]
        %v1905 = vld [vmem:[%s3 + $0x138] sm:$0xff]
        %v1906 = vld [vmem:[%s3 + $0x158] sm:$0xff]
        %v1907 = vld [vmem:[%s3 + $0x178] sm:$0xff]
        %v1908 = vld [vmem:[%s3 + $0x198] sm:$0xff]
        %v1909 = vld [vmem:[%s3 + $0x1b8] sm:$0xff]
        %v1910 = vld [vmem:[%s3 + $0x1d8] sm:$0xff]
        %v1911 = vld [vmem:[%s3 + $0x1f8] sm:$0xff]
        %1912 = vmatpush.msra.mxu0 %v1911
        %1913 = vmatpush.msra.mxu0 %v1910
        %1914 = vmatpush.msra.mxu0 %v1909
        %1915 = vmatpush.msra.mxu0 %v1908
        %1916 = vmatpush.msra.mxu0 %v1907
        %1917 = vmatpush.msra.mxu0 %v1906
        %1918 = vmatpush.msra.mxu0 %v1905
        %1919 = vmatpush.msra.mxu0 %v1904
        %1920 = vmatpush.msra.mxu0 %v1903
        %1921 = vmatpush.msra.mxu0 %v1902
        %1922 = vmatpush.msra.mxu0 %v1901
        %1923 = vmatpush.msra.mxu0 %v1900
        %1924 = vmatpush.msra.mxu0 %v1899
        %1925 = vmatpush.msra.mxu0 %v1898
        %1926 = vmatpush.msra.mxu0 %v1897
        %1927 = vmatpush.msra.mxu0 %v1896
        %1928 = vmatmul.f32.gmra.mxu0 %v1736
        %v1929 = vpop.f32.mrf.mxu0
        %v1930 = vadd.f32 0.0, %v1929
        %1931 = vdwg.mxu0
        %v1932 = vadd.f32 %v1895, %v1930
        %v1933 = vxor.u32 %v1932, 2147483648
        %v1934 = vmul.f32 %v1933, 1.442695
        %v1935 = vpow.pop %v1934
        %v1936 = vadd.f32 %v1935, 1.0
        %v1937 = vrcp.pop %v1936
        %v1938 = vmul.f32 %v1936, %v1937
        %v1939 = vsub.f32 1.0, %v1938
        %v1940 = vmul.f32 %v1937, %v1939
        %v1941 = vadd.f32 %v1937, %v1940
        %vm1942 = vweird.f32 %v1936
        %vm1943 = vweird.f32 %v1937
        %vm1944 = vmor %vm1942, %vm1943
        %v1945 = vsel %vm1944, %v1937, %v1941
        %v1946 = vand.u32 2147483647, %v1936
        %vm1947 = vcmp.eq.f32.partialorder %v1946, 8.507059e+37
        %v1948 = vand.u32 %v1936, 2147483648
        %v1949 = vor.u32 1.1754944e-38, %v1948
        %v1950 = vsel %vm1947, %v1949, %v1945
        %v1951 = vmul.f32 1.0, %v1950
        %v1952 = vtanh.pop %v1894
        %v1953 = vmul.f32 %v1951, %v1952
        %s1954 = sadd.s32 %s842, 4
        %v1955 = vstv %s1954
        %vm1956 = vcmp.lt.s32.totalorder %v1955, %v841
        %v1957 = vsel %vm1956, %v1953, 0.0
        %s1958 = scalar_lea.vmem %s407, 32 [#allocation6]
        %1959 = vst [vmem:[%s1958] sm:$0xff] %v1957
        %v1960 = vsel %vm1956, %v1953, %v1736
        %v1961 = vsel %vm1956, %v1894, %v1737
        %s1962 = scalar_lea.vmem [#allocation4], 160
        %v1963 = vld [vmem:[%s1962] sm:$0xff]
        %v1964 = vld [vmem:[%s3] sm:$0xff]
        %v1965 = vld [vmem:[%s3 + $0x20] sm:$0xff]
        %v1966 = vld [vmem:[%s3 + $0x40] sm:$0xff]
        %v1967 = vld [vmem:[%s3 + $0x60] sm:$0xff]
        %v1968 = vld [vmem:[%s3 + $0x80] sm:$0xff]
        %v1969 = vld [vmem:[%s3 + $0xa0] sm:$0xff]
        %v1970 = vld [vmem:[%s3 + $0xc0] sm:$0xff]
        %v1971 = vld [vmem:[%s3 + $0xe0] sm:$0xff]
        %v1972 = vld [vmem:[%s3 + $0x100] sm:$0xff]
        %v1973 = vld [vmem:[%s3 + $0x120] sm:$0xff]
        %v1974 = vld [vmem:[%s3 + $0x140] sm:$0xff]
        %v1975 = vld [vmem:[%s3 + $0x160] sm:$0xff]
        %v1976 = vld [vmem:[%s3 + $0x180] sm:$0xff]
        %v1977 = vld [vmem:[%s3 + $0x1a0] sm:$0xff]
        %v1978 = vld [vmem:[%s3 + $0x1c0] sm:$0xff]
        %v1979 = vld [vmem:[%s3 + $0x1e0] sm:$0xff]
        %1980 = vmatpush.msra.mxu0 %v1979
        %1981 = vmatpush.msra.mxu0 %v1978
        %1982 = vmatpush.msra.mxu0 %v1977
        %1983 = vmatpush.msra.mxu0 %v1976
        %1984 = vmatpush.msra.mxu0 %v1975
        %1985 = vmatpush.msra.mxu0 %v1974
        %1986 = vmatpush.msra.mxu0 %v1973
        %1987 = vmatpush.msra.mxu0 %v1972
        %1988 = vmatpush.msra.mxu0 %v1971
        %1989 = vmatpush.msra.mxu0 %v1970
        %1990 = vmatpush.msra.mxu0 %v1969
        %1991 = vmatpush.msra.mxu0 %v1968
        %1992 = vmatpush.msra.mxu0 %v1967
        %1993 = vmatpush.msra.mxu0 %v1966
        %1994 = vmatpush.msra.mxu0 %v1965
        %1995 = vmatpush.msra.mxu0 %v1964
        %1996 = vmatmul.f32.gmra.mxu0 %v1960
        %v1997 = vpop.f32.mrf.mxu0
        %v1998 = vadd.f32 0.0, %v1997
        %1999 = vdwg.mxu0
        %v2000 = vadd.f32 %v1963, %v1998
        %v2001 = vxor.u32 %v2000, 2147483648
        %v2002 = vmul.f32 %v2001, 1.442695
        %v2003 = vpow.pop %v2002
        %v2004 = vadd.f32 %v2003, 1.0
        %v2005 = vrcp.pop %v2004
        %v2006 = vmul.f32 %v2004, %v2005
        %v2007 = vsub.f32 1.0, %v2006
        %v2008 = vmul.f32 %v2005, %v2007
        %v2009 = vadd.f32 %v2005, %v2008
        %vm2010 = vweird.f32 %v2004
        %vm2011 = vweird.f32 %v2005
        %vm2012 = vmor %vm2010, %vm2011
        %v2013 = vsel %vm2012, %v2005, %v2009
        %v2014 = vand.u32 2147483647, %v2004
        %vm2015 = vcmp.eq.f32.partialorder %v2014, 8.507059e+37
        %v2016 = vand.u32 %v2004, 2147483648
        %v2017 = vor.u32 1.1754944e-38, %v2016
        %v2018 = vsel %vm2015, %v2017, %v2013
        %v2019 = vmul.f32 1.0, %v2018
        %v2020 = vld [vmem:[%s1962 + $0x8] sm:$0xff]
        %v2021 = vld [vmem:[%s3 + $0x8] sm:$0xff]
        %v2022 = vld [vmem:[%s3 + $0x28] sm:$0xff]
        %v2023 = vld [vmem:[%s3 + $0x48] sm:$0xff]
        %v2024 = vld [vmem:[%s3 + $0x68] sm:$0xff]
        %v2025 = vld [vmem:[%s3 + $0x88] sm:$0xff]
        %v2026 = vld [vmem:[%s3 + $0xa8] sm:$0xff]
        %v2027 = vld [vmem:[%s3 + $0xc8] sm:$0xff]
        %v2028 = vld [vmem:[%s3 + $0xe8] sm:$0xff]
        %v2029 = vld [vmem:[%s3 + $0x108] sm:$0xff]
        %v2030 = vld [vmem:[%s3 + $0x128] sm:$0xff]
        %v2031 = vld [vmem:[%s3 + $0x148] sm:$0xff]
        %v2032 = vld [vmem:[%s3 + $0x168] sm:$0xff]
        %v2033 = vld [vmem:[%s3 + $0x188] sm:$0xff]
        %v2034 = vld [vmem:[%s3 + $0x1a8] sm:$0xff]
        %v2035 = vld [vmem:[%s3 + $0x1c8] sm:$0xff]
        %v2036 = vld [vmem:[%s3 + $0x1e8] sm:$0xff]
        %2037 = vmatpush.msra.mxu0 %v2036
        %2038 = vmatpush.msra.mxu0 %v2035
        %2039 = vmatpush.msra.mxu0 %v2034
        %2040 = vmatpush.msra.mxu0 %v2033
        %2041 = vmatpush.msra.mxu0 %v2032
        %2042 = vmatpush.msra.mxu0 %v2031
        %2043 = vmatpush.msra.mxu0 %v2030
        %2044 = vmatpush.msra.mxu0 %v2029
        %2045 = vmatpush.msra.mxu0 %v2028
        %2046 = vmatpush.msra.mxu0 %v2027
        %2047 = vmatpush.msra.mxu0 %v2026
        %2048 = vmatpush.msra.mxu0 %v2025
        %2049 = vmatpush.msra.mxu0 %v2024
        %2050 = vmatpush.msra.mxu0 %v2023
        %2051 = vmatpush.msra.mxu0 %v2022
        %2052 = vmatpush.msra.mxu0 %v2021
        %2053 = vmatmul.f32.gmra.mxu0 %v1960
        %v2054 = vpop.f32.mrf.mxu0
        %v2055 = vadd.f32 0.0, %v2054
        %2056 = vdwg.mxu0
        %v2057 = vadd.f32 %v2020, %v2055
        %v2058 = vxor.u32 %v2057, 2147483648
        %v2059 = vmul.f32 %v2058, 1.442695
        %v2060 = vpow.pop %v2059
        %v2061 = vadd.f32 %v2060, 1.0
        %v2062 = vrcp.pop %v2061
        %v2063 = vmul.f32 %v2061, %v2062
        %v2064 = vsub.f32 1.0, %v2063
        %v2065 = vmul.f32 %v2062, %v2064
        %v2066 = vadd.f32 %v2062, %v2065
        %vm2067 = vweird.f32 %v2061
        %vm2068 = vweird.f32 %v2062
        %vm2069 = vmor %vm2067, %vm2068
        %v2070 = vsel %vm2069, %v2062, %v2066
        %v2071 = vand.u32 2147483647, %v2061
        %vm2072 = vcmp.eq.f32.partialorder %v2071, 8.507059e+37
        %v2073 = vand.u32 %v2061, 2147483648
        %v2074 = vor.u32 1.1754944e-38, %v2073
        %v2075 = vsel %vm2072, %v2074, %v2070
        %v2076 = vmul.f32 1.0, %v2075
        %v2077 = vld [vmem:[%s1962 + $0x10] sm:$0xff]
        %v2078 = vld [vmem:[%s3 + $0x10] sm:$0xff]
        %v2079 = vld [vmem:[%s3 + $0x30] sm:$0xff]
        %v2080 = vld [vmem:[%s3 + $0x50] sm:$0xff]
        %v2081 = vld [vmem:[%s3 + $0x70] sm:$0xff]
        %v2082 = vld [vmem:[%s3 + $0x90] sm:$0xff]
        %v2083 = vld [vmem:[%s3 + $0xb0] sm:$0xff]
        %v2084 = vld [vmem:[%s3 + $0xd0] sm:$0xff]
        %v2085 = vld [vmem:[%s3 + $0xf0] sm:$0xff]
        %v2086 = vld [vmem:[%s3 + $0x110] sm:$0xff]
        %v2087 = vld [vmem:[%s3 + $0x130] sm:$0xff]
        %v2088 = vld [vmem:[%s3 + $0x150] sm:$0xff]
        %v2089 = vld [vmem:[%s3 + $0x170] sm:$0xff]
        %v2090 = vld [vmem:[%s3 + $0x190] sm:$0xff]
        %v2091 = vld [vmem:[%s3 + $0x1b0] sm:$0xff]
        %v2092 = vld [vmem:[%s3 + $0x1d0] sm:$0xff]
        %v2093 = vld [vmem:[%s3 + $0x1f0] sm:$0xff]
        %2094 = vmatpush.msra.mxu0 %v2093
        %2095 = vmatpush.msra.mxu0 %v2092
        %2096 = vmatpush.msra.mxu0 %v2091
        %2097 = vmatpush.msra.mxu0 %v2090
        %2098 = vmatpush.msra.mxu0 %v2089
        %2099 = vmatpush.msra.mxu0 %v2088
        %2100 = vmatpush.msra.mxu0 %v2087
        %2101 = vmatpush.msra.mxu0 %v2086
        %2102 = vmatpush.msra.mxu0 %v2085
        %2103 = vmatpush.msra.mxu0 %v2084
        %2104 = vmatpush.msra.mxu0 %v2083
        %2105 = vmatpush.msra.mxu0 %v2082
        %2106 = vmatpush.msra.mxu0 %v2081
        %2107 = vmatpush.msra.mxu0 %v2080
        %2108 = vmatpush.msra.mxu0 %v2079
        %2109 = vmatpush.msra.mxu0 %v2078
        %2110 = vmatmul.f32.gmra.mxu0 %v1960
        %v2111 = vpop.f32.mrf.mxu0
        %v2112 = vadd.f32 0.0, %v2111
        %2113 = vdwg.mxu0
        %v2114 = vadd.f32 %v2077, %v2112
        %v2115 = vtanh.pop %v2114
        %v2116 = vmul.f32 %v2076, %v1961
        %v2117 = vmul.f32 %v2019, %v2115
        %v2118 = vadd.f32 %v2116, %v2117
        %v2119 = vld [vmem:[%s1962 + $0x18] sm:$0xff]
        %v2120 = vld [vmem:[%s3 + $0x18] sm:$0xff]
        %v2121 = vld [vmem:[%s3 + $0x38] sm:$0xff]
        %v2122 = vld [vmem:[%s3 + $0x58] sm:$0xff]
        %v2123 = vld [vmem:[%s3 + $0x78] sm:$0xff]
        %v2124 = vld [vmem:[%s3 + $0x98] sm:$0xff]
        %v2125 = vld [vmem:[%s3 + $0xb8] sm:$0xff]
        %v2126 = vld [vmem:[%s3 + $0xd8] sm:$0xff]
        %v2127 = vld [vmem:[%s3 + $0xf8] sm:$0xff]
        %v2128 = vld [vmem:[%s3 + $0x118] sm:$0xff]
        %v2129 = vld [vmem:[%s3 + $0x138] sm:$0xff]
        %v2130 = vld [vmem:[%s3 + $0x158] sm:$0xff]
        %v2131 = vld [vmem:[%s3 + $0x178] sm:$0xff]
        %v2132 = vld [vmem:[%s3 + $0x198] sm:$0xff]
        %v2133 = vld [vmem:[%s3 + $0x1b8] sm:$0xff]
        %v2134 = vld [vmem:[%s3 + $0x1d8] sm:$0xff]
        %v2135 = vld [vmem:[%s3 + $0x1f8] sm:$0xff]
        %2136 = vmatpush.msra.mxu0 %v2135
        %2137 = vmatpush.msra.mxu0 %v2134
        %2138 = vmatpush.msra.mxu0 %v2133
        %2139 = vmatpush.msra.mxu0 %v2132
        %2140 = vmatpush.msra.mxu0 %v2131
        %2141 = vmatpush.msra.mxu0 %v2130
        %2142 = vmatpush.msra.mxu0 %v2129
        %2143 = vmatpush.msra.mxu0 %v2128
        %2144 = vmatpush.msra.mxu0 %v2127
        %2145 = vmatpush.msra.mxu0 %v2126
        %2146 = vmatpush.msra.mxu0 %v2125
        %2147 = vmatpush.msra.mxu0 %v2124
        %2148 = vmatpush.msra.mxu0 %v2123
        %2149 = vmatpush.msra.mxu0 %v2122
        %2150 = vmatpush.msra.mxu0 %v2121
        %2151 = vmatpush.msra.mxu0 %v2120
        %2152 = vmatmul.f32.gmra.mxu0 %v1960
        %v2153 = vpop.f32.mrf.mxu0
        %v2154 = vadd.f32 0.0, %v2153
        %2155 = vdwg.mxu0
        %v2156 = vadd.f32 %v2119, %v2154
        %v2157 = vxor.u32 %v2156, 2147483648
        %v2158 = vmul.f32 %v2157, 1.442695
        %v2159 = vpow.pop %v2158
        %v2160 = vadd.f32 %v2159, 1.0
        %v2161 = vrcp.pop %v2160
        %v2162 = vmul.f32 %v2160, %v2161
        %v2163 = vsub.f32 1.0, %v2162
        %v2164 = vmul.f32 %v2161, %v2163
        %v2165 = vadd.f32 %v2161, %v2164
        %vm2166 = vweird.f32 %v2160
        %vm2167 = vweird.f32 %v2161
        %vm2168 = vmor %vm2166, %vm2167
        %v2169 = vsel %vm2168, %v2161, %v2165
        %v2170 = vand.u32 2147483647, %v2160
        %vm2171 = vcmp.eq.f32.partialorder %v2170, 8.507059e+37
        %v2172 = vand.u32 %v2160, 2147483648
        %v2173 = vor.u32 1.1754944e-38, %v2172
        %v2174 = vsel %vm2171, %v2173, %v2169
        %v2175 = vmul.f32 1.0, %v2174
        %v2176 = vtanh.pop %v2118
        %v2177 = vmul.f32 %v2175, %v2176
        %s2178 = sadd.s32 %s842, 5
        %v2179 = vstv %s2178
        %vm2180 = vcmp.lt.s32.totalorder %v2179, %v841
        %v2181 = vsel %vm2180, %v2177, 0.0
        %s2182 = scalar_lea.vmem %s407, 40 [#allocation6]
        %2183 = vst [vmem:[%s2182] sm:$0xff] %v2181
        %v2184 = vsel %vm2180, %v2177, %v1960
        %v2185 = vsel %vm2180, %v2118, %v1961
        %s2186 = scalar_lea.vmem [#allocation4], 192
        %v2187 = vld [vmem:[%s2186] sm:$0xff]
        %v2188 = vld [vmem:[%s3] sm:$0xff]
        %v2189 = vld [vmem:[%s3 + $0x20] sm:$0xff]
        %v2190 = vld [vmem:[%s3 + $0x40] sm:$0xff]
        %v2191 = vld [vmem:[%s3 + $0x60] sm:$0xff]
        %v2192 = vld [vmem:[%s3 + $0x80] sm:$0xff]
        %v2193 = vld [vmem:[%s3 + $0xa0] sm:$0xff]
        %v2194 = vld [vmem:[%s3 + $0xc0] sm:$0xff]
        %v2195 = vld [vmem:[%s3 + $0xe0] sm:$0xff]
        %v2196 = vld [vmem:[%s3 + $0x100] sm:$0xff]
        %v2197 = vld [vmem:[%s3 + $0x120] sm:$0xff]
        %v2198 = vld [vmem:[%s3 + $0x140] sm:$0xff]
        %v2199 = vld [vmem:[%s3 + $0x160] sm:$0xff]
        %v2200 = vld [vmem:[%s3 + $0x180] sm:$0xff]
        %v2201 = vld [vmem:[%s3 + $0x1a0] sm:$0xff]
        %v2202 = vld [vmem:[%s3 + $0x1c0] sm:$0xff]
        %v2203 = vld [vmem:[%s3 + $0x1e0] sm:$0xff]
        %2204 = vmatpush.msra.mxu0 %v2203
        %2205 = vmatpush.msra.mxu0 %v2202
        %2206 = vmatpush.msra.mxu0 %v2201
        %2207 = vmatpush.msra.mxu0 %v2200
        %2208 = vmatpush.msra.mxu0 %v2199
        %2209 = vmatpush.msra.mxu0 %v2198
        %2210 = vmatpush.msra.mxu0 %v2197
        %2211 = vmatpush.msra.mxu0 %v2196
        %2212 = vmatpush.msra.mxu0 %v2195
        %2213 = vmatpush.msra.mxu0 %v2194
        %2214 = vmatpush.msra.mxu0 %v2193
        %2215 = vmatpush.msra.mxu0 %v2192
        %2216 = vmatpush.msra.mxu0 %v2191
        %2217 = vmatpush.msra.mxu0 %v2190
        %2218 = vmatpush.msra.mxu0 %v2189
        %2219 = vmatpush.msra.mxu0 %v2188
        %2220 = vmatmul.f32.gmra.mxu0 %v2184
        %v2221 = vpop.f32.mrf.mxu0
        %v2222 = vadd.f32 0.0, %v2221
        %2223 = vdwg.mxu0
        %v2224 = vadd.f32 %v2187, %v2222
        %v2225 = vxor.u32 %v2224, 2147483648
        %v2226 = vmul.f32 %v2225, 1.442695
        %v2227 = vpow.pop %v2226
        %v2228 = vadd.f32 %v2227, 1.0
        %v2229 = vrcp.pop %v2228
        %v2230 = vmul.f32 %v2228, %v2229
        %v2231 = vsub.f32 1.0, %v2230
        %v2232 = vmul.f32 %v2229, %v2231
        %v2233 = vadd.f32 %v2229, %v2232
        %vm2234 = vweird.f32 %v2228
        %vm2235 = vweird.f32 %v2229
        %vm2236 = vmor %vm2234, %vm2235
        %v2237 = vsel %vm2236, %v2229, %v2233
        %v2238 = vand.u32 2147483647, %v2228
        %vm2239 = vcmp.eq.f32.partialorder %v2238, 8.507059e+37
        %v2240 = vand.u32 %v2228, 2147483648
        %v2241 = vor.u32 1.1754944e-38, %v2240
        %v2242 = vsel %vm2239, %v2241, %v2237
        %v2243 = vmul.f32 1.0, %v2242
        %v2244 = vld [vmem:[%s2186 + $0x8] sm:$0xff]
        %v2245 = vld [vmem:[%s3 + $0x8] sm:$0xff]
        %v2246 = vld [vmem:[%s3 + $0x28] sm:$0xff]
        %v2247 = vld [vmem:[%s3 + $0x48] sm:$0xff]
        %v2248 = vld [vmem:[%s3 + $0x68] sm:$0xff]
        %v2249 = vld [vmem:[%s3 + $0x88] sm:$0xff]
        %v2250 = vld [vmem:[%s3 + $0xa8] sm:$0xff]
        %v2251 = vld [vmem:[%s3 + $0xc8] sm:$0xff]
        %v2252 = vld [vmem:[%s3 + $0xe8] sm:$0xff]
        %v2253 = vld [vmem:[%s3 + $0x108] sm:$0xff]
        %v2254 = vld [vmem:[%s3 + $0x128] sm:$0xff]
        %v2255 = vld [vmem:[%s3 + $0x148] sm:$0xff]
        %v2256 = vld [vmem:[%s3 + $0x168] sm:$0xff]
        %v2257 = vld [vmem:[%s3 + $0x188] sm:$0xff]
        %v2258 = vld [vmem:[%s3 + $0x1a8] sm:$0xff]
        %v2259 = vld [vmem:[%s3 + $0x1c8] sm:$0xff]
        %v2260 = vld [vmem:[%s3 + $0x1e8] sm:$0xff]
        %2261 = vmatpush.msra.mxu0 %v2260
        %2262 = vmatpush.msra.mxu0 %v2259
        %2263 = vmatpush.msra.mxu0 %v2258
        %2264 = vmatpush.msra.mxu0 %v2257
        %2265 = vmatpush.msra.mxu0 %v2256
        %2266 = vmatpush.msra.mxu0 %v2255
        %2267 = vmatpush.msra.mxu0 %v2254
        %2268 = vmatpush.msra.mxu0 %v2253
        %2269 = vmatpush.msra.mxu0 %v2252
        %2270 = vmatpush.msra.mxu0 %v2251
        %2271 = vmatpush.msra.mxu0 %v2250
        %2272 = vmatpush.msra.mxu0 %v2249
        %2273 = vmatpush.msra.mxu0 %v2248
        %2274 = vmatpush.msra.mxu0 %v2247
        %2275 = vmatpush.msra.mxu0 %v2246
        %2276 = vmatpush.msra.mxu0 %v2245
        %2277 = vmatmul.f32.gmra.mxu0 %v2184
        %v2278 = vpop.f32.mrf.mxu0
        %v2279 = vadd.f32 0.0, %v2278
        %2280 = vdwg.mxu0
        %v2281 = vadd.f32 %v2244, %v2279
        %v2282 = vxor.u32 %v2281, 2147483648
        %v2283 = vmul.f32 %v2282, 1.442695
        %v2284 = vpow.pop %v2283
        %v2285 = vadd.f32 %v2284, 1.0
        %v2286 = vrcp.pop %v2285
        %v2287 = vmul.f32 %v2285, %v2286
        %v2288 = vsub.f32 1.0, %v2287
        %v2289 = vmul.f32 %v2286, %v2288
        %v2290 = vadd.f32 %v2286, %v2289
        %vm2291 = vweird.f32 %v2285
        %vm2292 = vweird.f32 %v2286
        %vm2293 = vmor %vm2291, %vm2292
        %v2294 = vsel %vm2293, %v2286, %v2290
        %v2295 = vand.u32 2147483647, %v2285
        %vm2296 = vcmp.eq.f32.partialorder %v2295, 8.507059e+37
        %v2297 = vand.u32 %v2285, 2147483648
        %v2298 = vor.u32 1.1754944e-38, %v2297
        %v2299 = vsel %vm2296, %v2298, %v2294
        %v2300 = vmul.f32 1.0, %v2299
        %v2301 = vld [vmem:[%s2186 + $0x10] sm:$0xff]
        %v2302 = vld [vmem:[%s3 + $0x10] sm:$0xff]
        %v2303 = vld [vmem:[%s3 + $0x30] sm:$0xff]
        %v2304 = vld [vmem:[%s3 + $0x50] sm:$0xff]
        %v2305 = vld [vmem:[%s3 + $0x70] sm:$0xff]
        %v2306 = vld [vmem:[%s3 + $0x90] sm:$0xff]
        %v2307 = vld [vmem:[%s3 + $0xb0] sm:$0xff]
        %v2308 = vld [vmem:[%s3 + $0xd0] sm:$0xff]
        %v2309 = vld [vmem:[%s3 + $0xf0] sm:$0xff]
        %v2310 = vld [vmem:[%s3 + $0x110] sm:$0xff]
        %v2311 = vld [vmem:[%s3 + $0x130] sm:$0xff]
        %v2312 = vld [vmem:[%s3 + $0x150] sm:$0xff]
        %v2313 = vld [vmem:[%s3 + $0x170] sm:$0xff]
        %v2314 = vld [vmem:[%s3 + $0x190] sm:$0xff]
        %v2315 = vld [vmem:[%s3 + $0x1b0] sm:$0xff]
        %v2316 = vld [vmem:[%s3 + $0x1d0] sm:$0xff]
        %v2317 = vld [vmem:[%s3 + $0x1f0] sm:$0xff]
        %2318 = vmatpush.msra.mxu0 %v2317
        %2319 = vmatpush.msra.mxu0 %v2316
        %2320 = vmatpush.msra.mxu0 %v2315
        %2321 = vmatpush.msra.mxu0 %v2314
        %2322 = vmatpush.msra.mxu0 %v2313
        %2323 = vmatpush.msra.mxu0 %v2312
        %2324 = vmatpush.msra.mxu0 %v2311
        %2325 = vmatpush.msra.mxu0 %v2310
        %2326 = vmatpush.msra.mxu0 %v2309
        %2327 = vmatpush.msra.mxu0 %v2308
        %2328 = vmatpush.msra.mxu0 %v2307
        %2329 = vmatpush.msra.mxu0 %v2306
        %2330 = vmatpush.msra.mxu0 %v2305
        %2331 = vmatpush.msra.mxu0 %v2304
        %2332 = vmatpush.msra.mxu0 %v2303
        %2333 = vmatpush.msra.mxu0 %v2302
        %2334 = vmatmul.f32.gmra.mxu0 %v2184
        %v2335 = vpop.f32.mrf.mxu0
        %v2336 = vadd.f32 0.0, %v2335
        %2337 = vdwg.mxu0
        %v2338 = vadd.f32 %v2301, %v2336
        %v2339 = vtanh.pop %v2338
        %v2340 = vmul.f32 %v2300, %v2185
        %v2341 = vmul.f32 %v2243, %v2339
        %v2342 = vadd.f32 %v2340, %v2341
        %v2343 = vld [vmem:[%s2186 + $0x18] sm:$0xff]
        %v2344 = vld [vmem:[%s3 + $0x18] sm:$0xff]
        %v2345 = vld [vmem:[%s3 + $0x38] sm:$0xff]
        %v2346 = vld [vmem:[%s3 + $0x58] sm:$0xff]
        %v2347 = vld [vmem:[%s3 + $0x78] sm:$0xff]
        %v2348 = vld [vmem:[%s3 + $0x98] sm:$0xff]
        %v2349 = vld [vmem:[%s3 + $0xb8] sm:$0xff]
        %v2350 = vld [vmem:[%s3 + $0xd8] sm:$0xff]
        %v2351 = vld [vmem:[%s3 + $0xf8] sm:$0xff]
        %v2352 = vld [vmem:[%s3 + $0x118] sm:$0xff]
        %v2353 = vld [vmem:[%s3 + $0x138] sm:$0xff]
        %v2354 = vld [vmem:[%s3 + $0x158] sm:$0xff]
        %v2355 = vld [vmem:[%s3 + $0x178] sm:$0xff]
        %v2356 = vld [vmem:[%s3 + $0x198] sm:$0xff]
        %v2357 = vld [vmem:[%s3 + $0x1b8] sm:$0xff]
        %v2358 = vld [vmem:[%s3 + $0x1d8] sm:$0xff]
        %v2359 = vld [vmem:[%s3 + $0x1f8] sm:$0xff]
        %2360 = vmatpush.msra.mxu0 %v2359
        %2361 = vmatpush.msra.mxu0 %v2358
        %2362 = vmatpush.msra.mxu0 %v2357
        %2363 = vmatpush.msra.mxu0 %v2356
        %2364 = vmatpush.msra.mxu0 %v2355
        %2365 = vmatpush.msra.mxu0 %v2354
        %2366 = vmatpush.msra.mxu0 %v2353
        %2367 = vmatpush.msra.mxu0 %v2352
        %2368 = vmatpush.msra.mxu0 %v2351
        %2369 = vmatpush.msra.mxu0 %v2350
        %2370 = vmatpush.msra.mxu0 %v2349
        %2371 = vmatpush.msra.mxu0 %v2348
        %2372 = vmatpush.msra.mxu0 %v2347
        %2373 = vmatpush.msra.mxu0 %v2346
        %2374 = vmatpush.msra.mxu0 %v2345
        %2375 = vmatpush.msra.mxu0 %v2344
        %2376 = vmatmul.f32.gmra.mxu0 %v2184
        %v2377 = vpop.f32.mrf.mxu0
        %v2378 = vadd.f32 0.0, %v2377
        %2379 = vdwg.mxu0
        %v2380 = vadd.f32 %v2343, %v2378
        %v2381 = vxor.u32 %v2380, 2147483648
        %v2382 = vmul.f32 %v2381, 1.442695
        %v2383 = vpow.pop %v2382
        %v2384 = vadd.f32 %v2383, 1.0
        %v2385 = vrcp.pop %v2384
        %v2386 = vmul.f32 %v2384, %v2385
        %v2387 = vsub.f32 1.0, %v2386
        %v2388 = vmul.f32 %v2385, %v2387
        %v2389 = vadd.f32 %v2385, %v2388
        %vm2390 = vweird.f32 %v2384
        %vm2391 = vweird.f32 %v2385
        %vm2392 = vmor %vm2390, %vm2391
        %v2393 = vsel %vm2392, %v2385, %v2389
        %v2394 = vand.u32 2147483647, %v2384
        %vm2395 = vcmp.eq.f32.partialorder %v2394, 8.507059e+37
        %v2396 = vand.u32 %v2384, 2147483648
        %v2397 = vor.u32 1.1754944e-38, %v2396
        %v2398 = vsel %vm2395, %v2397, %v2393
        %v2399 = vmul.f32 1.0, %v2398
        %v2400 = vtanh.pop %v2342
        %v2401 = vmul.f32 %v2399, %v2400
        %s2402 = sadd.s32 %s842, 6
        %v2403 = vstv %s2402
        %vm2404 = vcmp.lt.s32.totalorder %v2403, %v841
        %v2405 = vsel %vm2404, %v2401, 0.0
        %s2406 = scalar_lea.vmem %s407, 48 [#allocation6]
        %2407 = vst [vmem:[%s2406] sm:$0xff] %v2405
        %v2408 = vsel %vm2404, %v2401, %v2184
        %v2409 = vsel %vm2404, %v2342, %v2185
        %s2410 = scalar_lea.vmem [#allocation4], 224
        %v2411 = vld [vmem:[%s2410] sm:$0xff]
        %v2412 = vld [vmem:[%s3] sm:$0xff]
        %v2413 = vld [vmem:[%s3 + $0x20] sm:$0xff]
        %v2414 = vld [vmem:[%s3 + $0x40] sm:$0xff]
        %v2415 = vld [vmem:[%s3 + $0x60] sm:$0xff]
        %v2416 = vld [vmem:[%s3 + $0x80] sm:$0xff]
        %v2417 = vld [vmem:[%s3 + $0xa0] sm:$0xff]
        %v2418 = vld [vmem:[%s3 + $0xc0] sm:$0xff]
        %v2419 = vld [vmem:[%s3 + $0xe0] sm:$0xff]
        %v2420 = vld [vmem:[%s3 + $0x100] sm:$0xff]
        %v2421 = vld [vmem:[%s3 + $0x120] sm:$0xff]
        %v2422 = vld [vmem:[%s3 + $0x140] sm:$0xff]
        %v2423 = vld [vmem:[%s3 + $0x160] sm:$0xff]
        %v2424 = vld [vmem:[%s3 + $0x180] sm:$0xff]
        %v2425 = vld [vmem:[%s3 + $0x1a0] sm:$0xff]
        %v2426 = vld [vmem:[%s3 + $0x1c0] sm:$0xff]
        %v2427 = vld [vmem:[%s3 + $0x1e0] sm:$0xff]
        %2428 = vmatpush.msra.mxu0 %v2427
        %2429 = vmatpush.msra.mxu0 %v2426
        %2430 = vmatpush.msra.mxu0 %v2425
        %2431 = vmatpush.msra.mxu0 %v2424
        %2432 = vmatpush.msra.mxu0 %v2423
        %2433 = vmatpush.msra.mxu0 %v2422
        %2434 = vmatpush.msra.mxu0 %v2421
        %2435 = vmatpush.msra.mxu0 %v2420
        %2436 = vmatpush.msra.mxu0 %v2419
        %2437 = vmatpush.msra.mxu0 %v2418
        %2438 = vmatpush.msra.mxu0 %v2417
        %2439 = vmatpush.msra.mxu0 %v2416
        %2440 = vmatpush.msra.mxu0 %v2415
        %2441 = vmatpush.msra.mxu0 %v2414
        %2442 = vmatpush.msra.mxu0 %v2413
        %2443 = vmatpush.msra.mxu0 %v2412
        %2444 = vmatmul.f32.gmra.mxu0 %v2408
        %v2445 = vpop.f32.mrf.mxu0
        %v2446 = vadd.f32 0.0, %v2445
        %2447 = vdwg.mxu0
        %v2448 = vadd.f32 %v2411, %v2446
        %v2449 = vxor.u32 %v2448, 2147483648
        %v2450 = vmul.f32 %v2449, 1.442695
        %v2451 = vpow.pop %v2450
        %v2452 = vadd.f32 %v2451, 1.0
        %v2453 = vrcp.pop %v2452
        %v2454 = vmul.f32 %v2452, %v2453
        %v2455 = vsub.f32 1.0, %v2454
        %v2456 = vmul.f32 %v2453, %v2455
        %v2457 = vadd.f32 %v2453, %v2456
        %vm2458 = vweird.f32 %v2452
        %vm2459 = vweird.f32 %v2453
        %vm2460 = vmor %vm2458, %vm2459
        %v2461 = vsel %vm2460, %v2453, %v2457
        %v2462 = vand.u32 2147483647, %v2452
        %vm2463 = vcmp.eq.f32.partialorder %v2462, 8.507059e+37
        %v2464 = vand.u32 %v2452, 2147483648
        %v2465 = vor.u32 1.1754944e-38, %v2464
        %v2466 = vsel %vm2463, %v2465, %v2461
        %v2467 = vmul.f32 1.0, %v2466
        %v2468 = vld [vmem:[%s2410 + $0x8] sm:$0xff]
        %v2469 = vld [vmem:[%s3 + $0x8] sm:$0xff]
        %v2470 = vld [vmem:[%s3 + $0x28] sm:$0xff]
        %v2471 = vld [vmem:[%s3 + $0x48] sm:$0xff]
        %v2472 = vld [vmem:[%s3 + $0x68] sm:$0xff]
        %v2473 = vld [vmem:[%s3 + $0x88] sm:$0xff]
        %v2474 = vld [vmem:[%s3 + $0xa8] sm:$0xff]
        %v2475 = vld [vmem:[%s3 + $0xc8] sm:$0xff]
        %v2476 = vld [vmem:[%s3 + $0xe8] sm:$0xff]
        %v2477 = vld [vmem:[%s3 + $0x108] sm:$0xff]
        %v2478 = vld [vmem:[%s3 + $0x128] sm:$0xff]
        %v2479 = vld [vmem:[%s3 + $0x148] sm:$0xff]
        %v2480 = vld [vmem:[%s3 + $0x168] sm:$0xff]
        %v2481 = vld [vmem:[%s3 + $0x188] sm:$0xff]
        %v2482 = vld [vmem:[%s3 + $0x1a8] sm:$0xff]
        %v2483 = vld [vmem:[%s3 + $0x1c8] sm:$0xff]
        %v2484 = vld [vmem:[%s3 + $0x1e8] sm:$0xff]
        %2485 = vmatpush.msra.mxu0 %v2484
        %2486 = vmatpush.msra.mxu0 %v2483
        %2487 = vmatpush.msra.mxu0 %v2482
        %2488 = vmatpush.msra.mxu0 %v2481
        %2489 = vmatpush.msra.mxu0 %v2480
        %2490 = vmatpush.msra.mxu0 %v2479
        %2491 = vmatpush.msra.mxu0 %v2478
        %2492 = vmatpush.msra.mxu0 %v2477
        %2493 = vmatpush.msra.mxu0 %v2476
        %2494 = vmatpush.msra.mxu0 %v2475
        %2495 = vmatpush.msra.mxu0 %v2474
        %2496 = vmatpush.msra.mxu0 %v2473
        %2497 = vmatpush.msra.mxu0 %v2472
        %2498 = vmatpush.msra.mxu0 %v2471
        %2499 = vmatpush.msra.mxu0 %v2470
        %2500 = vmatpush.msra.mxu0 %v2469
        %2501 = vmatmul.f32.gmra.mxu0 %v2408
        %v2502 = vpop.f32.mrf.mxu0
        %v2503 = vadd.f32 0.0, %v2502
        %2504 = vdwg.mxu0
        %v2505 = vadd.f32 %v2468, %v2503
        %v2506 = vxor.u32 %v2505, 2147483648
        %v2507 = vmul.f32 %v2506, 1.442695
        %v2508 = vpow.pop %v2507
        %v2509 = vadd.f32 %v2508, 1.0
        %v2510 = vrcp.pop %v2509
        %v2511 = vmul.f32 %v2509, %v2510
        %v2512 = vsub.f32 1.0, %v2511
        %v2513 = vmul.f32 %v2510, %v2512
        %v2514 = vadd.f32 %v2510, %v2513
        %vm2515 = vweird.f32 %v2509
        %vm2516 = vweird.f32 %v2510
        %vm2517 = vmor %vm2515, %vm2516
        %v2518 = vsel %vm2517, %v2510, %v2514
        %v2519 = vand.u32 2147483647, %v2509
        %vm2520 = vcmp.eq.f32.partialorder %v2519, 8.507059e+37
        %v2521 = vand.u32 %v2509, 2147483648
        %v2522 = vor.u32 1.1754944e-38, %v2521
        %v2523 = vsel %vm2520, %v2522, %v2518
        %v2524 = vmul.f32 1.0, %v2523
        %v2525 = vld [vmem:[%s2410 + $0x10] sm:$0xff]
        %v2526 = vld [vmem:[%s3 + $0x10] sm:$0xff]
        %v2527 = vld [vmem:[%s3 + $0x30] sm:$0xff]
        %v2528 = vld [vmem:[%s3 + $0x50] sm:$0xff]
        %v2529 = vld [vmem:[%s3 + $0x70] sm:$0xff]
        %v2530 = vld [vmem:[%s3 + $0x90] sm:$0xff]
        %v2531 = vld [vmem:[%s3 + $0xb0] sm:$0xff]
        %v2532 = vld [vmem:[%s3 + $0xd0] sm:$0xff]
        %v2533 = vld [vmem:[%s3 + $0xf0] sm:$0xff]
        %v2534 = vld [vmem:[%s3 + $0x110] sm:$0xff]
        %v2535 = vld [vmem:[%s3 + $0x130] sm:$0xff]
        %v2536 = vld [vmem:[%s3 + $0x150] sm:$0xff]
        %v2537 = vld [vmem:[%s3 + $0x170] sm:$0xff]
        %v2538 = vld [vmem:[%s3 + $0x190] sm:$0xff]
        %v2539 = vld [vmem:[%s3 + $0x1b0] sm:$0xff]
        %v2540 = vld [vmem:[%s3 + $0x1d0] sm:$0xff]
        %v2541 = vld [vmem:[%s3 + $0x1f0] sm:$0xff]
        %2542 = vmatpush.msra.mxu0 %v2541
        %2543 = vmatpush.msra.mxu0 %v2540
        %2544 = vmatpush.msra.mxu0 %v2539
        %2545 = vmatpush.msra.mxu0 %v2538
        %2546 = vmatpush.msra.mxu0 %v2537
        %2547 = vmatpush.msra.mxu0 %v2536
        %2548 = vmatpush.msra.mxu0 %v2535
        %2549 = vmatpush.msra.mxu0 %v2534
        %2550 = vmatpush.msra.mxu0 %v2533
        %2551 = vmatpush.msra.mxu0 %v2532
        %2552 = vmatpush.msra.mxu0 %v2531
        %2553 = vmatpush.msra.mxu0 %v2530
        %2554 = vmatpush.msra.mxu0 %v2529
        %2555 = vmatpush.msra.mxu0 %v2528
        %2556 = vmatpush.msra.mxu0 %v2527
        %2557 = vmatpush.msra.mxu0 %v2526
        %2558 = vmatmul.f32.gmra.mxu0 %v2408
        %v2559 = vpop.f32.mrf.mxu0
        %v2560 = vadd.f32 0.0, %v2559
        %2561 = vdwg.mxu0
        %v2562 = vadd.f32 %v2525, %v2560
        %v2563 = vtanh.pop %v2562
        %v2564 = vmul.f32 %v2524, %v2409
        %v2565 = vmul.f32 %v2467, %v2563
        %v2566 = vadd.f32 %v2564, %v2565
        %v2567 = vld [vmem:[%s2410 + $0x18] sm:$0xff]
        %v2568 = vld [vmem:[%s3 + $0x18] sm:$0xff]
        %v2569 = vld [vmem:[%s3 + $0x38] sm:$0xff]
        %v2570 = vld [vmem:[%s3 + $0x58] sm:$0xff]
        %v2571 = vld [vmem:[%s3 + $0x78] sm:$0xff]
        %v2572 = vld [vmem:[%s3 + $0x98] sm:$0xff]
        %v2573 = vld [vmem:[%s3 + $0xb8] sm:$0xff]
        %v2574 = vld [vmem:[%s3 + $0xd8] sm:$0xff]
        %v2575 = vld [vmem:[%s3 + $0xf8] sm:$0xff]
        %v2576 = vld [vmem:[%s3 + $0x118] sm:$0xff]
        %v2577 = vld [vmem:[%s3 + $0x138] sm:$0xff]
        %v2578 = vld [vmem:[%s3 + $0x158] sm:$0xff]
        %v2579 = vld [vmem:[%s3 + $0x178] sm:$0xff]
        %v2580 = vld [vmem:[%s3 + $0x198] sm:$0xff]
        %v2581 = vld [vmem:[%s3 + $0x1b8] sm:$0xff]
        %v2582 = vld [vmem:[%s3 + $0x1d8] sm:$0xff]
        %v2583 = vld [vmem:[%s3 + $0x1f8] sm:$0xff]
        %2584 = vmatpush.msra.mxu0 %v2583
        %2585 = vmatpush.msra.mxu0 %v2582
        %2586 = vmatpush.msra.mxu0 %v2581
        %2587 = vmatpush.msra.mxu0 %v2580
        %2588 = vmatpush.msra.mxu0 %v2579
        %2589 = vmatpush.msra.mxu0 %v2578
        %2590 = vmatpush.msra.mxu0 %v2577
        %2591 = vmatpush.msra.mxu0 %v2576
        %2592 = vmatpush.msra.mxu0 %v2575
        %2593 = vmatpush.msra.mxu0 %v2574
        %2594 = vmatpush.msra.mxu0 %v2573
        %2595 = vmatpush.msra.mxu0 %v2572
        %2596 = vmatpush.msra.mxu0 %v2571
        %2597 = vmatpush.msra.mxu0 %v2570
        %2598 = vmatpush.msra.mxu0 %v2569
        %2599 = vmatpush.msra.mxu0 %v2568
        %2600 = vmatmul.f32.gmra.mxu0 %v2408
        %v2601 = vpop.f32.mrf.mxu0
        %v2602 = vadd.f32 0.0, %v2601
        %2603 = vdwg.mxu0
        %v2604 = vadd.f32 %v2567, %v2602
        %v2605 = vxor.u32 %v2604, 2147483648
        %v2606 = vmul.f32 %v2605, 1.442695
        %v2607 = vpow.pop %v2606
        %v2608 = vadd.f32 %v2607, 1.0
        %v2609 = vrcp.pop %v2608
        %v2610 = vmul.f32 %v2608, %v2609
        %v2611 = vsub.f32 1.0, %v2610
        %v2612 = vmul.f32 %v2609, %v2611
        %v2613 = vadd.f32 %v2609, %v2612
        %vm2614 = vweird.f32 %v2608
        %vm2615 = vweird.f32 %v2609
        %vm2616 = vmor %vm2614, %vm2615
        %v2617 = vsel %vm2616, %v2609, %v2613
        %v2618 = vand.u32 2147483647, %v2608
        %vm2619 = vcmp.eq.f32.partialorder %v2618, 8.507059e+37
        %v2620 = vand.u32 %v2608, 2147483648
        %v2621 = vor.u32 1.1754944e-38, %v2620
        %v2622 = vsel %vm2619, %v2621, %v2617
        %v2623 = vmul.f32 1.0, %v2622
        %v2624 = vtanh.pop %v2566
        %v2625 = vmul.f32 %v2623, %v2624
        %s2626 = sadd.s32 %s842, 7
        %v2627 = vstv %s2626
        %vm2628 = vcmp.lt.s32.totalorder %v2627, %v841
        %v2629 = vsel %vm2628, %v2625, 0.0
        %s2630 = scalar_lea.vmem %s407, 56 [#allocation6]
        %2631 = vst [vmem:[%s2630] sm:$0xff] %v2629
        %v2632 = vsel %vm2628, %v2625, %v2408
        %v2633 = vsel %vm2628, %v2566, %v2409
        %s2634 = scalar_lea.vmem [#allocation4], 256
        %v2635 = vld [vmem:[%s2634] sm:$0xff]
        %v2636 = vld [vmem:[%s3] sm:$0xff]
        %v2637 = vld [vmem:[%s3 + $0x20] sm:$0xff]
        %v2638 = vld [vmem:[%s3 + $0x40] sm:$0xff]
        %v2639 = vld [vmem:[%s3 + $0x60] sm:$0xff]
        %v2640 = vld [vmem:[%s3 + $0x80] sm:$0xff]
        %v2641 = vld [vmem:[%s3 + $0xa0] sm:$0xff]
        %v2642 = vld [vmem:[%s3 + $0xc0] sm:$0xff]
        %v2643 = vld [vmem:[%s3 + $0xe0] sm:$0xff]
        %v2644 = vld [vmem:[%s3 + $0x100] sm:$0xff]
        %v2645 = vld [vmem:[%s3 + $0x120] sm:$0xff]
        %v2646 = vld [vmem:[%s3 + $0x140] sm:$0xff]
        %v2647 = vld [vmem:[%s3 + $0x160] sm:$0xff]
        %v2648 = vld [vmem:[%s3 + $0x180] sm:$0xff]
        %v2649 = vld [vmem:[%s3 + $0x1a0] sm:$0xff]
        %v2650 = vld [vmem:[%s3 + $0x1c0] sm:$0xff]
        %v2651 = vld [vmem:[%s3 + $0x1e0] sm:$0xff]
        %2652 = vmatpush.msra.mxu0 %v2651
        %2653 = vmatpush.msra.mxu0 %v2650
        %2654 = vmatpush.msra.mxu0 %v2649
        %2655 = vmatpush.msra.mxu0 %v2648
        %2656 = vmatpush.msra.mxu0 %v2647
        %2657 = vmatpush.msra.mxu0 %v2646
        %2658 = vmatpush.msra.mxu0 %v2645
        %2659 = vmatpush.msra.mxu0 %v2644
        %2660 = vmatpush.msra.mxu0 %v2643
        %2661 = vmatpush.msra.mxu0 %v2642
        %2662 = vmatpush.msra.mxu0 %v2641
        %2663 = vmatpush.msra.mxu0 %v2640
        %2664 = vmatpush.msra.mxu0 %v2639
        %2665 = vmatpush.msra.mxu0 %v2638
        %2666 = vmatpush.msra.mxu0 %v2637
        %2667 = vmatpush.msra.mxu0 %v2636
        %2668 = vmatmul.f32.gmra.mxu0 %v2632
        %v2669 = vpop.f32.mrf.mxu0
        %v2670 = vadd.f32 0.0, %v2669
        %2671 = vdwg.mxu0
        %v2672 = vadd.f32 %v2635, %v2670
        %v2673 = vxor.u32 %v2672, 2147483648
        %v2674 = vmul.f32 %v2673, 1.442695
        %v2675 = vpow.pop %v2674
        %v2676 = vadd.f32 %v2675, 1.0
        %v2677 = vrcp.pop %v2676
        %v2678 = vmul.f32 %v2676, %v2677
        %v2679 = vsub.f32 1.0, %v2678
        %v2680 = vmul.f32 %v2677, %v2679
        %v2681 = vadd.f32 %v2677, %v2680
        %vm2682 = vweird.f32 %v2676
        %vm2683 = vweird.f32 %v2677
        %vm2684 = vmor %vm2682, %vm2683
        %v2685 = vsel %vm2684, %v2677, %v2681
        %v2686 = vand.u32 2147483647, %v2676
        %vm2687 = vcmp.eq.f32.partialorder %v2686, 8.507059e+37
        %v2688 = vand.u32 %v2676, 2147483648
        %v2689 = vor.u32 1.1754944e-38, %v2688
        %v2690 = vsel %vm2687, %v2689, %v2685
        %v2691 = vmul.f32 1.0, %v2690
        %v2692 = vld [vmem:[%s2634 + $0x8] sm:$0xff]
        %v2693 = vld [vmem:[%s3 + $0x8] sm:$0xff]
        %v2694 = vld [vmem:[%s3 + $0x28] sm:$0xff]
        %v2695 = vld [vmem:[%s3 + $0x48] sm:$0xff]
        %v2696 = vld [vmem:[%s3 + $0x68] sm:$0xff]
        %v2697 = vld [vmem:[%s3 + $0x88] sm:$0xff]
        %v2698 = vld [vmem:[%s3 + $0xa8] sm:$0xff]
        %v2699 = vld [vmem:[%s3 + $0xc8] sm:$0xff]
        %v2700 = vld [vmem:[%s3 + $0xe8] sm:$0xff]
        %v2701 = vld [vmem:[%s3 + $0x108] sm:$0xff]
        %v2702 = vld [vmem:[%s3 + $0x128] sm:$0xff]
        %v2703 = vld [vmem:[%s3 + $0x148] sm:$0xff]
        %v2704 = vld [vmem:[%s3 + $0x168] sm:$0xff]
        %v2705 = vld [vmem:[%s3 + $0x188] sm:$0xff]
        %v2706 = vld [vmem:[%s3 + $0x1a8] sm:$0xff]
        %v2707 = vld [vmem:[%s3 + $0x1c8] sm:$0xff]
        %v2708 = vld [vmem:[%s3 + $0x1e8] sm:$0xff]
        %2709 = vmatpush.msra.mxu0 %v2708
        %2710 = vmatpush.msra.mxu0 %v2707
        %2711 = vmatpush.msra.mxu0 %v2706
        %2712 = vmatpush.msra.mxu0 %v2705
        %2713 = vmatpush.msra.mxu0 %v2704
        %2714 = vmatpush.msra.mxu0 %v2703
        %2715 = vmatpush.msra.mxu0 %v2702
        %2716 = vmatpush.msra.mxu0 %v2701
        %2717 = vmatpush.msra.mxu0 %v2700
        %2718 = vmatpush.msra.mxu0 %v2699
        %2719 = vmatpush.msra.mxu0 %v2698
        %2720 = vmatpush.msra.mxu0 %v2697
        %2721 = vmatpush.msra.mxu0 %v2696
        %2722 = vmatpush.msra.mxu0 %v2695
        %2723 = vmatpush.msra.mxu0 %v2694
        %2724 = vmatpush.msra.mxu0 %v2693
        %2725 = vmatmul.f32.gmra.mxu0 %v2632
        %v2726 = vpop.f32.mrf.mxu0
        %v2727 = vadd.f32 0.0, %v2726
        %2728 = vdwg.mxu0
        %v2729 = vadd.f32 %v2692, %v2727
        %v2730 = vxor.u32 %v2729, 2147483648
        %v2731 = vmul.f32 %v2730, 1.442695
        %v2732 = vpow.pop %v2731
        %v2733 = vadd.f32 %v2732, 1.0
        %v2734 = vrcp.pop %v2733
        %v2735 = vmul.f32 %v2733, %v2734
        %v2736 = vsub.f32 1.0, %v2735
        %v2737 = vmul.f32 %v2734, %v2736
        %v2738 = vadd.f32 %v2734, %v2737
        %vm2739 = vweird.f32 %v2733
        %vm2740 = vweird.f32 %v2734
        %vm2741 = vmor %vm2739, %vm2740
        %v2742 = vsel %vm2741, %v2734, %v2738
        %v2743 = vand.u32 2147483647, %v2733
        %vm2744 = vcmp.eq.f32.partialorder %v2743, 8.507059e+37
        %v2745 = vand.u32 %v2733, 2147483648
        %v2746 = vor.u32 1.1754944e-38, %v2745
        %v2747 = vsel %vm2744, %v2746, %v2742
        %v2748 = vmul.f32 1.0, %v2747
        %v2749 = vld [vmem:[%s2634 + $0x10] sm:$0xff]
        %v2750 = vld [vmem:[%s3 + $0x10] sm:$0xff]
        %v2751 = vld [vmem:[%s3 + $0x30] sm:$0xff]
        %v2752 = vld [vmem:[%s3 + $0x50] sm:$0xff]
        %v2753 = vld [vmem:[%s3 + $0x70] sm:$0xff]
        %v2754 = vld [vmem:[%s3 + $0x90] sm:$0xff]
        %v2755 = vld [vmem:[%s3 + $0xb0] sm:$0xff]
        %v2756 = vld [vmem:[%s3 + $0xd0] sm:$0xff]
        %v2757 = vld [vmem:[%s3 + $0xf0] sm:$0xff]
        %v2758 = vld [vmem:[%s3 + $0x110] sm:$0xff]
        %v2759 = vld [vmem:[%s3 + $0x130] sm:$0xff]
        %v2760 = vld [vmem:[%s3 + $0x150] sm:$0xff]
        %v2761 = vld [vmem:[%s3 + $0x170] sm:$0xff]
        %v2762 = vld [vmem:[%s3 + $0x190] sm:$0xff]
        %v2763 = vld [vmem:[%s3 + $0x1b0] sm:$0xff]
        %v2764 = vld [vmem:[%s3 + $0x1d0] sm:$0xff]
        %v2765 = vld [vmem:[%s3 + $0x1f0] sm:$0xff]
        %2766 = vmatpush.msra.mxu0 %v2765
        %2767 = vmatpush.msra.mxu0 %v2764
        %2768 = vmatpush.msra.mxu0 %v2763
        %2769 = vmatpush.msra.mxu0 %v2762
        %2770 = vmatpush.msra.mxu0 %v2761
        %2771 = vmatpush.msra.mxu0 %v2760
        %2772 = vmatpush.msra.mxu0 %v2759
        %2773 = vmatpush.msra.mxu0 %v2758
        %2774 = vmatpush.msra.mxu0 %v2757
        %2775 = vmatpush.msra.mxu0 %v2756
        %2776 = vmatpush.msra.mxu0 %v2755
        %2777 = vmatpush.msra.mxu0 %v2754
        %2778 = vmatpush.msra.mxu0 %v2753
        %2779 = vmatpush.msra.mxu0 %v2752
        %2780 = vmatpush.msra.mxu0 %v2751
        %2781 = vmatpush.msra.mxu0 %v2750
        %2782 = vmatmul.f32.gmra.mxu0 %v2632
        %v2783 = vpop.f32.mrf.mxu0
        %v2784 = vadd.f32 0.0, %v2783
        %2785 = vdwg.mxu0
        %v2786 = vadd.f32 %v2749, %v2784
        %v2787 = vtanh.pop %v2786
        %v2788 = vmul.f32 %v2748, %v2633
        %v2789 = vmul.f32 %v2691, %v2787
        %v2790 = vadd.f32 %v2788, %v2789
        %v2791 = vld [vmem:[%s2634 + $0x18] sm:$0xff]
        %v2792 = vld [vmem:[%s3 + $0x18] sm:$0xff]
        %v2793 = vld [vmem:[%s3 + $0x38] sm:$0xff]
        %v2794 = vld [vmem:[%s3 + $0x58] sm:$0xff]
        %v2795 = vld [vmem:[%s3 + $0x78] sm:$0xff]
        %v2796 = vld [vmem:[%s3 + $0x98] sm:$0xff]
        %v2797 = vld [vmem:[%s3 + $0xb8] sm:$0xff]
        %v2798 = vld [vmem:[%s3 + $0xd8] sm:$0xff]
        %v2799 = vld [vmem:[%s3 + $0xf8] sm:$0xff]
        %v2800 = vld [vmem:[%s3 + $0x118] sm:$0xff]
        %v2801 = vld [vmem:[%s3 + $0x138] sm:$0xff]
        %v2802 = vld [vmem:[%s3 + $0x158] sm:$0xff]
        %v2803 = vld [vmem:[%s3 + $0x178] sm:$0xff]
        %v2804 = vld [vmem:[%s3 + $0x198] sm:$0xff]
        %v2805 = vld [vmem:[%s3 + $0x1b8] sm:$0xff]
        %v2806 = vld [vmem:[%s3 + $0x1d8] sm:$0xff]
        %v2807 = vld [vmem:[%s3 + $0x1f8] sm:$0xff]
        %2808 = vmatpush.msra.mxu0 %v2807
        %2809 = vmatpush.msra.mxu0 %v2806
        %2810 = vmatpush.msra.mxu0 %v2805
        %2811 = vmatpush.msra.mxu0 %v2804
        %2812 = vmatpush.msra.mxu0 %v2803
        %2813 = vmatpush.msra.mxu0 %v2802
        %2814 = vmatpush.msra.mxu0 %v2801
        %2815 = vmatpush.msra.mxu0 %v2800
        %2816 = vmatpush.msra.mxu0 %v2799
        %2817 = vmatpush.msra.mxu0 %v2798
        %2818 = vmatpush.msra.mxu0 %v2797
        %2819 = vmatpush.msra.mxu0 %v2796
        %2820 = vmatpush.msra.mxu0 %v2795
        %2821 = vmatpush.msra.mxu0 %v2794
        %2822 = vmatpush.msra.mxu0 %v2793
        %2823 = vmatpush.msra.mxu0 %v2792
        %2824 = vmatmul.f32.gmra.mxu0 %v2632
        %v2825 = vpop.f32.mrf.mxu0
        %v2826 = vadd.f32 0.0, %v2825
        %2827 = vdwg.mxu0
        %v2828 = vadd.f32 %v2791, %v2826
        %v2829 = vxor.u32 %v2828, 2147483648
        %v2830 = vmul.f32 %v2829, 1.442695
        %v2831 = vpow.pop %v2830
        %v2832 = vadd.f32 %v2831, 1.0
        %v2833 = vrcp.pop %v2832
        %v2834 = vmul.f32 %v2832, %v2833
        %v2835 = vsub.f32 1.0, %v2834
        %v2836 = vmul.f32 %v2833, %v2835
        %v2837 = vadd.f32 %v2833, %v2836
        %vm2838 = vweird.f32 %v2832
        %vm2839 = vweird.f32 %v2833
        %vm2840 = vmor %vm2838, %vm2839
        %v2841 = vsel %vm2840, %v2833, %v2837
        %v2842 = vand.u32 2147483647, %v2832
        %vm2843 = vcmp.eq.f32.partialorder %v2842, 8.507059e+37
        %v2844 = vand.u32 %v2832, 2147483648
        %v2845 = vor.u32 1.1754944e-38, %v2844
        %v2846 = vsel %vm2843, %v2845, %v2841
        %v2847 = vmul.f32 1.0, %v2846
        %v2848 = vtanh.pop %v2790
        %v2849 = vmul.f32 %v2847, %v2848
        %s2850 = sadd.s32 %s842, 8
        %v2851 = vstv %s2850
        %vm2852 = vcmp.lt.s32.totalorder %v2851, %v841
        %v2853 = vsel %vm2852, %v2849, 0.0
        %s2854 = scalar_lea.vmem %s407, 64 [#allocation6]
        %2855 = vst [vmem:[%s2854] sm:$0xff] %v2853
        %v2856 = vsel %vm2852, %v2849, %v2632
        %v2857 = vsel %vm2852, %v2790, %v2633
        %s2858 = scalar_lea.vmem [#allocation4], 288
        %v2859 = vld [vmem:[%s2858] sm:$0xff]
        %v2860 = vld [vmem:[%s3] sm:$0xff]
        %v2861 = vld [vmem:[%s3 + $0x20] sm:$0xff]
        %v2862 = vld [vmem:[%s3 + $0x40] sm:$0xff]
        %v2863 = vld [vmem:[%s3 + $0x60] sm:$0xff]
        %v2864 = vld [vmem:[%s3 + $0x80] sm:$0xff]
        %v2865 = vld [vmem:[%s3 + $0xa0] sm:$0xff]
        %v2866 = vld [vmem:[%s3 + $0xc0] sm:$0xff]
        %v2867 = vld [vmem:[%s3 + $0xe0] sm:$0xff]
        %v2868 = vld [vmem:[%s3 + $0x100] sm:$0xff]
        %v2869 = vld [vmem:[%s3 + $0x120] sm:$0xff]
        %v2870 = vld [vmem:[%s3 + $0x140] sm:$0xff]
        %v2871 = vld [vmem:[%s3 + $0x160] sm:$0xff]
        %v2872 = vld [vmem:[%s3 + $0x180] sm:$0xff]
        %v2873 = vld [vmem:[%s3 + $0x1a0] sm:$0xff]
        %v2874 = vld [vmem:[%s3 + $0x1c0] sm:$0xff]
        %v2875 = vld [vmem:[%s3 + $0x1e0] sm:$0xff]
        %2876 = vmatpush.msra.mxu0 %v2875
        %2877 = vmatpush.msra.mxu0 %v2874
        %2878 = vmatpush.msra.mxu0 %v2873
        %2879 = vmatpush.msra.mxu0 %v2872
        %2880 = vmatpush.msra.mxu0 %v2871
        %2881 = vmatpush.msra.mxu0 %v2870
        %2882 = vmatpush.msra.mxu0 %v2869
        %2883 = vmatpush.msra.mxu0 %v2868
        %2884 = vmatpush.msra.mxu0 %v2867
        %2885 = vmatpush.msra.mxu0 %v2866
        %2886 = vmatpush.msra.mxu0 %v2865
        %2887 = vmatpush.msra.mxu0 %v2864
        %2888 = vmatpush.msra.mxu0 %v2863
        %2889 = vmatpush.msra.mxu0 %v2862
        %2890 = vmatpush.msra.mxu0 %v2861
        %2891 = vmatpush.msra.mxu0 %v2860
        %2892 = vmatmul.f32.gmra.mxu0 %v2856
        %v2893 = vpop.f32.mrf.mxu0
        %v2894 = vadd.f32 0.0, %v2893
        %2895 = vdwg.mxu0
        %v2896 = vadd.f32 %v2859, %v2894
        %v2897 = vxor.u32 %v2896, 2147483648
        %v2898 = vmul.f32 %v2897, 1.442695
        %v2899 = vpow.pop %v2898
        %v2900 = vadd.f32 %v2899, 1.0
        %v2901 = vrcp.pop %v2900
        %v2902 = vmul.f32 %v2900, %v2901
        %v2903 = vsub.f32 1.0, %v2902
        %v2904 = vmul.f32 %v2901, %v2903
        %v2905 = vadd.f32 %v2901, %v2904
        %vm2906 = vweird.f32 %v2900
        %vm2907 = vweird.f32 %v2901
        %vm2908 = vmor %vm2906, %vm2907
        %v2909 = vsel %vm2908, %v2901, %v2905
        %v2910 = vand.u32 2147483647, %v2900
        %vm2911 = vcmp.eq.f32.partialorder %v2910, 8.507059e+37
        %v2912 = vand.u32 %v2900, 2147483648
        %v2913 = vor.u32 1.1754944e-38, %v2912
        %v2914 = vsel %vm2911, %v2913, %v2909
        %v2915 = vmul.f32 1.0, %v2914
        %v2916 = vld [vmem:[%s2858 + $0x8] sm:$0xff]
        %v2917 = vld [vmem:[%s3 + $0x8] sm:$0xff]
        %v2918 = vld [vmem:[%s3 + $0x28] sm:$0xff]
        %v2919 = vld [vmem:[%s3 + $0x48] sm:$0xff]
        %v2920 = vld [vmem:[%s3 + $0x68] sm:$0xff]
        %v2921 = vld [vmem:[%s3 + $0x88] sm:$0xff]
        %v2922 = vld [vmem:[%s3 + $0xa8] sm:$0xff]
        %v2923 = vld [vmem:[%s3 + $0xc8] sm:$0xff]
        %v2924 = vld [vmem:[%s3 + $0xe8] sm:$0xff]
        %v2925 = vld [vmem:[%s3 + $0x108] sm:$0xff]
        %v2926 = vld [vmem:[%s3 + $0x128] sm:$0xff]
        %v2927 = vld [vmem:[%s3 + $0x148] sm:$0xff]
        %v2928 = vld [vmem:[%s3 + $0x168] sm:$0xff]
        %v2929 = vld [vmem:[%s3 + $0x188] sm:$0xff]
        %v2930 = vld [vmem:[%s3 + $0x1a8] sm:$0xff]
        %v2931 = vld [vmem:[%s3 + $0x1c8] sm:$0xff]
        %v2932 = vld [vmem:[%s3 + $0x1e8] sm:$0xff]
        %2933 = vmatpush.msra.mxu0 %v2932
        %2934 = vmatpush.msra.mxu0 %v2931
        %2935 = vmatpush.msra.mxu0 %v2930
        %2936 = vmatpush.msra.mxu0 %v2929
        %2937 = vmatpush.msra.mxu0 %v2928
        %2938 = vmatpush.msra.mxu0 %v2927
        %2939 = vmatpush.msra.mxu0 %v2926
        %2940 = vmatpush.msra.mxu0 %v2925
        %2941 = vmatpush.msra.mxu0 %v2924
        %2942 = vmatpush.msra.mxu0 %v2923
        %2943 = vmatpush.msra.mxu0 %v2922
        %2944 = vmatpush.msra.mxu0 %v2921
        %2945 = vmatpush.msra.mxu0 %v2920
        %2946 = vmatpush.msra.mxu0 %v2919
        %2947 = vmatpush.msra.mxu0 %v2918
        %2948 = vmatpush.msra.mxu0 %v2917
        %2949 = vmatmul.f32.gmra.mxu0 %v2856
        %v2950 = vpop.f32.mrf.mxu0
        %v2951 = vadd.f32 0.0, %v2950
        %2952 = vdwg.mxu0
        %v2953 = vadd.f32 %v2916, %v2951
        %v2954 = vxor.u32 %v2953, 2147483648
        %v2955 = vmul.f32 %v2954, 1.442695
        %v2956 = vpow.pop %v2955
        %v2957 = vadd.f32 %v2956, 1.0
        %v2958 = vrcp.pop %v2957
        %v2959 = vmul.f32 %v2957, %v2958
        %v2960 = vsub.f32 1.0, %v2959
        %v2961 = vmul.f32 %v2958, %v2960
        %v2962 = vadd.f32 %v2958, %v2961
        %vm2963 = vweird.f32 %v2957
        %vm2964 = vweird.f32 %v2958
        %vm2965 = vmor %vm2963, %vm2964
        %v2966 = vsel %vm2965, %v2958, %v2962
        %v2967 = vand.u32 2147483647, %v2957
        %vm2968 = vcmp.eq.f32.partialorder %v2967, 8.507059e+37
        %v2969 = vand.u32 %v2957, 2147483648
        %v2970 = vor.u32 1.1754944e-38, %v2969
        %v2971 = vsel %vm2968, %v2970, %v2966
        %v2972 = vmul.f32 1.0, %v2971
        %v2973 = vld [vmem:[%s2858 + $0x10] sm:$0xff]
        %v2974 = vld [vmem:[%s3 + $0x10] sm:$0xff]
        %v2975 = vld [vmem:[%s3 + $0x30] sm:$0xff]
        %v2976 = vld [vmem:[%s3 + $0x50] sm:$0xff]
        %v2977 = vld [vmem:[%s3 + $0x70] sm:$0xff]
        %v2978 = vld [vmem:[%s3 + $0x90] sm:$0xff]
        %v2979 = vld [vmem:[%s3 + $0xb0] sm:$0xff]
        %v2980 = vld [vmem:[%s3 + $0xd0] sm:$0xff]
        %v2981 = vld [vmem:[%s3 + $0xf0] sm:$0xff]
        %v2982 = vld [vmem:[%s3 + $0x110] sm:$0xff]
        %v2983 = vld [vmem:[%s3 + $0x130] sm:$0xff]
        %v2984 = vld [vmem:[%s3 + $0x150] sm:$0xff]
        %v2985 = vld [vmem:[%s3 + $0x170] sm:$0xff]
        %v2986 = vld [vmem:[%s3 + $0x190] sm:$0xff]
        %v2987 = vld [vmem:[%s3 + $0x1b0] sm:$0xff]
        %v2988 = vld [vmem:[%s3 + $0x1d0] sm:$0xff]
        %v2989 = vld [vmem:[%s3 + $0x1f0] sm:$0xff]
        %2990 = vmatpush.msra.mxu0 %v2989
        %2991 = vmatpush.msra.mxu0 %v2988
        %2992 = vmatpush.msra.mxu0 %v2987
        %2993 = vmatpush.msra.mxu0 %v2986
        %2994 = vmatpush.msra.mxu0 %v2985
        %2995 = vmatpush.msra.mxu0 %v2984
        %2996 = vmatpush.msra.mxu0 %v2983
        %2997 = vmatpush.msra.mxu0 %v2982
        %2998 = vmatpush.msra.mxu0 %v2981
        %2999 = vmatpush.msra.mxu0 %v2980
        %3000 = vmatpush.msra.mxu0 %v2979
        %3001 = vmatpush.msra.mxu0 %v2978
        %3002 = vmatpush.msra.mxu0 %v2977
        %3003 = vmatpush.msra.mxu0 %v2976
        %3004 = vmatpush.msra.mxu0 %v2975
        %3005 = vmatpush.msra.mxu0 %v2974
        %3006 = vmatmul.f32.gmra.mxu0 %v2856
        %v3007 = vpop.f32.mrf.mxu0
        %v3008 = vadd.f32 0.0, %v3007
        %3009 = vdwg.mxu0
        %v3010 = vadd.f32 %v2973, %v3008
        %v3011 = vtanh.pop %v3010
        %v3012 = vmul.f32 %v2972, %v2857
        %v3013 = vmul.f32 %v2915, %v3011
        %v3014 = vadd.f32 %v3012, %v3013
        %v3015 = vld [vmem:[%s2858 + $0x18] sm:$0xff]
        %v3016 = vld [vmem:[%s3 + $0x18] sm:$0xff]
        %v3017 = vld [vmem:[%s3 + $0x38] sm:$0xff]
        %v3018 = vld [vmem:[%s3 + $0x58] sm:$0xff]
        %v3019 = vld [vmem:[%s3 + $0x78] sm:$0xff]
        %v3020 = vld [vmem:[%s3 + $0x98] sm:$0xff]
        %v3021 = vld [vmem:[%s3 + $0xb8] sm:$0xff]
        %v3022 = vld [vmem:[%s3 + $0xd8] sm:$0xff]
        %v3023 = vld [vmem:[%s3 + $0xf8] sm:$0xff]
        %v3024 = vld [vmem:[%s3 + $0x118] sm:$0xff]
        %v3025 = vld [vmem:[%s3 + $0x138] sm:$0xff]
        %v3026 = vld [vmem:[%s3 + $0x158] sm:$0xff]
        %v3027 = vld [vmem:[%s3 + $0x178] sm:$0xff]
        %v3028 = vld [vmem:[%s3 + $0x198] sm:$0xff]
        %v3029 = vld [vmem:[%s3 + $0x1b8] sm:$0xff]
        %v3030 = vld [vmem:[%s3 + $0x1d8] sm:$0xff]
        %v3031 = vld [vmem:[%s3 + $0x1f8] sm:$0xff]
        %3032 = vmatpush.msra.mxu0 %v3031
        %3033 = vmatpush.msra.mxu0 %v3030
        %3034 = vmatpush.msra.mxu0 %v3029
        %3035 = vmatpush.msra.mxu0 %v3028
        %3036 = vmatpush.msra.mxu0 %v3027
        %3037 = vmatpush.msra.mxu0 %v3026
        %3038 = vmatpush.msra.mxu0 %v3025
        %3039 = vmatpush.msra.mxu0 %v3024
        %3040 = vmatpush.msra.mxu0 %v3023
        %3041 = vmatpush.msra.mxu0 %v3022
        %3042 = vmatpush.msra.mxu0 %v3021
        %3043 = vmatpush.msra.mxu0 %v3020
        %3044 = vmatpush.msra.mxu0 %v3019
        %3045 = vmatpush.msra.mxu0 %v3018
        %3046 = vmatpush.msra.mxu0 %v3017
        %3047 = vmatpush.msra.mxu0 %v3016
        %3048 = vmatmul.f32.gmra.mxu0 %v2856
        %v3049 = vpop.f32.mrf.mxu0
        %v3050 = vadd.f32 0.0, %v3049
        %3051 = vdwg.mxu0
        %v3052 = vadd.f32 %v3015, %v3050
        %v3053 = vxor.u32 %v3052, 2147483648
        %v3054 = vmul.f32 %v3053, 1.442695
        %v3055 = vpow.pop %v3054
        %v3056 = vadd.f32 %v3055, 1.0
        %v3057 = vrcp.pop %v3056
        %v3058 = vmul.f32 %v3056, %v3057
        %v3059 = vsub.f32 1.0, %v3058
        %v3060 = vmul.f32 %v3057, %v3059
        %v3061 = vadd.f32 %v3057, %v3060
        %vm3062 = vweird.f32 %v3056
        %vm3063 = vweird.f32 %v3057
        %vm3064 = vmor %vm3062, %vm3063
        %v3065 = vsel %vm3064, %v3057, %v3061
        %v3066 = vand.u32 2147483647, %v3056
        %vm3067 = vcmp.eq.f32.partialorder %v3066, 8.507059e+37
        %v3068 = vand.u32 %v3056, 2147483648
        %v3069 = vor.u32 1.1754944e-38, %v3068
        %v3070 = vsel %vm3067, %v3069, %v3065
        %v3071 = vmul.f32 1.0, %v3070
        %v3072 = vtanh.pop %v3014
        %v3073 = vmul.f32 %v3071, %v3072
        %s3074 = sadd.s32 %s842, 9
        %v3075 = vstv %s3074
        %vm3076 = vcmp.lt.s32.totalorder %v3075, %v841
        %v3077 = vsel %vm3076, %v3073, 0.0
        %s3078 = scalar_lea.vmem %s407, 72 [#allocation6]
        %3079 = vst [vmem:[%s3078] sm:$0xff] %v3077
        %v3080 = vsel %vm3076, %v3073, %v2856
        %v3081 = vsel %vm3076, %v3014, %v2857
        %s3082 = scalar_lea.vmem [#allocation4], 320
        %v3083 = vld [vmem:[%s3082] sm:$0xff]
        %v3084 = vld [vmem:[%s3] sm:$0xff]
        %v3085 = vld [vmem:[%s3 + $0x20] sm:$0xff]
        %v3086 = vld [vmem:[%s3 + $0x40] sm:$0xff]
        %v3087 = vld [vmem:[%s3 + $0x60] sm:$0xff]
        %v3088 = vld [vmem:[%s3 + $0x80] sm:$0xff]
        %v3089 = vld [vmem:[%s3 + $0xa0] sm:$0xff]
        %v3090 = vld [vmem:[%s3 + $0xc0] sm:$0xff]
        %v3091 = vld [vmem:[%s3 + $0xe0] sm:$0xff]
        %v3092 = vld [vmem:[%s3 + $0x100] sm:$0xff]
        %v3093 = vld [vmem:[%s3 + $0x120] sm:$0xff]
        %v3094 = vld [vmem:[%s3 + $0x140] sm:$0xff]
        %v3095 = vld [vmem:[%s3 + $0x160] sm:$0xff]
        %v3096 = vld [vmem:[%s3 + $0x180] sm:$0xff]
        %v3097 = vld [vmem:[%s3 + $0x1a0] sm:$0xff]
        %v3098 = vld [vmem:[%s3 + $0x1c0] sm:$0xff]
        %v3099 = vld [vmem:[%s3 + $0x1e0] sm:$0xff]
        %3100 = vmatpush.msra.mxu0 %v3099
        %3101 = vmatpush.msra.mxu0 %v3098
        %3102 = vmatpush.msra.mxu0 %v3097
        %3103 = vmatpush.msra.mxu0 %v3096
        %3104 = vmatpush.msra.mxu0 %v3095
        %3105 = vmatpush.msra.mxu0 %v3094
        %3106 = vmatpush.msra.mxu0 %v3093
        %3107 = vmatpush.msra.mxu0 %v3092
        %3108 = vmatpush.msra.mxu0 %v3091
        %3109 = vmatpush.msra.mxu0 %v3090
        %3110 = vmatpush.msra.mxu0 %v3089
        %3111 = vmatpush.msra.mxu0 %v3088
        %3112 = vmatpush.msra.mxu0 %v3087
        %3113 = vmatpush.msra.mxu0 %v3086
        %3114 = vmatpush.msra.mxu0 %v3085
        %3115 = vmatpush.msra.mxu0 %v3084
        %3116 = vmatmul.f32.gmra.mxu0 %v3080
        %v3117 = vpop.f32.mrf.mxu0
        %v3118 = vadd.f32 0.0, %v3117
        %3119 = vdwg.mxu0
        %v3120 = vadd.f32 %v3083, %v3118
        %v3121 = vxor.u32 %v3120, 2147483648
        %v3122 = vmul.f32 %v3121, 1.442695
        %v3123 = vpow.pop %v3122
        %v3124 = vadd.f32 %v3123, 1.0
        %v3125 = vrcp.pop %v3124
        %v3126 = vmul.f32 %v3124, %v3125
        %v3127 = vsub.f32 1.0, %v3126
        %v3128 = vmul.f32 %v3125, %v3127
        %v3129 = vadd.f32 %v3125, %v3128
        %vm3130 = vweird.f32 %v3124
        %vm3131 = vweird.f32 %v3125
        %vm3132 = vmor %vm3130, %vm3131
        %v3133 = vsel %vm3132, %v3125, %v3129
        %v3134 = vand.u32 2147483647, %v3124
        %vm3135 = vcmp.eq.f32.partialorder %v3134, 8.507059e+37
        %v3136 = vand.u32 %v3124, 2147483648
        %v3137 = vor.u32 1.1754944e-38, %v3136
        %v3138 = vsel %vm3135, %v3137, %v3133
        %v3139 = vmul.f32 1.0, %v3138
        %v3140 = vld [vmem:[%s3082 + $0x8] sm:$0xff]
        %v3141 = vld [vmem:[%s3 + $0x8] sm:$0xff]
        %v3142 = vld [vmem:[%s3 + $0x28] sm:$0xff]
        %v3143 = vld [vmem:[%s3 + $0x48] sm:$0xff]
        %v3144 = vld [vmem:[%s3 + $0x68] sm:$0xff]
        %v3145 = vld [vmem:[%s3 + $0x88] sm:$0xff]
        %v3146 = vld [vmem:[%s3 + $0xa8] sm:$0xff]
        %v3147 = vld [vmem:[%s3 + $0xc8] sm:$0xff]
        %v3148 = vld [vmem:[%s3 + $0xe8] sm:$0xff]
        %v3149 = vld [vmem:[%s3 + $0x108] sm:$0xff]
        %v3150 = vld [vmem:[%s3 + $0x128] sm:$0xff]
        %v3151 = vld [vmem:[%s3 + $0x148] sm:$0xff]
        %v3152 = vld [vmem:[%s3 + $0x168] sm:$0xff]
        %v3153 = vld [vmem:[%s3 + $0x188] sm:$0xff]
        %v3154 = vld [vmem:[%s3 + $0x1a8] sm:$0xff]
        %v3155 = vld [vmem:[%s3 + $0x1c8] sm:$0xff]
        %v3156 = vld [vmem:[%s3 + $0x1e8] sm:$0xff]
        %3157 = vmatpush.msra.mxu0 %v3156
        %3158 = vmatpush.msra.mxu0 %v3155
        %3159 = vmatpush.msra.mxu0 %v3154
        %3160 = vmatpush.msra.mxu0 %v3153
        %3161 = vmatpush.msra.mxu0 %v3152
        %3162 = vmatpush.msra.mxu0 %v3151
        %3163 = vmatpush.msra.mxu0 %v3150
        %3164 = vmatpush.msra.mxu0 %v3149
        %3165 = vmatpush.msra.mxu0 %v3148
        %3166 = vmatpush.msra.mxu0 %v3147
        %3167 = vmatpush.msra.mxu0 %v3146
        %3168 = vmatpush.msra.mxu0 %v3145
        %3169 = vmatpush.msra.mxu0 %v3144
        %3170 = vmatpush.msra.mxu0 %v3143
        %3171 = vmatpush.msra.mxu0 %v3142
        %3172 = vmatpush.msra.mxu0 %v3141
        %3173 = vmatmul.f32.gmra.mxu0 %v3080
        %v3174 = vpop.f32.mrf.mxu0
        %v3175 = vadd.f32 0.0, %v3174
        %3176 = vdwg.mxu0
        %v3177 = vadd.f32 %v3140, %v3175
        %v3178 = vxor.u32 %v3177, 2147483648
        %v3179 = vmul.f32 %v3178, 1.442695
        %v3180 = vpow.pop %v3179
        %v3181 = vadd.f32 %v3180, 1.0
        %v3182 = vrcp.pop %v3181
        %v3183 = vmul.f32 %v3181, %v3182
        %v3184 = vsub.f32 1.0, %v3183
        %v3185 = vmul.f32 %v3182, %v3184
        %v3186 = vadd.f32 %v3182, %v3185
        %vm3187 = vweird.f32 %v3181
        %vm3188 = vweird.f32 %v3182
        %vm3189 = vmor %vm3187, %vm3188
        %v3190 = vsel %vm3189, %v3182, %v3186
        %v3191 = vand.u32 2147483647, %v3181
        %vm3192 = vcmp.eq.f32.partialorder %v3191, 8.507059e+37
        %v3193 = vand.u32 %v3181, 2147483648
        %v3194 = vor.u32 1.1754944e-38, %v3193
        %v3195 = vsel %vm3192, %v3194, %v3190
        %v3196 = vmul.f32 1.0, %v3195
        %v3197 = vld [vmem:[%s3082 + $0x10] sm:$0xff]
        %v3198 = vld [vmem:[%s3 + $0x10] sm:$0xff]
        %v3199 = vld [vmem:[%s3 + $0x30] sm:$0xff]
        %v3200 = vld [vmem:[%s3 + $0x50] sm:$0xff]
        %v3201 = vld [vmem:[%s3 + $0x70] sm:$0xff]
        %v3202 = vld [vmem:[%s3 + $0x90] sm:$0xff]
        %v3203 = vld [vmem:[%s3 + $0xb0] sm:$0xff]
        %v3204 = vld [vmem:[%s3 + $0xd0] sm:$0xff]
        %v3205 = vld [vmem:[%s3 + $0xf0] sm:$0xff]
        %v3206 = vld [vmem:[%s3 + $0x110] sm:$0xff]
        %v3207 = vld [vmem:[%s3 + $0x130] sm:$0xff]
        %v3208 = vld [vmem:[%s3 + $0x150] sm:$0xff]
        %v3209 = vld [vmem:[%s3 + $0x170] sm:$0xff]
        %v3210 = vld [vmem:[%s3 + $0x190] sm:$0xff]
        %v3211 = vld [vmem:[%s3 + $0x1b0] sm:$0xff]
        %v3212 = vld [vmem:[%s3 + $0x1d0] sm:$0xff]
        %v3213 = vld [vmem:[%s3 + $0x1f0] sm:$0xff]
        %3214 = vmatpush.msra.mxu0 %v3213
        %3215 = vmatpush.msra.mxu0 %v3212
        %3216 = vmatpush.msra.mxu0 %v3211
        %3217 = vmatpush.msra.mxu0 %v3210
        %3218 = vmatpush.msra.mxu0 %v3209
        %3219 = vmatpush.msra.mxu0 %v3208
        %3220 = vmatpush.msra.mxu0 %v3207
        %3221 = vmatpush.msra.mxu0 %v3206
        %3222 = vmatpush.msra.mxu0 %v3205
        %3223 = vmatpush.msra.mxu0 %v3204
        %3224 = vmatpush.msra.mxu0 %v3203
        %3225 = vmatpush.msra.mxu0 %v3202
        %3226 = vmatpush.msra.mxu0 %v3201
        %3227 = vmatpush.msra.mxu0 %v3200
        %3228 = vmatpush.msra.mxu0 %v3199
        %3229 = vmatpush.msra.mxu0 %v3198
        %3230 = vmatmul.f32.gmra.mxu0 %v3080
        %v3231 = vpop.f32.mrf.mxu0
        %v3232 = vadd.f32 0.0, %v3231
        %3233 = vdwg.mxu0
        %v3234 = vadd.f32 %v3197, %v3232
        %v3235 = vtanh.pop %v3234
        %v3236 = vmul.f32 %v3196, %v3081
        %v3237 = vmul.f32 %v3139, %v3235
        %v3238 = vadd.f32 %v3236, %v3237
        %v3239 = vld [vmem:[%s3082 + $0x18] sm:$0xff]
        %v3240 = vld [vmem:[%s3 + $0x18] sm:$0xff]
        %v3241 = vld [vmem:[%s3 + $0x38] sm:$0xff]
        %v3242 = vld [vmem:[%s3 + $0x58] sm:$0xff]
        %v3243 = vld [vmem:[%s3 + $0x78] sm:$0xff]
        %v3244 = vld [vmem:[%s3 + $0x98] sm:$0xff]
        %v3245 = vld [vmem:[%s3 + $0xb8] sm:$0xff]
        %v3246 = vld [vmem:[%s3 + $0xd8] sm:$0xff]
        %v3247 = vld [vmem:[%s3 + $0xf8] sm:$0xff]
        %v3248 = vld [vmem:[%s3 + $0x118] sm:$0xff]
        %v3249 = vld [vmem:[%s3 + $0x138] sm:$0xff]
        %v3250 = vld [vmem:[%s3 + $0x158] sm:$0xff]
        %v3251 = vld [vmem:[%s3 + $0x178] sm:$0xff]
        %v3252 = vld [vmem:[%s3 + $0x198] sm:$0xff]
        %v3253 = vld [vmem:[%s3 + $0x1b8] sm:$0xff]
        %v3254 = vld [vmem:[%s3 + $0x1d8] sm:$0xff]
        %v3255 = vld [vmem:[%s3 + $0x1f8] sm:$0xff]
        %3256 = vmatpush.msra.mxu0 %v3255
        %3257 = vmatpush.msra.mxu0 %v3254
        %3258 = vmatpush.msra.mxu0 %v3253
        %3259 = vmatpush.msra.mxu0 %v3252
        %3260 = vmatpush.msra.mxu0 %v3251
        %3261 = vmatpush.msra.mxu0 %v3250
        %3262 = vmatpush.msra.mxu0 %v3249
        %3263 = vmatpush.msra.mxu0 %v3248
        %3264 = vmatpush.msra.mxu0 %v3247
        %3265 = vmatpush.msra.mxu0 %v3246
        %3266 = vmatpush.msra.mxu0 %v3245
        %3267 = vmatpush.msra.mxu0 %v3244
        %3268 = vmatpush.msra.mxu0 %v3243
        %3269 = vmatpush.msra.mxu0 %v3242
        %3270 = vmatpush.msra.mxu0 %v3241
        %3271 = vmatpush.msra.mxu0 %v3240
        %3272 = vmatmul.f32.gmra.mxu0 %v3080
        %v3273 = vpop.f32.mrf.mxu0
        %v3274 = vadd.f32 0.0, %v3273
        %3275 = vdwg.mxu0
        %v3276 = vadd.f32 %v3239, %v3274
        %v3277 = vxor.u32 %v3276, 2147483648
        %v3278 = vmul.f32 %v3277, 1.442695
        %v3279 = vpow.pop %v3278
        %v3280 = vadd.f32 %v3279, 1.0
        %v3281 = vrcp.pop %v3280
        %v3282 = vmul.f32 %v3280, %v3281
        %v3283 = vsub.f32 1.0, %v3282
        %v3284 = vmul.f32 %v3281, %v3283
        %v3285 = vadd.f32 %v3281, %v3284
        %vm3286 = vweird.f32 %v3280
        %vm3287 = vweird.f32 %v3281
        %vm3288 = vmor %vm3286, %vm3287
        %v3289 = vsel %vm3288, %v3281, %v3285
        %v3290 = vand.u32 2147483647, %v3280
        %vm3291 = vcmp.eq.f32.partialorder %v3290, 8.507059e+37
        %v3292 = vand.u32 %v3280, 2147483648
        %v3293 = vor.u32 1.1754944e-38, %v3292
        %v3294 = vsel %vm3291, %v3293, %v3289
        %v3295 = vmul.f32 1.0, %v3294
        %v3296 = vtanh.pop %v3238
        %v3297 = vmul.f32 %v3295, %v3296
        %s3298 = sadd.s32 %s842, 10
        %v3299 = vstv %s3298
        %vm3300 = vcmp.lt.s32.totalorder %v3299, %v841
        %v3301 = vsel %vm3300, %v3297, 0.0
        %s3302 = scalar_lea.vmem %s407, 80 [#allocation6]
        %3303 = vst [vmem:[%s3302] sm:$0xff] %v3301
        %v3304 = vsel %vm3300, %v3297, %v3080
        %v3305 = vsel %vm3300, %v3238, %v3081
        %s3306 = scalar_lea.vmem [#allocation4], 352
        %v3307 = vld [vmem:[%s3306] sm:$0xff]
        %v3308 = vld [vmem:[%s3] sm:$0xff]
        %v3309 = vld [vmem:[%s3 + $0x20] sm:$0xff]
        %v3310 = vld [vmem:[%s3 + $0x40] sm:$0xff]
        %v3311 = vld [vmem:[%s3 + $0x60] sm:$0xff]
        %v3312 = vld [vmem:[%s3 + $0x80] sm:$0xff]
        %v3313 = vld [vmem:[%s3 + $0xa0] sm:$0xff]
        %v3314 = vld [vmem:[%s3 + $0xc0] sm:$0xff]
        %v3315 = vld [vmem:[%s3 + $0xe0] sm:$0xff]
        %v3316 = vld [vmem:[%s3 + $0x100] sm:$0xff]
        %v3317 = vld [vmem:[%s3 + $0x120] sm:$0xff]
        %v3318 = vld [vmem:[%s3 + $0x140] sm:$0xff]
        %v3319 = vld [vmem:[%s3 + $0x160] sm:$0xff]
        %v3320 = vld [vmem:[%s3 + $0x180] sm:$0xff]
        %v3321 = vld [vmem:[%s3 + $0x1a0] sm:$0xff]
        %v3322 = vld [vmem:[%s3 + $0x1c0] sm:$0xff]
        %v3323 = vld [vmem:[%s3 + $0x1e0] sm:$0xff]
        %3324 = vmatpush.msra.mxu0 %v3323
        %3325 = vmatpush.msra.mxu0 %v3322
        %3326 = vmatpush.msra.mxu0 %v3321
        %3327 = vmatpush.msra.mxu0 %v3320
        %3328 = vmatpush.msra.mxu0 %v3319
        %3329 = vmatpush.msra.mxu0 %v3318
        %3330 = vmatpush.msra.mxu0 %v3317
        %3331 = vmatpush.msra.mxu0 %v3316
        %3332 = vmatpush.msra.mxu0 %v3315
        %3333 = vmatpush.msra.mxu0 %v3314
        %3334 = vmatpush.msra.mxu0 %v3313
        %3335 = vmatpush.msra.mxu0 %v3312
        %3336 = vmatpush.msra.mxu0 %v3311
        %3337 = vmatpush.msra.mxu0 %v3310
        %3338 = vmatpush.msra.mxu0 %v3309
        %3339 = vmatpush.msra.mxu0 %v3308
        %3340 = vmatmul.f32.gmra.mxu0 %v3304
        %v3341 = vpop.f32.mrf.mxu0
        %v3342 = vadd.f32 0.0, %v3341
        %3343 = vdwg.mxu0
        %v3344 = vadd.f32 %v3307, %v3342
        %v3345 = vxor.u32 %v3344, 2147483648
        %v3346 = vmul.f32 %v3345, 1.442695
        %v3347 = vpow.pop %v3346
        %v3348 = vadd.f32 %v3347, 1.0
        %v3349 = vrcp.pop %v3348
        %v3350 = vmul.f32 %v3348, %v3349
        %v3351 = vsub.f32 1.0, %v3350
        %v3352 = vmul.f32 %v3349, %v3351
        %v3353 = vadd.f32 %v3349, %v3352
        %vm3354 = vweird.f32 %v3348
        %vm3355 = vweird.f32 %v3349
        %vm3356 = vmor %vm3354, %vm3355
        %v3357 = vsel %vm3356, %v3349, %v3353
        %v3358 = vand.u32 2147483647, %v3348
        %vm3359 = vcmp.eq.f32.partialorder %v3358, 8.507059e+37
        %v3360 = vand.u32 %v3348, 2147483648
        %v3361 = vor.u32 1.1754944e-38, %v3360
        %v3362 = vsel %vm3359, %v3361, %v3357
        %v3363 = vmul.f32 1.0, %v3362
        %v3364 = vld [vmem:[%s3306 + $0x8] sm:$0xff]
        %v3365 = vld [vmem:[%s3 + $0x8] sm:$0xff]
        %v3366 = vld [vmem:[%s3 + $0x28] sm:$0xff]
        %v3367 = vld [vmem:[%s3 + $0x48] sm:$0xff]
        %v3368 = vld [vmem:[%s3 + $0x68] sm:$0xff]
        %v3369 = vld [vmem:[%s3 + $0x88] sm:$0xff]
        %v3370 = vld [vmem:[%s3 + $0xa8] sm:$0xff]
        %v3371 = vld [vmem:[%s3 + $0xc8] sm:$0xff]
        %v3372 = vld [vmem:[%s3 + $0xe8] sm:$0xff]
        %v3373 = vld [vmem:[%s3 + $0x108] sm:$0xff]
        %v3374 = vld [vmem:[%s3 + $0x128] sm:$0xff]
        %v3375 = vld [vmem:[%s3 + $0x148] sm:$0xff]
        %v3376 = vld [vmem:[%s3 + $0x168] sm:$0xff]
        %v3377 = vld [vmem:[%s3 + $0x188] sm:$0xff]
        %v3378 = vld [vmem:[%s3 + $0x1a8] sm:$0xff]
        %v3379 = vld [vmem:[%s3 + $0x1c8] sm:$0xff]
        %v3380 = vld [vmem:[%s3 + $0x1e8] sm:$0xff]
        %3381 = vmatpush.msra.mxu0 %v3380
        %3382 = vmatpush.msra.mxu0 %v3379
        %3383 = vmatpush.msra.mxu0 %v3378
        %3384 = vmatpush.msra.mxu0 %v3377
        %3385 = vmatpush.msra.mxu0 %v3376
        %3386 = vmatpush.msra.mxu0 %v3375
        %3387 = vmatpush.msra.mxu0 %v3374
        %3388 = vmatpush.msra.mxu0 %v3373
        %3389 = vmatpush.msra.mxu0 %v3372
        %3390 = vmatpush.msra.mxu0 %v3371
        %3391 = vmatpush.msra.mxu0 %v3370
        %3392 = vmatpush.msra.mxu0 %v3369
        %3393 = vmatpush.msra.mxu0 %v3368
        %3394 = vmatpush.msra.mxu0 %v3367
        %3395 = vmatpush.msra.mxu0 %v3366
        %3396 = vmatpush.msra.mxu0 %v3365
        %3397 = vmatmul.f32.gmra.mxu0 %v3304
        %v3398 = vpop.f32.mrf.mxu0
        %v3399 = vadd.f32 0.0, %v3398
        %3400 = vdwg.mxu0
        %v3401 = vadd.f32 %v3364, %v3399
        %v3402 = vxor.u32 %v3401, 2147483648
        %v3403 = vmul.f32 %v3402, 1.442695
        %v3404 = vpow.pop %v3403
        %v3405 = vadd.f32 %v3404, 1.0
        %v3406 = vrcp.pop %v3405
        %v3407 = vmul.f32 %v3405, %v3406
        %v3408 = vsub.f32 1.0, %v3407
        %v3409 = vmul.f32 %v3406, %v3408
        %v3410 = vadd.f32 %v3406, %v3409
        %vm3411 = vweird.f32 %v3405
        %vm3412 = vweird.f32 %v3406
        %vm3413 = vmor %vm3411, %vm3412
        %v3414 = vsel %vm3413, %v3406, %v3410
        %v3415 = vand.u32 2147483647, %v3405
        %vm3416 = vcmp.eq.f32.partialorder %v3415, 8.507059e+37
        %v3417 = vand.u32 %v3405, 2147483648
        %v3418 = vor.u32 1.1754944e-38, %v3417
        %v3419 = vsel %vm3416, %v3418, %v3414
        %v3420 = vmul.f32 1.0, %v3419
        %v3421 = vld [vmem:[%s3306 + $0x10] sm:$0xff]
        %v3422 = vld [vmem:[%s3 + $0x10] sm:$0xff]
        %v3423 = vld [vmem:[%s3 + $0x30] sm:$0xff]
        %v3424 = vld [vmem:[%s3 + $0x50] sm:$0xff]
        %v3425 = vld [vmem:[%s3 + $0x70] sm:$0xff]
        %v3426 = vld [vmem:[%s3 + $0x90] sm:$0xff]
        %v3427 = vld [vmem:[%s3 + $0xb0] sm:$0xff]
        %v3428 = vld [vmem:[%s3 + $0xd0] sm:$0xff]
        %v3429 = vld [vmem:[%s3 + $0xf0] sm:$0xff]
        %v3430 = vld [vmem:[%s3 + $0x110] sm:$0xff]
        %v3431 = vld [vmem:[%s3 + $0x130] sm:$0xff]
        %v3432 = vld [vmem:[%s3 + $0x150] sm:$0xff]
        %v3433 = vld [vmem:[%s3 + $0x170] sm:$0xff]
        %v3434 = vld [vmem:[%s3 + $0x190] sm:$0xff]
        %v3435 = vld [vmem:[%s3 + $0x1b0] sm:$0xff]
        %v3436 = vld [vmem:[%s3 + $0x1d0] sm:$0xff]
        %v3437 = vld [vmem:[%s3 + $0x1f0] sm:$0xff]
        %3438 = vmatpush.msra.mxu0 %v3437
        %3439 = vmatpush.msra.mxu0 %v3436
        %3440 = vmatpush.msra.mxu0 %v3435
        %3441 = vmatpush.msra.mxu0 %v3434
        %3442 = vmatpush.msra.mxu0 %v3433
        %3443 = vmatpush.msra.mxu0 %v3432
        %3444 = vmatpush.msra.mxu0 %v3431
        %3445 = vmatpush.msra.mxu0 %v3430
        %3446 = vmatpush.msra.mxu0 %v3429
        %3447 = vmatpush.msra.mxu0 %v3428
        %3448 = vmatpush.msra.mxu0 %v3427
        %3449 = vmatpush.msra.mxu0 %v3426
        %3450 = vmatpush.msra.mxu0 %v3425
        %3451 = vmatpush.msra.mxu0 %v3424
        %3452 = vmatpush.msra.mxu0 %v3423
        %3453 = vmatpush.msra.mxu0 %v3422
        %3454 = vmatmul.f32.gmra.mxu0 %v3304
        %v3455 = vpop.f32.mrf.mxu0
        %v3456 = vadd.f32 0.0, %v3455
        %3457 = vdwg.mxu0
        %v3458 = vadd.f32 %v3421, %v3456
        %v3459 = vtanh.pop %v3458
        %v3460 = vmul.f32 %v3420, %v3305
        %v3461 = vmul.f32 %v3363, %v3459
        %v3462 = vadd.f32 %v3460, %v3461
        %v3463 = vld [vmem:[%s3306 + $0x18] sm:$0xff]
        %v3464 = vld [vmem:[%s3 + $0x18] sm:$0xff]
        %v3465 = vld [vmem:[%s3 + $0x38] sm:$0xff]
        %v3466 = vld [vmem:[%s3 + $0x58] sm:$0xff]
        %v3467 = vld [vmem:[%s3 + $0x78] sm:$0xff]
        %v3468 = vld [vmem:[%s3 + $0x98] sm:$0xff]
        %v3469 = vld [vmem:[%s3 + $0xb8] sm:$0xff]
        %v3470 = vld [vmem:[%s3 + $0xd8] sm:$0xff]
        %v3471 = vld [vmem:[%s3 + $0xf8] sm:$0xff]
        %v3472 = vld [vmem:[%s3 + $0x118] sm:$0xff]
        %v3473 = vld [vmem:[%s3 + $0x138] sm:$0xff]
        %v3474 = vld [vmem:[%s3 + $0x158] sm:$0xff]
        %v3475 = vld [vmem:[%s3 + $0x178] sm:$0xff]
        %v3476 = vld [vmem:[%s3 + $0x198] sm:$0xff]
        %v3477 = vld [vmem:[%s3 + $0x1b8] sm:$0xff]
        %v3478 = vld [vmem:[%s3 + $0x1d8] sm:$0xff]
        %v3479 = vld [vmem:[%s3 + $0x1f8] sm:$0xff]
        %3480 = vmatpush.msra.mxu0 %v3479
        %3481 = vmatpush.msra.mxu0 %v3478
        %3482 = vmatpush.msra.mxu0 %v3477
        %3483 = vmatpush.msra.mxu0 %v3476
        %3484 = vmatpush.msra.mxu0 %v3475
        %3485 = vmatpush.msra.mxu0 %v3474
        %3486 = vmatpush.msra.mxu0 %v3473
        %3487 = vmatpush.msra.mxu0 %v3472
        %3488 = vmatpush.msra.mxu0 %v3471
        %3489 = vmatpush.msra.mxu0 %v3470
        %3490 = vmatpush.msra.mxu0 %v3469
        %3491 = vmatpush.msra.mxu0 %v3468
        %3492 = vmatpush.msra.mxu0 %v3467
        %3493 = vmatpush.msra.mxu0 %v3466
        %3494 = vmatpush.msra.mxu0 %v3465
        %3495 = vmatpush.msra.mxu0 %v3464
        %3496 = vmatmul.f32.gmra.mxu0 %v3304
        %v3497 = vpop.f32.mrf.mxu0
        %v3498 = vadd.f32 0.0, %v3497
        %3499 = vdwg.mxu0
        %v3500 = vadd.f32 %v3463, %v3498
        %v3501 = vxor.u32 %v3500, 2147483648
        %v3502 = vmul.f32 %v3501, 1.442695
        %v3503 = vpow.pop %v3502
        %v3504 = vadd.f32 %v3503, 1.0
        %v3505 = vrcp.pop %v3504
        %v3506 = vmul.f32 %v3504, %v3505
        %v3507 = vsub.f32 1.0, %v3506
        %v3508 = vmul.f32 %v3505, %v3507
        %v3509 = vadd.f32 %v3505, %v3508
        %vm3510 = vweird.f32 %v3504
        %vm3511 = vweird.f32 %v3505
        %vm3512 = vmor %vm3510, %vm3511
        %v3513 = vsel %vm3512, %v3505, %v3509
        %v3514 = vand.u32 2147483647, %v3504
        %vm3515 = vcmp.eq.f32.partialorder %v3514, 8.507059e+37
        %v3516 = vand.u32 %v3504, 2147483648
        %v3517 = vor.u32 1.1754944e-38, %v3516
        %v3518 = vsel %vm3515, %v3517, %v3513
        %v3519 = vmul.f32 1.0, %v3518
        %v3520 = vtanh.pop %v3462
        %v3521 = vmul.f32 %v3519, %v3520
        %s3522 = sadd.s32 %s842, 11
        %v3523 = vstv %s3522
        %vm3524 = vcmp.lt.s32.totalorder %v3523, %v841
        %v3525 = vsel %vm3524, %v3521, 0.0
        %s3526 = scalar_lea.vmem %s407, 88 [#allocation6]
        %3527 = vst [vmem:[%s3526] sm:$0xff] %v3525
        %v3528 = vsel %vm3524, %v3521, %v3304
        %v3529 = vsel %vm3524, %v3462, %v3305
        %s3530 = scalar_lea.vmem [#allocation4], 384
        %v3531 = vld [vmem:[%s3530] sm:$0xff]
        %v3532 = vld [vmem:[%s3] sm:$0xff]
        %v3533 = vld [vmem:[%s3 + $0x20] sm:$0xff]
        %v3534 = vld [vmem:[%s3 + $0x40] sm:$0xff]
        %v3535 = vld [vmem:[%s3 + $0x60] sm:$0xff]
        %v3536 = vld [vmem:[%s3 + $0x80] sm:$0xff]
        %v3537 = vld [vmem:[%s3 + $0xa0] sm:$0xff]
        %v3538 = vld [vmem:[%s3 + $0xc0] sm:$0xff]
        %v3539 = vld [vmem:[%s3 + $0xe0] sm:$0xff]
        %v3540 = vld [vmem:[%s3 + $0x100] sm:$0xff]
        %v3541 = vld [vmem:[%s3 + $0x120] sm:$0xff]
        %v3542 = vld [vmem:[%s3 + $0x140] sm:$0xff]
        %v3543 = vld [vmem:[%s3 + $0x160] sm:$0xff]
        %v3544 = vld [vmem:[%s3 + $0x180] sm:$0xff]
        %v3545 = vld [vmem:[%s3 + $0x1a0] sm:$0xff]
        %v3546 = vld [vmem:[%s3 + $0x1c0] sm:$0xff]
        %v3547 = vld [vmem:[%s3 + $0x1e0] sm:$0xff]
        %3548 = vmatpush.msra.mxu0 %v3547
        %3549 = vmatpush.msra.mxu0 %v3546
        %3550 = vmatpush.msra.mxu0 %v3545
        %3551 = vmatpush.msra.mxu0 %v3544
        %3552 = vmatpush.msra.mxu0 %v3543
        %3553 = vmatpush.msra.mxu0 %v3542
        %3554 = vmatpush.msra.mxu0 %v3541
        %3555 = vmatpush.msra.mxu0 %v3540
        %3556 = vmatpush.msra.mxu0 %v3539
        %3557 = vmatpush.msra.mxu0 %v3538
        %3558 = vmatpush.msra.mxu0 %v3537
        %3559 = vmatpush.msra.mxu0 %v3536
        %3560 = vmatpush.msra.mxu0 %v3535
        %3561 = vmatpush.msra.mxu0 %v3534
        %3562 = vmatpush.msra.mxu0 %v3533
        %3563 = vmatpush.msra.mxu0 %v3532
        %3564 = vmatmul.f32.gmra.mxu0 %v3528
        %v3565 = vpop.f32.mrf.mxu0
        %v3566 = vadd.f32 0.0, %v3565
        %3567 = vdwg.mxu0
        %v3568 = vadd.f32 %v3531, %v3566
        %v3569 = vxor.u32 %v3568, 2147483648
        %v3570 = vmul.f32 %v3569, 1.442695
        %v3571 = vpow.pop %v3570
        %v3572 = vadd.f32 %v3571, 1.0
        %v3573 = vrcp.pop %v3572
        %v3574 = vmul.f32 %v3572, %v3573
        %v3575 = vsub.f32 1.0, %v3574
        %v3576 = vmul.f32 %v3573, %v3575
        %v3577 = vadd.f32 %v3573, %v3576
        %vm3578 = vweird.f32 %v3572
        %vm3579 = vweird.f32 %v3573
        %vm3580 = vmor %vm3578, %vm3579
        %v3581 = vsel %vm3580, %v3573, %v3577
        %v3582 = vand.u32 2147483647, %v3572
        %vm3583 = vcmp.eq.f32.partialorder %v3582, 8.507059e+37
        %v3584 = vand.u32 %v3572, 2147483648
        %v3585 = vor.u32 1.1754944e-38, %v3584
        %v3586 = vsel %vm3583, %v3585, %v3581
        %v3587 = vmul.f32 1.0, %v3586
        %v3588 = vld [vmem:[%s3530 + $0x8] sm:$0xff]
        %v3589 = vld [vmem:[%s3 + $0x8] sm:$0xff]
        %v3590 = vld [vmem:[%s3 + $0x28] sm:$0xff]
        %v3591 = vld [vmem:[%s3 + $0x48] sm:$0xff]
        %v3592 = vld [vmem:[%s3 + $0x68] sm:$0xff]
        %v3593 = vld [vmem:[%s3 + $0x88] sm:$0xff]
        %v3594 = vld [vmem:[%s3 + $0xa8] sm:$0xff]
        %v3595 = vld [vmem:[%s3 + $0xc8] sm:$0xff]
        %v3596 = vld [vmem:[%s3 + $0xe8] sm:$0xff]
        %v3597 = vld [vmem:[%s3 + $0x108] sm:$0xff]
        %v3598 = vld [vmem:[%s3 + $0x128] sm:$0xff]
        %v3599 = vld [vmem:[%s3 + $0x148] sm:$0xff]
        %v3600 = vld [vmem:[%s3 + $0x168] sm:$0xff]
        %v3601 = vld [vmem:[%s3 + $0x188] sm:$0xff]
        %v3602 = vld [vmem:[%s3 + $0x1a8] sm:$0xff]
        %v3603 = vld [vmem:[%s3 + $0x1c8] sm:$0xff]
        %v3604 = vld [vmem:[%s3 + $0x1e8] sm:$0xff]
        %3605 = vmatpush.msra.mxu0 %v3604
        %3606 = vmatpush.msra.mxu0 %v3603
        %3607 = vmatpush.msra.mxu0 %v3602
        %3608 = vmatpush.msra.mxu0 %v3601
        %3609 = vmatpush.msra.mxu0 %v3600
        %3610 = vmatpush.msra.mxu0 %v3599
        %3611 = vmatpush.msra.mxu0 %v3598
        %3612 = vmatpush.msra.mxu0 %v3597
        %3613 = vmatpush.msra.mxu0 %v3596
        %3614 = vmatpush.msra.mxu0 %v3595
        %3615 = vmatpush.msra.mxu0 %v3594
        %3616 = vmatpush.msra.mxu0 %v3593
        %3617 = vmatpush.msra.mxu0 %v3592
        %3618 = vmatpush.msra.mxu0 %v3591
        %3619 = vmatpush.msra.mxu0 %v3590
        %3620 = vmatpush.msra.mxu0 %v3589
        %3621 = vmatmul.f32.gmra.mxu0 %v3528
        %v3622 = vpop.f32.mrf.mxu0
        %v3623 = vadd.f32 0.0, %v3622
        %3624 = vdwg.mxu0
        %v3625 = vadd.f32 %v3588, %v3623
        %v3626 = vxor.u32 %v3625, 2147483648
        %v3627 = vmul.f32 %v3626, 1.442695
        %v3628 = vpow.pop %v3627
        %v3629 = vadd.f32 %v3628, 1.0
        %v3630 = vrcp.pop %v3629
        %v3631 = vmul.f32 %v3629, %v3630
        %v3632 = vsub.f32 1.0, %v3631
        %v3633 = vmul.f32 %v3630, %v3632
        %v3634 = vadd.f32 %v3630, %v3633
        %vm3635 = vweird.f32 %v3629
        %vm3636 = vweird.f32 %v3630
        %vm3637 = vmor %vm3635, %vm3636
        %v3638 = vsel %vm3637, %v3630, %v3634
        %v3639 = vand.u32 2147483647, %v3629
        %vm3640 = vcmp.eq.f32.partialorder %v3639, 8.507059e+37
        %v3641 = vand.u32 %v3629, 2147483648
        %v3642 = vor.u32 1.1754944e-38, %v3641
        %v3643 = vsel %vm3640, %v3642, %v3638
        %v3644 = vmul.f32 1.0, %v3643
        %v3645 = vld [vmem:[%s3530 + $0x10] sm:$0xff]
        %v3646 = vld [vmem:[%s3 + $0x10] sm:$0xff]
        %v3647 = vld [vmem:[%s3 + $0x30] sm:$0xff]
        %v3648 = vld [vmem:[%s3 + $0x50] sm:$0xff]
        %v3649 = vld [vmem:[%s3 + $0x70] sm:$0xff]
        %v3650 = vld [vmem:[%s3 + $0x90] sm:$0xff]
        %v3651 = vld [vmem:[%s3 + $0xb0] sm:$0xff]
        %v3652 = vld [vmem:[%s3 + $0xd0] sm:$0xff]
        %v3653 = vld [vmem:[%s3 + $0xf0] sm:$0xff]
        %v3654 = vld [vmem:[%s3 + $0x110] sm:$0xff]
        %v3655 = vld [vmem:[%s3 + $0x130] sm:$0xff]
        %v3656 = vld [vmem:[%s3 + $0x150] sm:$0xff]
        %v3657 = vld [vmem:[%s3 + $0x170] sm:$0xff]
        %v3658 = vld [vmem:[%s3 + $0x190] sm:$0xff]
        %v3659 = vld [vmem:[%s3 + $0x1b0] sm:$0xff]
        %v3660 = vld [vmem:[%s3 + $0x1d0] sm:$0xff]
        %v3661 = vld [vmem:[%s3 + $0x1f0] sm:$0xff]
        %3662 = vmatpush.msra.mxu0 %v3661
        %3663 = vmatpush.msra.mxu0 %v3660
        %3664 = vmatpush.msra.mxu0 %v3659
        %3665 = vmatpush.msra.mxu0 %v3658
        %3666 = vmatpush.msra.mxu0 %v3657
        %3667 = vmatpush.msra.mxu0 %v3656
        %3668 = vmatpush.msra.mxu0 %v3655
        %3669 = vmatpush.msra.mxu0 %v3654
        %3670 = vmatpush.msra.mxu0 %v3653
        %3671 = vmatpush.msra.mxu0 %v3652
        %3672 = vmatpush.msra.mxu0 %v3651
        %3673 = vmatpush.msra.mxu0 %v3650
        %3674 = vmatpush.msra.mxu0 %v3649
        %3675 = vmatpush.msra.mxu0 %v3648
        %3676 = vmatpush.msra.mxu0 %v3647
        %3677 = vmatpush.msra.mxu0 %v3646
        %3678 = vmatmul.f32.gmra.mxu0 %v3528
        %v3679 = vpop.f32.mrf.mxu0
        %v3680 = vadd.f32 0.0, %v3679
        %3681 = vdwg.mxu0
        %v3682 = vadd.f32 %v3645, %v3680
        %v3683 = vtanh.pop %v3682
        %v3684 = vmul.f32 %v3644, %v3529
        %v3685 = vmul.f32 %v3587, %v3683
        %v3686 = vadd.f32 %v3684, %v3685
        %v3687 = vld [vmem:[%s3530 + $0x18] sm:$0xff]
        %v3688 = vld [vmem:[%s3 + $0x18] sm:$0xff]
        %v3689 = vld [vmem:[%s3 + $0x38] sm:$0xff]
        %v3690 = vld [vmem:[%s3 + $0x58] sm:$0xff]
        %v3691 = vld [vmem:[%s3 + $0x78] sm:$0xff]
        %v3692 = vld [vmem:[%s3 + $0x98] sm:$0xff]
        %v3693 = vld [vmem:[%s3 + $0xb8] sm:$0xff]
        %v3694 = vld [vmem:[%s3 + $0xd8] sm:$0xff]
        %v3695 = vld [vmem:[%s3 + $0xf8] sm:$0xff]
        %v3696 = vld [vmem:[%s3 + $0x118] sm:$0xff]
        %v3697 = vld [vmem:[%s3 + $0x138] sm:$0xff]
        %v3698 = vld [vmem:[%s3 + $0x158] sm:$0xff]
        %v3699 = vld [vmem:[%s3 + $0x178] sm:$0xff]
        %v3700 = vld [vmem:[%s3 + $0x198] sm:$0xff]
        %v3701 = vld [vmem:[%s3 + $0x1b8] sm:$0xff]
        %v3702 = vld [vmem:[%s3 + $0x1d8] sm:$0xff]
        %v3703 = vld [vmem:[%s3 + $0x1f8] sm:$0xff]
        %3704 = vmatpush.msra.mxu0 %v3703
        %3705 = vmatpush.msra.mxu0 %v3702
        %3706 = vmatpush.msra.mxu0 %v3701
        %3707 = vmatpush.msra.mxu0 %v3700
        %3708 = vmatpush.msra.mxu0 %v3699
        %3709 = vmatpush.msra.mxu0 %v3698
        %3710 = vmatpush.msra.mxu0 %v3697
        %3711 = vmatpush.msra.mxu0 %v3696
        %3712 = vmatpush.msra.mxu0 %v3695
        %3713 = vmatpush.msra.mxu0 %v3694
        %3714 = vmatpush.msra.mxu0 %v3693
        %3715 = vmatpush.msra.mxu0 %v3692
        %3716 = vmatpush.msra.mxu0 %v3691
        %3717 = vmatpush.msra.mxu0 %v3690
        %3718 = vmatpush.msra.mxu0 %v3689
        %3719 = vmatpush.msra.mxu0 %v3688
        %3720 = vmatmul.f32.gmra.mxu0 %v3528
        %v3721 = vpop.f32.mrf.mxu0
        %v3722 = vadd.f32 0.0, %v3721
        %3723 = vdwg.mxu0
        %v3724 = vadd.f32 %v3687, %v3722
        %v3725 = vxor.u32 %v3724, 2147483648
        %v3726 = vmul.f32 %v3725, 1.442695
        %v3727 = vpow.pop %v3726
        %v3728 = vadd.f32 %v3727, 1.0
        %v3729 = vrcp.pop %v3728
        %v3730 = vmul.f32 %v3728, %v3729
        %v3731 = vsub.f32 1.0, %v3730
        %v3732 = vmul.f32 %v3729, %v3731
        %v3733 = vadd.f32 %v3729, %v3732
        %vm3734 = vweird.f32 %v3728
        %vm3735 = vweird.f32 %v3729
        %vm3736 = vmor %vm3734, %vm3735
        %v3737 = vsel %vm3736, %v3729, %v3733
        %v3738 = vand.u32 2147483647, %v3728
        %vm3739 = vcmp.eq.f32.partialorder %v3738, 8.507059e+37
        %v3740 = vand.u32 %v3728, 2147483648
        %v3741 = vor.u32 1.1754944e-38, %v3740
        %v3742 = vsel %vm3739, %v3741, %v3737
        %v3743 = vmul.f32 1.0, %v3742
        %v3744 = vtanh.pop %v3686
        %v3745 = vmul.f32 %v3743, %v3744
        %s3746 = sadd.s32 %s842, 12
        %v3747 = vstv %s3746
        %vm3748 = vcmp.lt.s32.totalorder %v3747, %v841
        %v3749 = vsel %vm3748, %v3745, 0.0
        %s3750 = scalar_lea.vmem %s407, 96 [#allocation6]
        %3751 = vst [vmem:[%s3750] sm:$0xff] %v3749
        %v3752 = vsel %vm3748, %v3745, %v3528
        %v3753 = vsel %vm3748, %v3686, %v3529
        %s3754 = scalar_lea.vmem [#allocation4], 416
        %v3755 = vld [vmem:[%s3754] sm:$0xff]
        %v3756 = vld [vmem:[%s3] sm:$0xff]
        %v3757 = vld [vmem:[%s3 + $0x20] sm:$0xff]
        %v3758 = vld [vmem:[%s3 + $0x40] sm:$0xff]
        %v3759 = vld [vmem:[%s3 + $0x60] sm:$0xff]
        %v3760 = vld [vmem:[%s3 + $0x80] sm:$0xff]
        %v3761 = vld [vmem:[%s3 + $0xa0] sm:$0xff]
        %v3762 = vld [vmem:[%s3 + $0xc0] sm:$0xff]
        %v3763 = vld [vmem:[%s3 + $0xe0] sm:$0xff]
        %v3764 = vld [vmem:[%s3 + $0x100] sm:$0xff]
        %v3765 = vld [vmem:[%s3 + $0x120] sm:$0xff]
        %v3766 = vld [vmem:[%s3 + $0x140] sm:$0xff]
        %v3767 = vld [vmem:[%s3 + $0x160] sm:$0xff]
        %v3768 = vld [vmem:[%s3 + $0x180] sm:$0xff]
        %v3769 = vld [vmem:[%s3 + $0x1a0] sm:$0xff]
        %v3770 = vld [vmem:[%s3 + $0x1c0] sm:$0xff]
        %v3771 = vld [vmem:[%s3 + $0x1e0] sm:$0xff]
        %3772 = vmatpush.msra.mxu0 %v3771
        %3773 = vmatpush.msra.mxu0 %v3770
        %3774 = vmatpush.msra.mxu0 %v3769
        %3775 = vmatpush.msra.mxu0 %v3768
        %3776 = vmatpush.msra.mxu0 %v3767
        %3777 = vmatpush.msra.mxu0 %v3766
        %3778 = vmatpush.msra.mxu0 %v3765
        %3779 = vmatpush.msra.mxu0 %v3764
        %3780 = vmatpush.msra.mxu0 %v3763
        %3781 = vmatpush.msra.mxu0 %v3762
        %3782 = vmatpush.msra.mxu0 %v3761
        %3783 = vmatpush.msra.mxu0 %v3760
        %3784 = vmatpush.msra.mxu0 %v3759
        %3785 = vmatpush.msra.mxu0 %v3758
        %3786 = vmatpush.msra.mxu0 %v3757
        %3787 = vmatpush.msra.mxu0 %v3756
        %3788 = vmatmul.f32.gmra.mxu0 %v3752
        %v3789 = vpop.f32.mrf.mxu0
        %v3790 = vadd.f32 0.0, %v3789
        %3791 = vdwg.mxu0
        %v3792 = vadd.f32 %v3755, %v3790
        %v3793 = vxor.u32 %v3792, 2147483648
        %v3794 = vmul.f32 %v3793, 1.442695
        %v3795 = vpow.pop %v3794
        %v3796 = vadd.f32 %v3795, 1.0
        %v3797 = vrcp.pop %v3796
        %v3798 = vmul.f32 %v3796, %v3797
        %v3799 = vsub.f32 1.0, %v3798
        %v3800 = vmul.f32 %v3797, %v3799
        %v3801 = vadd.f32 %v3797, %v3800
        %vm3802 = vweird.f32 %v3796
        %vm3803 = vweird.f32 %v3797
        %vm3804 = vmor %vm3802, %vm3803
        %v3805 = vsel %vm3804, %v3797, %v3801
        %v3806 = vand.u32 2147483647, %v3796
        %vm3807 = vcmp.eq.f32.partialorder %v3806, 8.507059e+37
        %v3808 = vand.u32 %v3796, 2147483648
        %v3809 = vor.u32 1.1754944e-38, %v3808
        %v3810 = vsel %vm3807, %v3809, %v3805
        %v3811 = vmul.f32 1.0, %v3810
        %v3812 = vld [vmem:[%s3754 + $0x8] sm:$0xff]
        %v3813 = vld [vmem:[%s3 + $0x8] sm:$0xff]
        %v3814 = vld [vmem:[%s3 + $0x28] sm:$0xff]
        %v3815 = vld [vmem:[%s3 + $0x48] sm:$0xff]
        %v3816 = vld [vmem:[%s3 + $0x68] sm:$0xff]
        %v3817 = vld [vmem:[%s3 + $0x88] sm:$0xff]
        %v3818 = vld [vmem:[%s3 + $0xa8] sm:$0xff]
        %v3819 = vld [vmem:[%s3 + $0xc8] sm:$0xff]
        %v3820 = vld [vmem:[%s3 + $0xe8] sm:$0xff]
        %v3821 = vld [vmem:[%s3 + $0x108] sm:$0xff]
        %v3822 = vld [vmem:[%s3 + $0x128] sm:$0xff]
        %v3823 = vld [vmem:[%s3 + $0x148] sm:$0xff]
        %v3824 = vld [vmem:[%s3 + $0x168] sm:$0xff]
        %v3825 = vld [vmem:[%s3 + $0x188] sm:$0xff]
        %v3826 = vld [vmem:[%s3 + $0x1a8] sm:$0xff]
        %v3827 = vld [vmem:[%s3 + $0x1c8] sm:$0xff]
        %v3828 = vld [vmem:[%s3 + $0x1e8] sm:$0xff]
        %3829 = vmatpush.msra.mxu0 %v3828
        %3830 = vmatpush.msra.mxu0 %v3827
        %3831 = vmatpush.msra.mxu0 %v3826
        %3832 = vmatpush.msra.mxu0 %v3825
        %3833 = vmatpush.msra.mxu0 %v3824
        %3834 = vmatpush.msra.mxu0 %v3823
        %3835 = vmatpush.msra.mxu0 %v3822
        %3836 = vmatpush.msra.mxu0 %v3821
        %3837 = vmatpush.msra.mxu0 %v3820
        %3838 = vmatpush.msra.mxu0 %v3819
        %3839 = vmatpush.msra.mxu0 %v3818
        %3840 = vmatpush.msra.mxu0 %v3817
        %3841 = vmatpush.msra.mxu0 %v3816
        %3842 = vmatpush.msra.mxu0 %v3815
        %3843 = vmatpush.msra.mxu0 %v3814
        %3844 = vmatpush.msra.mxu0 %v3813
        %3845 = vmatmul.f32.gmra.mxu0 %v3752
        %v3846 = vpop.f32.mrf.mxu0
        %v3847 = vadd.f32 0.0, %v3846
        %3848 = vdwg.mxu0
        %v3849 = vadd.f32 %v3812, %v3847
        %v3850 = vxor.u32 %v3849, 2147483648
        %v3851 = vmul.f32 %v3850, 1.442695
        %v3852 = vpow.pop %v3851
        %v3853 = vadd.f32 %v3852, 1.0
        %v3854 = vrcp.pop %v3853
        %v3855 = vmul.f32 %v3853, %v3854
        %v3856 = vsub.f32 1.0, %v3855
        %v3857 = vmul.f32 %v3854, %v3856
        %v3858 = vadd.f32 %v3854, %v3857
        %vm3859 = vweird.f32 %v3853
        %vm3860 = vweird.f32 %v3854
        %vm3861 = vmor %vm3859, %vm3860
        %v3862 = vsel %vm3861, %v3854, %v3858
        %v3863 = vand.u32 2147483647, %v3853
        %vm3864 = vcmp.eq.f32.partialorder %v3863, 8.507059e+37
        %v3865 = vand.u32 %v3853, 2147483648
        %v3866 = vor.u32 1.1754944e-38, %v3865
        %v3867 = vsel %vm3864, %v3866, %v3862
        %v3868 = vmul.f32 1.0, %v3867
        %v3869 = vld [vmem:[%s3754 + $0x10] sm:$0xff]
        %v3870 = vld [vmem:[%s3 + $0x10] sm:$0xff]
        %v3871 = vld [vmem:[%s3 + $0x30] sm:$0xff]
        %v3872 = vld [vmem:[%s3 + $0x50] sm:$0xff]
        %v3873 = vld [vmem:[%s3 + $0x70] sm:$0xff]
        %v3874 = vld [vmem:[%s3 + $0x90] sm:$0xff]
        %v3875 = vld [vmem:[%s3 + $0xb0] sm:$0xff]
        %v3876 = vld [vmem:[%s3 + $0xd0] sm:$0xff]
        %v3877 = vld [vmem:[%s3 + $0xf0] sm:$0xff]
        %v3878 = vld [vmem:[%s3 + $0x110] sm:$0xff]
        %v3879 = vld [vmem:[%s3 + $0x130] sm:$0xff]
        %v3880 = vld [vmem:[%s3 + $0x150] sm:$0xff]
        %v3881 = vld [vmem:[%s3 + $0x170] sm:$0xff]
        %v3882 = vld [vmem:[%s3 + $0x190] sm:$0xff]
        %v3883 = vld [vmem:[%s3 + $0x1b0] sm:$0xff]
        %v3884 = vld [vmem:[%s3 + $0x1d0] sm:$0xff]
        %v3885 = vld [vmem:[%s3 + $0x1f0] sm:$0xff]
        %3886 = vmatpush.msra.mxu0 %v3885
        %3887 = vmatpush.msra.mxu0 %v3884
        %3888 = vmatpush.msra.mxu0 %v3883
        %3889 = vmatpush.msra.mxu0 %v3882
        %3890 = vmatpush.msra.mxu0 %v3881
        %3891 = vmatpush.msra.mxu0 %v3880
        %3892 = vmatpush.msra.mxu0 %v3879
        %3893 = vmatpush.msra.mxu0 %v3878
        %3894 = vmatpush.msra.mxu0 %v3877
        %3895 = vmatpush.msra.mxu0 %v3876
        %3896 = vmatpush.msra.mxu0 %v3875
        %3897 = vmatpush.msra.mxu0 %v3874
        %3898 = vmatpush.msra.mxu0 %v3873
        %3899 = vmatpush.msra.mxu0 %v3872
        %3900 = vmatpush.msra.mxu0 %v3871
        %3901 = vmatpush.msra.mxu0 %v3870
        %3902 = vmatmul.f32.gmra.mxu0 %v3752
        %v3903 = vpop.f32.mrf.mxu0
        %v3904 = vadd.f32 0.0, %v3903
        %3905 = vdwg.mxu0
        %v3906 = vadd.f32 %v3869, %v3904
        %v3907 = vtanh.pop %v3906
        %v3908 = vmul.f32 %v3868, %v3753
        %v3909 = vmul.f32 %v3811, %v3907
        %v3910 = vadd.f32 %v3908, %v3909
        %v3911 = vld [vmem:[%s3754 + $0x18] sm:$0xff]
        %v3912 = vld [vmem:[%s3 + $0x18] sm:$0xff]
        %v3913 = vld [vmem:[%s3 + $0x38] sm:$0xff]
        %v3914 = vld [vmem:[%s3 + $0x58] sm:$0xff]
        %v3915 = vld [vmem:[%s3 + $0x78] sm:$0xff]
        %v3916 = vld [vmem:[%s3 + $0x98] sm:$0xff]
        %v3917 = vld [vmem:[%s3 + $0xb8] sm:$0xff]
        %v3918 = vld [vmem:[%s3 + $0xd8] sm:$0xff]
        %v3919 = vld [vmem:[%s3 + $0xf8] sm:$0xff]
        %v3920 = vld [vmem:[%s3 + $0x118] sm:$0xff]
        %v3921 = vld [vmem:[%s3 + $0x138] sm:$0xff]
        %v3922 = vld [vmem:[%s3 + $0x158] sm:$0xff]
        %v3923 = vld [vmem:[%s3 + $0x178] sm:$0xff]
        %v3924 = vld [vmem:[%s3 + $0x198] sm:$0xff]
        %v3925 = vld [vmem:[%s3 + $0x1b8] sm:$0xff]
        %v3926 = vld [vmem:[%s3 + $0x1d8] sm:$0xff]
        %v3927 = vld [vmem:[%s3 + $0x1f8] sm:$0xff]
        %3928 = vmatpush.msra.mxu0 %v3927
        %3929 = vmatpush.msra.mxu0 %v3926
        %3930 = vmatpush.msra.mxu0 %v3925
        %3931 = vmatpush.msra.mxu0 %v3924
        %3932 = vmatpush.msra.mxu0 %v3923
        %3933 = vmatpush.msra.mxu0 %v3922
        %3934 = vmatpush.msra.mxu0 %v3921
        %3935 = vmatpush.msra.mxu0 %v3920
        %3936 = vmatpush.msra.mxu0 %v3919
        %3937 = vmatpush.msra.mxu0 %v3918
        %3938 = vmatpush.msra.mxu0 %v3917
        %3939 = vmatpush.msra.mxu0 %v3916
        %3940 = vmatpush.msra.mxu0 %v3915
        %3941 = vmatpush.msra.mxu0 %v3914
        %3942 = vmatpush.msra.mxu0 %v3913
        %3943 = vmatpush.msra.mxu0 %v3912
        %3944 = vmatmul.f32.gmra.mxu0 %v3752
        %v3945 = vpop.f32.mrf.mxu0
        %v3946 = vadd.f32 0.0, %v3945
        %3947 = vdwg.mxu0
        %v3948 = vadd.f32 %v3911, %v3946
        %v3949 = vxor.u32 %v3948, 2147483648
        %v3950 = vmul.f32 %v3949, 1.442695
        %v3951 = vpow.pop %v3950
        %v3952 = vadd.f32 %v3951, 1.0
        %v3953 = vrcp.pop %v3952
        %v3954 = vmul.f32 %v3952, %v3953
        %v3955 = vsub.f32 1.0, %v3954
        %v3956 = vmul.f32 %v3953, %v3955
        %v3957 = vadd.f32 %v3953, %v3956
        %vm3958 = vweird.f32 %v3952
        %vm3959 = vweird.f32 %v3953
        %vm3960 = vmor %vm3958, %vm3959
        %v3961 = vsel %vm3960, %v3953, %v3957
        %v3962 = vand.u32 2147483647, %v3952
        %vm3963 = vcmp.eq.f32.partialorder %v3962, 8.507059e+37
        %v3964 = vand.u32 %v3952, 2147483648
        %v3965 = vor.u32 1.1754944e-38, %v3964
        %v3966 = vsel %vm3963, %v3965, %v3961
        %v3967 = vmul.f32 1.0, %v3966
        %v3968 = vtanh.pop %v3910
        %v3969 = vmul.f32 %v3967, %v3968
        %s3970 = sadd.s32 %s842, 13
        %v3971 = vstv %s3970
        %vm3972 = vcmp.lt.s32.totalorder %v3971, %v841
        %v3973 = vsel %vm3972, %v3969, 0.0
        %s3974 = scalar_lea.vmem %s407, 104 [#allocation6]
        %3975 = vst [vmem:[%s3974] sm:$0xff] %v3973
        %v3976 = vsel %vm3972, %v3969, %v3752
        %v3977 = vsel %vm3972, %v3910, %v3753
        %s3978 = scalar_lea.vmem [#allocation4], 448
        %v3979 = vld [vmem:[%s3978] sm:$0xff]
        %v3980 = vld [vmem:[%s3] sm:$0xff]
        %v3981 = vld [vmem:[%s3 + $0x20] sm:$0xff]
        %v3982 = vld [vmem:[%s3 + $0x40] sm:$0xff]
        %v3983 = vld [vmem:[%s3 + $0x60] sm:$0xff]
        %v3984 = vld [vmem:[%s3 + $0x80] sm:$0xff]
        %v3985 = vld [vmem:[%s3 + $0xa0] sm:$0xff]
        %v3986 = vld [vmem:[%s3 + $0xc0] sm:$0xff]
        %v3987 = vld [vmem:[%s3 + $0xe0] sm:$0xff]
        %v3988 = vld [vmem:[%s3 + $0x100] sm:$0xff]
        %v3989 = vld [vmem:[%s3 + $0x120] sm:$0xff]
        %v3990 = vld [vmem:[%s3 + $0x140] sm:$0xff]
        %v3991 = vld [vmem:[%s3 + $0x160] sm:$0xff]
        %v3992 = vld [vmem:[%s3 + $0x180] sm:$0xff]
        %v3993 = vld [vmem:[%s3 + $0x1a0] sm:$0xff]
        %v3994 = vld [vmem:[%s3 + $0x1c0] sm:$0xff]
        %v3995 = vld [vmem:[%s3 + $0x1e0] sm:$0xff]
        %3996 = vmatpush.msra.mxu0 %v3995
        %3997 = vmatpush.msra.mxu0 %v3994
        %3998 = vmatpush.msra.mxu0 %v3993
        %3999 = vmatpush.msra.mxu0 %v3992
        %4000 = vmatpush.msra.mxu0 %v3991
        %4001 = vmatpush.msra.mxu0 %v3990
        %4002 = vmatpush.msra.mxu0 %v3989
        %4003 = vmatpush.msra.mxu0 %v3988
        %4004 = vmatpush.msra.mxu0 %v3987
        %4005 = vmatpush.msra.mxu0 %v3986
        %4006 = vmatpush.msra.mxu0 %v3985
        %4007 = vmatpush.msra.mxu0 %v3984
        %4008 = vmatpush.msra.mxu0 %v3983
        %4009 = vmatpush.msra.mxu0 %v3982
        %4010 = vmatpush.msra.mxu0 %v3981
        %4011 = vmatpush.msra.mxu0 %v3980
        %4012 = vmatmul.f32.gmra.mxu0 %v3976
        %v4013 = vpop.f32.mrf.mxu0
        %v4014 = vadd.f32 0.0, %v4013
        %4015 = vdwg.mxu0
        %v4016 = vadd.f32 %v3979, %v4014
        %v4017 = vxor.u32 %v4016, 2147483648
        %v4018 = vmul.f32 %v4017, 1.442695
        %v4019 = vpow.pop %v4018
        %v4020 = vadd.f32 %v4019, 1.0
        %v4021 = vrcp.pop %v4020
        %v4022 = vmul.f32 %v4020, %v4021
        %v4023 = vsub.f32 1.0, %v4022
        %v4024 = vmul.f32 %v4021, %v4023
        %v4025 = vadd.f32 %v4021, %v4024
        %vm4026 = vweird.f32 %v4020
        %vm4027 = vweird.f32 %v4021
        %vm4028 = vmor %vm4026, %vm4027
        %v4029 = vsel %vm4028, %v4021, %v4025
        %v4030 = vand.u32 2147483647, %v4020
        %vm4031 = vcmp.eq.f32.partialorder %v4030, 8.507059e+37
        %v4032 = vand.u32 %v4020, 2147483648
        %v4033 = vor.u32 1.1754944e-38, %v4032
        %v4034 = vsel %vm4031, %v4033, %v4029
        %v4035 = vmul.f32 1.0, %v4034
        %v4036 = vld [vmem:[%s3978 + $0x8] sm:$0xff]
        %v4037 = vld [vmem:[%s3 + $0x8] sm:$0xff]
        %v4038 = vld [vmem:[%s3 + $0x28] sm:$0xff]
        %v4039 = vld [vmem:[%s3 + $0x48] sm:$0xff]
        %v4040 = vld [vmem:[%s3 + $0x68] sm:$0xff]
        %v4041 = vld [vmem:[%s3 + $0x88] sm:$0xff]
        %v4042 = vld [vmem:[%s3 + $0xa8] sm:$0xff]
        %v4043 = vld [vmem:[%s3 + $0xc8] sm:$0xff]
        %v4044 = vld [vmem:[%s3 + $0xe8] sm:$0xff]
        %v4045 = vld [vmem:[%s3 + $0x108] sm:$0xff]
        %v4046 = vld [vmem:[%s3 + $0x128] sm:$0xff]
        %v4047 = vld [vmem:[%s3 + $0x148] sm:$0xff]
        %v4048 = vld [vmem:[%s3 + $0x168] sm:$0xff]
        %v4049 = vld [vmem:[%s3 + $0x188] sm:$0xff]
        %v4050 = vld [vmem:[%s3 + $0x1a8] sm:$0xff]
        %v4051 = vld [vmem:[%s3 + $0x1c8] sm:$0xff]
        %v4052 = vld [vmem:[%s3 + $0x1e8] sm:$0xff]
        %4053 = vmatpush.msra.mxu0 %v4052
        %4054 = vmatpush.msra.mxu0 %v4051
        %4055 = vmatpush.msra.mxu0 %v4050
        %4056 = vmatpush.msra.mxu0 %v4049
        %4057 = vmatpush.msra.mxu0 %v4048
        %4058 = vmatpush.msra.mxu0 %v4047
        %4059 = vmatpush.msra.mxu0 %v4046
        %4060 = vmatpush.msra.mxu0 %v4045
        %4061 = vmatpush.msra.mxu0 %v4044
        %4062 = vmatpush.msra.mxu0 %v4043
        %4063 = vmatpush.msra.mxu0 %v4042
        %4064 = vmatpush.msra.mxu0 %v4041
        %4065 = vmatpush.msra.mxu0 %v4040
        %4066 = vmatpush.msra.mxu0 %v4039
        %4067 = vmatpush.msra.mxu0 %v4038
        %4068 = vmatpush.msra.mxu0 %v4037
        %4069 = vmatmul.f32.gmra.mxu0 %v3976
        %v4070 = vpop.f32.mrf.mxu0
        %v4071 = vadd.f32 0.0, %v4070
        %4072 = vdwg.mxu0
        %v4073 = vadd.f32 %v4036, %v4071
        %v4074 = vxor.u32 %v4073, 2147483648
        %v4075 = vmul.f32 %v4074, 1.442695
        %v4076 = vpow.pop %v4075
        %v4077 = vadd.f32 %v4076, 1.0
        %v4078 = vrcp.pop %v4077
        %v4079 = vmul.f32 %v4077, %v4078
        %v4080 = vsub.f32 1.0, %v4079
        %v4081 = vmul.f32 %v4078, %v4080
        %v4082 = vadd.f32 %v4078, %v4081
        %vm4083 = vweird.f32 %v4077
        %vm4084 = vweird.f32 %v4078
        %vm4085 = vmor %vm4083, %vm4084
        %v4086 = vsel %vm4085, %v4078, %v4082
        %v4087 = vand.u32 2147483647, %v4077
        %vm4088 = vcmp.eq.f32.partialorder %v4087, 8.507059e+37
        %v4089 = vand.u32 %v4077, 2147483648
        %v4090 = vor.u32 1.1754944e-38, %v4089
        %v4091 = vsel %vm4088, %v4090, %v4086
        %v4092 = vmul.f32 1.0, %v4091
        %v4093 = vld [vmem:[%s3978 + $0x10] sm:$0xff]
        %v4094 = vld [vmem:[%s3 + $0x10] sm:$0xff]
        %v4095 = vld [vmem:[%s3 + $0x30] sm:$0xff]
        %v4096 = vld [vmem:[%s3 + $0x50] sm:$0xff]
        %v4097 = vld [vmem:[%s3 + $0x70] sm:$0xff]
        %v4098 = vld [vmem:[%s3 + $0x90] sm:$0xff]
        %v4099 = vld [vmem:[%s3 + $0xb0] sm:$0xff]
        %v4100 = vld [vmem:[%s3 + $0xd0] sm:$0xff]
        %v4101 = vld [vmem:[%s3 + $0xf0] sm:$0xff]
        %v4102 = vld [vmem:[%s3 + $0x110] sm:$0xff]
        %v4103 = vld [vmem:[%s3 + $0x130] sm:$0xff]
        %v4104 = vld [vmem:[%s3 + $0x150] sm:$0xff]
        %v4105 = vld [vmem:[%s3 + $0x170] sm:$0xff]
        %v4106 = vld [vmem:[%s3 + $0x190] sm:$0xff]
        %v4107 = vld [vmem:[%s3 + $0x1b0] sm:$0xff]
        %v4108 = vld [vmem:[%s3 + $0x1d0] sm:$0xff]
        %v4109 = vld [vmem:[%s3 + $0x1f0] sm:$0xff]
        %4110 = vmatpush.msra.mxu0 %v4109
        %4111 = vmatpush.msra.mxu0 %v4108
        %4112 = vmatpush.msra.mxu0 %v4107
        %4113 = vmatpush.msra.mxu0 %v4106
        %4114 = vmatpush.msra.mxu0 %v4105
        %4115 = vmatpush.msra.mxu0 %v4104
        %4116 = vmatpush.msra.mxu0 %v4103
        %4117 = vmatpush.msra.mxu0 %v4102
        %4118 = vmatpush.msra.mxu0 %v4101
        %4119 = vmatpush.msra.mxu0 %v4100
        %4120 = vmatpush.msra.mxu0 %v4099
        %4121 = vmatpush.msra.mxu0 %v4098
        %4122 = vmatpush.msra.mxu0 %v4097
        %4123 = vmatpush.msra.mxu0 %v4096
        %4124 = vmatpush.msra.mxu0 %v4095
        %4125 = vmatpush.msra.mxu0 %v4094
        %4126 = vmatmul.f32.gmra.mxu0 %v3976
        %v4127 = vpop.f32.mrf.mxu0
        %v4128 = vadd.f32 0.0, %v4127
        %4129 = vdwg.mxu0
        %v4130 = vadd.f32 %v4093, %v4128
        %v4131 = vtanh.pop %v4130
        %v4132 = vmul.f32 %v4092, %v3977
        %v4133 = vmul.f32 %v4035, %v4131
        %v4134 = vadd.f32 %v4132, %v4133
        %v4135 = vld [vmem:[%s3978 + $0x18] sm:$0xff]
        %v4136 = vld [vmem:[%s3 + $0x18] sm:$0xff]
        %v4137 = vld [vmem:[%s3 + $0x38] sm:$0xff]
        %v4138 = vld [vmem:[%s3 + $0x58] sm:$0xff]
        %v4139 = vld [vmem:[%s3 + $0x78] sm:$0xff]
        %v4140 = vld [vmem:[%s3 + $0x98] sm:$0xff]
        %v4141 = vld [vmem:[%s3 + $0xb8] sm:$0xff]
        %v4142 = vld [vmem:[%s3 + $0xd8] sm:$0xff]
        %v4143 = vld [vmem:[%s3 + $0xf8] sm:$0xff]
        %v4144 = vld [vmem:[%s3 + $0x118] sm:$0xff]
        %v4145 = vld [vmem:[%s3 + $0x138] sm:$0xff]
        %v4146 = vld [vmem:[%s3 + $0x158] sm:$0xff]
        %v4147 = vld [vmem:[%s3 + $0x178] sm:$0xff]
        %v4148 = vld [vmem:[%s3 + $0x198] sm:$0xff]
        %v4149 = vld [vmem:[%s3 + $0x1b8] sm:$0xff]
        %v4150 = vld [vmem:[%s3 + $0x1d8] sm:$0xff]
        %v4151 = vld [vmem:[%s3 + $0x1f8] sm:$0xff]
        %4152 = vmatpush.msra.mxu0 %v4151
        %4153 = vmatpush.msra.mxu0 %v4150
        %4154 = vmatpush.msra.mxu0 %v4149
        %4155 = vmatpush.msra.mxu0 %v4148
        %4156 = vmatpush.msra.mxu0 %v4147
        %4157 = vmatpush.msra.mxu0 %v4146
        %4158 = vmatpush.msra.mxu0 %v4145
        %4159 = vmatpush.msra.mxu0 %v4144
        %4160 = vmatpush.msra.mxu0 %v4143
        %4161 = vmatpush.msra.mxu0 %v4142
        %4162 = vmatpush.msra.mxu0 %v4141
        %4163 = vmatpush.msra.mxu0 %v4140
        %4164 = vmatpush.msra.mxu0 %v4139
        %4165 = vmatpush.msra.mxu0 %v4138
        %4166 = vmatpush.msra.mxu0 %v4137
        %4167 = vmatpush.msra.mxu0 %v4136
        %4168 = vmatmul.f32.gmra.mxu0 %v3976
        %v4169 = vpop.f32.mrf.mxu0
        %v4170 = vadd.f32 0.0, %v4169
        %4171 = vdwg.mxu0
        %v4172 = vadd.f32 %v4135, %v4170
        %v4173 = vxor.u32 %v4172, 2147483648
        %v4174 = vmul.f32 %v4173, 1.442695
        %v4175 = vpow.pop %v4174
        %v4176 = vadd.f32 %v4175, 1.0
        %v4177 = vrcp.pop %v4176
        %v4178 = vmul.f32 %v4176, %v4177
        %v4179 = vsub.f32 1.0, %v4178
        %v4180 = vmul.f32 %v4177, %v4179
        %v4181 = vadd.f32 %v4177, %v4180
        %vm4182 = vweird.f32 %v4176
        %vm4183 = vweird.f32 %v4177
        %vm4184 = vmor %vm4182, %vm4183
        %v4185 = vsel %vm4184, %v4177, %v4181
        %v4186 = vand.u32 2147483647, %v4176
        %vm4187 = vcmp.eq.f32.partialorder %v4186, 8.507059e+37
        %v4188 = vand.u32 %v4176, 2147483648
        %v4189 = vor.u32 1.1754944e-38, %v4188
        %v4190 = vsel %vm4187, %v4189, %v4185
        %v4191 = vmul.f32 1.0, %v4190
        %v4192 = vtanh.pop %v4134
        %v4193 = vmul.f32 %v4191, %v4192
        %s4194 = sadd.s32 %s842, 14
        %v4195 = vstv %s4194
        %vm4196 = vcmp.lt.s32.totalorder %v4195, %v841
        %v4197 = vsel %vm4196, %v4193, 0.0
        %s4198 = scalar_lea.vmem %s407, 112 [#allocation6]
        %4199 = vst [vmem:[%s4198] sm:$0xff] %v4197
        %v4200 = vsel %vm4196, %v4193, %v3976
        %v4201 = vsel %vm4196, %v4134, %v3977
        %s4202 = scalar_lea.vmem [#allocation4], 480
        %v4203 = vld [vmem:[%s4202] sm:$0xff]
        %v4204 = vld [vmem:[%s3] sm:$0xff]
        %v4205 = vld [vmem:[%s3 + $0x20] sm:$0xff]
        %v4206 = vld [vmem:[%s3 + $0x40] sm:$0xff]
        %v4207 = vld [vmem:[%s3 + $0x60] sm:$0xff]
        %v4208 = vld [vmem:[%s3 + $0x80] sm:$0xff]
        %v4209 = vld [vmem:[%s3 + $0xa0] sm:$0xff]
        %v4210 = vld [vmem:[%s3 + $0xc0] sm:$0xff]
        %v4211 = vld [vmem:[%s3 + $0xe0] sm:$0xff]
        %v4212 = vld [vmem:[%s3 + $0x100] sm:$0xff]
        %v4213 = vld [vmem:[%s3 + $0x120] sm:$0xff]
        %v4214 = vld [vmem:[%s3 + $0x140] sm:$0xff]
        %v4215 = vld [vmem:[%s3 + $0x160] sm:$0xff]
        %v4216 = vld [vmem:[%s3 + $0x180] sm:$0xff]
        %v4217 = vld [vmem:[%s3 + $0x1a0] sm:$0xff]
        %v4218 = vld [vmem:[%s3 + $0x1c0] sm:$0xff]
        %v4219 = vld [vmem:[%s3 + $0x1e0] sm:$0xff]
        %4220 = vmatpush.msra.mxu0 %v4219
        %4221 = vmatpush.msra.mxu0 %v4218
        %4222 = vmatpush.msra.mxu0 %v4217
        %4223 = vmatpush.msra.mxu0 %v4216
        %4224 = vmatpush.msra.mxu0 %v4215
        %4225 = vmatpush.msra.mxu0 %v4214
        %4226 = vmatpush.msra.mxu0 %v4213
        %4227 = vmatpush.msra.mxu0 %v4212
        %4228 = vmatpush.msra.mxu0 %v4211
        %4229 = vmatpush.msra.mxu0 %v4210
        %4230 = vmatpush.msra.mxu0 %v4209
        %4231 = vmatpush.msra.mxu0 %v4208
        %4232 = vmatpush.msra.mxu0 %v4207
        %4233 = vmatpush.msra.mxu0 %v4206
        %4234 = vmatpush.msra.mxu0 %v4205
        %4235 = vmatpush.msra.mxu0 %v4204
        %4236 = vmatmul.f32.gmra.mxu0 %v4200
        %v4237 = vpop.f32.mrf.mxu0
        %v4238 = vadd.f32 0.0, %v4237
        %4239 = vdwg.mxu0
        %v4240 = vadd.f32 %v4203, %v4238
        %v4241 = vxor.u32 %v4240, 2147483648
        %v4242 = vmul.f32 %v4241, 1.442695
        %v4243 = vpow.pop %v4242
        %v4244 = vadd.f32 %v4243, 1.0
        %v4245 = vrcp.pop %v4244
        %v4246 = vmul.f32 %v4244, %v4245
        %v4247 = vsub.f32 1.0, %v4246
        %v4248 = vmul.f32 %v4245, %v4247
        %v4249 = vadd.f32 %v4245, %v4248
        %vm4250 = vweird.f32 %v4244
        %vm4251 = vweird.f32 %v4245
        %vm4252 = vmor %vm4250, %vm4251
        %v4253 = vsel %vm4252, %v4245, %v4249
        %v4254 = vand.u32 2147483647, %v4244
        %vm4255 = vcmp.eq.f32.partialorder %v4254, 8.507059e+37
        %v4256 = vand.u32 %v4244, 2147483648
        %v4257 = vor.u32 1.1754944e-38, %v4256
        %v4258 = vsel %vm4255, %v4257, %v4253
        %v4259 = vmul.f32 1.0, %v4258
        %v4260 = vld [vmem:[%s4202 + $0x8] sm:$0xff]
        %v4261 = vld [vmem:[%s3 + $0x8] sm:$0xff]
        %v4262 = vld [vmem:[%s3 + $0x28] sm:$0xff]
        %v4263 = vld [vmem:[%s3 + $0x48] sm:$0xff]
        %v4264 = vld [vmem:[%s3 + $0x68] sm:$0xff]
        %v4265 = vld [vmem:[%s3 + $0x88] sm:$0xff]
        %v4266 = vld [vmem:[%s3 + $0xa8] sm:$0xff]
        %v4267 = vld [vmem:[%s3 + $0xc8] sm:$0xff]
        %v4268 = vld [vmem:[%s3 + $0xe8] sm:$0xff]
        %v4269 = vld [vmem:[%s3 + $0x108] sm:$0xff]
        %v4270 = vld [vmem:[%s3 + $0x128] sm:$0xff]
        %v4271 = vld [vmem:[%s3 + $0x148] sm:$0xff]
        %v4272 = vld [vmem:[%s3 + $0x168] sm:$0xff]
        %v4273 = vld [vmem:[%s3 + $0x188] sm:$0xff]
        %v4274 = vld [vmem:[%s3 + $0x1a8] sm:$0xff]
        %v4275 = vld [vmem:[%s3 + $0x1c8] sm:$0xff]
        %v4276 = vld [vmem:[%s3 + $0x1e8] sm:$0xff]
        %4277 = vmatpush.msra.mxu0 %v4276
        %4278 = vmatpush.msra.mxu0 %v4275
        %4279 = vmatpush.msra.mxu0 %v4274
        %4280 = vmatpush.msra.mxu0 %v4273
        %4281 = vmatpush.msra.mxu0 %v4272
        %4282 = vmatpush.msra.mxu0 %v4271
        %4283 = vmatpush.msra.mxu0 %v4270
        %4284 = vmatpush.msra.mxu0 %v4269
        %4285 = vmatpush.msra.mxu0 %v4268
        %4286 = vmatpush.msra.mxu0 %v4267
        %4287 = vmatpush.msra.mxu0 %v4266
        %4288 = vmatpush.msra.mxu0 %v4265
        %4289 = vmatpush.msra.mxu0 %v4264
        %4290 = vmatpush.msra.mxu0 %v4263
        %4291 = vmatpush.msra.mxu0 %v4262
        %4292 = vmatpush.msra.mxu0 %v4261
        %4293 = vmatmul.f32.gmra.mxu0 %v4200
        %v4294 = vpop.f32.mrf.mxu0
        %v4295 = vadd.f32 0.0, %v4294
        %4296 = vdwg.mxu0
        %v4297 = vadd.f32 %v4260, %v4295
        %v4298 = vxor.u32 %v4297, 2147483648
        %v4299 = vmul.f32 %v4298, 1.442695
        %v4300 = vpow.pop %v4299
        %v4301 = vadd.f32 %v4300, 1.0
        %v4302 = vrcp.pop %v4301
        %v4303 = vmul.f32 %v4301, %v4302
        %v4304 = vsub.f32 1.0, %v4303
        %v4305 = vmul.f32 %v4302, %v4304
        %v4306 = vadd.f32 %v4302, %v4305
        %vm4307 = vweird.f32 %v4301
        %vm4308 = vweird.f32 %v4302
        %vm4309 = vmor %vm4307, %vm4308
        %v4310 = vsel %vm4309, %v4302, %v4306
        %v4311 = vand.u32 2147483647, %v4301
        %vm4312 = vcmp.eq.f32.partialorder %v4311, 8.507059e+37
        %v4313 = vand.u32 %v4301, 2147483648
        %v4314 = vor.u32 1.1754944e-38, %v4313
        %v4315 = vsel %vm4312, %v4314, %v4310
        %v4316 = vmul.f32 1.0, %v4315
        %v4317 = vld [vmem:[%s4202 + $0x10] sm:$0xff]
        %v4318 = vld [vmem:[%s3 + $0x10] sm:$0xff]
        %v4319 = vld [vmem:[%s3 + $0x30] sm:$0xff]
        %v4320 = vld [vmem:[%s3 + $0x50] sm:$0xff]
        %v4321 = vld [vmem:[%s3 + $0x70] sm:$0xff]
        %v4322 = vld [vmem:[%s3 + $0x90] sm:$0xff]
        %v4323 = vld [vmem:[%s3 + $0xb0] sm:$0xff]
        %v4324 = vld [vmem:[%s3 + $0xd0] sm:$0xff]
        %v4325 = vld [vmem:[%s3 + $0xf0] sm:$0xff]
        %v4326 = vld [vmem:[%s3 + $0x110] sm:$0xff]
        %v4327 = vld [vmem:[%s3 + $0x130] sm:$0xff]
        %v4328 = vld [vmem:[%s3 + $0x150] sm:$0xff]
        %v4329 = vld [vmem:[%s3 + $0x170] sm:$0xff]
        %v4330 = vld [vmem:[%s3 + $0x190] sm:$0xff]
        %v4331 = vld [vmem:[%s3 + $0x1b0] sm:$0xff]
        %v4332 = vld [vmem:[%s3 + $0x1d0] sm:$0xff]
        %v4333 = vld [vmem:[%s3 + $0x1f0] sm:$0xff]
        %4334 = vmatpush.msra.mxu0 %v4333
        %4335 = vmatpush.msra.mxu0 %v4332
        %4336 = vmatpush.msra.mxu0 %v4331
        %4337 = vmatpush.msra.mxu0 %v4330
        %4338 = vmatpush.msra.mxu0 %v4329
        %4339 = vmatpush.msra.mxu0 %v4328
        %4340 = vmatpush.msra.mxu0 %v4327
        %4341 = vmatpush.msra.mxu0 %v4326
        %4342 = vmatpush.msra.mxu0 %v4325
        %4343 = vmatpush.msra.mxu0 %v4324
        %4344 = vmatpush.msra.mxu0 %v4323
        %4345 = vmatpush.msra.mxu0 %v4322
        %4346 = vmatpush.msra.mxu0 %v4321
        %4347 = vmatpush.msra.mxu0 %v4320
        %4348 = vmatpush.msra.mxu0 %v4319
        %4349 = vmatpush.msra.mxu0 %v4318
        %4350 = vmatmul.f32.gmra.mxu0 %v4200
        %v4351 = vpop.f32.mrf.mxu0
        %v4352 = vadd.f32 0.0, %v4351
        %4353 = vdwg.mxu0
        %v4354 = vadd.f32 %v4317, %v4352
        %v4355 = vtanh.pop %v4354
        %v4356 = vmul.f32 %v4316, %v4201
        %v4357 = vmul.f32 %v4259, %v4355
        %v4358 = vadd.f32 %v4356, %v4357
        %v4359 = vld [vmem:[%s4202 + $0x18] sm:$0xff]
        %v4360 = vld [vmem:[%s3 + $0x18] sm:$0xff]
        %v4361 = vld [vmem:[%s3 + $0x38] sm:$0xff]
        %v4362 = vld [vmem:[%s3 + $0x58] sm:$0xff]
        %v4363 = vld [vmem:[%s3 + $0x78] sm:$0xff]
        %v4364 = vld [vmem:[%s3 + $0x98] sm:$0xff]
        %v4365 = vld [vmem:[%s3 + $0xb8] sm:$0xff]
        %v4366 = vld [vmem:[%s3 + $0xd8] sm:$0xff]
        %v4367 = vld [vmem:[%s3 + $0xf8] sm:$0xff]
        %v4368 = vld [vmem:[%s3 + $0x118] sm:$0xff]
        %v4369 = vld [vmem:[%s3 + $0x138] sm:$0xff]
        %v4370 = vld [vmem:[%s3 + $0x158] sm:$0xff]
        %v4371 = vld [vmem:[%s3 + $0x178] sm:$0xff]
        %v4372 = vld [vmem:[%s3 + $0x198] sm:$0xff]
        %v4373 = vld [vmem:[%s3 + $0x1b8] sm:$0xff]
        %v4374 = vld [vmem:[%s3 + $0x1d8] sm:$0xff]
        %v4375 = vld [vmem:[%s3 + $0x1f8] sm:$0xff]
        %4376 = vmatpush.msra.mxu0 %v4375
        %4377 = vmatpush.msra.mxu0 %v4374
        %4378 = vmatpush.msra.mxu0 %v4373
        %4379 = vmatpush.msra.mxu0 %v4372
        %4380 = vmatpush.msra.mxu0 %v4371
        %4381 = vmatpush.msra.mxu0 %v4370
        %4382 = vmatpush.msra.mxu0 %v4369
        %4383 = vmatpush.msra.mxu0 %v4368
        %4384 = vmatpush.msra.mxu0 %v4367
        %4385 = vmatpush.msra.mxu0 %v4366
        %4386 = vmatpush.msra.mxu0 %v4365
        %4387 = vmatpush.msra.mxu0 %v4364
        %4388 = vmatpush.msra.mxu0 %v4363
        %4389 = vmatpush.msra.mxu0 %v4362
        %4390 = vmatpush.msra.mxu0 %v4361
        %4391 = vmatpush.msra.mxu0 %v4360
        %4392 = vmatmul.f32.gmra.mxu0 %v4200
        %v4393 = vpop.f32.mrf.mxu0
        %v4394 = vadd.f32 0.0, %v4393
        %4395 = vdwg.mxu0
        %v4396 = vadd.f32 %v4359, %v4394
        %v4397 = vxor.u32 %v4396, 2147483648
        %v4398 = vmul.f32 %v4397, 1.442695
        %v4399 = vpow.pop %v4398
        %v4400 = vadd.f32 %v4399, 1.0
        %v4401 = vrcp.pop %v4400
        %v4402 = vmul.f32 %v4400, %v4401
        %v4403 = vsub.f32 1.0, %v4402
        %v4404 = vmul.f32 %v4401, %v4403
        %v4405 = vadd.f32 %v4401, %v4404
        %vm4406 = vweird.f32 %v4400
        %vm4407 = vweird.f32 %v4401
        %vm4408 = vmor %vm4406, %vm4407
        %v4409 = vsel %vm4408, %v4401, %v4405
        %v4410 = vand.u32 2147483647, %v4400
        %vm4411 = vcmp.eq.f32.partialorder %v4410, 8.507059e+37
        %v4412 = vand.u32 %v4400, 2147483648
        %v4413 = vor.u32 1.1754944e-38, %v4412
        %v4414 = vsel %vm4411, %v4413, %v4409
        %v4415 = vmul.f32 1.0, %v4414
        %v4416 = vtanh.pop %v4358
        %v4417 = vmul.f32 %v4415, %v4416
        %s4418 = sadd.s32 %s842, 15
        %v4419 = vstv %s4418
        %vm4420 = vcmp.lt.s32.totalorder %v4419, %v841
        %v4421 = vsel %vm4420, %v4417, 0.0
        %s4422 = scalar_lea.vmem %s407, 120 [#allocation6]
        %4423 = vst [vmem:[%s4422] sm:$0xff] %v4421
        %v4424 = vsel %vm4420, %v4417, %v4200
        %v4425 = vsel %vm4420, %v4358, %v4201
        %4426 = vst [vmem:[#allocation2] sm:$0xff] %v4424
        %4427 = vst [vmem:[#allocation3] sm:$0xff] %v4425
        %p4428 = scmp.eq.s32.totalorder %s30, 2
        // Predicated region
        $region83: #{tpu_custom_call.1} parent=73 // pred_check
          %p4429 = pneg %p4428
        $region84: #{tpu_custom_call.1} parent=73 // pred_check_branch
          %4431 = sbr.rel (%p4429) target = $region86
        $region85: #{tpu_custom_call.1} parent=73 // pred_region
          %4432 = vst [vmem:[%s414] sm:$0xff] %v4424
          %4433 = vst [vmem:[%s421] sm:$0xff] %v4425
        $region86: #{tpu_custom_call.1} parent=73 // pred_fallthru
          _
        %s4434 = sand.u32 %s164, 1
        %s4435 = scalar_lea.sflag [#allocation7], %s4434
        %s4436 = sand.u32 %s164, 1
        %s4437 = smul.addr %s4436, 128
        %s4438 = scalar_lea.vmem [#allocation6], %s4437
        %s4439 = sand.u32 %s25, 1
        %s4440 = scalar_lea.sflag [#allocation9], %s4439
        %s4441 = sand.u32 %s190, 1
        %s4442 = smul.addr %s4441, 8
        %s4443 = scalar_lea.vmem [#allocation8], %s4442
        %s4444 = sand.u32 %s25, 1
        %s4445 = scalar_lea.sflag [#allocation9], %s4444
        %s4446 = sand.u32 %s216, 1
        %s4447 = smul.addr %s4446, 8
        %s4448 = scalar_lea.vmem [#allocation10], %s4447
        // Predicated region
        $region87: #{tpu_custom_call.1} parent=73 // pred_check
          %p4449 = pneg %p174
        $region88: #{tpu_custom_call.1} parent=73 // pred_check_branch
          %4451 = sbr.rel (%p4449) target = $region90
        $region89: #{tpu_custom_call.1} parent=73 // pred_region
          %s4452 = smul.u32 16, %s30
          %4454 = vsyncadd %s4435, 0
          %s4455 = smul.addr %s4452, 2
          %s4456 = sadd.s32 %s29, %s4455
          %s4457 = smul.addr %s4456, 8
          %s4458 = scalar_lea.hbm %s5, %s4457
          %s4459 = sshll.u32 %s4438, 4
          %s4460 = int_to_ptr.vmem [resolvable:$true] %s4459
          %s4461 = sshll.u32 %s4458, 4
          %s4462 = int_to_ptr.hbm [resolvable:$true] %s4461
          %4467 = dma.vmem_to_hbm [thread:$0]  %s4460, 2048, %s4462, %s4435, 128, 256, 8
        $region90: #{tpu_custom_call.1} parent=73 // pred_fallthru
          _
        // Predicated region
        $region91: #{tpu_custom_call.1} parent=73 // pred_check
          %p4468 = pneg %p200
        $region92: #{tpu_custom_call.1} parent=73 // pred_check_branch
          %4470 = sbr.rel (%p4468) target = $region94
        $region93: #{tpu_custom_call.1} parent=73 // pred_region
          %4472 = vsyncadd %s4440, 0
          %s4473 = smul.addr %s29, 8
          %s4474 = scalar_lea.hbm %s6, %s4473
          %s4476 = sshll.u32 %s4443, 4
          %s4477 = int_to_ptr.vmem [resolvable:$true] %s4476
          %s4478 = sshll.u32 %s4474, 4
          %s4479 = int_to_ptr.hbm [resolvable:$true] %s4478
          %4481 = dma.vmem_to_hbm [thread:$0]  %s4477, 128, %s4479, %s4440
        $region94: #{tpu_custom_call.1} parent=73 // pred_fallthru
          _
        // Predicated region
        $region95: #{tpu_custom_call.1} parent=73 // pred_check
          %p4482 = pneg %p226
        $region96: #{tpu_custom_call.1} parent=73 // pred_check_branch
          %4484 = sbr.rel (%p4482) target = $region98
        $region97: #{tpu_custom_call.1} parent=73 // pred_region
          %4486 = vsyncadd %s4445, 0
          %s4487 = smul.addr %s29, 8
          %s4488 = scalar_lea.hbm %s7, %s4487
          %s4490 = sshll.u32 %s4448, 4
          %s4491 = int_to_ptr.vmem [resolvable:$true] %s4490
          %s4492 = sshll.u32 %s4488, 4
          %s4493 = int_to_ptr.hbm [resolvable:$true] %s4492
          %4495 = dma.vmem_to_hbm [thread:$0]  %s4491, 128, %s4493, %s4445
        $region98: #{tpu_custom_call.1} parent=73 // pred_fallthru
          _
      $region74: #{tpu_custom_call.1} parent=5 // pred_fallthru
        _
      %p4496 = scmp.le.s32.totalorder 2, %s20
      // Predicated region
      $region99: #{tpu_custom_call.1} parent=5 // pred_check
        %p4497 = pneg %p4496
      $region100: #{tpu_custom_call.1} parent=5 // pred_check_branch
        %4499 = sbr.rel (%p4497) target = $region102
      $region101: #{tpu_custom_call.1} parent=5 // pred_region
        %s4500 = ssub.s32 %s20, 2
        // Predicated region
        $region103: #{tpu_custom_call.1} parent=101 // pred_check
          %p4501 = pneg %p180
        $region104: #{tpu_custom_call.1} parent=101 // pred_check_branch
          %4503 = sbr.rel (%p4501) target = $region106
        $region105: #{tpu_custom_call.1} parent=101 // pred_region
          %s4504 = sand.u32 %s165, 1
          %s4505 = scalar_lea.sflag [#allocation7], %s4504
          %s4506 = sand.u32 %s165, 1
          %s4507 = smul.addr %s4506, 128
          %s4508 = scalar_lea.vmem [#allocation6], %s4507
          %4510 = dma.done %s4505, 2048
        $region106: #{tpu_custom_call.1} parent=101 // pred_fallthru
          _
        // Predicated region
        $region107: #{tpu_custom_call.1} parent=101 // pred_check
          %p4511 = pneg %p206
        $region108: #{tpu_custom_call.1} parent=101 // pred_check_branch
          %4513 = sbr.rel (%p4511) target = $region110
        $region109: #{tpu_custom_call.1} parent=101 // pred_region
          %s4514 = sand.u32 %s26, 1
          %s4515 = scalar_lea.sflag [#allocation9], %s4514
          %s4516 = sand.u32 %s191, 1
          %s4517 = smul.addr %s4516, 8
          %s4518 = scalar_lea.vmem [#allocation8], %s4517
          %4520 = dma.done %s4515, 128
        $region110: #{tpu_custom_call.1} parent=101 // pred_fallthru
          _
        // Predicated region
        $region111: #{tpu_custom_call.1} parent=101 // pred_check
          %p4521 = pneg %p232
        $region112: #{tpu_custom_call.1} parent=101 // pred_check_branch
          %4523 = sbr.rel (%p4521) target = $region114
        $region113: #{tpu_custom_call.1} parent=101 // pred_region
          %s4524 = sand.u32 %s26, 1
          %s4525 = scalar_lea.sflag [#allocation9], %s4524
          %s4526 = sand.u32 %s217, 1
          %s4527 = smul.addr %s4526, 8
          %s4528 = scalar_lea.vmem [#allocation10], %s4527
          %4530 = dma.done %s4525, 128
        $region114: #{tpu_custom_call.1} parent=101 // pred_fallthru
          _
      $region102: #{tpu_custom_call.1} parent=5 // pred_fallthru
        _
    $region6: #{tpu_custom_call.1} parent=1 // loop_footer
      %s24 = sadd.s32 1, %s20
    $region7: #{tpu_custom_call.1} parent=1 // loop_footer_branch
      %19 = sbr.rel target = $region3
    $region8: #{tpu_custom_call.1} parent=1 // loop_exit
      _
    %4531 = vsyncpa [#allocation7], 1
    %s4532 = scalar_lea.sflag [#allocation7], 1
    %4533 = vsyncpa %s4532, 1
    %4534 = vsyncpa [#allocation9], 1
    %s4535 = scalar_lea.sflag [#allocation9], 1
    %4536 = vsyncpa %s4535, 1

</llo_original>
